<compile_context>
chip_gen: v7x
topology: tpu7x:2x2x1
jax: 0.10.0
libtpu: 0.0.40
codegen_flags: <defaults>
</compile_context>

<pallas_src>
import jax
import jax.numpy as jnp
from jax.experimental import pallas as pl
from jax.experimental.pallas import tpu as pltpu

KS = 7          # kernel_size (module default)
PAD = 3         # padding for kernel_size == 7
MID_C = 16      # conv1 output channels (fixed by the module)
GROUP = 4       # conv1 output channels per accumulator group (vreg pressure)


def _make_kernel(nb, C, H, W):
    SLAB = W + 2 * PAD          # per-image lane slab (image + its 3-wide halos)
    LPAD = nb * SLAB            # packed, padded lane width of the scratch
    LOUT = LPAD - 2 * PAD       # packed conv-output lane width

    def kernel(x_ref, w1_ref, w2_ref, o_ref,
               pad1_ref, mid_ref, acc1_ref, acc2_ref):
        # x_ref  : (nb, C, H, W)             VMEM
        # w1_ref : (49*32,)                  SMEM  idx = (ky*7+kx)*32 + 2*m + c
        # w2_ref : (49*16,)                  SMEM  idx = (ky*7+kx)*16 + m
        # o_ref  : (nb, 1, H, W)             VMEM
        # pad1_ref: (2, H+6, LPAD)           packed pooled input, zero-padded
        # mid_ref : (16, H+6, LPAD)          packed conv1 output, zero-padded
        # acc1_ref: (GROUP, H, LOUT)         conv1 group accumulators
        # acc2_ref: (H, LOUT)                conv2 accumulator

        # ---- 0. clear scratch halos (interior is fully rewritten below) ----
        pad1_ref[...] = jnp.zeros_like(pad1_ref)
        mid_ref[:, 0:PAD, :] = jnp.zeros((MID_C, PAD, LPAD), jnp.float32)
        mid_ref[:, PAD + H:, :] = jnp.zeros((MID_C, PAD, LPAD), jnp.float32)
        mid_ref[:, :, 0:PAD] = jnp.zeros((MID_C, H + 2 * PAD, PAD), jnp.float32)
        mid_ref[:, :, LPAD - PAD:] = jnp.zeros((MID_C, H + 2 * PAD, PAD),
                                               jnp.float32)

        # ---- 1. channel mean / max pooling, packed along lanes -------------
        for n in range(nb):
            xn = x_ref[n].astype(jnp.float32)            # (C, H, W)
            c0 = n * SLAB + PAD
            pad1_ref[0, PAD:PAD + H, c0:c0 + W] = jnp.mean(xn, axis=0)
            pad1_ref[1, PAD:PAD + H, c0:c0 + W] = jnp.max(xn, axis=0)

        # Valid output columns of the packed accumulators; everything else is
        # an inter-image gap that must stay zero (conv2's crop semantics).
        cols = jax.lax.broadcasted_iota(jnp.int32, (H, LOUT), 1)
        col_mask = jnp.zeros((H, LOUT), jnp.bool_)
        for n in range(nb):
            col_mask = jnp.logical_or(
                col_mask,
                jnp.logical_and(cols >= n * SLAB, cols < n * SLAB + W))

        # ---- 2. conv1: 2 -> 16 channels, 7x7, pad 3, no bias ---------------
        # GROUP output channels at a time; the two shifted windows per tap are
        # loaded once and reused by the whole group.  Each scalar tap read
        # from SMEM now drives a vector FMA that covers all nb packed images.
        for g in range(MID_C // GROUP):
            acc1_ref[...] = jnp.zeros_like(acc1_ref)

            @pl.loop(0, KS)
            def _(ky, base=g * GROUP):
                accs = [acc1_ref[j] for j in range(GROUP)]
                for kx in range(KS):
                    k = ky * KS + kx
                    win0 = pad1_ref[0, pl.ds(ky, H), kx:kx + LOUT]
                    win1 = pad1_ref[1, pl.ds(ky, H), kx:kx + LOUT]
                    for j in range(GROUP):
                        m = base + j
                        accs[j] = (accs[j]
                                   + w1_ref[k * (2 * MID_C) + 2 * m] * win0
                                   + w1_ref[k * (2 * MID_C) + 2 * m + 1] * win1)
                for j in range(GROUP):
                    acc1_ref[j] = accs[j]

            # Crop-and-repad: write valid columns, force gaps to zero.
            for j in range(GROUP):
                mid_ref[g * GROUP + j, PAD:PAD + H, PAD:PAD + LOUT] = jnp.where(
                    col_mask, acc1_ref[j], 0.0)

        # ---- 3. conv2: 16 -> 1 channel, 7x7, pad 3, no bias ----------------
        acc2_ref[...] = jnp.zeros_like(acc2_ref)

        @pl.loop(0, KS)
        def _(ky):
            s = acc2_ref[...]
            for kx in range(KS):
                k = ky * KS + kx
                for m in range(MID_C):
                    s = s + w2_ref[k * MID_C + m] * mid_ref[
                        m, pl.ds(ky, H), kx:kx + LOUT]
            acc2_ref[...] = s

        # ---- 4. sigmoid + unpack one (H, W) map per image ------------------
        att = jax.nn.sigmoid(acc2_ref[...])
        for n in range(nb):
            o_ref[n, 0, :, :] = att[:, n * SLAB:n * SLAB + W].astype(o_ref.dtype)

    return kernel


def _pick_block_batch(n, c, h, w):
    """Images per grid step: lane-dense packed width, decent DMA block size,
    >=2 grid steps when the batch allows (v7x: 2 TensorCores), VMEM-safe."""
    slab = w + 2 * PAD
    nb = max(1, min(n, -(-128 // slab)))          # ~128+ packed lanes
    if n >= 4 and n < 2 * nb:
        nb = n // 2                               # keep both v7x cores busy

    def vmem_bytes(nb_):
        lpad = nb_ * slab
        return 4 * (2 * nb_ * c * h * w                      # input (x2 buf)
                    + 2 * nb_ * h * w                        # output (x2 buf)
                    + (2 + MID_C) * (h + 2 * PAD) * lpad     # padded scratch
                    + (GROUP + 1) * h * (lpad - 2 * PAD))    # accumulators

    while nb > 1 and vmem_bytes(nb) > 16 * 1024 * 1024:
        nb -= 1
    while n % nb:                                 # uniform blocks only
        nb -= 1
    return nb
    # TODO(synk): for very large C on v7x, add a C-tiling "arbitrary" grid
    # axis with running sum/max pooling accumulators.


def spatial_attention(x, w1, w2):
    """x: (N, C, H, W); w1: (16, 2, 7, 7); w2: (1, 16, 7, 7) -> (N, 1, H, W)."""
    N, C, H, W = x.shape
    nb = _pick_block_batch(N, C, H, W)
    slab = W + 2 * PAD
    lpad = nb * slab
    lout = lpad - 2 * PAD

    # Flatten filter taps for scalar reads from SMEM (1-D to avoid 2-D SMEM
    # padding blow-up):
    #   w1_flat[(ky*7+kx)*32 + 2*m + c] = w1[m, c, ky, kx]
    #   w2_flat[(ky*7+kx)*16 + m]       = w2[0, m, ky, kx]
    w1_flat = jnp.transpose(w1.astype(jnp.float32), (2, 3, 0, 1)).reshape(-1)
    w2_flat = jnp.transpose(w2.astype(jnp.float32), (2, 3, 0, 1)).reshape(-1)

    kernel = _make_kernel(nb, C, H, W)
    return pl.pallas_call(
        kernel,
        out_shape=jax.ShapeDtypeStruct((N, 1, H, W), x.dtype),
        grid=(N // nb,),
        in_specs=[
            pl.BlockSpec((nb, C, H, W), lambda b: (b, 0, 0, 0)),
            pl.BlockSpec(memory_space=pltpu.MemorySpace.SMEM),
            pl.BlockSpec(memory_space=pltpu.MemorySpace.SMEM),
        ],
        out_specs=pl.BlockSpec((nb, 1, H, W), lambda b: (b, 0, 0, 0)),
        scratch_shapes=[
            pltpu.VMEM((2, H + 2 * PAD, lpad), jnp.float32),      # packed pooled input
            pltpu.VMEM((MID_C, H + 2 * PAD, lpad), jnp.float32),  # packed conv1 output
            pltpu.VMEM((GROUP, H, lout), jnp.float32),            # conv1 group accs
            pltpu.VMEM((H, lout), jnp.float32),                   # conv2 acc
        ],
        compiler_params=pltpu.CompilerParams(
            dimension_semantics=("parallel",),
            vmem_limit_bytes=32 * 1024 * 1024),
    )(x, w1_flat, w2_flat)


def _reference(x, w1, w2):
    """Pure-JAX reference matching the PyTorch forward pass."""
    avg = jnp.mean(x, axis=1, keepdims=True)
    mx = jnp.max(x, axis=1, keepdims=True)
    h = jnp.concatenate([avg, mx], axis=1)
    dn = jax.lax.conv_dimension_numbers(h.shape, w1.shape, ("NCHW", "OIHW", "NCHW"))
    h = jax.lax.conv_general_dilated(
        h, w1, (1, 1), [(PAD, PAD), (PAD, PAD)], dimension_numbers=dn,
        precision=jax.lax.Precision.HIGHEST)
    dn2 = jax.lax.conv_dimension_numbers(h.shape, w2.shape, ("NCHW", "OIHW", "NCHW"))
    h = jax.lax.conv_general_dilated(
        h, w2, (1, 1), [(PAD, PAD), (PAD, PAD)], dimension_numbers=dn2,
        precision=jax.lax.Precision.HIGHEST)
    return jax.nn.sigmoid(h)


if __name__ == "__main__":
    key = jax.random.PRNGKey(0)
    kx_, k1, k2 = jax.random.split(key, 3)

    N, C, H, W = 2, 4, 16, 16
    x = jax.random.normal(kx_, (N, C, H, W), dtype=jnp.float32)
    # Deterministic synthetic weights (shapes from the module __init__).
    w1 = jax.random.normal(k1, (MID_C, 2, KS, KS), dtype=jnp.float32) * (
        1.0 / (2 * KS * KS)) ** 0.5
    w2 = jax.random.normal(k2, (1, MID_C, KS, KS), dtype=jnp.float32) * (
        1.0 / (MID_C * KS * KS)) ** 0.5

    out = spatial_attention(x, w1, w2)
    out = jax.block_until_ready(out)

    ref = _reference(x, w1, w2)
    assert out.shape == (N, 1, H, W), out.shape
    max_err = float(jnp.max(jnp.abs(out - ref)))
    assert jnp.allclose(out, ref, atol=1e-4, rtol=1e-4), f"max abs err {max_err}"
    print("KERNEL_OK")
</pallas_src>

<mosaic_0001>
module attributes {stable_mosaic.version = 11 : i64} {
  func.func @kernel(%arg0: i32, %arg1: memref<2x4x16x16xf32, #tpu.memory_space<vmem>>, %arg2: memref<1568xf32, #tpu.memory_space<smem>>, %arg3: memref<784xf32, #tpu.memory_space<smem>>, %arg4: memref<2x1x16x16xf32, #tpu.memory_space<vmem>>, %arg5: memref<2x22x44xf32, #tpu.memory_space<vmem>>, %arg6: memref<16x22x44xf32, #tpu.memory_space<vmem>>, %arg7: memref<4x16x38xf32, #tpu.memory_space<vmem>>, %arg8: memref<16x38xf32, #tpu.memory_space<vmem>>) attributes {dimension_semantics = [#tpu.dimension_semantics<parallel>], iteration_bounds = array<i64: 1>, scalar_prefetch = 0 : i64, scratch_operands = 4 : i64, tpu.core_type = #tpu.core_type<tc>, window_params = [{transform_indices = @transform_0, window_bounds = array<i64: 2, 4, 16, 16>}, {transform_indices = @transform_1, window_bounds = array<i64: 1568>}, {transform_indices = @transform_2, window_bounds = array<i64: 784>}, {transform_indices = @transform_3, window_bounds = array<i64: 2, 1, 16, 16>}]} {
    %cst = arith.constant 0.000000e+00 : f32
    %0 = vector.broadcast %cst : f32 to vector<2x22x44xf32>
    %c0 = arith.constant 0 : index
    %c0_0 = arith.constant 0 : index
    %c0_1 = arith.constant 0 : index
    %1 = vector.load %arg5[%c0, %c0_0, %c0_1] : memref<2x22x44xf32, #tpu.memory_space<vmem>>, vector<2x22x44xf32>
    tpu.vector_store %arg5[%c0, %c0_0, %c0_1], %0 {strides = array<i32>} : memref<2x22x44xf32, #tpu.memory_space<vmem>>, vector<2x22x44xf32>,
    %cst_2 = arith.constant 0.000000e+00 : f32
    %2 = vector.broadcast %cst_2 : f32 to vector<16x3x44xf32>
    %c0_3 = arith.constant 0 : index
    %c0_4 = arith.constant 0 : index
    %c0_5 = arith.constant 0 : index
    %3 = vector.load %arg6[%c0_3, %c0_4, %c0_5] : memref<16x22x44xf32, #tpu.memory_space<vmem>>, vector<16x3x44xf32>
    tpu.vector_store %arg6[%c0_3, %c0_4, %c0_5], %2 {strides = array<i32>} : memref<16x22x44xf32, #tpu.memory_space<vmem>>, vector<16x3x44xf32>,
    %cst_6 = arith.constant 0.000000e+00 : f32
    %4 = vector.broadcast %cst_6 : f32 to vector<16x3x44xf32>
    %c0_7 = arith.constant 0 : index
    %c19 = arith.constant 19 : index
    %c0_8 = arith.constant 0 : index
    %5 = vector.load %arg6[%c0_7, %c19, %c0_8] : memref<16x22x44xf32, #tpu.memory_space<vmem>>, vector<16x3x44xf32>
    tpu.vector_store %arg6[%c0_7, %c19, %c0_8], %4 {strides = array<i32>} : memref<16x22x44xf32, #tpu.memory_space<vmem>>, vector<16x3x44xf32>,
    %cst_9 = arith.constant 0.000000e+00 : f32
    %6 = vector.broadcast %cst_9 : f32 to vector<16x22x3xf32>
    %c0_10 = arith.constant 0 : index
    %c0_11 = arith.constant 0 : index
    %c0_12 = arith.constant 0 : index
    %7 = vector.load %arg6[%c0_10, %c0_11, %c0_12] : memref<16x22x44xf32, #tpu.memory_space<vmem>>, vector<16x22x3xf32>
    tpu.vector_store %arg6[%c0_10, %c0_11, %c0_12], %6 {strides = array<i32>} : memref<16x22x44xf32, #tpu.memory_space<vmem>>, vector<16x22x3xf32>,
    %cst_13 = arith.constant 0.000000e+00 : f32
    %8 = vector.broadcast %cst_13 : f32 to vector<16x22x3xf32>
    %c0_14 = arith.constant 0 : index
    %c0_15 = arith.constant 0 : index
    %c41 = arith.constant 41 : index
    %9 = vector.load %arg6[%c0_14, %c0_15, %c41] : memref<16x22x44xf32, #tpu.memory_space<vmem>>, vector<16x22x3xf32>
    tpu.vector_store %arg6[%c0_14, %c0_15, %c41], %8 {strides = array<i32>} : memref<16x22x44xf32, #tpu.memory_space<vmem>>, vector<16x22x3xf32>,
    %c0_16 = arith.constant 0 : index
    %c0_17 = arith.constant 0 : index
    %c0_18 = arith.constant 0 : index
    %c0_19 = arith.constant 0 : index
    %10 = vector.load %arg1[%c0_16, %c0_17, %c0_18, %c0_19] : memref<2x4x16x16xf32, #tpu.memory_space<vmem>>, vector<1x4x16x16xf32>
    %11 = vector.shape_cast %10 : vector<1x4x16x16xf32> to vector<4x16x16xf32>
    %cst_20 = arith.constant dense<0.000000e+00> : vector<16x16xf32>
    %12 = vector.multi_reduction <add>, %11, %cst_20 [0] : vector<4x16x16xf32> to vector<16x16xf32>
    %cst_21 = arith.constant 4.000000e+00 : f32
    %13 = vector.broadcast %cst_21 : f32 to vector<16x16xf32>
    %14 = arith.divf %12, %13 : vector<16x16xf32>
    %c0_22 = arith.constant 0 : index
    %c3 = arith.constant 3 : index
    %c3_23 = arith.constant 3 : index
    %15 = vector.load %arg5[%c0_22, %c3, %c3_23] : memref<2x22x44xf32, #tpu.memory_space<vmem>>, vector<1x16x16xf32>
    %16 = vector.shape_cast %15 : vector<1x16x16xf32> to vector<16x16xf32>
    %17 = vector.shape_cast %14 : vector<16x16xf32> to vector<1x16x16xf32>
    tpu.vector_store %arg5[%c0_22, %c3, %c3_23], %17 {strides = array<i32>} : memref<2x22x44xf32, #tpu.memory_space<vmem>>, vector<1x16x16xf32>,
    %cst_24 = arith.constant dense<0xFF800000> : vector<16x16xf32>
    %18 = vector.multi_reduction <maximumf>, %11, %cst_24 [0] : vector<4x16x16xf32> to vector<16x16xf32>
    %c1 = arith.constant 1 : index
    %c3_25 = arith.constant 3 : index
    %c3_26 = arith.constant 3 : index
    %19 = vector.load %arg5[%c1, %c3_25, %c3_26] : memref<2x22x44xf32, #tpu.memory_space<vmem>>, vector<1x16x16xf32>
    %20 = vector.shape_cast %19 : vector<1x16x16xf32> to vector<16x16xf32>
    %21 = vector.shape_cast %18 : vector<16x16xf32> to vector<1x16x16xf32>
    tpu.vector_store %arg5[%c1, %c3_25, %c3_26], %21 {strides = array<i32>} : memref<2x22x44xf32, #tpu.memory_space<vmem>>, vector<1x16x16xf32>,
    %c1_27 = arith.constant 1 : index
    %c0_28 = arith.constant 0 : index
    %c0_29 = arith.constant 0 : index
    %c0_30 = arith.constant 0 : index
    %22 = vector.load %arg1[%c1_27, %c0_28, %c0_29, %c0_30] : memref<2x4x16x16xf32, #tpu.memory_space<vmem>>, vector<1x4x16x16xf32>
    %23 = vector.shape_cast %22 : vector<1x4x16x16xf32> to vector<4x16x16xf32>
    %cst_31 = arith.constant dense<0.000000e+00> : vector<16x16xf32>
    %24 = vector.multi_reduction <add>, %23, %cst_31 [0] : vector<4x16x16xf32> to vector<16x16xf32>
    %cst_32 = arith.constant 4.000000e+00 : f32
    %25 = vector.broadcast %cst_32 : f32 to vector<16x16xf32>
    %26 = arith.divf %24, %25 : vector<16x16xf32>
    %c0_33 = arith.constant 0 : index
    %c3_34 = arith.constant 3 : index
    %c25 = arith.constant 25 : index
    %27 = vector.load %arg5[%c0_33, %c3_34, %c25] : memref<2x22x44xf32, #tpu.memory_space<vmem>>, vector<1x16x16xf32>
    %28 = vector.shape_cast %27 : vector<1x16x16xf32> to vector<16x16xf32>
    %29 = vector.shape_cast %26 : vector<16x16xf32> to vector<1x16x16xf32>
    tpu.vector_store %arg5[%c0_33, %c3_34, %c25], %29 {strides = array<i32>} : memref<2x22x44xf32, #tpu.memory_space<vmem>>, vector<1x16x16xf32>,
    %cst_35 = arith.constant dense<0xFF800000> : vector<16x16xf32>
    %30 = vector.multi_reduction <maximumf>, %23, %cst_35 [0] : vector<4x16x16xf32> to vector<16x16xf32>
    %c1_36 = arith.constant 1 : index
    %c3_37 = arith.constant 3 : index
    %c25_38 = arith.constant 25 : index
    %31 = vector.load %arg5[%c1_36, %c3_37, %c25_38] : memref<2x22x44xf32, #tpu.memory_space<vmem>>, vector<1x16x16xf32>
    %32 = vector.shape_cast %31 : vector<1x16x16xf32> to vector<16x16xf32>
    %33 = vector.shape_cast %30 : vector<16x16xf32> to vector<1x16x16xf32>
    tpu.vector_store %arg5[%c1_36, %c3_37, %c25_38], %33 {strides = array<i32>} : memref<2x22x44xf32, #tpu.memory_space<vmem>>, vector<1x16x16xf32>,
    %34 = tpu.iota {dimensions = array<i32: 1>} : vector<16x38xi32>
    %false = arith.constant false
    %35 = vector.broadcast %false : i1 to vector<16x38xi1>
    %c0_i32 = arith.constant 0 : i32
    %36 = vector.broadcast %c0_i32 : i32 to vector<16x38xi32>
    %37 = arith.cmpi sge, %34, %36 : vector<16x38xi32>
    %c16_i32 = arith.constant 16 : i32
    %38 = vector.broadcast %c16_i32 : i32 to vector<16x38xi32>
    %39 = arith.cmpi slt, %34, %38 : vector<16x38xi32>
    %40 = arith.andi %37, %39 : vector<16x38xi1>
    %41 = arith.ori %35, %40 : vector<16x38xi1>
    %c22_i32 = arith.constant 22 : i32
    %42 = vector.broadcast %c22_i32 : i32 to vector<16x38xi32>
    %43 = arith.cmpi sge, %34, %42 : vector<16x38xi32>
    %c38_i32 = arith.constant 38 : i32
    %44 = vector.broadcast %c38_i32 : i32 to vector<16x38xi32>
    %45 = arith.cmpi slt, %34, %44 : vector<16x38xi32>
    %46 = arith.andi %43, %45 : vector<16x38xi1>
    %47 = arith.ori %41, %46 : vector<16x38xi1>
    %cst_39 = arith.constant 0.000000e+00 : f32
    %48 = vector.broadcast %cst_39 : f32 to vector<4x16x38xf32>
    %c0_40 = arith.constant 0 : index
    %c0_41 = arith.constant 0 : index
    %c0_42 = arith.constant 0 : index
    %49 = vector.load %arg7[%c0_40, %c0_41, %c0_42] : memref<4x16x38xf32, #tpu.memory_space<vmem>>, vector<4x16x38xf32>
    tpu.vector_store %arg7[%c0_40, %c0_41, %c0_42], %48 {strides = array<i32>} : memref<4x16x38xf32, #tpu.memory_space<vmem>>, vector<4x16x38xf32>,
    %c0_i32_43 = arith.constant 0 : i32
    %c7_i32 = arith.constant 7 : i32
    %50 = arith.addi %c0_i32_43, %c7_i32 : i32
    %c1_i32 = arith.constant 1 : i32
    scf.for %arg9 = %c0_i32_43 to %50 step %c1_i32  : i32 {
      %c1_i32_186 = arith.constant 1 : i32
      %189 = arith.muli %arg9, %c1_i32_186 : i32
      %c0_i32_187 = arith.constant 0 : i32
      %190 = arith.addi %c0_i32_187, %189 : i32
      %c0_188 = arith.constant 0 : index
      %c0_189 = arith.constant 0 : index
      %c0_190 = arith.constant 0 : index
      %191 = vector.load %arg7[%c0_188, %c0_189, %c0_190] : memref<4x16x38xf32, #tpu.memory_space<vmem>>, vector<1x16x38xf32>
      %192 = vector.shape_cast %191 : vector<1x16x38xf32> to vector<16x38xf32>
      %c1_191 = arith.constant 1 : index
      %c0_192 = arith.constant 0 : index
      %c0_193 = arith.constant 0 : index
      %193 = vector.load %arg7[%c1_191, %c0_192, %c0_193] : memref<4x16x38xf32, #tpu.memory_space<vmem>>, vector<1x16x38xf32>
      %194 = vector.shape_cast %193 : vector<1x16x38xf32> to vector<16x38xf32>
      %c2_194 = arith.constant 2 : index
      %c0_195 = arith.constant 0 : index
      %c0_196 = arith.constant 0 : index
      %195 = vector.load %arg7[%c2_194, %c0_195, %c0_196] : memref<4x16x38xf32, #tpu.memory_space<vmem>>, vector<1x16x38xf32>
      %196 = vector.shape_cast %195 : vector<1x16x38xf32> to vector<16x38xf32>
      %c3_197 = arith.constant 3 : index
      %c0_198 = arith.constant 0 : index
      %c0_199 = arith.constant 0 : index
      %197 = vector.load %arg7[%c3_197, %c0_198, %c0_199] : memref<4x16x38xf32, #tpu.memory_space<vmem>>, vector<1x16x38xf32>
      %198 = vector.shape_cast %197 : vector<1x16x38xf32> to vector<16x38xf32>
      %c7_i32_200 = arith.constant 7 : i32
      %199 = arith.muli %190, %c7_i32_200 : i32
      %c0_i32_201 = arith.constant 0 : i32
      %200 = arith.addi %199, %c0_i32_201 : i32
      %c0_202 = arith.constant 0 : index
      %201 = arith.index_cast %190 : i32 to index
      %c0_203 = arith.constant 0 : index
      %202 = vector.load %arg5[%c0_202, %201, %c0_203] : memref<2x22x44xf32, #tpu.memory_space<vmem>>, vector<1x16x38xf32>
      %203 = vector.shape_cast %202 : vector<1x16x38xf32> to vector<16x38xf32>
      %c1_204 = arith.constant 1 : index
      %204 = arith.index_cast %190 : i32 to index
      %c0_205 = arith.constant 0 : index
      %205 = vector.load %arg5[%c1_204, %204, %c0_205] : memref<2x22x44xf32, #tpu.memory_space<vmem>>, vector<1x16x38xf32>
      %206 = vector.shape_cast %205 : vector<1x16x38xf32> to vector<16x38xf32>
      %c32_i32 = arith.constant 32 : i32
      %207 = arith.muli %200, %c32_i32 : i32
      %c0_i32_206 = arith.constant 0 : i32
      %208 = arith.addi %207, %c0_i32_206 : i32
      %209 = arith.index_cast %208 : i32 to index
      %210 = memref.load %arg2[%209] : memref<1568xf32, #tpu.memory_space<smem>>
      %211 = vector.broadcast %210 : f32 to vector<16x38xf32>
      %212 = arith.mulf %211, %203 : vector<16x38xf32>
      %213 = arith.addf %192, %212 : vector<16x38xf32>
      %c32_i32_207 = arith.constant 32 : i32
      %214 = arith.muli %200, %c32_i32_207 : i32
      %c0_i32_208 = arith.constant 0 : i32
      %215 = arith.addi %214, %c0_i32_208 : i32
      %c1_i32_209 = arith.constant 1 : i32
      %216 = arith.addi %215, %c1_i32_209 : i32
      %217 = arith.index_cast %216 : i32 to index
      %218 = memref.load %arg2[%217] : memref<1568xf32, #tpu.memory_space<smem>>
      %219 = vector.broadcast %218 : f32 to vector<16x38xf32>
      %220 = arith.mulf %219, %206 : vector<16x38xf32>
      %221 = arith.addf %213, %220 : vector<16x38xf32>
      %c32_i32_210 = arith.constant 32 : i32
      %222 = arith.muli %200, %c32_i32_210 : i32
      %c2_i32 = arith.constant 2 : i32
      %223 = arith.addi %222, %c2_i32 : i32
      %224 = arith.index_cast %223 : i32 to index
      %225 = memref.load %arg2[%224] : memref<1568xf32, #tpu.memory_space<smem>>
      %226 = vector.broadcast %225 : f32 to vector<16x38xf32>
      %227 = arith.mulf %226, %203 : vector<16x38xf32>
      %228 = arith.addf %194, %227 : vector<16x38xf32>
      %c32_i32_211 = arith.constant 32 : i32
      %229 = arith.muli %200, %c32_i32_211 : i32
      %c2_i32_212 = arith.constant 2 : i32
      %230 = arith.addi %229, %c2_i32_212 : i32
      %c1_i32_213 = arith.constant 1 : i32
      %231 = arith.addi %230, %c1_i32_213 : i32
      %232 = arith.index_cast %231 : i32 to index
      %233 = memref.load %arg2[%232] : memref<1568xf32, #tpu.memory_space<smem>>
      %234 = vector.broadcast %233 : f32 to vector<16x38xf32>
      %235 = arith.mulf %234, %206 : vector<16x38xf32>
      %236 = arith.addf %228, %235 : vector<16x38xf32>
      %c32_i32_214 = arith.constant 32 : i32
      %237 = arith.muli %200, %c32_i32_214 : i32
      %c4_i32 = arith.constant 4 : i32
      %238 = arith.addi %237, %c4_i32 : i32
      %239 = arith.index_cast %238 : i32 to index
      %240 = memref.load %arg2[%239] : memref<1568xf32, #tpu.memory_space<smem>>
      %241 = vector.broadcast %240 : f32 to vector<16x38xf32>
      %242 = arith.mulf %241, %203 : vector<16x38xf32>
      %243 = arith.addf %196, %242 : vector<16x38xf32>
      %c32_i32_215 = arith.constant 32 : i32
      %244 = arith.muli %200, %c32_i32_215 : i32
      %c4_i32_216 = arith.constant 4 : i32
      %245 = arith.addi %244, %c4_i32_216 : i32
      %c1_i32_217 = arith.constant 1 : i32
      %246 = arith.addi %245, %c1_i32_217 : i32
      %247 = arith.index_cast %246 : i32 to index
      %248 = memref.load %arg2[%247] : memref<1568xf32, #tpu.memory_space<smem>>
      %249 = vector.broadcast %248 : f32 to vector<16x38xf32>
      %250 = arith.mulf %249, %206 : vector<16x38xf32>
      %251 = arith.addf %243, %250 : vector<16x38xf32>
      %c32_i32_218 = arith.constant 32 : i32
      %252 = arith.muli %200, %c32_i32_218 : i32
      %c6_i32 = arith.constant 6 : i32
      %253 = arith.addi %252, %c6_i32 : i32
      %254 = arith.index_cast %253 : i32 to index
      %255 = memref.load %arg2[%254] : memref<1568xf32, #tpu.memory_space<smem>>
      %256 = vector.broadcast %255 : f32 to vector<16x38xf32>
      %257 = arith.mulf %256, %203 : vector<16x38xf32>
      %258 = arith.addf %198, %257 : vector<16x38xf32>
      %c32_i32_219 = arith.constant 32 : i32
      %259 = arith.muli %200, %c32_i32_219 : i32
      %c6_i32_220 = arith.constant 6 : i32
      %260 = arith.addi %259, %c6_i32_220 : i32
      %c1_i32_221 = arith.constant 1 : i32
      %261 = arith.addi %260, %c1_i32_221 : i32
      %262 = arith.index_cast %261 : i32 to index
      %263 = memref.load %arg2[%262] : memref<1568xf32, #tpu.memory_space<smem>>
      %264 = vector.broadcast %263 : f32 to vector<16x38xf32>
      %265 = arith.mulf %264, %206 : vector<16x38xf32>
      %266 = arith.addf %258, %265 : vector<16x38xf32>
      %c7_i32_222 = arith.constant 7 : i32
      %267 = arith.muli %190, %c7_i32_222 : i32
      %c1_i32_223 = arith.constant 1 : i32
      %268 = arith.addi %267, %c1_i32_223 : i32
      %c0_224 = arith.constant 0 : index
      %269 = arith.index_cast %190 : i32 to index
      %c1_225 = arith.constant 1 : index
      %270 = vector.load %arg5[%c0_224, %269, %c1_225] : memref<2x22x44xf32, #tpu.memory_space<vmem>>, vector<1x16x38xf32>
      %271 = vector.shape_cast %270 : vector<1x16x38xf32> to vector<16x38xf32>
      %c1_226 = arith.constant 1 : index
      %272 = arith.index_cast %190 : i32 to index
      %c1_227 = arith.constant 1 : index
      %273 = vector.load %arg5[%c1_226, %272, %c1_227] : memref<2x22x44xf32, #tpu.memory_space<vmem>>, vector<1x16x38xf32>
      %274 = vector.shape_cast %273 : vector<1x16x38xf32> to vector<16x38xf32>
      %c32_i32_228 = arith.constant 32 : i32
      %275 = arith.muli %268, %c32_i32_228 : i32
      %c0_i32_229 = arith.constant 0 : i32
      %276 = arith.addi %275, %c0_i32_229 : i32
      %277 = arith.index_cast %276 : i32 to index
      %278 = memref.load %arg2[%277] : memref<1568xf32, #tpu.memory_space<smem>>
      %279 = vector.broadcast %278 : f32 to vector<16x38xf32>
      %280 = arith.mulf %279, %271 : vector<16x38xf32>
      %281 = arith.addf %221, %280 : vector<16x38xf32>
      %c32_i32_230 = arith.constant 32 : i32
      %282 = arith.muli %268, %c32_i32_230 : i32
      %c0_i32_231 = arith.constant 0 : i32
      %283 = arith.addi %282, %c0_i32_231 : i32
      %c1_i32_232 = arith.constant 1 : i32
      %284 = arith.addi %283, %c1_i32_232 : i32
      %285 = arith.index_cast %284 : i32 to index
      %286 = memref.load %arg2[%285] : memref<1568xf32, #tpu.memory_space<smem>>
      %287 = vector.broadcast %286 : f32 to vector<16x38xf32>
      %288 = arith.mulf %287, %274 : vector<16x38xf32>
      %289 = arith.addf %281, %288 : vector<16x38xf32>
      %c32_i32_233 = arith.constant 32 : i32
      %290 = arith.muli %268, %c32_i32_233 : i32
      %c2_i32_234 = arith.constant 2 : i32
      %291 = arith.addi %290, %c2_i32_234 : i32
      %292 = arith.index_cast %291 : i32 to index
      %293 = memref.load %arg2[%292] : memref<1568xf32, #tpu.memory_space<smem>>
      %294 = vector.broadcast %293 : f32 to vector<16x38xf32>
      %295 = arith.mulf %294, %271 : vector<16x38xf32>
      %296 = arith.addf %236, %295 : vector<16x38xf32>
      %c32_i32_235 = arith.constant 32 : i32
      %297 = arith.muli %268, %c32_i32_235 : i32
      %c2_i32_236 = arith.constant 2 : i32
      %298 = arith.addi %297, %c2_i32_236 : i32
      %c1_i32_237 = arith.constant 1 : i32
      %299 = arith.addi %298, %c1_i32_237 : i32
      %300 = arith.index_cast %299 : i32 to index
      %301 = memref.load %arg2[%300] : memref<1568xf32, #tpu.memory_space<smem>>
      %302 = vector.broadcast %301 : f32 to vector<16x38xf32>
      %303 = arith.mulf %302, %274 : vector<16x38xf32>
      %304 = arith.addf %296, %303 : vector<16x38xf32>
      %c32_i32_238 = arith.constant 32 : i32
      %305 = arith.muli %268, %c32_i32_238 : i32
      %c4_i32_239 = arith.constant 4 : i32
      %306 = arith.addi %305, %c4_i32_239 : i32
      %307 = arith.index_cast %306 : i32 to index
      %308 = memref.load %arg2[%307] : memref<1568xf32, #tpu.memory_space<smem>>
      %309 = vector.broadcast %308 : f32 to vector<16x38xf32>
      %310 = arith.mulf %309, %271 : vector<16x38xf32>
      %311 = arith.addf %251, %310 : vector<16x38xf32>
      %c32_i32_240 = arith.constant 32 : i32
      %312 = arith.muli %268, %c32_i32_240 : i32
      %c4_i32_241 = arith.constant 4 : i32
      %313 = arith.addi %312, %c4_i32_241 : i32
      %c1_i32_242 = arith.constant 1 : i32
      %314 = arith.addi %313, %c1_i32_242 : i32
      %315 = arith.index_cast %314 : i32 to index
      %316 = memref.load %arg2[%315] : memref<1568xf32, #tpu.memory_space<smem>>
      %317 = vector.broadcast %316 : f32 to vector<16x38xf32>
      %318 = arith.mulf %317, %274 : vector<16x38xf32>
      %319 = arith.addf %311, %318 : vector<16x38xf32>
      %c32_i32_243 = arith.constant 32 : i32
      %320 = arith.muli %268, %c32_i32_243 : i32
      %c6_i32_244 = arith.constant 6 : i32
      %321 = arith.addi %320, %c6_i32_244 : i32
      %322 = arith.index_cast %321 : i32 to index
      %323 = memref.load %arg2[%322] : memref<1568xf32, #tpu.memory_space<smem>>
      %324 = vector.broadcast %323 : f32 to vector<16x38xf32>
      %325 = arith.mulf %324, %271 : vector<16x38xf32>
      %326 = arith.addf %266, %325 : vector<16x38xf32>
      %c32_i32_245 = arith.constant 32 : i32
      %327 = arith.muli %268, %c32_i32_245 : i32
      %c6_i32_246 = arith.constant 6 : i32
      %328 = arith.addi %327, %c6_i32_246 : i32
      %c1_i32_247 = arith.constant 1 : i32
      %329 = arith.addi %328, %c1_i32_247 : i32
      %330 = arith.index_cast %329 : i32 to index
      %331 = memref.load %arg2[%330] : memref<1568xf32, #tpu.memory_space<smem>>
      %332 = vector.broadcast %331 : f32 to vector<16x38xf32>
      %333 = arith.mulf %332, %274 : vector<16x38xf32>
      %334 = arith.addf %326, %333 : vector<16x38xf32>
      %c7_i32_248 = arith.constant 7 : i32
      %335 = arith.muli %190, %c7_i32_248 : i32
      %c2_i32_249 = arith.constant 2 : i32
      %336 = arith.addi %335, %c2_i32_249 : i32
      %c0_250 = arith.constant 0 : index
      %337 = arith.index_cast %190 : i32 to index
      %c2_251 = arith.constant 2 : index
      %338 = vector.load %arg5[%c0_250, %337, %c2_251] : memref<2x22x44xf32, #tpu.memory_space<vmem>>, vector<1x16x38xf32>
      %339 = vector.shape_cast %338 : vector<1x16x38xf32> to vector<16x38xf32>
      %c1_252 = arith.constant 1 : index
      %340 = arith.index_cast %190 : i32 to index
      %c2_253 = arith.constant 2 : index
      %341 = vector.load %arg5[%c1_252, %340, %c2_253] : memref<2x22x44xf32, #tpu.memory_space<vmem>>, vector<1x16x38xf32>
      %342 = vector.shape_cast %341 : vector<1x16x38xf32> to vector<16x38xf32>
      %c32_i32_254 = arith.constant 32 : i32
      %343 = arith.muli %336, %c32_i32_254 : i32
      %c0_i32_255 = arith.constant 0 : i32
      %344 = arith.addi %343, %c0_i32_255 : i32
      %345 = arith.index_cast %344 : i32 to index
      %346 = memref.load %arg2[%345] : memref<1568xf32, #tpu.memory_space<smem>>
      %347 = vector.broadcast %346 : f32 to vector<16x38xf32>
      %348 = arith.mulf %347, %339 : vector<16x38xf32>
      %349 = arith.addf %289, %348 : vector<16x38xf32>
      %c32_i32_256 = arith.constant 32 : i32
      %350 = arith.muli %336, %c32_i32_256 : i32
      %c0_i32_257 = arith.constant 0 : i32
      %351 = arith.addi %350, %c0_i32_257 : i32
      %c1_i32_258 = arith.constant 1 : i32
      %352 = arith.addi %351, %c1_i32_258 : i32
      %353 = arith.index_cast %352 : i32 to index
      %354 = memref.load %arg2[%353] : memref<1568xf32, #tpu.memory_space<smem>>
      %355 = vector.broadcast %354 : f32 to vector<16x38xf32>
      %356 = arith.mulf %355, %342 : vector<16x38xf32>
      %357 = arith.addf %349, %356 : vector<16x38xf32>
      %c32_i32_259 = arith.constant 32 : i32
      %358 = arith.muli %336, %c32_i32_259 : i32
      %c2_i32_260 = arith.constant 2 : i32
      %359 = arith.addi %358, %c2_i32_260 : i32
      %360 = arith.index_cast %359 : i32 to index
      %361 = memref.load %arg2[%360] : memref<1568xf32, #tpu.memory_space<smem>>
      %362 = vector.broadcast %361 : f32 to vector<16x38xf32>
      %363 = arith.mulf %362, %339 : vector<16x38xf32>
      %364 = arith.addf %304, %363 : vector<16x38xf32>
      %c32_i32_261 = arith.constant 32 : i32
      %365 = arith.muli %336, %c32_i32_261 : i32
      %c2_i32_262 = arith.constant 2 : i32
      %366 = arith.addi %365, %c2_i32_262 : i32
      %c1_i32_263 = arith.constant 1 : i32
      %367 = arith.addi %366, %c1_i32_263 : i32
      %368 = arith.index_cast %367 : i32 to index
      %369 = memref.load %arg2[%368] : memref<1568xf32, #tpu.memory_space<smem>>
      %370 = vector.broadcast %369 : f32 to vector<16x38xf32>
      %371 = arith.mulf %370, %342 : vector<16x38xf32>
      %372 = arith.addf %364, %371 : vector<16x38xf32>
      %c32_i32_264 = arith.constant 32 : i32
      %373 = arith.muli %336, %c32_i32_264 : i32
      %c4_i32_265 = arith.constant 4 : i32
      %374 = arith.addi %373, %c4_i32_265 : i32
      %375 = arith.index_cast %374 : i32 to index
      %376 = memref.load %arg2[%375] : memref<1568xf32, #tpu.memory_space<smem>>
      %377 = vector.broadcast %376 : f32 to vector<16x38xf32>
      %378 = arith.mulf %377, %339 : vector<16x38xf32>
      %379 = arith.addf %319, %378 : vector<16x38xf32>
      %c32_i32_266 = arith.constant 32 : i32
      %380 = arith.muli %336, %c32_i32_266 : i32
      %c4_i32_267 = arith.constant 4 : i32
      %381 = arith.addi %380, %c4_i32_267 : i32
      %c1_i32_268 = arith.constant 1 : i32
      %382 = arith.addi %381, %c1_i32_268 : i32
      %383 = arith.index_cast %382 : i32 to index
      %384 = memref.load %arg2[%383] : memref<1568xf32, #tpu.memory_space<smem>>
      %385 = vector.broadcast %384 : f32 to vector<16x38xf32>
      %386 = arith.mulf %385, %342 : vector<16x38xf32>
      %387 = arith.addf %379, %386 : vector<16x38xf32>
      %c32_i32_269 = arith.constant 32 : i32
      %388 = arith.muli %336, %c32_i32_269 : i32
      %c6_i32_270 = arith.constant 6 : i32
      %389 = arith.addi %388, %c6_i32_270 : i32
      %390 = arith.index_cast %389 : i32 to index
      %391 = memref.load %arg2[%390] : memref<1568xf32, #tpu.memory_space<smem>>
      %392 = vector.broadcast %391 : f32 to vector<16x38xf32>
      %393 = arith.mulf %392, %339 : vector<16x38xf32>
      %394 = arith.addf %334, %393 : vector<16x38xf32>
      %c32_i32_271 = arith.constant 32 : i32
      %395 = arith.muli %336, %c32_i32_271 : i32
      %c6_i32_272 = arith.constant 6 : i32
      %396 = arith.addi %395, %c6_i32_272 : i32
      %c1_i32_273 = arith.constant 1 : i32
      %397 = arith.addi %396, %c1_i32_273 : i32
      %398 = arith.index_cast %397 : i32 to index
      %399 = memref.load %arg2[%398] : memref<1568xf32, #tpu.memory_space<smem>>
      %400 = vector.broadcast %399 : f32 to vector<16x38xf32>
      %401 = arith.mulf %400, %342 : vector<16x38xf32>
      %402 = arith.addf %394, %401 : vector<16x38xf32>
      %c7_i32_274 = arith.constant 7 : i32
      %403 = arith.muli %190, %c7_i32_274 : i32
      %c3_i32 = arith.constant 3 : i32
      %404 = arith.addi %403, %c3_i32 : i32
      %c0_275 = arith.constant 0 : index
      %405 = arith.index_cast %190 : i32 to index
      %c3_276 = arith.constant 3 : index
      %406 = vector.load %arg5[%c0_275, %405, %c3_276] : memref<2x22x44xf32, #tpu.memory_space<vmem>>, vector<1x16x38xf32>
      %407 = vector.shape_cast %406 : vector<1x16x38xf32> to vector<16x38xf32>
      %c1_277 = arith.constant 1 : index
      %408 = arith.index_cast %190 : i32 to index
      %c3_278 = arith.constant 3 : index
      %409 = vector.load %arg5[%c1_277, %408, %c3_278] : memref<2x22x44xf32, #tpu.memory_space<vmem>>, vector<1x16x38xf32>
      %410 = vector.shape_cast %409 : vector<1x16x38xf32> to vector<16x38xf32>
      %c32_i32_279 = arith.constant 32 : i32
      %411 = arith.muli %404, %c32_i32_279 : i32
      %c0_i32_280 = arith.constant 0 : i32
      %412 = arith.addi %411, %c0_i32_280 : i32
      %413 = arith.index_cast %412 : i32 to index
      %414 = memref.load %arg2[%413] : memref<1568xf32, #tpu.memory_space<smem>>
      %415 = vector.broadcast %414 : f32 to vector<16x38xf32>
      %416 = arith.mulf %415, %407 : vector<16x38xf32>
      %417 = arith.addf %357, %416 : vector<16x38xf32>
      %c32_i32_281 = arith.constant 32 : i32
      %418 = arith.muli %404, %c32_i32_281 : i32
      %c0_i32_282 = arith.constant 0 : i32
      %419 = arith.addi %418, %c0_i32_282 : i32
      %c1_i32_283 = arith.constant 1 : i32
      %420 = arith.addi %419, %c1_i32_283 : i32
      %421 = arith.index_cast %420 : i32 to index
      %422 = memref.load %arg2[%421] : memref<1568xf32, #tpu.memory_space<smem>>
      %423 = vector.broadcast %422 : f32 to vector<16x38xf32>
      %424 = arith.mulf %423, %410 : vector<16x38xf32>
      %425 = arith.addf %417, %424 : vector<16x38xf32>
      %c32_i32_284 = arith.constant 32 : i32
      %426 = arith.muli %404, %c32_i32_284 : i32
      %c2_i32_285 = arith.constant 2 : i32
      %427 = arith.addi %426, %c2_i32_285 : i32
      %428 = arith.index_cast %427 : i32 to index
      %429 = memref.load %arg2[%428] : memref<1568xf32, #tpu.memory_space<smem>>
      %430 = vector.broadcast %429 : f32 to vector<16x38xf32>
      %431 = arith.mulf %430, %407 : vector<16x38xf32>
      %432 = arith.addf %372, %431 : vector<16x38xf32>
      %c32_i32_286 = arith.constant 32 : i32
      %433 = arith.muli %404, %c32_i32_286 : i32
      %c2_i32_287 = arith.constant 2 : i32
      %434 = arith.addi %433, %c2_i32_287 : i32
      %c1_i32_288 = arith.constant 1 : i32
      %435 = arith.addi %434, %c1_i32_288 : i32
      %436 = arith.index_cast %435 : i32 to index
      %437 = memref.load %arg2[%436] : memref<1568xf32, #tpu.memory_space<smem>>
      %438 = vector.broadcast %437 : f32 to vector<16x38xf32>
      %439 = arith.mulf %438, %410 : vector<16x38xf32>
      %440 = arith.addf %432, %439 : vector<16x38xf32>
      %c32_i32_289 = arith.constant 32 : i32
      %441 = arith.muli %404, %c32_i32_289 : i32
      %c4_i32_290 = arith.constant 4 : i32
      %442 = arith.addi %441, %c4_i32_290 : i32
      %443 = arith.index_cast %442 : i32 to index
      %444 = memref.load %arg2[%443] : memref<1568xf32, #tpu.memory_space<smem>>
      %445 = vector.broadcast %444 : f32 to vector<16x38xf32>
      %446 = arith.mulf %445, %407 : vector<16x38xf32>
      %447 = arith.addf %387, %446 : vector<16x38xf32>
      %c32_i32_291 = arith.constant 32 : i32
      %448 = arith.muli %404, %c32_i32_291 : i32
      %c4_i32_292 = arith.constant 4 : i32
      %449 = arith.addi %448, %c4_i32_292 : i32
      %c1_i32_293 = arith.constant 1 : i32
      %450 = arith.addi %449, %c1_i32_293 : i32
      %451 = arith.index_cast %450 : i32 to index
      %452 = memref.load %arg2[%451] : memref<1568xf32, #tpu.memory_space<smem>>
      %453 = vector.broadcast %452 : f32 to vector<16x38xf32>
      %454 = arith.mulf %453, %410 : vector<16x38xf32>
      %455 = arith.addf %447, %454 : vector<16x38xf32>
      %c32_i32_294 = arith.constant 32 : i32
      %456 = arith.muli %404, %c32_i32_294 : i32
      %c6_i32_295 = arith.constant 6 : i32
      %457 = arith.addi %456, %c6_i32_295 : i32
      %458 = arith.index_cast %457 : i32 to index
      %459 = memref.load %arg2[%458] : memref<1568xf32, #tpu.memory_space<smem>>
      %460 = vector.broadcast %459 : f32 to vector<16x38xf32>
      %461 = arith.mulf %460, %407 : vector<16x38xf32>
      %462 = arith.addf %402, %461 : vector<16x38xf32>
      %c32_i32_296 = arith.constant 32 : i32
      %463 = arith.muli %404, %c32_i32_296 : i32
      %c6_i32_297 = arith.constant 6 : i32
      %464 = arith.addi %463, %c6_i32_297 : i32
      %c1_i32_298 = arith.constant 1 : i32
      %465 = arith.addi %464, %c1_i32_298 : i32
      %466 = arith.index_cast %465 : i32 to index
      %467 = memref.load %arg2[%466] : memref<1568xf32, #tpu.memory_space<smem>>
      %468 = vector.broadcast %467 : f32 to vector<16x38xf32>
      %469 = arith.mulf %468, %410 : vector<16x38xf32>
      %470 = arith.addf %462, %469 : vector<16x38xf32>
      %c7_i32_299 = arith.constant 7 : i32
      %471 = arith.muli %190, %c7_i32_299 : i32
      %c4_i32_300 = arith.constant 4 : i32
      %472 = arith.addi %471, %c4_i32_300 : i32
      %c0_301 = arith.constant 0 : index
      %473 = arith.index_cast %190 : i32 to index
      %c4_302 = arith.constant 4 : index
      %474 = vector.load %arg5[%c0_301, %473, %c4_302] : memref<2x22x44xf32, #tpu.memory_space<vmem>>, vector<1x16x38xf32>
      %475 = vector.shape_cast %474 : vector<1x16x38xf32> to vector<16x38xf32>
      %c1_303 = arith.constant 1 : index
      %476 = arith.index_cast %190 : i32 to index
      %c4_304 = arith.constant 4 : index
      %477 = vector.load %arg5[%c1_303, %476, %c4_304] : memref<2x22x44xf32, #tpu.memory_space<vmem>>, vector<1x16x38xf32>
      %478 = vector.shape_cast %477 : vector<1x16x38xf32> to vector<16x38xf32>
      %c32_i32_305 = arith.constant 32 : i32
      %479 = arith.muli %472, %c32_i32_305 : i32
      %c0_i32_306 = arith.constant 0 : i32
      %480 = arith.addi %479, %c0_i32_306 : i32
      %481 = arith.index_cast %480 : i32 to index
      %482 = memref.load %arg2[%481] : memref<1568xf32, #tpu.memory_space<smem>>
      %483 = vector.broadcast %482 : f32 to vector<16x38xf32>
      %484 = arith.mulf %483, %475 : vector<16x38xf32>
      %485 = arith.addf %425, %484 : vector<16x38xf32>
      %c32_i32_307 = arith.constant 32 : i32
      %486 = arith.muli %472, %c32_i32_307 : i32
      %c0_i32_308 = arith.constant 0 : i32
      %487 = arith.addi %486, %c0_i32_308 : i32
      %c1_i32_309 = arith.constant 1 : i32
      %488 = arith.addi %487, %c1_i32_309 : i32
      %489 = arith.index_cast %488 : i32 to index
      %490 = memref.load %arg2[%489] : memref<1568xf32, #tpu.memory_space<smem>>
      %491 = vector.broadcast %490 : f32 to vector<16x38xf32>
      %492 = arith.mulf %491, %478 : vector<16x38xf32>
      %493 = arith.addf %485, %492 : vector<16x38xf32>
      %c32_i32_310 = arith.constant 32 : i32
      %494 = arith.muli %472, %c32_i32_310 : i32
      %c2_i32_311 = arith.constant 2 : i32
      %495 = arith.addi %494, %c2_i32_311 : i32
      %496 = arith.index_cast %495 : i32 to index
      %497 = memref.load %arg2[%496] : memref<1568xf32, #tpu.memory_space<smem>>
      %498 = vector.broadcast %497 : f32 to vector<16x38xf32>
      %499 = arith.mulf %498, %475 : vector<16x38xf32>
      %500 = arith.addf %440, %499 : vector<16x38xf32>
      %c32_i32_312 = arith.constant 32 : i32
      %501 = arith.muli %472, %c32_i32_312 : i32
      %c2_i32_313 = arith.constant 2 : i32
      %502 = arith.addi %501, %c2_i32_313 : i32
      %c1_i32_314 = arith.constant 1 : i32
      %503 = arith.addi %502, %c1_i32_314 : i32
      %504 = arith.index_cast %503 : i32 to index
      %505 = memref.load %arg2[%504] : memref<1568xf32, #tpu.memory_space<smem>>
      %506 = vector.broadcast %505 : f32 to vector<16x38xf32>
      %507 = arith.mulf %506, %478 : vector<16x38xf32>
      %508 = arith.addf %500, %507 : vector<16x38xf32>
      %c32_i32_315 = arith.constant 32 : i32
      %509 = arith.muli %472, %c32_i32_315 : i32
      %c4_i32_316 = arith.constant 4 : i32
      %510 = arith.addi %509, %c4_i32_316 : i32
      %511 = arith.index_cast %510 : i32 to index
      %512 = memref.load %arg2[%511] : memref<1568xf32, #tpu.memory_space<smem>>
      %513 = vector.broadcast %512 : f32 to vector<16x38xf32>
      %514 = arith.mulf %513, %475 : vector<16x38xf32>
      %515 = arith.addf %455, %514 : vector<16x38xf32>
      %c32_i32_317 = arith.constant 32 : i32
      %516 = arith.muli %472, %c32_i32_317 : i32
      %c4_i32_318 = arith.constant 4 : i32
      %517 = arith.addi %516, %c4_i32_318 : i32
      %c1_i32_319 = arith.constant 1 : i32
      %518 = arith.addi %517, %c1_i32_319 : i32
      %519 = arith.index_cast %518 : i32 to index
      %520 = memref.load %arg2[%519] : memref<1568xf32, #tpu.memory_space<smem>>
      %521 = vector.broadcast %520 : f32 to vector<16x38xf32>
      %522 = arith.mulf %521, %478 : vector<16x38xf32>
      %523 = arith.addf %515, %522 : vector<16x38xf32>
      %c32_i32_320 = arith.constant 32 : i32
      %524 = arith.muli %472, %c32_i32_320 : i32
      %c6_i32_321 = arith.constant 6 : i32
      %525 = arith.addi %524, %c6_i32_321 : i32
      %526 = arith.index_cast %525 : i32 to index
      %527 = memref.load %arg2[%526] : memref<1568xf32, #tpu.memory_space<smem>>
      %528 = vector.broadcast %527 : f32 to vector<16x38xf32>
      %529 = arith.mulf %528, %475 : vector<16x38xf32>
      %530 = arith.addf %470, %529 : vector<16x38xf32>
      %c32_i32_322 = arith.constant 32 : i32
      %531 = arith.muli %472, %c32_i32_322 : i32
      %c6_i32_323 = arith.constant 6 : i32
      %532 = arith.addi %531, %c6_i32_323 : i32
      %c1_i32_324 = arith.constant 1 : i32
      %533 = arith.addi %532, %c1_i32_324 : i32
      %534 = arith.index_cast %533 : i32 to index
      %535 = memref.load %arg2[%534] : memref<1568xf32, #tpu.memory_space<smem>>
      %536 = vector.broadcast %535 : f32 to vector<16x38xf32>
      %537 = arith.mulf %536, %478 : vector<16x38xf32>
      %538 = arith.addf %530, %537 : vector<16x38xf32>
      %c7_i32_325 = arith.constant 7 : i32
      %539 = arith.muli %190, %c7_i32_325 : i32
      %c5_i32 = arith.constant 5 : i32
      %540 = arith.addi %539, %c5_i32 : i32
      %c0_326 = arith.constant 0 : index
      %541 = arith.index_cast %190 : i32 to index
      %c5_327 = arith.constant 5 : index
      %542 = vector.load %arg5[%c0_326, %541, %c5_327] : memref<2x22x44xf32, #tpu.memory_space<vmem>>, vector<1x16x38xf32>
      %543 = vector.shape_cast %542 : vector<1x16x38xf32> to vector<16x38xf32>
      %c1_328 = arith.constant 1 : index
      %544 = arith.index_cast %190 : i32 to index
      %c5_329 = arith.constant 5 : index
      %545 = vector.load %arg5[%c1_328, %544, %c5_329] : memref<2x22x44xf32, #tpu.memory_space<vmem>>, vector<1x16x38xf32>
      %546 = vector.shape_cast %545 : vector<1x16x38xf32> to vector<16x38xf32>
      %c32_i32_330 = arith.constant 32 : i32
      %547 = arith.muli %540, %c32_i32_330 : i32
      %c0_i32_331 = arith.constant 0 : i32
      %548 = arith.addi %547, %c0_i32_331 : i32
      %549 = arith.index_cast %548 : i32 to index
      %550 = memref.load %arg2[%549] : memref<1568xf32, #tpu.memory_space<smem>>
      %551 = vector.broadcast %550 : f32 to vector<16x38xf32>
      %552 = arith.mulf %551, %543 : vector<16x38xf32>
      %553 = arith.addf %493, %552 : vector<16x38xf32>
      %c32_i32_332 = arith.constant 32 : i32
      %554 = arith.muli %540, %c32_i32_332 : i32
      %c0_i32_333 = arith.constant 0 : i32
      %555 = arith.addi %554, %c0_i32_333 : i32
      %c1_i32_334 = arith.constant 1 : i32
      %556 = arith.addi %555, %c1_i32_334 : i32
      %557 = arith.index_cast %556 : i32 to index
      %558 = memref.load %arg2[%557] : memref<1568xf32, #tpu.memory_space<smem>>
      %559 = vector.broadcast %558 : f32 to vector<16x38xf32>
      %560 = arith.mulf %559, %546 : vector<16x38xf32>
      %561 = arith.addf %553, %560 : vector<16x38xf32>
      %c32_i32_335 = arith.constant 32 : i32
      %562 = arith.muli %540, %c32_i32_335 : i32
      %c2_i32_336 = arith.constant 2 : i32
      %563 = arith.addi %562, %c2_i32_336 : i32
      %564 = arith.index_cast %563 : i32 to index
      %565 = memref.load %arg2[%564] : memref<1568xf32, #tpu.memory_space<smem>>
      %566 = vector.broadcast %565 : f32 to vector<16x38xf32>
      %567 = arith.mulf %566, %543 : vector<16x38xf32>
      %568 = arith.addf %508, %567 : vector<16x38xf32>
      %c32_i32_337 = arith.constant 32 : i32
      %569 = arith.muli %540, %c32_i32_337 : i32
      %c2_i32_338 = arith.constant 2 : i32
      %570 = arith.addi %569, %c2_i32_338 : i32
      %c1_i32_339 = arith.constant 1 : i32
      %571 = arith.addi %570, %c1_i32_339 : i32
      %572 = arith.index_cast %571 : i32 to index
      %573 = memref.load %arg2[%572] : memref<1568xf32, #tpu.memory_space<smem>>
      %574 = vector.broadcast %573 : f32 to vector<16x38xf32>
      %575 = arith.mulf %574, %546 : vector<16x38xf32>
      %576 = arith.addf %568, %575 : vector<16x38xf32>
      %c32_i32_340 = arith.constant 32 : i32
      %577 = arith.muli %540, %c32_i32_340 : i32
      %c4_i32_341 = arith.constant 4 : i32
      %578 = arith.addi %577, %c4_i32_341 : i32
      %579 = arith.index_cast %578 : i32 to index
      %580 = memref.load %arg2[%579] : memref<1568xf32, #tpu.memory_space<smem>>
      %581 = vector.broadcast %580 : f32 to vector<16x38xf32>
      %582 = arith.mulf %581, %543 : vector<16x38xf32>
      %583 = arith.addf %523, %582 : vector<16x38xf32>
      %c32_i32_342 = arith.constant 32 : i32
      %584 = arith.muli %540, %c32_i32_342 : i32
      %c4_i32_343 = arith.constant 4 : i32
      %585 = arith.addi %584, %c4_i32_343 : i32
      %c1_i32_344 = arith.constant 1 : i32
      %586 = arith.addi %585, %c1_i32_344 : i32
      %587 = arith.index_cast %586 : i32 to index
      %588 = memref.load %arg2[%587] : memref<1568xf32, #tpu.memory_space<smem>>
      %589 = vector.broadcast %588 : f32 to vector<16x38xf32>
      %590 = arith.mulf %589, %546 : vector<16x38xf32>
      %591 = arith.addf %583, %590 : vector<16x38xf32>
      %c32_i32_345 = arith.constant 32 : i32
      %592 = arith.muli %540, %c32_i32_345 : i32
      %c6_i32_346 = arith.constant 6 : i32
      %593 = arith.addi %592, %c6_i32_346 : i32
      %594 = arith.index_cast %593 : i32 to index
      %595 = memref.load %arg2[%594] : memref<1568xf32, #tpu.memory_space<smem>>
      %596 = vector.broadcast %595 : f32 to vector<16x38xf32>
      %597 = arith.mulf %596, %543 : vector<16x38xf32>
      %598 = arith.addf %538, %597 : vector<16x38xf32>
      %c32_i32_347 = arith.constant 32 : i32
      %599 = arith.muli %540, %c32_i32_347 : i32
      %c6_i32_348 = arith.constant 6 : i32
      %600 = arith.addi %599, %c6_i32_348 : i32
      %c1_i32_349 = arith.constant 1 : i32
      %601 = arith.addi %600, %c1_i32_349 : i32
      %602 = arith.index_cast %601 : i32 to index
      %603 = memref.load %arg2[%602] : memref<1568xf32, #tpu.memory_space<smem>>
      %604 = vector.broadcast %603 : f32 to vector<16x38xf32>
      %605 = arith.mulf %604, %546 : vector<16x38xf32>
      %606 = arith.addf %598, %605 : vector<16x38xf32>
      %c7_i32_350 = arith.constant 7 : i32
      %607 = arith.muli %190, %c7_i32_350 : i32
      %c6_i32_351 = arith.constant 6 : i32
      %608 = arith.addi %607, %c6_i32_351 : i32
      %c0_352 = arith.constant 0 : index
      %609 = arith.index_cast %190 : i32 to index
      %c6_353 = arith.constant 6 : index
      %610 = vector.load %arg5[%c0_352, %609, %c6_353] : memref<2x22x44xf32, #tpu.memory_space<vmem>>, vector<1x16x38xf32>
      %611 = vector.shape_cast %610 : vector<1x16x38xf32> to vector<16x38xf32>
      %c1_354 = arith.constant 1 : index
      %612 = arith.index_cast %190 : i32 to index
      %c6_355 = arith.constant 6 : index
      %613 = vector.load %arg5[%c1_354, %612, %c6_355] : memref<2x22x44xf32, #tpu.memory_space<vmem>>, vector<1x16x38xf32>
      %614 = vector.shape_cast %613 : vector<1x16x38xf32> to vector<16x38xf32>
      %c32_i32_356 = arith.constant 32 : i32
      %615 = arith.muli %608, %c32_i32_356 : i32
      %c0_i32_357 = arith.constant 0 : i32
      %616 = arith.addi %615, %c0_i32_357 : i32
      %617 = arith.index_cast %616 : i32 to index
      %618 = memref.load %arg2[%617] : memref<1568xf32, #tpu.memory_space<smem>>
      %619 = vector.broadcast %618 : f32 to vector<16x38xf32>
      %620 = arith.mulf %619, %611 : vector<16x38xf32>
      %621 = arith.addf %561, %620 : vector<16x38xf32>
      %c32_i32_358 = arith.constant 32 : i32
      %622 = arith.muli %608, %c32_i32_358 : i32
      %c0_i32_359 = arith.constant 0 : i32
      %623 = arith.addi %622, %c0_i32_359 : i32
      %c1_i32_360 = arith.constant 1 : i32
      %624 = arith.addi %623, %c1_i32_360 : i32
      %625 = arith.index_cast %624 : i32 to index
      %626 = memref.load %arg2[%625] : memref<1568xf32, #tpu.memory_space<smem>>
      %627 = vector.broadcast %626 : f32 to vector<16x38xf32>
      %628 = arith.mulf %627, %614 : vector<16x38xf32>
      %629 = arith.addf %621, %628 : vector<16x38xf32>
      %c32_i32_361 = arith.constant 32 : i32
      %630 = arith.muli %608, %c32_i32_361 : i32
      %c2_i32_362 = arith.constant 2 : i32
      %631 = arith.addi %630, %c2_i32_362 : i32
      %632 = arith.index_cast %631 : i32 to index
      %633 = memref.load %arg2[%632] : memref<1568xf32, #tpu.memory_space<smem>>
      %634 = vector.broadcast %633 : f32 to vector<16x38xf32>
      %635 = arith.mulf %634, %611 : vector<16x38xf32>
      %636 = arith.addf %576, %635 : vector<16x38xf32>
      %c32_i32_363 = arith.constant 32 : i32
      %637 = arith.muli %608, %c32_i32_363 : i32
      %c2_i32_364 = arith.constant 2 : i32
      %638 = arith.addi %637, %c2_i32_364 : i32
      %c1_i32_365 = arith.constant 1 : i32
      %639 = arith.addi %638, %c1_i32_365 : i32
      %640 = arith.index_cast %639 : i32 to index
      %641 = memref.load %arg2[%640] : memref<1568xf32, #tpu.memory_space<smem>>
      %642 = vector.broadcast %641 : f32 to vector<16x38xf32>
      %643 = arith.mulf %642, %614 : vector<16x38xf32>
      %644 = arith.addf %636, %643 : vector<16x38xf32>
      %c32_i32_366 = arith.constant 32 : i32
      %645 = arith.muli %608, %c32_i32_366 : i32
      %c4_i32_367 = arith.constant 4 : i32
      %646 = arith.addi %645, %c4_i32_367 : i32
      %647 = arith.index_cast %646 : i32 to index
      %648 = memref.load %arg2[%647] : memref<1568xf32, #tpu.memory_space<smem>>
      %649 = vector.broadcast %648 : f32 to vector<16x38xf32>
      %650 = arith.mulf %649, %611 : vector<16x38xf32>
      %651 = arith.addf %591, %650 : vector<16x38xf32>
      %c32_i32_368 = arith.constant 32 : i32
      %652 = arith.muli %608, %c32_i32_368 : i32
      %c4_i32_369 = arith.constant 4 : i32
      %653 = arith.addi %652, %c4_i32_369 : i32
      %c1_i32_370 = arith.constant 1 : i32
      %654 = arith.addi %653, %c1_i32_370 : i32
      %655 = arith.index_cast %654 : i32 to index
      %656 = memref.load %arg2[%655] : memref<1568xf32, #tpu.memory_space<smem>>
      %657 = vector.broadcast %656 : f32 to vector<16x38xf32>
      %658 = arith.mulf %657, %614 : vector<16x38xf32>
      %659 = arith.addf %651, %658 : vector<16x38xf32>
      %c32_i32_371 = arith.constant 32 : i32
      %660 = arith.muli %608, %c32_i32_371 : i32
      %c6_i32_372 = arith.constant 6 : i32
      %661 = arith.addi %660, %c6_i32_372 : i32
      %662 = arith.index_cast %661 : i32 to index
      %663 = memref.load %arg2[%662] : memref<1568xf32, #tpu.memory_space<smem>>
      %664 = vector.broadcast %663 : f32 to vector<16x38xf32>
      %665 = arith.mulf %664, %611 : vector<16x38xf32>
      %666 = arith.addf %606, %665 : vector<16x38xf32>
      %c32_i32_373 = arith.constant 32 : i32
      %667 = arith.muli %608, %c32_i32_373 : i32
      %c6_i32_374 = arith.constant 6 : i32
      %668 = arith.addi %667, %c6_i32_374 : i32
      %c1_i32_375 = arith.constant 1 : i32
      %669 = arith.addi %668, %c1_i32_375 : i32
      %670 = arith.index_cast %669 : i32 to index
      %671 = memref.load %arg2[%670] : memref<1568xf32, #tpu.memory_space<smem>>
      %672 = vector.broadcast %671 : f32 to vector<16x38xf32>
      %673 = arith.mulf %672, %614 : vector<16x38xf32>
      %674 = arith.addf %666, %673 : vector<16x38xf32>
      %c0_376 = arith.constant 0 : index
      %c0_377 = arith.constant 0 : index
      %c0_378 = arith.constant 0 : index
      %675 = vector.load %arg7[%c0_376, %c0_377, %c0_378] : memref<4x16x38xf32, #tpu.memory_space<vmem>>, vector<1x16x38xf32>
      %676 = vector.shape_cast %675 : vector<1x16x38xf32> to vector<16x38xf32>
      %677 = vector.shape_cast %629 : vector<16x38xf32> to vector<1x16x38xf32>
      tpu.vector_store %arg7[%c0_376, %c0_377, %c0_378], %677 {strides = array<i32>} : memref<4x16x38xf32, #tpu.memory_space<vmem>>, vector<1x16x38xf32>,
      %c1_379 = arith.constant 1 : index
      %c0_380 = arith.constant 0 : index
      %c0_381 = arith.constant 0 : index
      %678 = vector.load %arg7[%c1_379, %c0_380, %c0_381] : memref<4x16x38xf32, #tpu.memory_space<vmem>>, vector<1x16x38xf32>
      %679 = vector.shape_cast %678 : vector<1x16x38xf32> to vector<16x38xf32>
      %680 = vector.shape_cast %644 : vector<16x38xf32> to vector<1x16x38xf32>
      tpu.vector_store %arg7[%c1_379, %c0_380, %c0_381], %680 {strides = array<i32>} : memref<4x16x38xf32, #tpu.memory_space<vmem>>, vector<1x16x38xf32>,
      %c2_382 = arith.constant 2 : index
      %c0_383 = arith.constant 0 : index
      %c0_384 = arith.constant 0 : index
      %681 = vector.load %arg7[%c2_382, %c0_383, %c0_384] : memref<4x16x38xf32, #tpu.memory_space<vmem>>, vector<1x16x38xf32>
      %682 = vector.shape_cast %681 : vector<1x16x38xf32> to vector<16x38xf32>
      %683 = vector.shape_cast %659 : vector<16x38xf32> to vector<1x16x38xf32>
      tpu.vector_store %arg7[%c2_382, %c0_383, %c0_384], %683 {strides = array<i32>} : memref<4x16x38xf32, #tpu.memory_space<vmem>>, vector<1x16x38xf32>,
      %c3_385 = arith.constant 3 : index
      %c0_386 = arith.constant 0 : index
      %c0_387 = arith.constant 0 : index
      %684 = vector.load %arg7[%c3_385, %c0_386, %c0_387] : memref<4x16x38xf32, #tpu.memory_space<vmem>>, vector<1x16x38xf32>
      %685 = vector.shape_cast %684 : vector<1x16x38xf32> to vector<16x38xf32>
      %686 = vector.shape_cast %674 : vector<16x38xf32> to vector<1x16x38xf32>
      tpu.vector_store %arg7[%c3_385, %c0_386, %c0_387], %686 {strides = array<i32>} : memref<4x16x38xf32, #tpu.memory_space<vmem>>, vector<1x16x38xf32>,
    }
    %c7_i32_44 = arith.constant 7 : i32
    %c0_45 = arith.constant 0 : index
    %c0_46 = arith.constant 0 : index
    %c0_47 = arith.constant 0 : index
    %51 = vector.load %arg7[%c0_45, %c0_46, %c0_47] : memref<4x16x38xf32, #tpu.memory_space<vmem>>, vector<1x16x38xf32>
    %52 = vector.shape_cast %51 : vector<1x16x38xf32> to vector<16x38xf32>
    %cst_48 = arith.constant 0.000000e+00 : f32
    %53 = vector.broadcast %cst_48 : f32 to vector<16x38xf32>
    %54 = arith.select %47, %52, %53 : vector<16x38xi1>, vector<16x38xf32>
    %c0_49 = arith.constant 0 : index
    %c3_50 = arith.constant 3 : index
    %c3_51 = arith.constant 3 : index
    %55 = vector.load %arg6[%c0_49, %c3_50, %c3_51] : memref<16x22x44xf32, #tpu.memory_space<vmem>>, vector<1x16x38xf32>
    %56 = vector.shape_cast %55 : vector<1x16x38xf32> to vector<16x38xf32>
    %57 = vector.shape_cast %54 : vector<16x38xf32> to vector<1x16x38xf32>
    tpu.vector_store %arg6[%c0_49, %c3_50, %c3_51], %57 {strides = array<i32>} : memref<16x22x44xf32, #tpu.memory_space<vmem>>, vector<1x16x38xf32>,
    %c1_52 = arith.constant 1 : index
    %c0_53 = arith.constant 0 : index
    %c0_54 = arith.constant 0 : index
    %58 = vector.load %arg7[%c1_52, %c0_53, %c0_54] : memref<4x16x38xf32, #tpu.memory_space<vmem>>, vector<1x16x38xf32>
    %59 = vector.shape_cast %58 : vector<1x16x38xf32> to vector<16x38xf32>
    %cst_55 = arith.constant 0.000000e+00 : f32
    %60 = vector.broadcast %cst_55 : f32 to vector<16x38xf32>
    %61 = arith.select %47, %59, %60 : vector<16x38xi1>, vector<16x38xf32>
    %c1_56 = arith.constant 1 : index
    %c3_57 = arith.constant 3 : index
    %c3_58 = arith.constant 3 : index
    %62 = vector.load %arg6[%c1_56, %c3_57, %c3_58] : memref<16x22x44xf32, #tpu.memory_space<vmem>>, vector<1x16x38xf32>
    %63 = vector.shape_cast %62 : vector<1x16x38xf32> to vector<16x38xf32>
    %64 = vector.shape_cast %61 : vector<16x38xf32> to vector<1x16x38xf32>
    tpu.vector_store %arg6[%c1_56, %c3_57, %c3_58], %64 {strides = array<i32>} : memref<16x22x44xf32, #tpu.memory_space<vmem>>, vector<1x16x38xf32>,
    %c2 = arith.constant 2 : index
    %c0_59 = arith.constant 0 : index
    %c0_60 = arith.constant 0 : index
    %65 = vector.load %arg7[%c2, %c0_59, %c0_60] : memref<4x16x38xf32, #tpu.memory_space<vmem>>, vector<1x16x38xf32>
    %66 = vector.shape_cast %65 : vector<1x16x38xf32> to vector<16x38xf32>
    %cst_61 = arith.constant 0.000000e+00 : f32
    %67 = vector.broadcast %cst_61 : f32 to vector<16x38xf32>
    %68 = arith.select %47, %66, %67 : vector<16x38xi1>, vector<16x38xf32>
    %c2_62 = arith.constant 2 : index
    %c3_63 = arith.constant 3 : index
    %c3_64 = arith.constant 3 : index
    %69 = vector.load %arg6[%c2_62, %c3_63, %c3_64] : memref<16x22x44xf32, #tpu.memory_space<vmem>>, vector<1x16x38xf32>
    %70 = vector.shape_cast %69 : vector<1x16x38xf32> to vector<16x38xf32>
    %71 = vector.shape_cast %68 : vector<16x38xf32> to vector<1x16x38xf32>
    tpu.vector_store %arg6[%c2_62, %c3_63, %c3_64], %71 {strides = array<i32>} : memref<16x22x44xf32, #tpu.memory_space<vmem>>, vector<1x16x38xf32>,
    %c3_65 = arith.constant 3 : index
    %c0_66 = arith.constant 0 : index
    %c0_67 = arith.constant 0 : index
    %72 = vector.load %arg7[%c3_65, %c0_66, %c0_67] : memref<4x16x38xf32, #tpu.memory_space<vmem>>, vector<1x16x38xf32>
    %73 = vector.shape_cast %72 : vector<1x16x38xf32> to vector<16x38xf32>
    %cst_68 = arith.constant 0.000000e+00 : f32
    %74 = vector.broadcast %cst_68 : f32 to vector<16x38xf32>
    %75 = arith.select %47, %73, %74 : vector<16x38xi1>, vector<16x38xf32>
    %c3_69 = arith.constant 3 : index
    %c3_70 = arith.constant 3 : index
    %c3_71 = arith.constant 3 : index
    %76 = vector.load %arg6[%c3_69, %c3_70, %c3_71] : memref<16x22x44xf32, #tpu.memory_space<vmem>>, vector<1x16x38xf32>
    %77 = vector.shape_cast %76 : vector<1x16x38xf32> to vector<16x38xf32>
    %78 = vector.shape_cast %75 : vector<16x38xf32> to vector<1x16x38xf32>
    tpu.vector_store %arg6[%c3_69, %c3_70, %c3_71], %78 {strides = array<i32>} : memref<16x22x44xf32, #tpu.memory_space<vmem>>, vector<1x16x38xf32>,
    %cst_72 = arith.constant 0.000000e+00 : f32
    %79 = vector.broadcast %cst_72 : f32 to vector<4x16x38xf32>
    %c0_73 = arith.constant 0 : index
    %c0_74 = arith.constant 0 : index
    %c0_75 = arith.constant 0 : index
    %80 = vector.load %arg7[%c0_73, %c0_74, %c0_75] : memref<4x16x38xf32, #tpu.memory_space<vmem>>, vector<4x16x38xf32>
    tpu.vector_store %arg7[%c0_73, %c0_74, %c0_75], %79 {strides = array<i32>} : memref<4x16x38xf32, #tpu.memory_space<vmem>>, vector<4x16x38xf32>,
    %c0_i32_76 = arith.constant 0 : i32
    %c7_i32_77 = arith.constant 7 : i32
    %81 = arith.addi %c0_i32_76, %c7_i32_77 : i32
    %c1_i32_78 = arith.constant 1 : i32
    scf.for %arg9 = %c0_i32_76 to %81 step %c1_i32_78  : i32 {
      %c1_i32_186 = arith.constant 1 : i32
      %189 = arith.muli %arg9, %c1_i32_186 : i32
      %c0_i32_187 = arith.constant 0 : i32
      %190 = arith.addi %c0_i32_187, %189 : i32
      %c0_188 = arith.constant 0 : index
      %c0_189 = arith.constant 0 : index
      %c0_190 = arith.constant 0 : index
      %191 = vector.load %arg7[%c0_188, %c0_189, %c0_190] : memref<4x16x38xf32, #tpu.memory_space<vmem>>, vector<1x16x38xf32>
      %192 = vector.shape_cast %191 : vector<1x16x38xf32> to vector<16x38xf32>
      %c1_191 = arith.constant 1 : index
      %c0_192 = arith.constant 0 : index
      %c0_193 = arith.constant 0 : index
      %193 = vector.load %arg7[%c1_191, %c0_192, %c0_193] : memref<4x16x38xf32, #tpu.memory_space<vmem>>, vector<1x16x38xf32>
      %194 = vector.shape_cast %193 : vector<1x16x38xf32> to vector<16x38xf32>
      %c2_194 = arith.constant 2 : index
      %c0_195 = arith.constant 0 : index
      %c0_196 = arith.constant 0 : index
      %195 = vector.load %arg7[%c2_194, %c0_195, %c0_196] : memref<4x16x38xf32, #tpu.memory_space<vmem>>, vector<1x16x38xf32>
      %196 = vector.shape_cast %195 : vector<1x16x38xf32> to vector<16x38xf32>
      %c3_197 = arith.constant 3 : index
      %c0_198 = arith.constant 0 : index
      %c0_199 = arith.constant 0 : index
      %197 = vector.load %arg7[%c3_197, %c0_198, %c0_199] : memref<4x16x38xf32, #tpu.memory_space<vmem>>, vector<1x16x38xf32>
      %198 = vector.shape_cast %197 : vector<1x16x38xf32> to vector<16x38xf32>
      %c7_i32_200 = arith.constant 7 : i32
      %199 = arith.muli %190, %c7_i32_200 : i32
      %c0_i32_201 = arith.constant 0 : i32
      %200 = arith.addi %199, %c0_i32_201 : i32
      %c0_202 = arith.constant 0 : index
      %201 = arith.index_cast %190 : i32 to index
      %c0_203 = arith.constant 0 : index
      %202 = vector.load %arg5[%c0_202, %201, %c0_203] : memref<2x22x44xf32, #tpu.memory_space<vmem>>, vector<1x16x38xf32>
      %203 = vector.shape_cast %202 : vector<1x16x38xf32> to vector<16x38xf32>
      %c1_204 = arith.constant 1 : index
      %204 = arith.index_cast %190 : i32 to index
      %c0_205 = arith.constant 0 : index
      %205 = vector.load %arg5[%c1_204, %204, %c0_205] : memref<2x22x44xf32, #tpu.memory_space<vmem>>, vector<1x16x38xf32>
      %206 = vector.shape_cast %205 : vector<1x16x38xf32> to vector<16x38xf32>
      %c32_i32 = arith.constant 32 : i32
      %207 = arith.muli %200, %c32_i32 : i32
      %c8_i32 = arith.constant 8 : i32
      %208 = arith.addi %207, %c8_i32 : i32
      %209 = arith.index_cast %208 : i32 to index
      %210 = memref.load %arg2[%209] : memref<1568xf32, #tpu.memory_space<smem>>
      %211 = vector.broadcast %210 : f32 to vector<16x38xf32>
      %212 = arith.mulf %211, %203 : vector<16x38xf32>
      %213 = arith.addf %192, %212 : vector<16x38xf32>
      %c32_i32_206 = arith.constant 32 : i32
      %214 = arith.muli %200, %c32_i32_206 : i32
      %c8_i32_207 = arith.constant 8 : i32
      %215 = arith.addi %214, %c8_i32_207 : i32
      %c1_i32_208 = arith.constant 1 : i32
      %216 = arith.addi %215, %c1_i32_208 : i32
      %217 = arith.index_cast %216 : i32 to index
      %218 = memref.load %arg2[%217] : memref<1568xf32, #tpu.memory_space<smem>>
      %219 = vector.broadcast %218 : f32 to vector<16x38xf32>
      %220 = arith.mulf %219, %206 : vector<16x38xf32>
      %221 = arith.addf %213, %220 : vector<16x38xf32>
      %c32_i32_209 = arith.constant 32 : i32
      %222 = arith.muli %200, %c32_i32_209 : i32
      %c10_i32 = arith.constant 10 : i32
      %223 = arith.addi %222, %c10_i32 : i32
      %224 = arith.index_cast %223 : i32 to index
      %225 = memref.load %arg2[%224] : memref<1568xf32, #tpu.memory_space<smem>>
      %226 = vector.broadcast %225 : f32 to vector<16x38xf32>
      %227 = arith.mulf %226, %203 : vector<16x38xf32>
      %228 = arith.addf %194, %227 : vector<16x38xf32>
      %c32_i32_210 = arith.constant 32 : i32
      %229 = arith.muli %200, %c32_i32_210 : i32
      %c10_i32_211 = arith.constant 10 : i32
      %230 = arith.addi %229, %c10_i32_211 : i32
      %c1_i32_212 = arith.constant 1 : i32
      %231 = arith.addi %230, %c1_i32_212 : i32
      %232 = arith.index_cast %231 : i32 to index
      %233 = memref.load %arg2[%232] : memref<1568xf32, #tpu.memory_space<smem>>
      %234 = vector.broadcast %233 : f32 to vector<16x38xf32>
      %235 = arith.mulf %234, %206 : vector<16x38xf32>
      %236 = arith.addf %228, %235 : vector<16x38xf32>
      %c32_i32_213 = arith.constant 32 : i32
      %237 = arith.muli %200, %c32_i32_213 : i32
      %c12_i32 = arith.constant 12 : i32
      %238 = arith.addi %237, %c12_i32 : i32
      %239 = arith.index_cast %238 : i32 to index
      %240 = memref.load %arg2[%239] : memref<1568xf32, #tpu.memory_space<smem>>
      %241 = vector.broadcast %240 : f32 to vector<16x38xf32>
      %242 = arith.mulf %241, %203 : vector<16x38xf32>
      %243 = arith.addf %196, %242 : vector<16x38xf32>
      %c32_i32_214 = arith.constant 32 : i32
      %244 = arith.muli %200, %c32_i32_214 : i32
      %c12_i32_215 = arith.constant 12 : i32
      %245 = arith.addi %244, %c12_i32_215 : i32
      %c1_i32_216 = arith.constant 1 : i32
      %246 = arith.addi %245, %c1_i32_216 : i32
      %247 = arith.index_cast %246 : i32 to index
      %248 = memref.load %arg2[%247] : memref<1568xf32, #tpu.memory_space<smem>>
      %249 = vector.broadcast %248 : f32 to vector<16x38xf32>
      %250 = arith.mulf %249, %206 : vector<16x38xf32>
      %251 = arith.addf %243, %250 : vector<16x38xf32>
      %c32_i32_217 = arith.constant 32 : i32
      %252 = arith.muli %200, %c32_i32_217 : i32
      %c14_i32 = arith.constant 14 : i32
      %253 = arith.addi %252, %c14_i32 : i32
      %254 = arith.index_cast %253 : i32 to index
      %255 = memref.load %arg2[%254] : memref<1568xf32, #tpu.memory_space<smem>>
      %256 = vector.broadcast %255 : f32 to vector<16x38xf32>
      %257 = arith.mulf %256, %203 : vector<16x38xf32>
      %258 = arith.addf %198, %257 : vector<16x38xf32>
      %c32_i32_218 = arith.constant 32 : i32
      %259 = arith.muli %200, %c32_i32_218 : i32
      %c14_i32_219 = arith.constant 14 : i32
      %260 = arith.addi %259, %c14_i32_219 : i32
      %c1_i32_220 = arith.constant 1 : i32
      %261 = arith.addi %260, %c1_i32_220 : i32
      %262 = arith.index_cast %261 : i32 to index
      %263 = memref.load %arg2[%262] : memref<1568xf32, #tpu.memory_space<smem>>
      %264 = vector.broadcast %263 : f32 to vector<16x38xf32>
      %265 = arith.mulf %264, %206 : vector<16x38xf32>
      %266 = arith.addf %258, %265 : vector<16x38xf32>
      %c7_i32_221 = arith.constant 7 : i32
      %267 = arith.muli %190, %c7_i32_221 : i32
      %c1_i32_222 = arith.constant 1 : i32
      %268 = arith.addi %267, %c1_i32_222 : i32
      %c0_223 = arith.constant 0 : index
      %269 = arith.index_cast %190 : i32 to index
      %c1_224 = arith.constant 1 : index
      %270 = vector.load %arg5[%c0_223, %269, %c1_224] : memref<2x22x44xf32, #tpu.memory_space<vmem>>, vector<1x16x38xf32>
      %271 = vector.shape_cast %270 : vector<1x16x38xf32> to vector<16x38xf32>
      %c1_225 = arith.constant 1 : index
      %272 = arith.index_cast %190 : i32 to index
      %c1_226 = arith.constant 1 : index
      %273 = vector.load %arg5[%c1_225, %272, %c1_226] : memref<2x22x44xf32, #tpu.memory_space<vmem>>, vector<1x16x38xf32>
      %274 = vector.shape_cast %273 : vector<1x16x38xf32> to vector<16x38xf32>
      %c32_i32_227 = arith.constant 32 : i32
      %275 = arith.muli %268, %c32_i32_227 : i32
      %c8_i32_228 = arith.constant 8 : i32
      %276 = arith.addi %275, %c8_i32_228 : i32
      %277 = arith.index_cast %276 : i32 to index
      %278 = memref.load %arg2[%277] : memref<1568xf32, #tpu.memory_space<smem>>
      %279 = vector.broadcast %278 : f32 to vector<16x38xf32>
      %280 = arith.mulf %279, %271 : vector<16x38xf32>
      %281 = arith.addf %221, %280 : vector<16x38xf32>
      %c32_i32_229 = arith.constant 32 : i32
      %282 = arith.muli %268, %c32_i32_229 : i32
      %c8_i32_230 = arith.constant 8 : i32
      %283 = arith.addi %282, %c8_i32_230 : i32
      %c1_i32_231 = arith.constant 1 : i32
      %284 = arith.addi %283, %c1_i32_231 : i32
      %285 = arith.index_cast %284 : i32 to index
      %286 = memref.load %arg2[%285] : memref<1568xf32, #tpu.memory_space<smem>>
      %287 = vector.broadcast %286 : f32 to vector<16x38xf32>
      %288 = arith.mulf %287, %274 : vector<16x38xf32>
      %289 = arith.addf %281, %288 : vector<16x38xf32>
      %c32_i32_232 = arith.constant 32 : i32
      %290 = arith.muli %268, %c32_i32_232 : i32
      %c10_i32_233 = arith.constant 10 : i32
      %291 = arith.addi %290, %c10_i32_233 : i32
      %292 = arith.index_cast %291 : i32 to index
      %293 = memref.load %arg2[%292] : memref<1568xf32, #tpu.memory_space<smem>>
      %294 = vector.broadcast %293 : f32 to vector<16x38xf32>
      %295 = arith.mulf %294, %271 : vector<16x38xf32>
      %296 = arith.addf %236, %295 : vector<16x38xf32>
      %c32_i32_234 = arith.constant 32 : i32
      %297 = arith.muli %268, %c32_i32_234 : i32
      %c10_i32_235 = arith.constant 10 : i32
      %298 = arith.addi %297, %c10_i32_235 : i32
      %c1_i32_236 = arith.constant 1 : i32
      %299 = arith.addi %298, %c1_i32_236 : i32
      %300 = arith.index_cast %299 : i32 to index
      %301 = memref.load %arg2[%300] : memref<1568xf32, #tpu.memory_space<smem>>
      %302 = vector.broadcast %301 : f32 to vector<16x38xf32>
      %303 = arith.mulf %302, %274 : vector<16x38xf32>
      %304 = arith.addf %296, %303 : vector<16x38xf32>
      %c32_i32_237 = arith.constant 32 : i32
      %305 = arith.muli %268, %c32_i32_237 : i32
      %c12_i32_238 = arith.constant 12 : i32
      %306 = arith.addi %305, %c12_i32_238 : i32
      %307 = arith.index_cast %306 : i32 to index
      %308 = memref.load %arg2[%307] : memref<1568xf32, #tpu.memory_space<smem>>
      %309 = vector.broadcast %308 : f32 to vector<16x38xf32>
      %310 = arith.mulf %309, %271 : vector<16x38xf32>
      %311 = arith.addf %251, %310 : vector<16x38xf32>
      %c32_i32_239 = arith.constant 32 : i32
      %312 = arith.muli %268, %c32_i32_239 : i32
      %c12_i32_240 = arith.constant 12 : i32
      %313 = arith.addi %312, %c12_i32_240 : i32
      %c1_i32_241 = arith.constant 1 : i32
      %314 = arith.addi %313, %c1_i32_241 : i32
      %315 = arith.index_cast %314 : i32 to index
      %316 = memref.load %arg2[%315] : memref<1568xf32, #tpu.memory_space<smem>>
      %317 = vector.broadcast %316 : f32 to vector<16x38xf32>
      %318 = arith.mulf %317, %274 : vector<16x38xf32>
      %319 = arith.addf %311, %318 : vector<16x38xf32>
      %c32_i32_242 = arith.constant 32 : i32
      %320 = arith.muli %268, %c32_i32_242 : i32
      %c14_i32_243 = arith.constant 14 : i32
      %321 = arith.addi %320, %c14_i32_243 : i32
      %322 = arith.index_cast %321 : i32 to index
      %323 = memref.load %arg2[%322] : memref<1568xf32, #tpu.memory_space<smem>>
      %324 = vector.broadcast %323 : f32 to vector<16x38xf32>
      %325 = arith.mulf %324, %271 : vector<16x38xf32>
      %326 = arith.addf %266, %325 : vector<16x38xf32>
      %c32_i32_244 = arith.constant 32 : i32
      %327 = arith.muli %268, %c32_i32_244 : i32
      %c14_i32_245 = arith.constant 14 : i32
      %328 = arith.addi %327, %c14_i32_245 : i32
      %c1_i32_246 = arith.constant 1 : i32
      %329 = arith.addi %328, %c1_i32_246 : i32
      %330 = arith.index_cast %329 : i32 to index
      %331 = memref.load %arg2[%330] : memref<1568xf32, #tpu.memory_space<smem>>
      %332 = vector.broadcast %331 : f32 to vector<16x38xf32>
      %333 = arith.mulf %332, %274 : vector<16x38xf32>
      %334 = arith.addf %326, %333 : vector<16x38xf32>
      %c7_i32_247 = arith.constant 7 : i32
      %335 = arith.muli %190, %c7_i32_247 : i32
      %c2_i32 = arith.constant 2 : i32
      %336 = arith.addi %335, %c2_i32 : i32
      %c0_248 = arith.constant 0 : index
      %337 = arith.index_cast %190 : i32 to index
      %c2_249 = arith.constant 2 : index
      %338 = vector.load %arg5[%c0_248, %337, %c2_249] : memref<2x22x44xf32, #tpu.memory_space<vmem>>, vector<1x16x38xf32>
      %339 = vector.shape_cast %338 : vector<1x16x38xf32> to vector<16x38xf32>
      %c1_250 = arith.constant 1 : index
      %340 = arith.index_cast %190 : i32 to index
      %c2_251 = arith.constant 2 : index
      %341 = vector.load %arg5[%c1_250, %340, %c2_251] : memref<2x22x44xf32, #tpu.memory_space<vmem>>, vector<1x16x38xf32>
      %342 = vector.shape_cast %341 : vector<1x16x38xf32> to vector<16x38xf32>
      %c32_i32_252 = arith.constant 32 : i32
      %343 = arith.muli %336, %c32_i32_252 : i32
      %c8_i32_253 = arith.constant 8 : i32
      %344 = arith.addi %343, %c8_i32_253 : i32
      %345 = arith.index_cast %344 : i32 to index
      %346 = memref.load %arg2[%345] : memref<1568xf32, #tpu.memory_space<smem>>
      %347 = vector.broadcast %346 : f32 to vector<16x38xf32>
      %348 = arith.mulf %347, %339 : vector<16x38xf32>
      %349 = arith.addf %289, %348 : vector<16x38xf32>
      %c32_i32_254 = arith.constant 32 : i32
      %350 = arith.muli %336, %c32_i32_254 : i32
      %c8_i32_255 = arith.constant 8 : i32
      %351 = arith.addi %350, %c8_i32_255 : i32
      %c1_i32_256 = arith.constant 1 : i32
      %352 = arith.addi %351, %c1_i32_256 : i32
      %353 = arith.index_cast %352 : i32 to index
      %354 = memref.load %arg2[%353] : memref<1568xf32, #tpu.memory_space<smem>>
      %355 = vector.broadcast %354 : f32 to vector<16x38xf32>
      %356 = arith.mulf %355, %342 : vector<16x38xf32>
      %357 = arith.addf %349, %356 : vector<16x38xf32>
      %c32_i32_257 = arith.constant 32 : i32
      %358 = arith.muli %336, %c32_i32_257 : i32
      %c10_i32_258 = arith.constant 10 : i32
      %359 = arith.addi %358, %c10_i32_258 : i32
      %360 = arith.index_cast %359 : i32 to index
      %361 = memref.load %arg2[%360] : memref<1568xf32, #tpu.memory_space<smem>>
      %362 = vector.broadcast %361 : f32 to vector<16x38xf32>
      %363 = arith.mulf %362, %339 : vector<16x38xf32>
      %364 = arith.addf %304, %363 : vector<16x38xf32>
      %c32_i32_259 = arith.constant 32 : i32
      %365 = arith.muli %336, %c32_i32_259 : i32
      %c10_i32_260 = arith.constant 10 : i32
      %366 = arith.addi %365, %c10_i32_260 : i32
      %c1_i32_261 = arith.constant 1 : i32
      %367 = arith.addi %366, %c1_i32_261 : i32
      %368 = arith.index_cast %367 : i32 to index
      %369 = memref.load %arg2[%368] : memref<1568xf32, #tpu.memory_space<smem>>
      %370 = vector.broadcast %369 : f32 to vector<16x38xf32>
      %371 = arith.mulf %370, %342 : vector<16x38xf32>
      %372 = arith.addf %364, %371 : vector<16x38xf32>
      %c32_i32_262 = arith.constant 32 : i32
      %373 = arith.muli %336, %c32_i32_262 : i32
      %c12_i32_263 = arith.constant 12 : i32
      %374 = arith.addi %373, %c12_i32_263 : i32
      %375 = arith.index_cast %374 : i32 to index
      %376 = memref.load %arg2[%375] : memref<1568xf32, #tpu.memory_space<smem>>
      %377 = vector.broadcast %376 : f32 to vector<16x38xf32>
      %378 = arith.mulf %377, %339 : vector<16x38xf32>
      %379 = arith.addf %319, %378 : vector<16x38xf32>
      %c32_i32_264 = arith.constant 32 : i32
      %380 = arith.muli %336, %c32_i32_264 : i32
      %c12_i32_265 = arith.constant 12 : i32
      %381 = arith.addi %380, %c12_i32_265 : i32
      %c1_i32_266 = arith.constant 1 : i32
      %382 = arith.addi %381, %c1_i32_266 : i32
      %383 = arith.index_cast %382 : i32 to index
      %384 = memref.load %arg2[%383] : memref<1568xf32, #tpu.memory_space<smem>>
      %385 = vector.broadcast %384 : f32 to vector<16x38xf32>
      %386 = arith.mulf %385, %342 : vector<16x38xf32>
      %387 = arith.addf %379, %386 : vector<16x38xf32>
      %c32_i32_267 = arith.constant 32 : i32
      %388 = arith.muli %336, %c32_i32_267 : i32
      %c14_i32_268 = arith.constant 14 : i32
      %389 = arith.addi %388, %c14_i32_268 : i32
      %390 = arith.index_cast %389 : i32 to index
      %391 = memref.load %arg2[%390] : memref<1568xf32, #tpu.memory_space<smem>>
      %392 = vector.broadcast %391 : f32 to vector<16x38xf32>
      %393 = arith.mulf %392, %339 : vector<16x38xf32>
      %394 = arith.addf %334, %393 : vector<16x38xf32>
      %c32_i32_269 = arith.constant 32 : i32
      %395 = arith.muli %336, %c32_i32_269 : i32
      %c14_i32_270 = arith.constant 14 : i32
      %396 = arith.addi %395, %c14_i32_270 : i32
      %c1_i32_271 = arith.constant 1 : i32
      %397 = arith.addi %396, %c1_i32_271 : i32
      %398 = arith.index_cast %397 : i32 to index
      %399 = memref.load %arg2[%398] : memref<1568xf32, #tpu.memory_space<smem>>
      %400 = vector.broadcast %399 : f32 to vector<16x38xf32>
      %401 = arith.mulf %400, %342 : vector<16x38xf32>
      %402 = arith.addf %394, %401 : vector<16x38xf32>
      %c7_i32_272 = arith.constant 7 : i32
      %403 = arith.muli %190, %c7_i32_272 : i32
      %c3_i32 = arith.constant 3 : i32
      %404 = arith.addi %403, %c3_i32 : i32
      %c0_273 = arith.constant 0 : index
      %405 = arith.index_cast %190 : i32 to index
      %c3_274 = arith.constant 3 : index
      %406 = vector.load %arg5[%c0_273, %405, %c3_274] : memref<2x22x44xf32, #tpu.memory_space<vmem>>, vector<1x16x38xf32>
      %407 = vector.shape_cast %406 : vector<1x16x38xf32> to vector<16x38xf32>
      %c1_275 = arith.constant 1 : index
      %408 = arith.index_cast %190 : i32 to index
      %c3_276 = arith.constant 3 : index
      %409 = vector.load %arg5[%c1_275, %408, %c3_276] : memref<2x22x44xf32, #tpu.memory_space<vmem>>, vector<1x16x38xf32>
      %410 = vector.shape_cast %409 : vector<1x16x38xf32> to vector<16x38xf32>
      %c32_i32_277 = arith.constant 32 : i32
      %411 = arith.muli %404, %c32_i32_277 : i32
      %c8_i32_278 = arith.constant 8 : i32
      %412 = arith.addi %411, %c8_i32_278 : i32
      %413 = arith.index_cast %412 : i32 to index
      %414 = memref.load %arg2[%413] : memref<1568xf32, #tpu.memory_space<smem>>
      %415 = vector.broadcast %414 : f32 to vector<16x38xf32>
      %416 = arith.mulf %415, %407 : vector<16x38xf32>
      %417 = arith.addf %357, %416 : vector<16x38xf32>
      %c32_i32_279 = arith.constant 32 : i32
      %418 = arith.muli %404, %c32_i32_279 : i32
      %c8_i32_280 = arith.constant 8 : i32
      %419 = arith.addi %418, %c8_i32_280 : i32
      %c1_i32_281 = arith.constant 1 : i32
      %420 = arith.addi %419, %c1_i32_281 : i32
      %421 = arith.index_cast %420 : i32 to index
      %422 = memref.load %arg2[%421] : memref<1568xf32, #tpu.memory_space<smem>>
      %423 = vector.broadcast %422 : f32 to vector<16x38xf32>
      %424 = arith.mulf %423, %410 : vector<16x38xf32>
      %425 = arith.addf %417, %424 : vector<16x38xf32>
      %c32_i32_282 = arith.constant 32 : i32
      %426 = arith.muli %404, %c32_i32_282 : i32
      %c10_i32_283 = arith.constant 10 : i32
      %427 = arith.addi %426, %c10_i32_283 : i32
      %428 = arith.index_cast %427 : i32 to index
      %429 = memref.load %arg2[%428] : memref<1568xf32, #tpu.memory_space<smem>>
      %430 = vector.broadcast %429 : f32 to vector<16x38xf32>
      %431 = arith.mulf %430, %407 : vector<16x38xf32>
      %432 = arith.addf %372, %431 : vector<16x38xf32>
      %c32_i32_284 = arith.constant 32 : i32
      %433 = arith.muli %404, %c32_i32_284 : i32
      %c10_i32_285 = arith.constant 10 : i32
      %434 = arith.addi %433, %c10_i32_285 : i32
      %c1_i32_286 = arith.constant 1 : i32
      %435 = arith.addi %434, %c1_i32_286 : i32
      %436 = arith.index_cast %435 : i32 to index
      %437 = memref.load %arg2[%436] : memref<1568xf32, #tpu.memory_space<smem>>
      %438 = vector.broadcast %437 : f32 to vector<16x38xf32>
      %439 = arith.mulf %438, %410 : vector<16x38xf32>
      %440 = arith.addf %432, %439 : vector<16x38xf32>
      %c32_i32_287 = arith.constant 32 : i32
      %441 = arith.muli %404, %c32_i32_287 : i32
      %c12_i32_288 = arith.constant 12 : i32
      %442 = arith.addi %441, %c12_i32_288 : i32
      %443 = arith.index_cast %442 : i32 to index
      %444 = memref.load %arg2[%443] : memref<1568xf32, #tpu.memory_space<smem>>
      %445 = vector.broadcast %444 : f32 to vector<16x38xf32>
      %446 = arith.mulf %445, %407 : vector<16x38xf32>
      %447 = arith.addf %387, %446 : vector<16x38xf32>
      %c32_i32_289 = arith.constant 32 : i32
      %448 = arith.muli %404, %c32_i32_289 : i32
      %c12_i32_290 = arith.constant 12 : i32
      %449 = arith.addi %448, %c12_i32_290 : i32
      %c1_i32_291 = arith.constant 1 : i32
      %450 = arith.addi %449, %c1_i32_291 : i32
      %451 = arith.index_cast %450 : i32 to index
      %452 = memref.load %arg2[%451] : memref<1568xf32, #tpu.memory_space<smem>>
      %453 = vector.broadcast %452 : f32 to vector<16x38xf32>
      %454 = arith.mulf %453, %410 : vector<16x38xf32>
      %455 = arith.addf %447, %454 : vector<16x38xf32>
      %c32_i32_292 = arith.constant 32 : i32
      %456 = arith.muli %404, %c32_i32_292 : i32
      %c14_i32_293 = arith.constant 14 : i32
      %457 = arith.addi %456, %c14_i32_293 : i32
      %458 = arith.index_cast %457 : i32 to index
      %459 = memref.load %arg2[%458] : memref<1568xf32, #tpu.memory_space<smem>>
      %460 = vector.broadcast %459 : f32 to vector<16x38xf32>
      %461 = arith.mulf %460, %407 : vector<16x38xf32>
      %462 = arith.addf %402, %461 : vector<16x38xf32>
      %c32_i32_294 = arith.constant 32 : i32
      %463 = arith.muli %404, %c32_i32_294 : i32
      %c14_i32_295 = arith.constant 14 : i32
      %464 = arith.addi %463, %c14_i32_295 : i32
      %c1_i32_296 = arith.constant 1 : i32
      %465 = arith.addi %464, %c1_i32_296 : i32
      %466 = arith.index_cast %465 : i32 to index
      %467 = memref.load %arg2[%466] : memref<1568xf32, #tpu.memory_space<smem>>
      %468 = vector.broadcast %467 : f32 to vector<16x38xf32>
      %469 = arith.mulf %468, %410 : vector<16x38xf32>
      %470 = arith.addf %462, %469 : vector<16x38xf32>
      %c7_i32_297 = arith.constant 7 : i32
      %471 = arith.muli %190, %c7_i32_297 : i32
      %c4_i32 = arith.constant 4 : i32
      %472 = arith.addi %471, %c4_i32 : i32
      %c0_298 = arith.constant 0 : index
      %473 = arith.index_cast %190 : i32 to index
      %c4_299 = arith.constant 4 : index
      %474 = vector.load %arg5[%c0_298, %473, %c4_299] : memref<2x22x44xf32, #tpu.memory_space<vmem>>, vector<1x16x38xf32>
      %475 = vector.shape_cast %474 : vector<1x16x38xf32> to vector<16x38xf32>
      %c1_300 = arith.constant 1 : index
      %476 = arith.index_cast %190 : i32 to index
      %c4_301 = arith.constant 4 : index
      %477 = vector.load %arg5[%c1_300, %476, %c4_301] : memref<2x22x44xf32, #tpu.memory_space<vmem>>, vector<1x16x38xf32>
      %478 = vector.shape_cast %477 : vector<1x16x38xf32> to vector<16x38xf32>
      %c32_i32_302 = arith.constant 32 : i32
      %479 = arith.muli %472, %c32_i32_302 : i32
      %c8_i32_303 = arith.constant 8 : i32
      %480 = arith.addi %479, %c8_i32_303 : i32
      %481 = arith.index_cast %480 : i32 to index
      %482 = memref.load %arg2[%481] : memref<1568xf32, #tpu.memory_space<smem>>
      %483 = vector.broadcast %482 : f32 to vector<16x38xf32>
      %484 = arith.mulf %483, %475 : vector<16x38xf32>
      %485 = arith.addf %425, %484 : vector<16x38xf32>
      %c32_i32_304 = arith.constant 32 : i32
      %486 = arith.muli %472, %c32_i32_304 : i32
      %c8_i32_305 = arith.constant 8 : i32
      %487 = arith.addi %486, %c8_i32_305 : i32
      %c1_i32_306 = arith.constant 1 : i32
      %488 = arith.addi %487, %c1_i32_306 : i32
      %489 = arith.index_cast %488 : i32 to index
      %490 = memref.load %arg2[%489] : memref<1568xf32, #tpu.memory_space<smem>>
      %491 = vector.broadcast %490 : f32 to vector<16x38xf32>
      %492 = arith.mulf %491, %478 : vector<16x38xf32>
      %493 = arith.addf %485, %492 : vector<16x38xf32>
      %c32_i32_307 = arith.constant 32 : i32
      %494 = arith.muli %472, %c32_i32_307 : i32
      %c10_i32_308 = arith.constant 10 : i32
      %495 = arith.addi %494, %c10_i32_308 : i32
      %496 = arith.index_cast %495 : i32 to index
      %497 = memref.load %arg2[%496] : memref<1568xf32, #tpu.memory_space<smem>>
      %498 = vector.broadcast %497 : f32 to vector<16x38xf32>
      %499 = arith.mulf %498, %475 : vector<16x38xf32>
      %500 = arith.addf %440, %499 : vector<16x38xf32>
      %c32_i32_309 = arith.constant 32 : i32
      %501 = arith.muli %472, %c32_i32_309 : i32
      %c10_i32_310 = arith.constant 10 : i32
      %502 = arith.addi %501, %c10_i32_310 : i32
      %c1_i32_311 = arith.constant 1 : i32
      %503 = arith.addi %502, %c1_i32_311 : i32
      %504 = arith.index_cast %503 : i32 to index
      %505 = memref.load %arg2[%504] : memref<1568xf32, #tpu.memory_space<smem>>
      %506 = vector.broadcast %505 : f32 to vector<16x38xf32>
      %507 = arith.mulf %506, %478 : vector<16x38xf32>
      %508 = arith.addf %500, %507 : vector<16x38xf32>
      %c32_i32_312 = arith.constant 32 : i32
      %509 = arith.muli %472, %c32_i32_312 : i32
      %c12_i32_313 = arith.constant 12 : i32
      %510 = arith.addi %509, %c12_i32_313 : i32
      %511 = arith.index_cast %510 : i32 to index
      %512 = memref.load %arg2[%511] : memref<1568xf32, #tpu.memory_space<smem>>
      %513 = vector.broadcast %512 : f32 to vector<16x38xf32>
      %514 = arith.mulf %513, %475 : vector<16x38xf32>
      %515 = arith.addf %455, %514 : vector<16x38xf32>
      %c32_i32_314 = arith.constant 32 : i32
      %516 = arith.muli %472, %c32_i32_314 : i32
      %c12_i32_315 = arith.constant 12 : i32
      %517 = arith.addi %516, %c12_i32_315 : i32
      %c1_i32_316 = arith.constant 1 : i32
      %518 = arith.addi %517, %c1_i32_316 : i32
      %519 = arith.index_cast %518 : i32 to index
      %520 = memref.load %arg2[%519] : memref<1568xf32, #tpu.memory_space<smem>>
      %521 = vector.broadcast %520 : f32 to vector<16x38xf32>
      %522 = arith.mulf %521, %478 : vector<16x38xf32>
      %523 = arith.addf %515, %522 : vector<16x38xf32>
      %c32_i32_317 = arith.constant 32 : i32
      %524 = arith.muli %472, %c32_i32_317 : i32
      %c14_i32_318 = arith.constant 14 : i32
      %525 = arith.addi %524, %c14_i32_318 : i32
      %526 = arith.index_cast %525 : i32 to index
      %527 = memref.load %arg2[%526] : memref<1568xf32, #tpu.memory_space<smem>>
      %528 = vector.broadcast %527 : f32 to vector<16x38xf32>
      %529 = arith.mulf %528, %475 : vector<16x38xf32>
      %530 = arith.addf %470, %529 : vector<16x38xf32>
      %c32_i32_319 = arith.constant 32 : i32
      %531 = arith.muli %472, %c32_i32_319 : i32
      %c14_i32_320 = arith.constant 14 : i32
      %532 = arith.addi %531, %c14_i32_320 : i32
      %c1_i32_321 = arith.constant 1 : i32
      %533 = arith.addi %532, %c1_i32_321 : i32
      %534 = arith.index_cast %533 : i32 to index
      %535 = memref.load %arg2[%534] : memref<1568xf32, #tpu.memory_space<smem>>
      %536 = vector.broadcast %535 : f32 to vector<16x38xf32>
      %537 = arith.mulf %536, %478 : vector<16x38xf32>
      %538 = arith.addf %530, %537 : vector<16x38xf32>
      %c7_i32_322 = arith.constant 7 : i32
      %539 = arith.muli %190, %c7_i32_322 : i32
      %c5_i32 = arith.constant 5 : i32
      %540 = arith.addi %539, %c5_i32 : i32
      %c0_323 = arith.constant 0 : index
      %541 = arith.index_cast %190 : i32 to index
      %c5_324 = arith.constant 5 : index
      %542 = vector.load %arg5[%c0_323, %541, %c5_324] : memref<2x22x44xf32, #tpu.memory_space<vmem>>, vector<1x16x38xf32>
      %543 = vector.shape_cast %542 : vector<1x16x38xf32> to vector<16x38xf32>
      %c1_325 = arith.constant 1 : index
      %544 = arith.index_cast %190 : i32 to index
      %c5_326 = arith.constant 5 : index
      %545 = vector.load %arg5[%c1_325, %544, %c5_326] : memref<2x22x44xf32, #tpu.memory_space<vmem>>, vector<1x16x38xf32>
      %546 = vector.shape_cast %545 : vector<1x16x38xf32> to vector<16x38xf32>
      %c32_i32_327 = arith.constant 32 : i32
      %547 = arith.muli %540, %c32_i32_327 : i32
      %c8_i32_328 = arith.constant 8 : i32
      %548 = arith.addi %547, %c8_i32_328 : i32
      %549 = arith.index_cast %548 : i32 to index
      %550 = memref.load %arg2[%549] : memref<1568xf32, #tpu.memory_space<smem>>
      %551 = vector.broadcast %550 : f32 to vector<16x38xf32>
      %552 = arith.mulf %551, %543 : vector<16x38xf32>
      %553 = arith.addf %493, %552 : vector<16x38xf32>
      %c32_i32_329 = arith.constant 32 : i32
      %554 = arith.muli %540, %c32_i32_329 : i32
      %c8_i32_330 = arith.constant 8 : i32
      %555 = arith.addi %554, %c8_i32_330 : i32
      %c1_i32_331 = arith.constant 1 : i32
      %556 = arith.addi %555, %c1_i32_331 : i32
      %557 = arith.index_cast %556 : i32 to index
      %558 = memref.load %arg2[%557] : memref<1568xf32, #tpu.memory_space<smem>>
      %559 = vector.broadcast %558 : f32 to vector<16x38xf32>
      %560 = arith.mulf %559, %546 : vector<16x38xf32>
      %561 = arith.addf %553, %560 : vector<16x38xf32>
      %c32_i32_332 = arith.constant 32 : i32
      %562 = arith.muli %540, %c32_i32_332 : i32
      %c10_i32_333 = arith.constant 10 : i32
      %563 = arith.addi %562, %c10_i32_333 : i32
      %564 = arith.index_cast %563 : i32 to index
      %565 = memref.load %arg2[%564] : memref<1568xf32, #tpu.memory_space<smem>>
      %566 = vector.broadcast %565 : f32 to vector<16x38xf32>
      %567 = arith.mulf %566, %543 : vector<16x38xf32>
      %568 = arith.addf %508, %567 : vector<16x38xf32>
      %c32_i32_334 = arith.constant 32 : i32
      %569 = arith.muli %540, %c32_i32_334 : i32
      %c10_i32_335 = arith.constant 10 : i32
      %570 = arith.addi %569, %c10_i32_335 : i32
      %c1_i32_336 = arith.constant 1 : i32
      %571 = arith.addi %570, %c1_i32_336 : i32
      %572 = arith.index_cast %571 : i32 to index
      %573 = memref.load %arg2[%572] : memref<1568xf32, #tpu.memory_space<smem>>
      %574 = vector.broadcast %573 : f32 to vector<16x38xf32>
      %575 = arith.mulf %574, %546 : vector<16x38xf32>
      %576 = arith.addf %568, %575 : vector<16x38xf32>
      %c32_i32_337 = arith.constant 32 : i32
      %577 = arith.muli %540, %c32_i32_337 : i32
      %c12_i32_338 = arith.constant 12 : i32
      %578 = arith.addi %577, %c12_i32_338 : i32
      %579 = arith.index_cast %578 : i32 to index
      %580 = memref.load %arg2[%579] : memref<1568xf32, #tpu.memory_space<smem>>
      %581 = vector.broadcast %580 : f32 to vector<16x38xf32>
      %582 = arith.mulf %581, %543 : vector<16x38xf32>
      %583 = arith.addf %523, %582 : vector<16x38xf32>
      %c32_i32_339 = arith.constant 32 : i32
      %584 = arith.muli %540, %c32_i32_339 : i32
      %c12_i32_340 = arith.constant 12 : i32
      %585 = arith.addi %584, %c12_i32_340 : i32
      %c1_i32_341 = arith.constant 1 : i32
      %586 = arith.addi %585, %c1_i32_341 : i32
      %587 = arith.index_cast %586 : i32 to index
      %588 = memref.load %arg2[%587] : memref<1568xf32, #tpu.memory_space<smem>>
      %589 = vector.broadcast %588 : f32 to vector<16x38xf32>
      %590 = arith.mulf %589, %546 : vector<16x38xf32>
      %591 = arith.addf %583, %590 : vector<16x38xf32>
      %c32_i32_342 = arith.constant 32 : i32
      %592 = arith.muli %540, %c32_i32_342 : i32
      %c14_i32_343 = arith.constant 14 : i32
      %593 = arith.addi %592, %c14_i32_343 : i32
      %594 = arith.index_cast %593 : i32 to index
      %595 = memref.load %arg2[%594] : memref<1568xf32, #tpu.memory_space<smem>>
      %596 = vector.broadcast %595 : f32 to vector<16x38xf32>
      %597 = arith.mulf %596, %543 : vector<16x38xf32>
      %598 = arith.addf %538, %597 : vector<16x38xf32>
      %c32_i32_344 = arith.constant 32 : i32
      %599 = arith.muli %540, %c32_i32_344 : i32
      %c14_i32_345 = arith.constant 14 : i32
      %600 = arith.addi %599, %c14_i32_345 : i32
      %c1_i32_346 = arith.constant 1 : i32
      %601 = arith.addi %600, %c1_i32_346 : i32
      %602 = arith.index_cast %601 : i32 to index
      %603 = memref.load %arg2[%602] : memref<1568xf32, #tpu.memory_space<smem>>
      %604 = vector.broadcast %603 : f32 to vector<16x38xf32>
      %605 = arith.mulf %604, %546 : vector<16x38xf32>
      %606 = arith.addf %598, %605 : vector<16x38xf32>
      %c7_i32_347 = arith.constant 7 : i32
      %607 = arith.muli %190, %c7_i32_347 : i32
      %c6_i32 = arith.constant 6 : i32
      %608 = arith.addi %607, %c6_i32 : i32
      %c0_348 = arith.constant 0 : index
      %609 = arith.index_cast %190 : i32 to index
      %c6_349 = arith.constant 6 : index
      %610 = vector.load %arg5[%c0_348, %609, %c6_349] : memref<2x22x44xf32, #tpu.memory_space<vmem>>, vector<1x16x38xf32>
      %611 = vector.shape_cast %610 : vector<1x16x38xf32> to vector<16x38xf32>
      %c1_350 = arith.constant 1 : index
      %612 = arith.index_cast %190 : i32 to index
      %c6_351 = arith.constant 6 : index
      %613 = vector.load %arg5[%c1_350, %612, %c6_351] : memref<2x22x44xf32, #tpu.memory_space<vmem>>, vector<1x16x38xf32>
      %614 = vector.shape_cast %613 : vector<1x16x38xf32> to vector<16x38xf32>
      %c32_i32_352 = arith.constant 32 : i32
      %615 = arith.muli %608, %c32_i32_352 : i32
      %c8_i32_353 = arith.constant 8 : i32
      %616 = arith.addi %615, %c8_i32_353 : i32
      %617 = arith.index_cast %616 : i32 to index
      %618 = memref.load %arg2[%617] : memref<1568xf32, #tpu.memory_space<smem>>
      %619 = vector.broadcast %618 : f32 to vector<16x38xf32>
      %620 = arith.mulf %619, %611 : vector<16x38xf32>
      %621 = arith.addf %561, %620 : vector<16x38xf32>
      %c32_i32_354 = arith.constant 32 : i32
      %622 = arith.muli %608, %c32_i32_354 : i32
      %c8_i32_355 = arith.constant 8 : i32
      %623 = arith.addi %622, %c8_i32_355 : i32
      %c1_i32_356 = arith.constant 1 : i32
      %624 = arith.addi %623, %c1_i32_356 : i32
      %625 = arith.index_cast %624 : i32 to index
      %626 = memref.load %arg2[%625] : memref<1568xf32, #tpu.memory_space<smem>>
      %627 = vector.broadcast %626 : f32 to vector<16x38xf32>
      %628 = arith.mulf %627, %614 : vector<16x38xf32>
      %629 = arith.addf %621, %628 : vector<16x38xf32>
      %c32_i32_357 = arith.constant 32 : i32
      %630 = arith.muli %608, %c32_i32_357 : i32
      %c10_i32_358 = arith.constant 10 : i32
      %631 = arith.addi %630, %c10_i32_358 : i32
      %632 = arith.index_cast %631 : i32 to index
      %633 = memref.load %arg2[%632] : memref<1568xf32, #tpu.memory_space<smem>>
      %634 = vector.broadcast %633 : f32 to vector<16x38xf32>
      %635 = arith.mulf %634, %611 : vector<16x38xf32>
      %636 = arith.addf %576, %635 : vector<16x38xf32>
      %c32_i32_359 = arith.constant 32 : i32
      %637 = arith.muli %608, %c32_i32_359 : i32
      %c10_i32_360 = arith.constant 10 : i32
      %638 = arith.addi %637, %c10_i32_360 : i32
      %c1_i32_361 = arith.constant 1 : i32
      %639 = arith.addi %638, %c1_i32_361 : i32
      %640 = arith.index_cast %639 : i32 to index
      %641 = memref.load %arg2[%640] : memref<1568xf32, #tpu.memory_space<smem>>
      %642 = vector.broadcast %641 : f32 to vector<16x38xf32>
      %643 = arith.mulf %642, %614 : vector<16x38xf32>
      %644 = arith.addf %636, %643 : vector<16x38xf32>
      %c32_i32_362 = arith.constant 32 : i32
      %645 = arith.muli %608, %c32_i32_362 : i32
      %c12_i32_363 = arith.constant 12 : i32
      %646 = arith.addi %645, %c12_i32_363 : i32
      %647 = arith.index_cast %646 : i32 to index
      %648 = memref.load %arg2[%647] : memref<1568xf32, #tpu.memory_space<smem>>
      %649 = vector.broadcast %648 : f32 to vector<16x38xf32>
      %650 = arith.mulf %649, %611 : vector<16x38xf32>
      %651 = arith.addf %591, %650 : vector<16x38xf32>
      %c32_i32_364 = arith.constant 32 : i32
      %652 = arith.muli %608, %c32_i32_364 : i32
      %c12_i32_365 = arith.constant 12 : i32
      %653 = arith.addi %652, %c12_i32_365 : i32
      %c1_i32_366 = arith.constant 1 : i32
      %654 = arith.addi %653, %c1_i32_366 : i32
      %655 = arith.index_cast %654 : i32 to index
      %656 = memref.load %arg2[%655] : memref<1568xf32, #tpu.memory_space<smem>>
      %657 = vector.broadcast %656 : f32 to vector<16x38xf32>
      %658 = arith.mulf %657, %614 : vector<16x38xf32>
      %659 = arith.addf %651, %658 : vector<16x38xf32>
      %c32_i32_367 = arith.constant 32 : i32
      %660 = arith.muli %608, %c32_i32_367 : i32
      %c14_i32_368 = arith.constant 14 : i32
      %661 = arith.addi %660, %c14_i32_368 : i32
      %662 = arith.index_cast %661 : i32 to index
      %663 = memref.load %arg2[%662] : memref<1568xf32, #tpu.memory_space<smem>>
      %664 = vector.broadcast %663 : f32 to vector<16x38xf32>
      %665 = arith.mulf %664, %611 : vector<16x38xf32>
      %666 = arith.addf %606, %665 : vector<16x38xf32>
      %c32_i32_369 = arith.constant 32 : i32
      %667 = arith.muli %608, %c32_i32_369 : i32
      %c14_i32_370 = arith.constant 14 : i32
      %668 = arith.addi %667, %c14_i32_370 : i32
      %c1_i32_371 = arith.constant 1 : i32
      %669 = arith.addi %668, %c1_i32_371 : i32
      %670 = arith.index_cast %669 : i32 to index
      %671 = memref.load %arg2[%670] : memref<1568xf32, #tpu.memory_space<smem>>
      %672 = vector.broadcast %671 : f32 to vector<16x38xf32>
      %673 = arith.mulf %672, %614 : vector<16x38xf32>
      %674 = arith.addf %666, %673 : vector<16x38xf32>
      %c0_372 = arith.constant 0 : index
      %c0_373 = arith.constant 0 : index
      %c0_374 = arith.constant 0 : index
      %675 = vector.load %arg7[%c0_372, %c0_373, %c0_374] : memref<4x16x38xf32, #tpu.memory_space<vmem>>, vector<1x16x38xf32>
      %676 = vector.shape_cast %675 : vector<1x16x38xf32> to vector<16x38xf32>
      %677 = vector.shape_cast %629 : vector<16x38xf32> to vector<1x16x38xf32>
      tpu.vector_store %arg7[%c0_372, %c0_373, %c0_374], %677 {strides = array<i32>} : memref<4x16x38xf32, #tpu.memory_space<vmem>>, vector<1x16x38xf32>,
      %c1_375 = arith.constant 1 : index
      %c0_376 = arith.constant 0 : index
      %c0_377 = arith.constant 0 : index
      %678 = vector.load %arg7[%c1_375, %c0_376, %c0_377] : memref<4x16x38xf32, #tpu.memory_space<vmem>>, vector<1x16x38xf32>
      %679 = vector.shape_cast %678 : vector<1x16x38xf32> to vector<16x38xf32>
      %680 = vector.shape_cast %644 : vector<16x38xf32> to vector<1x16x38xf32>
      tpu.vector_store %arg7[%c1_375, %c0_376, %c0_377], %680 {strides = array<i32>} : memref<4x16x38xf32, #tpu.memory_space<vmem>>, vector<1x16x38xf32>,
      %c2_378 = arith.constant 2 : index
      %c0_379 = arith.constant 0 : index
      %c0_380 = arith.constant 0 : index
      %681 = vector.load %arg7[%c2_378, %c0_379, %c0_380] : memref<4x16x38xf32, #tpu.memory_space<vmem>>, vector<1x16x38xf32>
      %682 = vector.shape_cast %681 : vector<1x16x38xf32> to vector<16x38xf32>
      %683 = vector.shape_cast %659 : vector<16x38xf32> to vector<1x16x38xf32>
      tpu.vector_store %arg7[%c2_378, %c0_379, %c0_380], %683 {strides = array<i32>} : memref<4x16x38xf32, #tpu.memory_space<vmem>>, vector<1x16x38xf32>,
      %c3_381 = arith.constant 3 : index
      %c0_382 = arith.constant 0 : index
      %c0_383 = arith.constant 0 : index
      %684 = vector.load %arg7[%c3_381, %c0_382, %c0_383] : memref<4x16x38xf32, #tpu.memory_space<vmem>>, vector<1x16x38xf32>
      %685 = vector.shape_cast %684 : vector<1x16x38xf32> to vector<16x38xf32>
      %686 = vector.shape_cast %674 : vector<16x38xf32> to vector<1x16x38xf32>
      tpu.vector_store %arg7[%c3_381, %c0_382, %c0_383], %686 {strides = array<i32>} : memref<4x16x38xf32, #tpu.memory_space<vmem>>, vector<1x16x38xf32>,
    }
    %c7_i32_79 = arith.constant 7 : i32
    %c0_80 = arith.constant 0 : index
    %c0_81 = arith.constant 0 : index
    %c0_82 = arith.constant 0 : index
    %82 = vector.load %arg7[%c0_80, %c0_81, %c0_82] : memref<4x16x38xf32, #tpu.memory_space<vmem>>, vector<1x16x38xf32>
    %83 = vector.shape_cast %82 : vector<1x16x38xf32> to vector<16x38xf32>
    %cst_83 = arith.constant 0.000000e+00 : f32
    %84 = vector.broadcast %cst_83 : f32 to vector<16x38xf32>
    %85 = arith.select %47, %83, %84 : vector<16x38xi1>, vector<16x38xf32>
    %c4 = arith.constant 4 : index
    %c3_84 = arith.constant 3 : index
    %c3_85 = arith.constant 3 : index
    %86 = vector.load %arg6[%c4, %c3_84, %c3_85] : memref<16x22x44xf32, #tpu.memory_space<vmem>>, vector<1x16x38xf32>
    %87 = vector.shape_cast %86 : vector<1x16x38xf32> to vector<16x38xf32>
    %88 = vector.shape_cast %85 : vector<16x38xf32> to vector<1x16x38xf32>
    tpu.vector_store %arg6[%c4, %c3_84, %c3_85], %88 {strides = array<i32>} : memref<16x22x44xf32, #tpu.memory_space<vmem>>, vector<1x16x38xf32>,
    %c1_86 = arith.constant 1 : index
    %c0_87 = arith.constant 0 : index
    %c0_88 = arith.constant 0 : index
    %89 = vector.load %arg7[%c1_86, %c0_87, %c0_88] : memref<4x16x38xf32, #tpu.memory_space<vmem>>, vector<1x16x38xf32>
    %90 = vector.shape_cast %89 : vector<1x16x38xf32> to vector<16x38xf32>
    %cst_89 = arith.constant 0.000000e+00 : f32
    %91 = vector.broadcast %cst_89 : f32 to vector<16x38xf32>
    %92 = arith.select %47, %90, %91 : vector<16x38xi1>, vector<16x38xf32>
    %c5 = arith.constant 5 : index
    %c3_90 = arith.constant 3 : index
    %c3_91 = arith.constant 3 : index
    %93 = vector.load %arg6[%c5, %c3_90, %c3_91] : memref<16x22x44xf32, #tpu.memory_space<vmem>>, vector<1x16x38xf32>
    %94 = vector.shape_cast %93 : vector<1x16x38xf32> to vector<16x38xf32>
    %95 = vector.shape_cast %92 : vector<16x38xf32> to vector<1x16x38xf32>
    tpu.vector_store %arg6[%c5, %c3_90, %c3_91], %95 {strides = array<i32>} : memref<16x22x44xf32, #tpu.memory_space<vmem>>, vector<1x16x38xf32>,
    %c2_92 = arith.constant 2 : index
    %c0_93 = arith.constant 0 : index
    %c0_94 = arith.constant 0 : index
    %96 = vector.load %arg7[%c2_92, %c0_93, %c0_94] : memref<4x16x38xf32, #tpu.memory_space<vmem>>, vector<1x16x38xf32>
    %97 = vector.shape_cast %96 : vector<1x16x38xf32> to vector<16x38xf32>
    %cst_95 = arith.constant 0.000000e+00 : f32
    %98 = vector.broadcast %cst_95 : f32 to vector<16x38xf32>
    %99 = arith.select %47, %97, %98 : vector<16x38xi1>, vector<16x38xf32>
    %c6 = arith.constant 6 : index
    %c3_96 = arith.constant 3 : index
    %c3_97 = arith.constant 3 : index
    %100 = vector.load %arg6[%c6, %c3_96, %c3_97] : memref<16x22x44xf32, #tpu.memory_space<vmem>>, vector<1x16x38xf32>
    %101 = vector.shape_cast %100 : vector<1x16x38xf32> to vector<16x38xf32>
    %102 = vector.shape_cast %99 : vector<16x38xf32> to vector<1x16x38xf32>
    tpu.vector_store %arg6[%c6, %c3_96, %c3_97], %102 {strides = array<i32>} : memref<16x22x44xf32, #tpu.memory_space<vmem>>, vector<1x16x38xf32>,
    %c3_98 = arith.constant 3 : index
    %c0_99 = arith.constant 0 : index
    %c0_100 = arith.constant 0 : index
    %103 = vector.load %arg7[%c3_98, %c0_99, %c0_100] : memref<4x16x38xf32, #tpu.memory_space<vmem>>, vector<1x16x38xf32>
    %104 = vector.shape_cast %103 : vector<1x16x38xf32> to vector<16x38xf32>
    %cst_101 = arith.constant 0.000000e+00 : f32
    %105 = vector.broadcast %cst_101 : f32 to vector<16x38xf32>
    %106 = arith.select %47, %104, %105 : vector<16x38xi1>, vector<16x38xf32>
    %c7 = arith.constant 7 : index
    %c3_102 = arith.constant 3 : index
    %c3_103 = arith.constant 3 : index
    %107 = vector.load %arg6[%c7, %c3_102, %c3_103] : memref<16x22x44xf32, #tpu.memory_space<vmem>>, vector<1x16x38xf32>
    %108 = vector.shape_cast %107 : vector<1x16x38xf32> to vector<16x38xf32>
    %109 = vector.shape_cast %106 : vector<16x38xf32> to vector<1x16x38xf32>
    tpu.vector_store %arg6[%c7, %c3_102, %c3_103], %109 {strides = array<i32>} : memref<16x22x44xf32, #tpu.memory_space<vmem>>, vector<1x16x38xf32>,
    %cst_104 = arith.constant 0.000000e+00 : f32
    %110 = vector.broadcast %cst_104 : f32 to vector<4x16x38xf32>
    %c0_105 = arith.constant 0 : index
    %c0_106 = arith.constant 0 : index
    %c0_107 = arith.constant 0 : index
    %111 = vector.load %arg7[%c0_105, %c0_106, %c0_107] : memref<4x16x38xf32, #tpu.memory_space<vmem>>, vector<4x16x38xf32>
    tpu.vector_store %arg7[%c0_105, %c0_106, %c0_107], %110 {strides = array<i32>} : memref<4x16x38xf32, #tpu.memory_space<vmem>>, vector<4x16x38xf32>,
    %c0_i32_108 = arith.constant 0 : i32
    %c7_i32_109 = arith.constant 7 : i32
    %112 = arith.addi %c0_i32_108, %c7_i32_109 : i32
    %c1_i32_110 = arith.constant 1 : i32
    scf.for %arg9 = %c0_i32_108 to %112 step %c1_i32_110  : i32 {
      %c1_i32_186 = arith.constant 1 : i32
      %189 = arith.muli %arg9, %c1_i32_186 : i32
      %c0_i32_187 = arith.constant 0 : i32
      %190 = arith.addi %c0_i32_187, %189 : i32
      %c0_188 = arith.constant 0 : index
      %c0_189 = arith.constant 0 : index
      %c0_190 = arith.constant 0 : index
      %191 = vector.load %arg7[%c0_188, %c0_189, %c0_190] : memref<4x16x38xf32, #tpu.memory_space<vmem>>, vector<1x16x38xf32>
      %192 = vector.shape_cast %191 : vector<1x16x38xf32> to vector<16x38xf32>
      %c1_191 = arith.constant 1 : index
      %c0_192 = arith.constant 0 : index
      %c0_193 = arith.constant 0 : index
      %193 = vector.load %arg7[%c1_191, %c0_192, %c0_193] : memref<4x16x38xf32, #tpu.memory_space<vmem>>, vector<1x16x38xf32>
      %194 = vector.shape_cast %193 : vector<1x16x38xf32> to vector<16x38xf32>
      %c2_194 = arith.constant 2 : index
      %c0_195 = arith.constant 0 : index
      %c0_196 = arith.constant 0 : index
      %195 = vector.load %arg7[%c2_194, %c0_195, %c0_196] : memref<4x16x38xf32, #tpu.memory_space<vmem>>, vector<1x16x38xf32>
      %196 = vector.shape_cast %195 : vector<1x16x38xf32> to vector<16x38xf32>
      %c3_197 = arith.constant 3 : index
      %c0_198 = arith.constant 0 : index
      %c0_199 = arith.constant 0 : index
      %197 = vector.load %arg7[%c3_197, %c0_198, %c0_199] : memref<4x16x38xf32, #tpu.memory_space<vmem>>, vector<1x16x38xf32>
      %198 = vector.shape_cast %197 : vector<1x16x38xf32> to vector<16x38xf32>
      %c7_i32_200 = arith.constant 7 : i32
      %199 = arith.muli %190, %c7_i32_200 : i32
      %c0_i32_201 = arith.constant 0 : i32
      %200 = arith.addi %199, %c0_i32_201 : i32
      %c0_202 = arith.constant 0 : index
      %201 = arith.index_cast %190 : i32 to index
      %c0_203 = arith.constant 0 : index
      %202 = vector.load %arg5[%c0_202, %201, %c0_203] : memref<2x22x44xf32, #tpu.memory_space<vmem>>, vector<1x16x38xf32>
      %203 = vector.shape_cast %202 : vector<1x16x38xf32> to vector<16x38xf32>
      %c1_204 = arith.constant 1 : index
      %204 = arith.index_cast %190 : i32 to index
      %c0_205 = arith.constant 0 : index
      %205 = vector.load %arg5[%c1_204, %204, %c0_205] : memref<2x22x44xf32, #tpu.memory_space<vmem>>, vector<1x16x38xf32>
      %206 = vector.shape_cast %205 : vector<1x16x38xf32> to vector<16x38xf32>
      %c32_i32 = arith.constant 32 : i32
      %207 = arith.muli %200, %c32_i32 : i32
      %c16_i32_206 = arith.constant 16 : i32
      %208 = arith.addi %207, %c16_i32_206 : i32
      %209 = arith.index_cast %208 : i32 to index
      %210 = memref.load %arg2[%209] : memref<1568xf32, #tpu.memory_space<smem>>
      %211 = vector.broadcast %210 : f32 to vector<16x38xf32>
      %212 = arith.mulf %211, %203 : vector<16x38xf32>
      %213 = arith.addf %192, %212 : vector<16x38xf32>
      %c32_i32_207 = arith.constant 32 : i32
      %214 = arith.muli %200, %c32_i32_207 : i32
      %c16_i32_208 = arith.constant 16 : i32
      %215 = arith.addi %214, %c16_i32_208 : i32
      %c1_i32_209 = arith.constant 1 : i32
      %216 = arith.addi %215, %c1_i32_209 : i32
      %217 = arith.index_cast %216 : i32 to index
      %218 = memref.load %arg2[%217] : memref<1568xf32, #tpu.memory_space<smem>>
      %219 = vector.broadcast %218 : f32 to vector<16x38xf32>
      %220 = arith.mulf %219, %206 : vector<16x38xf32>
      %221 = arith.addf %213, %220 : vector<16x38xf32>
      %c32_i32_210 = arith.constant 32 : i32
      %222 = arith.muli %200, %c32_i32_210 : i32
      %c18_i32 = arith.constant 18 : i32
      %223 = arith.addi %222, %c18_i32 : i32
      %224 = arith.index_cast %223 : i32 to index
      %225 = memref.load %arg2[%224] : memref<1568xf32, #tpu.memory_space<smem>>
      %226 = vector.broadcast %225 : f32 to vector<16x38xf32>
      %227 = arith.mulf %226, %203 : vector<16x38xf32>
      %228 = arith.addf %194, %227 : vector<16x38xf32>
      %c32_i32_211 = arith.constant 32 : i32
      %229 = arith.muli %200, %c32_i32_211 : i32
      %c18_i32_212 = arith.constant 18 : i32
      %230 = arith.addi %229, %c18_i32_212 : i32
      %c1_i32_213 = arith.constant 1 : i32
      %231 = arith.addi %230, %c1_i32_213 : i32
      %232 = arith.index_cast %231 : i32 to index
      %233 = memref.load %arg2[%232] : memref<1568xf32, #tpu.memory_space<smem>>
      %234 = vector.broadcast %233 : f32 to vector<16x38xf32>
      %235 = arith.mulf %234, %206 : vector<16x38xf32>
      %236 = arith.addf %228, %235 : vector<16x38xf32>
      %c32_i32_214 = arith.constant 32 : i32
      %237 = arith.muli %200, %c32_i32_214 : i32
      %c20_i32 = arith.constant 20 : i32
      %238 = arith.addi %237, %c20_i32 : i32
      %239 = arith.index_cast %238 : i32 to index
      %240 = memref.load %arg2[%239] : memref<1568xf32, #tpu.memory_space<smem>>
      %241 = vector.broadcast %240 : f32 to vector<16x38xf32>
      %242 = arith.mulf %241, %203 : vector<16x38xf32>
      %243 = arith.addf %196, %242 : vector<16x38xf32>
      %c32_i32_215 = arith.constant 32 : i32
      %244 = arith.muli %200, %c32_i32_215 : i32
      %c20_i32_216 = arith.constant 20 : i32
      %245 = arith.addi %244, %c20_i32_216 : i32
      %c1_i32_217 = arith.constant 1 : i32
      %246 = arith.addi %245, %c1_i32_217 : i32
      %247 = arith.index_cast %246 : i32 to index
      %248 = memref.load %arg2[%247] : memref<1568xf32, #tpu.memory_space<smem>>
      %249 = vector.broadcast %248 : f32 to vector<16x38xf32>
      %250 = arith.mulf %249, %206 : vector<16x38xf32>
      %251 = arith.addf %243, %250 : vector<16x38xf32>
      %c32_i32_218 = arith.constant 32 : i32
      %252 = arith.muli %200, %c32_i32_218 : i32
      %c22_i32_219 = arith.constant 22 : i32
      %253 = arith.addi %252, %c22_i32_219 : i32
      %254 = arith.index_cast %253 : i32 to index
      %255 = memref.load %arg2[%254] : memref<1568xf32, #tpu.memory_space<smem>>
      %256 = vector.broadcast %255 : f32 to vector<16x38xf32>
      %257 = arith.mulf %256, %203 : vector<16x38xf32>
      %258 = arith.addf %198, %257 : vector<16x38xf32>
      %c32_i32_220 = arith.constant 32 : i32
      %259 = arith.muli %200, %c32_i32_220 : i32
      %c22_i32_221 = arith.constant 22 : i32
      %260 = arith.addi %259, %c22_i32_221 : i32
      %c1_i32_222 = arith.constant 1 : i32
      %261 = arith.addi %260, %c1_i32_222 : i32
      %262 = arith.index_cast %261 : i32 to index
      %263 = memref.load %arg2[%262] : memref<1568xf32, #tpu.memory_space<smem>>
      %264 = vector.broadcast %263 : f32 to vector<16x38xf32>
      %265 = arith.mulf %264, %206 : vector<16x38xf32>
      %266 = arith.addf %258, %265 : vector<16x38xf32>
      %c7_i32_223 = arith.constant 7 : i32
      %267 = arith.muli %190, %c7_i32_223 : i32
      %c1_i32_224 = arith.constant 1 : i32
      %268 = arith.addi %267, %c1_i32_224 : i32
      %c0_225 = arith.constant 0 : index
      %269 = arith.index_cast %190 : i32 to index
      %c1_226 = arith.constant 1 : index
      %270 = vector.load %arg5[%c0_225, %269, %c1_226] : memref<2x22x44xf32, #tpu.memory_space<vmem>>, vector<1x16x38xf32>
      %271 = vector.shape_cast %270 : vector<1x16x38xf32> to vector<16x38xf32>
      %c1_227 = arith.constant 1 : index
      %272 = arith.index_cast %190 : i32 to index
      %c1_228 = arith.constant 1 : index
      %273 = vector.load %arg5[%c1_227, %272, %c1_228] : memref<2x22x44xf32, #tpu.memory_space<vmem>>, vector<1x16x38xf32>
      %274 = vector.shape_cast %273 : vector<1x16x38xf32> to vector<16x38xf32>
      %c32_i32_229 = arith.constant 32 : i32
      %275 = arith.muli %268, %c32_i32_229 : i32
      %c16_i32_230 = arith.constant 16 : i32
      %276 = arith.addi %275, %c16_i32_230 : i32
      %277 = arith.index_cast %276 : i32 to index
      %278 = memref.load %arg2[%277] : memref<1568xf32, #tpu.memory_space<smem>>
      %279 = vector.broadcast %278 : f32 to vector<16x38xf32>
      %280 = arith.mulf %279, %271 : vector<16x38xf32>
      %281 = arith.addf %221, %280 : vector<16x38xf32>
      %c32_i32_231 = arith.constant 32 : i32
      %282 = arith.muli %268, %c32_i32_231 : i32
      %c16_i32_232 = arith.constant 16 : i32
      %283 = arith.addi %282, %c16_i32_232 : i32
      %c1_i32_233 = arith.constant 1 : i32
      %284 = arith.addi %283, %c1_i32_233 : i32
      %285 = arith.index_cast %284 : i32 to index
      %286 = memref.load %arg2[%285] : memref<1568xf32, #tpu.memory_space<smem>>
      %287 = vector.broadcast %286 : f32 to vector<16x38xf32>
      %288 = arith.mulf %287, %274 : vector<16x38xf32>
      %289 = arith.addf %281, %288 : vector<16x38xf32>
      %c32_i32_234 = arith.constant 32 : i32
      %290 = arith.muli %268, %c32_i32_234 : i32
      %c18_i32_235 = arith.constant 18 : i32
      %291 = arith.addi %290, %c18_i32_235 : i32
      %292 = arith.index_cast %291 : i32 to index
      %293 = memref.load %arg2[%292] : memref<1568xf32, #tpu.memory_space<smem>>
      %294 = vector.broadcast %293 : f32 to vector<16x38xf32>
      %295 = arith.mulf %294, %271 : vector<16x38xf32>
      %296 = arith.addf %236, %295 : vector<16x38xf32>
      %c32_i32_236 = arith.constant 32 : i32
      %297 = arith.muli %268, %c32_i32_236 : i32
      %c18_i32_237 = arith.constant 18 : i32
      %298 = arith.addi %297, %c18_i32_237 : i32
      %c1_i32_238 = arith.constant 1 : i32
      %299 = arith.addi %298, %c1_i32_238 : i32
      %300 = arith.index_cast %299 : i32 to index
      %301 = memref.load %arg2[%300] : memref<1568xf32, #tpu.memory_space<smem>>
      %302 = vector.broadcast %301 : f32 to vector<16x38xf32>
      %303 = arith.mulf %302, %274 : vector<16x38xf32>
      %304 = arith.addf %296, %303 : vector<16x38xf32>
      %c32_i32_239 = arith.constant 32 : i32
      %305 = arith.muli %268, %c32_i32_239 : i32
      %c20_i32_240 = arith.constant 20 : i32
      %306 = arith.addi %305, %c20_i32_240 : i32
      %307 = arith.index_cast %306 : i32 to index
      %308 = memref.load %arg2[%307] : memref<1568xf32, #tpu.memory_space<smem>>
      %309 = vector.broadcast %308 : f32 to vector<16x38xf32>
      %310 = arith.mulf %309, %271 : vector<16x38xf32>
      %311 = arith.addf %251, %310 : vector<16x38xf32>
      %c32_i32_241 = arith.constant 32 : i32
      %312 = arith.muli %268, %c32_i32_241 : i32
      %c20_i32_242 = arith.constant 20 : i32
      %313 = arith.addi %312, %c20_i32_242 : i32
      %c1_i32_243 = arith.constant 1 : i32
      %314 = arith.addi %313, %c1_i32_243 : i32
      %315 = arith.index_cast %314 : i32 to index
      %316 = memref.load %arg2[%315] : memref<1568xf32, #tpu.memory_space<smem>>
      %317 = vector.broadcast %316 : f32 to vector<16x38xf32>
      %318 = arith.mulf %317, %274 : vector<16x38xf32>
      %319 = arith.addf %311, %318 : vector<16x38xf32>
      %c32_i32_244 = arith.constant 32 : i32
      %320 = arith.muli %268, %c32_i32_244 : i32
      %c22_i32_245 = arith.constant 22 : i32
      %321 = arith.addi %320, %c22_i32_245 : i32
      %322 = arith.index_cast %321 : i32 to index
      %323 = memref.load %arg2[%322] : memref<1568xf32, #tpu.memory_space<smem>>
      %324 = vector.broadcast %323 : f32 to vector<16x38xf32>
      %325 = arith.mulf %324, %271 : vector<16x38xf32>
      %326 = arith.addf %266, %325 : vector<16x38xf32>
      %c32_i32_246 = arith.constant 32 : i32
      %327 = arith.muli %268, %c32_i32_246 : i32
      %c22_i32_247 = arith.constant 22 : i32
      %328 = arith.addi %327, %c22_i32_247 : i32
      %c1_i32_248 = arith.constant 1 : i32
      %329 = arith.addi %328, %c1_i32_248 : i32
      %330 = arith.index_cast %329 : i32 to index
      %331 = memref.load %arg2[%330] : memref<1568xf32, #tpu.memory_space<smem>>
      %332 = vector.broadcast %331 : f32 to vector<16x38xf32>
      %333 = arith.mulf %332, %274 : vector<16x38xf32>
      %334 = arith.addf %326, %333 : vector<16x38xf32>
      %c7_i32_249 = arith.constant 7 : i32
      %335 = arith.muli %190, %c7_i32_249 : i32
      %c2_i32 = arith.constant 2 : i32
      %336 = arith.addi %335, %c2_i32 : i32
      %c0_250 = arith.constant 0 : index
      %337 = arith.index_cast %190 : i32 to index
      %c2_251 = arith.constant 2 : index
      %338 = vector.load %arg5[%c0_250, %337, %c2_251] : memref<2x22x44xf32, #tpu.memory_space<vmem>>, vector<1x16x38xf32>
      %339 = vector.shape_cast %338 : vector<1x16x38xf32> to vector<16x38xf32>
      %c1_252 = arith.constant 1 : index
      %340 = arith.index_cast %190 : i32 to index
      %c2_253 = arith.constant 2 : index
      %341 = vector.load %arg5[%c1_252, %340, %c2_253] : memref<2x22x44xf32, #tpu.memory_space<vmem>>, vector<1x16x38xf32>
      %342 = vector.shape_cast %341 : vector<1x16x38xf32> to vector<16x38xf32>
      %c32_i32_254 = arith.constant 32 : i32
      %343 = arith.muli %336, %c32_i32_254 : i32
      %c16_i32_255 = arith.constant 16 : i32
      %344 = arith.addi %343, %c16_i32_255 : i32
      %345 = arith.index_cast %344 : i32 to index
      %346 = memref.load %arg2[%345] : memref<1568xf32, #tpu.memory_space<smem>>
      %347 = vector.broadcast %346 : f32 to vector<16x38xf32>
      %348 = arith.mulf %347, %339 : vector<16x38xf32>
      %349 = arith.addf %289, %348 : vector<16x38xf32>
      %c32_i32_256 = arith.constant 32 : i32
      %350 = arith.muli %336, %c32_i32_256 : i32
      %c16_i32_257 = arith.constant 16 : i32
      %351 = arith.addi %350, %c16_i32_257 : i32
      %c1_i32_258 = arith.constant 1 : i32
      %352 = arith.addi %351, %c1_i32_258 : i32
      %353 = arith.index_cast %352 : i32 to index
      %354 = memref.load %arg2[%353] : memref<1568xf32, #tpu.memory_space<smem>>
      %355 = vector.broadcast %354 : f32 to vector<16x38xf32>
      %356 = arith.mulf %355, %342 : vector<16x38xf32>
      %357 = arith.addf %349, %356 : vector<16x38xf32>
      %c32_i32_259 = arith.constant 32 : i32
      %358 = arith.muli %336, %c32_i32_259 : i32
      %c18_i32_260 = arith.constant 18 : i32
      %359 = arith.addi %358, %c18_i32_260 : i32
      %360 = arith.index_cast %359 : i32 to index
      %361 = memref.load %arg2[%360] : memref<1568xf32, #tpu.memory_space<smem>>
      %362 = vector.broadcast %361 : f32 to vector<16x38xf32>
      %363 = arith.mulf %362, %339 : vector<16x38xf32>
      %364 = arith.addf %304, %363 : vector<16x38xf32>
      %c32_i32_261 = arith.constant 32 : i32
      %365 = arith.muli %336, %c32_i32_261 : i32
      %c18_i32_262 = arith.constant 18 : i32
      %366 = arith.addi %365, %c18_i32_262 : i32
      %c1_i32_263 = arith.constant 1 : i32
      %367 = arith.addi %366, %c1_i32_263 : i32
      %368 = arith.index_cast %367 : i32 to index
      %369 = memref.load %arg2[%368] : memref<1568xf32, #tpu.memory_space<smem>>
      %370 = vector.broadcast %369 : f32 to vector<16x38xf32>
      %371 = arith.mulf %370, %342 : vector<16x38xf32>
      %372 = arith.addf %364, %371 : vector<16x38xf32>
      %c32_i32_264 = arith.constant 32 : i32
      %373 = arith.muli %336, %c32_i32_264 : i32
      %c20_i32_265 = arith.constant 20 : i32
      %374 = arith.addi %373, %c20_i32_265 : i32
      %375 = arith.index_cast %374 : i32 to index
      %376 = memref.load %arg2[%375] : memref<1568xf32, #tpu.memory_space<smem>>
      %377 = vector.broadcast %376 : f32 to vector<16x38xf32>
      %378 = arith.mulf %377, %339 : vector<16x38xf32>
      %379 = arith.addf %319, %378 : vector<16x38xf32>
      %c32_i32_266 = arith.constant 32 : i32
      %380 = arith.muli %336, %c32_i32_266 : i32
      %c20_i32_267 = arith.constant 20 : i32
      %381 = arith.addi %380, %c20_i32_267 : i32
      %c1_i32_268 = arith.constant 1 : i32
      %382 = arith.addi %381, %c1_i32_268 : i32
      %383 = arith.index_cast %382 : i32 to index
      %384 = memref.load %arg2[%383] : memref<1568xf32, #tpu.memory_space<smem>>
      %385 = vector.broadcast %384 : f32 to vector<16x38xf32>
      %386 = arith.mulf %385, %342 : vector<16x38xf32>
      %387 = arith.addf %379, %386 : vector<16x38xf32>
      %c32_i32_269 = arith.constant 32 : i32
      %388 = arith.muli %336, %c32_i32_269 : i32
      %c22_i32_270 = arith.constant 22 : i32
      %389 = arith.addi %388, %c22_i32_270 : i32
      %390 = arith.index_cast %389 : i32 to index
      %391 = memref.load %arg2[%390] : memref<1568xf32, #tpu.memory_space<smem>>
      %392 = vector.broadcast %391 : f32 to vector<16x38xf32>
      %393 = arith.mulf %392, %339 : vector<16x38xf32>
      %394 = arith.addf %334, %393 : vector<16x38xf32>
      %c32_i32_271 = arith.constant 32 : i32
      %395 = arith.muli %336, %c32_i32_271 : i32
      %c22_i32_272 = arith.constant 22 : i32
      %396 = arith.addi %395, %c22_i32_272 : i32
      %c1_i32_273 = arith.constant 1 : i32
      %397 = arith.addi %396, %c1_i32_273 : i32
      %398 = arith.index_cast %397 : i32 to index
      %399 = memref.load %arg2[%398] : memref<1568xf32, #tpu.memory_space<smem>>
      %400 = vector.broadcast %399 : f32 to vector<16x38xf32>
      %401 = arith.mulf %400, %342 : vector<16x38xf32>
      %402 = arith.addf %394, %401 : vector<16x38xf32>
      %c7_i32_274 = arith.constant 7 : i32
      %403 = arith.muli %190, %c7_i32_274 : i32
      %c3_i32 = arith.constant 3 : i32
      %404 = arith.addi %403, %c3_i32 : i32
      %c0_275 = arith.constant 0 : index
      %405 = arith.index_cast %190 : i32 to index
      %c3_276 = arith.constant 3 : index
      %406 = vector.load %arg5[%c0_275, %405, %c3_276] : memref<2x22x44xf32, #tpu.memory_space<vmem>>, vector<1x16x38xf32>
      %407 = vector.shape_cast %406 : vector<1x16x38xf32> to vector<16x38xf32>
      %c1_277 = arith.constant 1 : index
      %408 = arith.index_cast %190 : i32 to index
      %c3_278 = arith.constant 3 : index
      %409 = vector.load %arg5[%c1_277, %408, %c3_278] : memref<2x22x44xf32, #tpu.memory_space<vmem>>, vector<1x16x38xf32>
      %410 = vector.shape_cast %409 : vector<1x16x38xf32> to vector<16x38xf32>
      %c32_i32_279 = arith.constant 32 : i32
      %411 = arith.muli %404, %c32_i32_279 : i32
      %c16_i32_280 = arith.constant 16 : i32
      %412 = arith.addi %411, %c16_i32_280 : i32
      %413 = arith.index_cast %412 : i32 to index
      %414 = memref.load %arg2[%413] : memref<1568xf32, #tpu.memory_space<smem>>
      %415 = vector.broadcast %414 : f32 to vector<16x38xf32>
      %416 = arith.mulf %415, %407 : vector<16x38xf32>
      %417 = arith.addf %357, %416 : vector<16x38xf32>
      %c32_i32_281 = arith.constant 32 : i32
      %418 = arith.muli %404, %c32_i32_281 : i32
      %c16_i32_282 = arith.constant 16 : i32
      %419 = arith.addi %418, %c16_i32_282 : i32
      %c1_i32_283 = arith.constant 1 : i32
      %420 = arith.addi %419, %c1_i32_283 : i32
      %421 = arith.index_cast %420 : i32 to index
      %422 = memref.load %arg2[%421] : memref<1568xf32, #tpu.memory_space<smem>>
      %423 = vector.broadcast %422 : f32 to vector<16x38xf32>
      %424 = arith.mulf %423, %410 : vector<16x38xf32>
      %425 = arith.addf %417, %424 : vector<16x38xf32>
      %c32_i32_284 = arith.constant 32 : i32
      %426 = arith.muli %404, %c32_i32_284 : i32
      %c18_i32_285 = arith.constant 18 : i32
      %427 = arith.addi %426, %c18_i32_285 : i32
      %428 = arith.index_cast %427 : i32 to index
      %429 = memref.load %arg2[%428] : memref<1568xf32, #tpu.memory_space<smem>>
      %430 = vector.broadcast %429 : f32 to vector<16x38xf32>
      %431 = arith.mulf %430, %407 : vector<16x38xf32>
      %432 = arith.addf %372, %431 : vector<16x38xf32>
      %c32_i32_286 = arith.constant 32 : i32
      %433 = arith.muli %404, %c32_i32_286 : i32
      %c18_i32_287 = arith.constant 18 : i32
      %434 = arith.addi %433, %c18_i32_287 : i32
      %c1_i32_288 = arith.constant 1 : i32
      %435 = arith.addi %434, %c1_i32_288 : i32
      %436 = arith.index_cast %435 : i32 to index
      %437 = memref.load %arg2[%436] : memref<1568xf32, #tpu.memory_space<smem>>
      %438 = vector.broadcast %437 : f32 to vector<16x38xf32>
      %439 = arith.mulf %438, %410 : vector<16x38xf32>
      %440 = arith.addf %432, %439 : vector<16x38xf32>
      %c32_i32_289 = arith.constant 32 : i32
      %441 = arith.muli %404, %c32_i32_289 : i32
      %c20_i32_290 = arith.constant 20 : i32
      %442 = arith.addi %441, %c20_i32_290 : i32
      %443 = arith.index_cast %442 : i32 to index
      %444 = memref.load %arg2[%443] : memref<1568xf32, #tpu.memory_space<smem>>
      %445 = vector.broadcast %444 : f32 to vector<16x38xf32>
      %446 = arith.mulf %445, %407 : vector<16x38xf32>
      %447 = arith.addf %387, %446 : vector<16x38xf32>
      %c32_i32_291 = arith.constant 32 : i32
      %448 = arith.muli %404, %c32_i32_291 : i32
      %c20_i32_292 = arith.constant 20 : i32
      %449 = arith.addi %448, %c20_i32_292 : i32
      %c1_i32_293 = arith.constant 1 : i32
      %450 = arith.addi %449, %c1_i32_293 : i32
      %451 = arith.index_cast %450 : i32 to index
      %452 = memref.load %arg2[%451] : memref<1568xf32, #tpu.memory_space<smem>>
      %453 = vector.broadcast %452 : f32 to vector<16x38xf32>
      %454 = arith.mulf %453, %410 : vector<16x38xf32>
      %455 = arith.addf %447, %454 : vector<16x38xf32>
      %c32_i32_294 = arith.constant 32 : i32
      %456 = arith.muli %404, %c32_i32_294 : i32
      %c22_i32_295 = arith.constant 22 : i32
      %457 = arith.addi %456, %c22_i32_295 : i32
      %458 = arith.index_cast %457 : i32 to index
      %459 = memref.load %arg2[%458] : memref<1568xf32, #tpu.memory_space<smem>>
      %460 = vector.broadcast %459 : f32 to vector<16x38xf32>
      %461 = arith.mulf %460, %407 : vector<16x38xf32>
      %462 = arith.addf %402, %461 : vector<16x38xf32>
      %c32_i32_296 = arith.constant 32 : i32
      %463 = arith.muli %404, %c32_i32_296 : i32
      %c22_i32_297 = arith.constant 22 : i32
      %464 = arith.addi %463, %c22_i32_297 : i32
      %c1_i32_298 = arith.constant 1 : i32
      %465 = arith.addi %464, %c1_i32_298 : i32
      %466 = arith.index_cast %465 : i32 to index
      %467 = memref.load %arg2[%466] : memref<1568xf32, #tpu.memory_space<smem>>
      %468 = vector.broadcast %467 : f32 to vector<16x38xf32>
      %469 = arith.mulf %468, %410 : vector<16x38xf32>
      %470 = arith.addf %462, %469 : vector<16x38xf32>
      %c7_i32_299 = arith.constant 7 : i32
      %471 = arith.muli %190, %c7_i32_299 : i32
      %c4_i32 = arith.constant 4 : i32
      %472 = arith.addi %471, %c4_i32 : i32
      %c0_300 = arith.constant 0 : index
      %473 = arith.index_cast %190 : i32 to index
      %c4_301 = arith.constant 4 : index
      %474 = vector.load %arg5[%c0_300, %473, %c4_301] : memref<2x22x44xf32, #tpu.memory_space<vmem>>, vector<1x16x38xf32>
      %475 = vector.shape_cast %474 : vector<1x16x38xf32> to vector<16x38xf32>
      %c1_302 = arith.constant 1 : index
      %476 = arith.index_cast %190 : i32 to index
      %c4_303 = arith.constant 4 : index
      %477 = vector.load %arg5[%c1_302, %476, %c4_303] : memref<2x22x44xf32, #tpu.memory_space<vmem>>, vector<1x16x38xf32>
      %478 = vector.shape_cast %477 : vector<1x16x38xf32> to vector<16x38xf32>
      %c32_i32_304 = arith.constant 32 : i32
      %479 = arith.muli %472, %c32_i32_304 : i32
      %c16_i32_305 = arith.constant 16 : i32
      %480 = arith.addi %479, %c16_i32_305 : i32
      %481 = arith.index_cast %480 : i32 to index
      %482 = memref.load %arg2[%481] : memref<1568xf32, #tpu.memory_space<smem>>
      %483 = vector.broadcast %482 : f32 to vector<16x38xf32>
      %484 = arith.mulf %483, %475 : vector<16x38xf32>
      %485 = arith.addf %425, %484 : vector<16x38xf32>
      %c32_i32_306 = arith.constant 32 : i32
      %486 = arith.muli %472, %c32_i32_306 : i32
      %c16_i32_307 = arith.constant 16 : i32
      %487 = arith.addi %486, %c16_i32_307 : i32
      %c1_i32_308 = arith.constant 1 : i32
      %488 = arith.addi %487, %c1_i32_308 : i32
      %489 = arith.index_cast %488 : i32 to index
      %490 = memref.load %arg2[%489] : memref<1568xf32, #tpu.memory_space<smem>>
      %491 = vector.broadcast %490 : f32 to vector<16x38xf32>
      %492 = arith.mulf %491, %478 : vector<16x38xf32>
      %493 = arith.addf %485, %492 : vector<16x38xf32>
      %c32_i32_309 = arith.constant 32 : i32
      %494 = arith.muli %472, %c32_i32_309 : i32
      %c18_i32_310 = arith.constant 18 : i32
      %495 = arith.addi %494, %c18_i32_310 : i32
      %496 = arith.index_cast %495 : i32 to index
      %497 = memref.load %arg2[%496] : memref<1568xf32, #tpu.memory_space<smem>>
      %498 = vector.broadcast %497 : f32 to vector<16x38xf32>
      %499 = arith.mulf %498, %475 : vector<16x38xf32>
      %500 = arith.addf %440, %499 : vector<16x38xf32>
      %c32_i32_311 = arith.constant 32 : i32
      %501 = arith.muli %472, %c32_i32_311 : i32
      %c18_i32_312 = arith.constant 18 : i32
      %502 = arith.addi %501, %c18_i32_312 : i32
      %c1_i32_313 = arith.constant 1 : i32
      %503 = arith.addi %502, %c1_i32_313 : i32
      %504 = arith.index_cast %503 : i32 to index
      %505 = memref.load %arg2[%504] : memref<1568xf32, #tpu.memory_space<smem>>
      %506 = vector.broadcast %505 : f32 to vector<16x38xf32>
      %507 = arith.mulf %506, %478 : vector<16x38xf32>
      %508 = arith.addf %500, %507 : vector<16x38xf32>
      %c32_i32_314 = arith.constant 32 : i32
      %509 = arith.muli %472, %c32_i32_314 : i32
      %c20_i32_315 = arith.constant 20 : i32
      %510 = arith.addi %509, %c20_i32_315 : i32
      %511 = arith.index_cast %510 : i32 to index
      %512 = memref.load %arg2[%511] : memref<1568xf32, #tpu.memory_space<smem>>
      %513 = vector.broadcast %512 : f32 to vector<16x38xf32>
      %514 = arith.mulf %513, %475 : vector<16x38xf32>
      %515 = arith.addf %455, %514 : vector<16x38xf32>
      %c32_i32_316 = arith.constant 32 : i32
      %516 = arith.muli %472, %c32_i32_316 : i32
      %c20_i32_317 = arith.constant 20 : i32
      %517 = arith.addi %516, %c20_i32_317 : i32
      %c1_i32_318 = arith.constant 1 : i32
      %518 = arith.addi %517, %c1_i32_318 : i32
      %519 = arith.index_cast %518 : i32 to index
      %520 = memref.load %arg2[%519] : memref<1568xf32, #tpu.memory_space<smem>>
      %521 = vector.broadcast %520 : f32 to vector<16x38xf32>
      %522 = arith.mulf %521, %478 : vector<16x38xf32>
      %523 = arith.addf %515, %522 : vector<16x38xf32>
      %c32_i32_319 = arith.constant 32 : i32
      %524 = arith.muli %472, %c32_i32_319 : i32
      %c22_i32_320 = arith.constant 22 : i32
      %525 = arith.addi %524, %c22_i32_320 : i32
      %526 = arith.index_cast %525 : i32 to index
      %527 = memref.load %arg2[%526] : memref<1568xf32, #tpu.memory_space<smem>>
      %528 = vector.broadcast %527 : f32 to vector<16x38xf32>
      %529 = arith.mulf %528, %475 : vector<16x38xf32>
      %530 = arith.addf %470, %529 : vector<16x38xf32>
      %c32_i32_321 = arith.constant 32 : i32
      %531 = arith.muli %472, %c32_i32_321 : i32
      %c22_i32_322 = arith.constant 22 : i32
      %532 = arith.addi %531, %c22_i32_322 : i32
      %c1_i32_323 = arith.constant 1 : i32
      %533 = arith.addi %532, %c1_i32_323 : i32
      %534 = arith.index_cast %533 : i32 to index
      %535 = memref.load %arg2[%534] : memref<1568xf32, #tpu.memory_space<smem>>
      %536 = vector.broadcast %535 : f32 to vector<16x38xf32>
      %537 = arith.mulf %536, %478 : vector<16x38xf32>
      %538 = arith.addf %530, %537 : vector<16x38xf32>
      %c7_i32_324 = arith.constant 7 : i32
      %539 = arith.muli %190, %c7_i32_324 : i32
      %c5_i32 = arith.constant 5 : i32
      %540 = arith.addi %539, %c5_i32 : i32
      %c0_325 = arith.constant 0 : index
      %541 = arith.index_cast %190 : i32 to index
      %c5_326 = arith.constant 5 : index
      %542 = vector.load %arg5[%c0_325, %541, %c5_326] : memref<2x22x44xf32, #tpu.memory_space<vmem>>, vector<1x16x38xf32>
      %543 = vector.shape_cast %542 : vector<1x16x38xf32> to vector<16x38xf32>
      %c1_327 = arith.constant 1 : index
      %544 = arith.index_cast %190 : i32 to index
      %c5_328 = arith.constant 5 : index
      %545 = vector.load %arg5[%c1_327, %544, %c5_328] : memref<2x22x44xf32, #tpu.memory_space<vmem>>, vector<1x16x38xf32>
      %546 = vector.shape_cast %545 : vector<1x16x38xf32> to vector<16x38xf32>
      %c32_i32_329 = arith.constant 32 : i32
      %547 = arith.muli %540, %c32_i32_329 : i32
      %c16_i32_330 = arith.constant 16 : i32
      %548 = arith.addi %547, %c16_i32_330 : i32
      %549 = arith.index_cast %548 : i32 to index
      %550 = memref.load %arg2[%549] : memref<1568xf32, #tpu.memory_space<smem>>
      %551 = vector.broadcast %550 : f32 to vector<16x38xf32>
      %552 = arith.mulf %551, %543 : vector<16x38xf32>
      %553 = arith.addf %493, %552 : vector<16x38xf32>
      %c32_i32_331 = arith.constant 32 : i32
      %554 = arith.muli %540, %c32_i32_331 : i32
      %c16_i32_332 = arith.constant 16 : i32
      %555 = arith.addi %554, %c16_i32_332 : i32
      %c1_i32_333 = arith.constant 1 : i32
      %556 = arith.addi %555, %c1_i32_333 : i32
      %557 = arith.index_cast %556 : i32 to index
      %558 = memref.load %arg2[%557] : memref<1568xf32, #tpu.memory_space<smem>>
      %559 = vector.broadcast %558 : f32 to vector<16x38xf32>
      %560 = arith.mulf %559, %546 : vector<16x38xf32>
      %561 = arith.addf %553, %560 : vector<16x38xf32>
      %c32_i32_334 = arith.constant 32 : i32
      %562 = arith.muli %540, %c32_i32_334 : i32
      %c18_i32_335 = arith.constant 18 : i32
      %563 = arith.addi %562, %c18_i32_335 : i32
      %564 = arith.index_cast %563 : i32 to index
      %565 = memref.load %arg2[%564] : memref<1568xf32, #tpu.memory_space<smem>>
      %566 = vector.broadcast %565 : f32 to vector<16x38xf32>
      %567 = arith.mulf %566, %543 : vector<16x38xf32>
      %568 = arith.addf %508, %567 : vector<16x38xf32>
      %c32_i32_336 = arith.constant 32 : i32
      %569 = arith.muli %540, %c32_i32_336 : i32
      %c18_i32_337 = arith.constant 18 : i32
      %570 = arith.addi %569, %c18_i32_337 : i32
      %c1_i32_338 = arith.constant 1 : i32
      %571 = arith.addi %570, %c1_i32_338 : i32
      %572 = arith.index_cast %571 : i32 to index
      %573 = memref.load %arg2[%572] : memref<1568xf32, #tpu.memory_space<smem>>
      %574 = vector.broadcast %573 : f32 to vector<16x38xf32>
      %575 = arith.mulf %574, %546 : vector<16x38xf32>
      %576 = arith.addf %568, %575 : vector<16x38xf32>
      %c32_i32_339 = arith.constant 32 : i32
      %577 = arith.muli %540, %c32_i32_339 : i32
      %c20_i32_340 = arith.constant 20 : i32
      %578 = arith.addi %577, %c20_i32_340 : i32
      %579 = arith.index_cast %578 : i32 to index
      %580 = memref.load %arg2[%579] : memref<1568xf32, #tpu.memory_space<smem>>
      %581 = vector.broadcast %580 : f32 to vector<16x38xf32>
      %582 = arith.mulf %581, %543 : vector<16x38xf32>
      %583 = arith.addf %523, %582 : vector<16x38xf32>
      %c32_i32_341 = arith.constant 32 : i32
      %584 = arith.muli %540, %c32_i32_341 : i32
      %c20_i32_342 = arith.constant 20 : i32
      %585 = arith.addi %584, %c20_i32_342 : i32
      %c1_i32_343 = arith.constant 1 : i32
      %586 = arith.addi %585, %c1_i32_343 : i32
      %587 = arith.index_cast %586 : i32 to index
      %588 = memref.load %arg2[%587] : memref<1568xf32, #tpu.memory_space<smem>>
      %589 = vector.broadcast %588 : f32 to vector<16x38xf32>
      %590 = arith.mulf %589, %546 : vector<16x38xf32>
      %591 = arith.addf %583, %590 : vector<16x38xf32>
      %c32_i32_344 = arith.constant 32 : i32
      %592 = arith.muli %540, %c32_i32_344 : i32
      %c22_i32_345 = arith.constant 22 : i32
      %593 = arith.addi %592, %c22_i32_345 : i32
      %594 = arith.index_cast %593 : i32 to index
      %595 = memref.load %arg2[%594] : memref<1568xf32, #tpu.memory_space<smem>>
      %596 = vector.broadcast %595 : f32 to vector<16x38xf32>
      %597 = arith.mulf %596, %543 : vector<16x38xf32>
      %598 = arith.addf %538, %597 : vector<16x38xf32>
      %c32_i32_346 = arith.constant 32 : i32
      %599 = arith.muli %540, %c32_i32_346 : i32
      %c22_i32_347 = arith.constant 22 : i32
      %600 = arith.addi %599, %c22_i32_347 : i32
      %c1_i32_348 = arith.constant 1 : i32
      %601 = arith.addi %600, %c1_i32_348 : i32
      %602 = arith.index_cast %601 : i32 to index
      %603 = memref.load %arg2[%602] : memref<1568xf32, #tpu.memory_space<smem>>
      %604 = vector.broadcast %603 : f32 to vector<16x38xf32>
      %605 = arith.mulf %604, %546 : vector<16x38xf32>
      %606 = arith.addf %598, %605 : vector<16x38xf32>
      %c7_i32_349 = arith.constant 7 : i32
      %607 = arith.muli %190, %c7_i32_349 : i32
      %c6_i32 = arith.constant 6 : i32
      %608 = arith.addi %607, %c6_i32 : i32
      %c0_350 = arith.constant 0 : index
      %609 = arith.index_cast %190 : i32 to index
      %c6_351 = arith.constant 6 : index
      %610 = vector.load %arg5[%c0_350, %609, %c6_351] : memref<2x22x44xf32, #tpu.memory_space<vmem>>, vector<1x16x38xf32>
      %611 = vector.shape_cast %610 : vector<1x16x38xf32> to vector<16x38xf32>
      %c1_352 = arith.constant 1 : index
      %612 = arith.index_cast %190 : i32 to index
      %c6_353 = arith.constant 6 : index
      %613 = vector.load %arg5[%c1_352, %612, %c6_353] : memref<2x22x44xf32, #tpu.memory_space<vmem>>, vector<1x16x38xf32>
      %614 = vector.shape_cast %613 : vector<1x16x38xf32> to vector<16x38xf32>
      %c32_i32_354 = arith.constant 32 : i32
      %615 = arith.muli %608, %c32_i32_354 : i32
      %c16_i32_355 = arith.constant 16 : i32
      %616 = arith.addi %615, %c16_i32_355 : i32
      %617 = arith.index_cast %616 : i32 to index
      %618 = memref.load %arg2[%617] : memref<1568xf32, #tpu.memory_space<smem>>
      %619 = vector.broadcast %618 : f32 to vector<16x38xf32>
      %620 = arith.mulf %619, %611 : vector<16x38xf32>
      %621 = arith.addf %561, %620 : vector<16x38xf32>
      %c32_i32_356 = arith.constant 32 : i32
      %622 = arith.muli %608, %c32_i32_356 : i32
      %c16_i32_357 = arith.constant 16 : i32
      %623 = arith.addi %622, %c16_i32_357 : i32
      %c1_i32_358 = arith.constant 1 : i32
      %624 = arith.addi %623, %c1_i32_358 : i32
      %625 = arith.index_cast %624 : i32 to index
      %626 = memref.load %arg2[%625] : memref<1568xf32, #tpu.memory_space<smem>>
      %627 = vector.broadcast %626 : f32 to vector<16x38xf32>
      %628 = arith.mulf %627, %614 : vector<16x38xf32>
      %629 = arith.addf %621, %628 : vector<16x38xf32>
      %c32_i32_359 = arith.constant 32 : i32
      %630 = arith.muli %608, %c32_i32_359 : i32
      %c18_i32_360 = arith.constant 18 : i32
      %631 = arith.addi %630, %c18_i32_360 : i32
      %632 = arith.index_cast %631 : i32 to index
      %633 = memref.load %arg2[%632] : memref<1568xf32, #tpu.memory_space<smem>>
      %634 = vector.broadcast %633 : f32 to vector<16x38xf32>
      %635 = arith.mulf %634, %611 : vector<16x38xf32>
      %636 = arith.addf %576, %635 : vector<16x38xf32>
      %c32_i32_361 = arith.constant 32 : i32
      %637 = arith.muli %608, %c32_i32_361 : i32
      %c18_i32_362 = arith.constant 18 : i32
      %638 = arith.addi %637, %c18_i32_362 : i32
      %c1_i32_363 = arith.constant 1 : i32
      %639 = arith.addi %638, %c1_i32_363 : i32
      %640 = arith.index_cast %639 : i32 to index
      %641 = memref.load %arg2[%640] : memref<1568xf32, #tpu.memory_space<smem>>
      %642 = vector.broadcast %641 : f32 to vector<16x38xf32>
      %643 = arith.mulf %642, %614 : vector<16x38xf32>
      %644 = arith.addf %636, %643 : vector<16x38xf32>
      %c32_i32_364 = arith.constant 32 : i32
      %645 = arith.muli %608, %c32_i32_364 : i32
      %c20_i32_365 = arith.constant 20 : i32
      %646 = arith.addi %645, %c20_i32_365 : i32
      %647 = arith.index_cast %646 : i32 to index
      %648 = memref.load %arg2[%647] : memref<1568xf32, #tpu.memory_space<smem>>
      %649 = vector.broadcast %648 : f32 to vector<16x38xf32>
      %650 = arith.mulf %649, %611 : vector<16x38xf32>
      %651 = arith.addf %591, %650 : vector<16x38xf32>
      %c32_i32_366 = arith.constant 32 : i32
      %652 = arith.muli %608, %c32_i32_366 : i32
      %c20_i32_367 = arith.constant 20 : i32
      %653 = arith.addi %652, %c20_i32_367 : i32
      %c1_i32_368 = arith.constant 1 : i32
      %654 = arith.addi %653, %c1_i32_368 : i32
      %655 = arith.index_cast %654 : i32 to index
      %656 = memref.load %arg2[%655] : memref<1568xf32, #tpu.memory_space<smem>>
      %657 = vector.broadcast %656 : f32 to vector<16x38xf32>
      %658 = arith.mulf %657, %614 : vector<16x38xf32>
      %659 = arith.addf %651, %658 : vector<16x38xf32>
      %c32_i32_369 = arith.constant 32 : i32
      %660 = arith.muli %608, %c32_i32_369 : i32
      %c22_i32_370 = arith.constant 22 : i32
      %661 = arith.addi %660, %c22_i32_370 : i32
      %662 = arith.index_cast %661 : i32 to index
      %663 = memref.load %arg2[%662] : memref<1568xf32, #tpu.memory_space<smem>>
      %664 = vector.broadcast %663 : f32 to vector<16x38xf32>
      %665 = arith.mulf %664, %611 : vector<16x38xf32>
      %666 = arith.addf %606, %665 : vector<16x38xf32>
      %c32_i32_371 = arith.constant 32 : i32
      %667 = arith.muli %608, %c32_i32_371 : i32
      %c22_i32_372 = arith.constant 22 : i32
      %668 = arith.addi %667, %c22_i32_372 : i32
      %c1_i32_373 = arith.constant 1 : i32
      %669 = arith.addi %668, %c1_i32_373 : i32
      %670 = arith.index_cast %669 : i32 to index
      %671 = memref.load %arg2[%670] : memref<1568xf32, #tpu.memory_space<smem>>
      %672 = vector.broadcast %671 : f32 to vector<16x38xf32>
      %673 = arith.mulf %672, %614 : vector<16x38xf32>
      %674 = arith.addf %666, %673 : vector<16x38xf32>
      %c0_374 = arith.constant 0 : index
      %c0_375 = arith.constant 0 : index
      %c0_376 = arith.constant 0 : index
      %675 = vector.load %arg7[%c0_374, %c0_375, %c0_376] : memref<4x16x38xf32, #tpu.memory_space<vmem>>, vector<1x16x38xf32>
      %676 = vector.shape_cast %675 : vector<1x16x38xf32> to vector<16x38xf32>
      %677 = vector.shape_cast %629 : vector<16x38xf32> to vector<1x16x38xf32>
      tpu.vector_store %arg7[%c0_374, %c0_375, %c0_376], %677 {strides = array<i32>} : memref<4x16x38xf32, #tpu.memory_space<vmem>>, vector<1x16x38xf32>,
      %c1_377 = arith.constant 1 : index
      %c0_378 = arith.constant 0 : index
      %c0_379 = arith.constant 0 : index
      %678 = vector.load %arg7[%c1_377, %c0_378, %c0_379] : memref<4x16x38xf32, #tpu.memory_space<vmem>>, vector<1x16x38xf32>
      %679 = vector.shape_cast %678 : vector<1x16x38xf32> to vector<16x38xf32>
      %680 = vector.shape_cast %644 : vector<16x38xf32> to vector<1x16x38xf32>
      tpu.vector_store %arg7[%c1_377, %c0_378, %c0_379], %680 {strides = array<i32>} : memref<4x16x38xf32, #tpu.memory_space<vmem>>, vector<1x16x38xf32>,
      %c2_380 = arith.constant 2 : index
      %c0_381 = arith.constant 0 : index
      %c0_382 = arith.constant 0 : index
      %681 = vector.load %arg7[%c2_380, %c0_381, %c0_382] : memref<4x16x38xf32, #tpu.memory_space<vmem>>, vector<1x16x38xf32>
      %682 = vector.shape_cast %681 : vector<1x16x38xf32> to vector<16x38xf32>
      %683 = vector.shape_cast %659 : vector<16x38xf32> to vector<1x16x38xf32>
      tpu.vector_store %arg7[%c2_380, %c0_381, %c0_382], %683 {strides = array<i32>} : memref<4x16x38xf32, #tpu.memory_space<vmem>>, vector<1x16x38xf32>,
      %c3_383 = arith.constant 3 : index
      %c0_384 = arith.constant 0 : index
      %c0_385 = arith.constant 0 : index
      %684 = vector.load %arg7[%c3_383, %c0_384, %c0_385] : memref<4x16x38xf32, #tpu.memory_space<vmem>>, vector<1x16x38xf32>
      %685 = vector.shape_cast %684 : vector<1x16x38xf32> to vector<16x38xf32>
      %686 = vector.shape_cast %674 : vector<16x38xf32> to vector<1x16x38xf32>
      tpu.vector_store %arg7[%c3_383, %c0_384, %c0_385], %686 {strides = array<i32>} : memref<4x16x38xf32, #tpu.memory_space<vmem>>, vector<1x16x38xf32>,
    }
    %c7_i32_111 = arith.constant 7 : i32
    %c0_112 = arith.constant 0 : index
    %c0_113 = arith.constant 0 : index
    %c0_114 = arith.constant 0 : index
    %113 = vector.load %arg7[%c0_112, %c0_113, %c0_114] : memref<4x16x38xf32, #tpu.memory_space<vmem>>, vector<1x16x38xf32>
    %114 = vector.shape_cast %113 : vector<1x16x38xf32> to vector<16x38xf32>
    %cst_115 = arith.constant 0.000000e+00 : f32
    %115 = vector.broadcast %cst_115 : f32 to vector<16x38xf32>
    %116 = arith.select %47, %114, %115 : vector<16x38xi1>, vector<16x38xf32>
    %c8 = arith.constant 8 : index
    %c3_116 = arith.constant 3 : index
    %c3_117 = arith.constant 3 : index
    %117 = vector.load %arg6[%c8, %c3_116, %c3_117] : memref<16x22x44xf32, #tpu.memory_space<vmem>>, vector<1x16x38xf32>
    %118 = vector.shape_cast %117 : vector<1x16x38xf32> to vector<16x38xf32>
    %119 = vector.shape_cast %116 : vector<16x38xf32> to vector<1x16x38xf32>
    tpu.vector_store %arg6[%c8, %c3_116, %c3_117], %119 {strides = array<i32>} : memref<16x22x44xf32, #tpu.memory_space<vmem>>, vector<1x16x38xf32>,
    %c1_118 = arith.constant 1 : index
    %c0_119 = arith.constant 0 : index
    %c0_120 = arith.constant 0 : index
    %120 = vector.load %arg7[%c1_118, %c0_119, %c0_120] : memref<4x16x38xf32, #tpu.memory_space<vmem>>, vector<1x16x38xf32>
    %121 = vector.shape_cast %120 : vector<1x16x38xf32> to vector<16x38xf32>
    %cst_121 = arith.constant 0.000000e+00 : f32
    %122 = vector.broadcast %cst_121 : f32 to vector<16x38xf32>
    %123 = arith.select %47, %121, %122 : vector<16x38xi1>, vector<16x38xf32>
    %c9 = arith.constant 9 : index
    %c3_122 = arith.constant 3 : index
    %c3_123 = arith.constant 3 : index
    %124 = vector.load %arg6[%c9, %c3_122, %c3_123] : memref<16x22x44xf32, #tpu.memory_space<vmem>>, vector<1x16x38xf32>
    %125 = vector.shape_cast %124 : vector<1x16x38xf32> to vector<16x38xf32>
    %126 = vector.shape_cast %123 : vector<16x38xf32> to vector<1x16x38xf32>
    tpu.vector_store %arg6[%c9, %c3_122, %c3_123], %126 {strides = array<i32>} : memref<16x22x44xf32, #tpu.memory_space<vmem>>, vector<1x16x38xf32>,
    %c2_124 = arith.constant 2 : index
    %c0_125 = arith.constant 0 : index
    %c0_126 = arith.constant 0 : index
    %127 = vector.load %arg7[%c2_124, %c0_125, %c0_126] : memref<4x16x38xf32, #tpu.memory_space<vmem>>, vector<1x16x38xf32>
    %128 = vector.shape_cast %127 : vector<1x16x38xf32> to vector<16x38xf32>
    %cst_127 = arith.constant 0.000000e+00 : f32
    %129 = vector.broadcast %cst_127 : f32 to vector<16x38xf32>
    %130 = arith.select %47, %128, %129 : vector<16x38xi1>, vector<16x38xf32>
    %c10 = arith.constant 10 : index
    %c3_128 = arith.constant 3 : index
    %c3_129 = arith.constant 3 : index
    %131 = vector.load %arg6[%c10, %c3_128, %c3_129] : memref<16x22x44xf32, #tpu.memory_space<vmem>>, vector<1x16x38xf32>
    %132 = vector.shape_cast %131 : vector<1x16x38xf32> to vector<16x38xf32>
    %133 = vector.shape_cast %130 : vector<16x38xf32> to vector<1x16x38xf32>
    tpu.vector_store %arg6[%c10, %c3_128, %c3_129], %133 {strides = array<i32>} : memref<16x22x44xf32, #tpu.memory_space<vmem>>, vector<1x16x38xf32>,
    %c3_130 = arith.constant 3 : index
    %c0_131 = arith.constant 0 : index
    %c0_132 = arith.constant 0 : index
    %134 = vector.load %arg7[%c3_130, %c0_131, %c0_132] : memref<4x16x38xf32, #tpu.memory_space<vmem>>, vector<1x16x38xf32>
    %135 = vector.shape_cast %134 : vector<1x16x38xf32> to vector<16x38xf32>
    %cst_133 = arith.constant 0.000000e+00 : f32
    %136 = vector.broadcast %cst_133 : f32 to vector<16x38xf32>
    %137 = arith.select %47, %135, %136 : vector<16x38xi1>, vector<16x38xf32>
    %c11 = arith.constant 11 : index
    %c3_134 = arith.constant 3 : index
    %c3_135 = arith.constant 3 : index
    %138 = vector.load %arg6[%c11, %c3_134, %c3_135] : memref<16x22x44xf32, #tpu.memory_space<vmem>>, vector<1x16x38xf32>
    %139 = vector.shape_cast %138 : vector<1x16x38xf32> to vector<16x38xf32>
    %140 = vector.shape_cast %137 : vector<16x38xf32> to vector<1x16x38xf32>
    tpu.vector_store %arg6[%c11, %c3_134, %c3_135], %140 {strides = array<i32>} : memref<16x22x44xf32, #tpu.memory_space<vmem>>, vector<1x16x38xf32>,
    %cst_136 = arith.constant 0.000000e+00 : f32
    %141 = vector.broadcast %cst_136 : f32 to vector<4x16x38xf32>
    %c0_137 = arith.constant 0 : index
    %c0_138 = arith.constant 0 : index
    %c0_139 = arith.constant 0 : index
    %142 = vector.load %arg7[%c0_137, %c0_138, %c0_139] : memref<4x16x38xf32, #tpu.memory_space<vmem>>, vector<4x16x38xf32>
    tpu.vector_store %arg7[%c0_137, %c0_138, %c0_139], %141 {strides = array<i32>} : memref<4x16x38xf32, #tpu.memory_space<vmem>>, vector<4x16x38xf32>,
    %c0_i32_140 = arith.constant 0 : i32
    %c7_i32_141 = arith.constant 7 : i32
    %143 = arith.addi %c0_i32_140, %c7_i32_141 : i32
    %c1_i32_142 = arith.constant 1 : i32
    scf.for %arg9 = %c0_i32_140 to %143 step %c1_i32_142  : i32 {
      %c1_i32_186 = arith.constant 1 : i32
      %189 = arith.muli %arg9, %c1_i32_186 : i32
      %c0_i32_187 = arith.constant 0 : i32
      %190 = arith.addi %c0_i32_187, %189 : i32
      %c0_188 = arith.constant 0 : index
      %c0_189 = arith.constant 0 : index
      %c0_190 = arith.constant 0 : index
      %191 = vector.load %arg7[%c0_188, %c0_189, %c0_190] : memref<4x16x38xf32, #tpu.memory_space<vmem>>, vector<1x16x38xf32>
      %192 = vector.shape_cast %191 : vector<1x16x38xf32> to vector<16x38xf32>
      %c1_191 = arith.constant 1 : index
      %c0_192 = arith.constant 0 : index
      %c0_193 = arith.constant 0 : index
      %193 = vector.load %arg7[%c1_191, %c0_192, %c0_193] : memref<4x16x38xf32, #tpu.memory_space<vmem>>, vector<1x16x38xf32>
      %194 = vector.shape_cast %193 : vector<1x16x38xf32> to vector<16x38xf32>
      %c2_194 = arith.constant 2 : index
      %c0_195 = arith.constant 0 : index
      %c0_196 = arith.constant 0 : index
      %195 = vector.load %arg7[%c2_194, %c0_195, %c0_196] : memref<4x16x38xf32, #tpu.memory_space<vmem>>, vector<1x16x38xf32>
      %196 = vector.shape_cast %195 : vector<1x16x38xf32> to vector<16x38xf32>
      %c3_197 = arith.constant 3 : index
      %c0_198 = arith.constant 0 : index
      %c0_199 = arith.constant 0 : index
      %197 = vector.load %arg7[%c3_197, %c0_198, %c0_199] : memref<4x16x38xf32, #tpu.memory_space<vmem>>, vector<1x16x38xf32>
      %198 = vector.shape_cast %197 : vector<1x16x38xf32> to vector<16x38xf32>
      %c7_i32_200 = arith.constant 7 : i32
      %199 = arith.muli %190, %c7_i32_200 : i32
      %c0_i32_201 = arith.constant 0 : i32
      %200 = arith.addi %199, %c0_i32_201 : i32
      %c0_202 = arith.constant 0 : index
      %201 = arith.index_cast %190 : i32 to index
      %c0_203 = arith.constant 0 : index
      %202 = vector.load %arg5[%c0_202, %201, %c0_203] : memref<2x22x44xf32, #tpu.memory_space<vmem>>, vector<1x16x38xf32>
      %203 = vector.shape_cast %202 : vector<1x16x38xf32> to vector<16x38xf32>
      %c1_204 = arith.constant 1 : index
      %204 = arith.index_cast %190 : i32 to index
      %c0_205 = arith.constant 0 : index
      %205 = vector.load %arg5[%c1_204, %204, %c0_205] : memref<2x22x44xf32, #tpu.memory_space<vmem>>, vector<1x16x38xf32>
      %206 = vector.shape_cast %205 : vector<1x16x38xf32> to vector<16x38xf32>
      %c32_i32 = arith.constant 32 : i32
      %207 = arith.muli %200, %c32_i32 : i32
      %c24_i32 = arith.constant 24 : i32
      %208 = arith.addi %207, %c24_i32 : i32
      %209 = arith.index_cast %208 : i32 to index
      %210 = memref.load %arg2[%209] : memref<1568xf32, #tpu.memory_space<smem>>
      %211 = vector.broadcast %210 : f32 to vector<16x38xf32>
      %212 = arith.mulf %211, %203 : vector<16x38xf32>
      %213 = arith.addf %192, %212 : vector<16x38xf32>
      %c32_i32_206 = arith.constant 32 : i32
      %214 = arith.muli %200, %c32_i32_206 : i32
      %c24_i32_207 = arith.constant 24 : i32
      %215 = arith.addi %214, %c24_i32_207 : i32
      %c1_i32_208 = arith.constant 1 : i32
      %216 = arith.addi %215, %c1_i32_208 : i32
      %217 = arith.index_cast %216 : i32 to index
      %218 = memref.load %arg2[%217] : memref<1568xf32, #tpu.memory_space<smem>>
      %219 = vector.broadcast %218 : f32 to vector<16x38xf32>
      %220 = arith.mulf %219, %206 : vector<16x38xf32>
      %221 = arith.addf %213, %220 : vector<16x38xf32>
      %c32_i32_209 = arith.constant 32 : i32
      %222 = arith.muli %200, %c32_i32_209 : i32
      %c26_i32 = arith.constant 26 : i32
      %223 = arith.addi %222, %c26_i32 : i32
      %224 = arith.index_cast %223 : i32 to index
      %225 = memref.load %arg2[%224] : memref<1568xf32, #tpu.memory_space<smem>>
      %226 = vector.broadcast %225 : f32 to vector<16x38xf32>
      %227 = arith.mulf %226, %203 : vector<16x38xf32>
      %228 = arith.addf %194, %227 : vector<16x38xf32>
      %c32_i32_210 = arith.constant 32 : i32
      %229 = arith.muli %200, %c32_i32_210 : i32
      %c26_i32_211 = arith.constant 26 : i32
      %230 = arith.addi %229, %c26_i32_211 : i32
      %c1_i32_212 = arith.constant 1 : i32
      %231 = arith.addi %230, %c1_i32_212 : i32
      %232 = arith.index_cast %231 : i32 to index
      %233 = memref.load %arg2[%232] : memref<1568xf32, #tpu.memory_space<smem>>
      %234 = vector.broadcast %233 : f32 to vector<16x38xf32>
      %235 = arith.mulf %234, %206 : vector<16x38xf32>
      %236 = arith.addf %228, %235 : vector<16x38xf32>
      %c32_i32_213 = arith.constant 32 : i32
      %237 = arith.muli %200, %c32_i32_213 : i32
      %c28_i32 = arith.constant 28 : i32
      %238 = arith.addi %237, %c28_i32 : i32
      %239 = arith.index_cast %238 : i32 to index
      %240 = memref.load %arg2[%239] : memref<1568xf32, #tpu.memory_space<smem>>
      %241 = vector.broadcast %240 : f32 to vector<16x38xf32>
      %242 = arith.mulf %241, %203 : vector<16x38xf32>
      %243 = arith.addf %196, %242 : vector<16x38xf32>
      %c32_i32_214 = arith.constant 32 : i32
      %244 = arith.muli %200, %c32_i32_214 : i32
      %c28_i32_215 = arith.constant 28 : i32
      %245 = arith.addi %244, %c28_i32_215 : i32
      %c1_i32_216 = arith.constant 1 : i32
      %246 = arith.addi %245, %c1_i32_216 : i32
      %247 = arith.index_cast %246 : i32 to index
      %248 = memref.load %arg2[%247] : memref<1568xf32, #tpu.memory_space<smem>>
      %249 = vector.broadcast %248 : f32 to vector<16x38xf32>
      %250 = arith.mulf %249, %206 : vector<16x38xf32>
      %251 = arith.addf %243, %250 : vector<16x38xf32>
      %c32_i32_217 = arith.constant 32 : i32
      %252 = arith.muli %200, %c32_i32_217 : i32
      %c30_i32 = arith.constant 30 : i32
      %253 = arith.addi %252, %c30_i32 : i32
      %254 = arith.index_cast %253 : i32 to index
      %255 = memref.load %arg2[%254] : memref<1568xf32, #tpu.memory_space<smem>>
      %256 = vector.broadcast %255 : f32 to vector<16x38xf32>
      %257 = arith.mulf %256, %203 : vector<16x38xf32>
      %258 = arith.addf %198, %257 : vector<16x38xf32>
      %c32_i32_218 = arith.constant 32 : i32
      %259 = arith.muli %200, %c32_i32_218 : i32
      %c30_i32_219 = arith.constant 30 : i32
      %260 = arith.addi %259, %c30_i32_219 : i32
      %c1_i32_220 = arith.constant 1 : i32
      %261 = arith.addi %260, %c1_i32_220 : i32
      %262 = arith.index_cast %261 : i32 to index
      %263 = memref.load %arg2[%262] : memref<1568xf32, #tpu.memory_space<smem>>
      %264 = vector.broadcast %263 : f32 to vector<16x38xf32>
      %265 = arith.mulf %264, %206 : vector<16x38xf32>
      %266 = arith.addf %258, %265 : vector<16x38xf32>
      %c7_i32_221 = arith.constant 7 : i32
      %267 = arith.muli %190, %c7_i32_221 : i32
      %c1_i32_222 = arith.constant 1 : i32
      %268 = arith.addi %267, %c1_i32_222 : i32
      %c0_223 = arith.constant 0 : index
      %269 = arith.index_cast %190 : i32 to index
      %c1_224 = arith.constant 1 : index
      %270 = vector.load %arg5[%c0_223, %269, %c1_224] : memref<2x22x44xf32, #tpu.memory_space<vmem>>, vector<1x16x38xf32>
      %271 = vector.shape_cast %270 : vector<1x16x38xf32> to vector<16x38xf32>
      %c1_225 = arith.constant 1 : index
      %272 = arith.index_cast %190 : i32 to index
      %c1_226 = arith.constant 1 : index
      %273 = vector.load %arg5[%c1_225, %272, %c1_226] : memref<2x22x44xf32, #tpu.memory_space<vmem>>, vector<1x16x38xf32>
      %274 = vector.shape_cast %273 : vector<1x16x38xf32> to vector<16x38xf32>
      %c32_i32_227 = arith.constant 32 : i32
      %275 = arith.muli %268, %c32_i32_227 : i32
      %c24_i32_228 = arith.constant 24 : i32
      %276 = arith.addi %275, %c24_i32_228 : i32
      %277 = arith.index_cast %276 : i32 to index
      %278 = memref.load %arg2[%277] : memref<1568xf32, #tpu.memory_space<smem>>
      %279 = vector.broadcast %278 : f32 to vector<16x38xf32>
      %280 = arith.mulf %279, %271 : vector<16x38xf32>
      %281 = arith.addf %221, %280 : vector<16x38xf32>
      %c32_i32_229 = arith.constant 32 : i32
      %282 = arith.muli %268, %c32_i32_229 : i32
      %c24_i32_230 = arith.constant 24 : i32
      %283 = arith.addi %282, %c24_i32_230 : i32
      %c1_i32_231 = arith.constant 1 : i32
      %284 = arith.addi %283, %c1_i32_231 : i32
      %285 = arith.index_cast %284 : i32 to index
      %286 = memref.load %arg2[%285] : memref<1568xf32, #tpu.memory_space<smem>>
      %287 = vector.broadcast %286 : f32 to vector<16x38xf32>
      %288 = arith.mulf %287, %274 : vector<16x38xf32>
      %289 = arith.addf %281, %288 : vector<16x38xf32>
      %c32_i32_232 = arith.constant 32 : i32
      %290 = arith.muli %268, %c32_i32_232 : i32
      %c26_i32_233 = arith.constant 26 : i32
      %291 = arith.addi %290, %c26_i32_233 : i32
      %292 = arith.index_cast %291 : i32 to index
      %293 = memref.load %arg2[%292] : memref<1568xf32, #tpu.memory_space<smem>>
      %294 = vector.broadcast %293 : f32 to vector<16x38xf32>
      %295 = arith.mulf %294, %271 : vector<16x38xf32>
      %296 = arith.addf %236, %295 : vector<16x38xf32>
      %c32_i32_234 = arith.constant 32 : i32
      %297 = arith.muli %268, %c32_i32_234 : i32
      %c26_i32_235 = arith.constant 26 : i32
      %298 = arith.addi %297, %c26_i32_235 : i32
      %c1_i32_236 = arith.constant 1 : i32
      %299 = arith.addi %298, %c1_i32_236 : i32
      %300 = arith.index_cast %299 : i32 to index
      %301 = memref.load %arg2[%300] : memref<1568xf32, #tpu.memory_space<smem>>
      %302 = vector.broadcast %301 : f32 to vector<16x38xf32>
      %303 = arith.mulf %302, %274 : vector<16x38xf32>
      %304 = arith.addf %296, %303 : vector<16x38xf32>
      %c32_i32_237 = arith.constant 32 : i32
      %305 = arith.muli %268, %c32_i32_237 : i32
      %c28_i32_238 = arith.constant 28 : i32
      %306 = arith.addi %305, %c28_i32_238 : i32
      %307 = arith.index_cast %306 : i32 to index
      %308 = memref.load %arg2[%307] : memref<1568xf32, #tpu.memory_space<smem>>
      %309 = vector.broadcast %308 : f32 to vector<16x38xf32>
      %310 = arith.mulf %309, %271 : vector<16x38xf32>
      %311 = arith.addf %251, %310 : vector<16x38xf32>
      %c32_i32_239 = arith.constant 32 : i32
      %312 = arith.muli %268, %c32_i32_239 : i32
      %c28_i32_240 = arith.constant 28 : i32
      %313 = arith.addi %312, %c28_i32_240 : i32
      %c1_i32_241 = arith.constant 1 : i32
      %314 = arith.addi %313, %c1_i32_241 : i32
      %315 = arith.index_cast %314 : i32 to index
      %316 = memref.load %arg2[%315] : memref<1568xf32, #tpu.memory_space<smem>>
      %317 = vector.broadcast %316 : f32 to vector<16x38xf32>
      %318 = arith.mulf %317, %274 : vector<16x38xf32>
      %319 = arith.addf %311, %318 : vector<16x38xf32>
      %c32_i32_242 = arith.constant 32 : i32
      %320 = arith.muli %268, %c32_i32_242 : i32
      %c30_i32_243 = arith.constant 30 : i32
      %321 = arith.addi %320, %c30_i32_243 : i32
      %322 = arith.index_cast %321 : i32 to index
      %323 = memref.load %arg2[%322] : memref<1568xf32, #tpu.memory_space<smem>>
      %324 = vector.broadcast %323 : f32 to vector<16x38xf32>
      %325 = arith.mulf %324, %271 : vector<16x38xf32>
      %326 = arith.addf %266, %325 : vector<16x38xf32>
      %c32_i32_244 = arith.constant 32 : i32
      %327 = arith.muli %268, %c32_i32_244 : i32
      %c30_i32_245 = arith.constant 30 : i32
      %328 = arith.addi %327, %c30_i32_245 : i32
      %c1_i32_246 = arith.constant 1 : i32
      %329 = arith.addi %328, %c1_i32_246 : i32
      %330 = arith.index_cast %329 : i32 to index
      %331 = memref.load %arg2[%330] : memref<1568xf32, #tpu.memory_space<smem>>
      %332 = vector.broadcast %331 : f32 to vector<16x38xf32>
      %333 = arith.mulf %332, %274 : vector<16x38xf32>
      %334 = arith.addf %326, %333 : vector<16x38xf32>
      %c7_i32_247 = arith.constant 7 : i32
      %335 = arith.muli %190, %c7_i32_247 : i32
      %c2_i32 = arith.constant 2 : i32
      %336 = arith.addi %335, %c2_i32 : i32
      %c0_248 = arith.constant 0 : index
      %337 = arith.index_cast %190 : i32 to index
      %c2_249 = arith.constant 2 : index
      %338 = vector.load %arg5[%c0_248, %337, %c2_249] : memref<2x22x44xf32, #tpu.memory_space<vmem>>, vector<1x16x38xf32>
      %339 = vector.shape_cast %338 : vector<1x16x38xf32> to vector<16x38xf32>
      %c1_250 = arith.constant 1 : index
      %340 = arith.index_cast %190 : i32 to index
      %c2_251 = arith.constant 2 : index
      %341 = vector.load %arg5[%c1_250, %340, %c2_251] : memref<2x22x44xf32, #tpu.memory_space<vmem>>, vector<1x16x38xf32>
      %342 = vector.shape_cast %341 : vector<1x16x38xf32> to vector<16x38xf32>
      %c32_i32_252 = arith.constant 32 : i32
      %343 = arith.muli %336, %c32_i32_252 : i32
      %c24_i32_253 = arith.constant 24 : i32
      %344 = arith.addi %343, %c24_i32_253 : i32
      %345 = arith.index_cast %344 : i32 to index
      %346 = memref.load %arg2[%345] : memref<1568xf32, #tpu.memory_space<smem>>
      %347 = vector.broadcast %346 : f32 to vector<16x38xf32>
      %348 = arith.mulf %347, %339 : vector<16x38xf32>
      %349 = arith.addf %289, %348 : vector<16x38xf32>
      %c32_i32_254 = arith.constant 32 : i32
      %350 = arith.muli %336, %c32_i32_254 : i32
      %c24_i32_255 = arith.constant 24 : i32
      %351 = arith.addi %350, %c24_i32_255 : i32
      %c1_i32_256 = arith.constant 1 : i32
      %352 = arith.addi %351, %c1_i32_256 : i32
      %353 = arith.index_cast %352 : i32 to index
      %354 = memref.load %arg2[%353] : memref<1568xf32, #tpu.memory_space<smem>>
      %355 = vector.broadcast %354 : f32 to vector<16x38xf32>
      %356 = arith.mulf %355, %342 : vector<16x38xf32>
      %357 = arith.addf %349, %356 : vector<16x38xf32>
      %c32_i32_257 = arith.constant 32 : i32
      %358 = arith.muli %336, %c32_i32_257 : i32
      %c26_i32_258 = arith.constant 26 : i32
      %359 = arith.addi %358, %c26_i32_258 : i32
      %360 = arith.index_cast %359 : i32 to index
      %361 = memref.load %arg2[%360] : memref<1568xf32, #tpu.memory_space<smem>>
      %362 = vector.broadcast %361 : f32 to vector<16x38xf32>
      %363 = arith.mulf %362, %339 : vector<16x38xf32>
      %364 = arith.addf %304, %363 : vector<16x38xf32>
      %c32_i32_259 = arith.constant 32 : i32
      %365 = arith.muli %336, %c32_i32_259 : i32
      %c26_i32_260 = arith.constant 26 : i32
      %366 = arith.addi %365, %c26_i32_260 : i32
      %c1_i32_261 = arith.constant 1 : i32
      %367 = arith.addi %366, %c1_i32_261 : i32
      %368 = arith.index_cast %367 : i32 to index
      %369 = memref.load %arg2[%368] : memref<1568xf32, #tpu.memory_space<smem>>
      %370 = vector.broadcast %369 : f32 to vector<16x38xf32>
      %371 = arith.mulf %370, %342 : vector<16x38xf32>
      %372 = arith.addf %364, %371 : vector<16x38xf32>
      %c32_i32_262 = arith.constant 32 : i32
      %373 = arith.muli %336, %c32_i32_262 : i32
      %c28_i32_263 = arith.constant 28 : i32
      %374 = arith.addi %373, %c28_i32_263 : i32
      %375 = arith.index_cast %374 : i32 to index
      %376 = memref.load %arg2[%375] : memref<1568xf32, #tpu.memory_space<smem>>
      %377 = vector.broadcast %376 : f32 to vector<16x38xf32>
      %378 = arith.mulf %377, %339 : vector<16x38xf32>
      %379 = arith.addf %319, %378 : vector<16x38xf32>
      %c32_i32_264 = arith.constant 32 : i32
      %380 = arith.muli %336, %c32_i32_264 : i32
      %c28_i32_265 = arith.constant 28 : i32
      %381 = arith.addi %380, %c28_i32_265 : i32
      %c1_i32_266 = arith.constant 1 : i32
      %382 = arith.addi %381, %c1_i32_266 : i32
      %383 = arith.index_cast %382 : i32 to index
      %384 = memref.load %arg2[%383] : memref<1568xf32, #tpu.memory_space<smem>>
      %385 = vector.broadcast %384 : f32 to vector<16x38xf32>
      %386 = arith.mulf %385, %342 : vector<16x38xf32>
      %387 = arith.addf %379, %386 : vector<16x38xf32>
      %c32_i32_267 = arith.constant 32 : i32
      %388 = arith.muli %336, %c32_i32_267 : i32
      %c30_i32_268 = arith.constant 30 : i32
      %389 = arith.addi %388, %c30_i32_268 : i32
      %390 = arith.index_cast %389 : i32 to index
      %391 = memref.load %arg2[%390] : memref<1568xf32, #tpu.memory_space<smem>>
      %392 = vector.broadcast %391 : f32 to vector<16x38xf32>
      %393 = arith.mulf %392, %339 : vector<16x38xf32>
      %394 = arith.addf %334, %393 : vector<16x38xf32>
      %c32_i32_269 = arith.constant 32 : i32
      %395 = arith.muli %336, %c32_i32_269 : i32
      %c30_i32_270 = arith.constant 30 : i32
      %396 = arith.addi %395, %c30_i32_270 : i32
      %c1_i32_271 = arith.constant 1 : i32
      %397 = arith.addi %396, %c1_i32_271 : i32
      %398 = arith.index_cast %397 : i32 to index
      %399 = memref.load %arg2[%398] : memref<1568xf32, #tpu.memory_space<smem>>
      %400 = vector.broadcast %399 : f32 to vector<16x38xf32>
      %401 = arith.mulf %400, %342 : vector<16x38xf32>
      %402 = arith.addf %394, %401 : vector<16x38xf32>
      %c7_i32_272 = arith.constant 7 : i32
      %403 = arith.muli %190, %c7_i32_272 : i32
      %c3_i32 = arith.constant 3 : i32
      %404 = arith.addi %403, %c3_i32 : i32
      %c0_273 = arith.constant 0 : index
      %405 = arith.index_cast %190 : i32 to index
      %c3_274 = arith.constant 3 : index
      %406 = vector.load %arg5[%c0_273, %405, %c3_274] : memref<2x22x44xf32, #tpu.memory_space<vmem>>, vector<1x16x38xf32>
      %407 = vector.shape_cast %406 : vector<1x16x38xf32> to vector<16x38xf32>
      %c1_275 = arith.constant 1 : index
      %408 = arith.index_cast %190 : i32 to index
      %c3_276 = arith.constant 3 : index
      %409 = vector.load %arg5[%c1_275, %408, %c3_276] : memref<2x22x44xf32, #tpu.memory_space<vmem>>, vector<1x16x38xf32>
      %410 = vector.shape_cast %409 : vector<1x16x38xf32> to vector<16x38xf32>
      %c32_i32_277 = arith.constant 32 : i32
      %411 = arith.muli %404, %c32_i32_277 : i32
      %c24_i32_278 = arith.constant 24 : i32
      %412 = arith.addi %411, %c24_i32_278 : i32
      %413 = arith.index_cast %412 : i32 to index
      %414 = memref.load %arg2[%413] : memref<1568xf32, #tpu.memory_space<smem>>
      %415 = vector.broadcast %414 : f32 to vector<16x38xf32>
      %416 = arith.mulf %415, %407 : vector<16x38xf32>
      %417 = arith.addf %357, %416 : vector<16x38xf32>
      %c32_i32_279 = arith.constant 32 : i32
      %418 = arith.muli %404, %c32_i32_279 : i32
      %c24_i32_280 = arith.constant 24 : i32
      %419 = arith.addi %418, %c24_i32_280 : i32
      %c1_i32_281 = arith.constant 1 : i32
      %420 = arith.addi %419, %c1_i32_281 : i32
      %421 = arith.index_cast %420 : i32 to index
      %422 = memref.load %arg2[%421] : memref<1568xf32, #tpu.memory_space<smem>>
      %423 = vector.broadcast %422 : f32 to vector<16x38xf32>
      %424 = arith.mulf %423, %410 : vector<16x38xf32>
      %425 = arith.addf %417, %424 : vector<16x38xf32>
      %c32_i32_282 = arith.constant 32 : i32
      %426 = arith.muli %404, %c32_i32_282 : i32
      %c26_i32_283 = arith.constant 26 : i32
      %427 = arith.addi %426, %c26_i32_283 : i32
      %428 = arith.index_cast %427 : i32 to index
      %429 = memref.load %arg2[%428] : memref<1568xf32, #tpu.memory_space<smem>>
      %430 = vector.broadcast %429 : f32 to vector<16x38xf32>
      %431 = arith.mulf %430, %407 : vector<16x38xf32>
      %432 = arith.addf %372, %431 : vector<16x38xf32>
      %c32_i32_284 = arith.constant 32 : i32
      %433 = arith.muli %404, %c32_i32_284 : i32
      %c26_i32_285 = arith.constant 26 : i32
      %434 = arith.addi %433, %c26_i32_285 : i32
      %c1_i32_286 = arith.constant 1 : i32
      %435 = arith.addi %434, %c1_i32_286 : i32
      %436 = arith.index_cast %435 : i32 to index
      %437 = memref.load %arg2[%436] : memref<1568xf32, #tpu.memory_space<smem>>
      %438 = vector.broadcast %437 : f32 to vector<16x38xf32>
      %439 = arith.mulf %438, %410 : vector<16x38xf32>
      %440 = arith.addf %432, %439 : vector<16x38xf32>
      %c32_i32_287 = arith.constant 32 : i32
      %441 = arith.muli %404, %c32_i32_287 : i32
      %c28_i32_288 = arith.constant 28 : i32
      %442 = arith.addi %441, %c28_i32_288 : i32
      %443 = arith.index_cast %442 : i32 to index
      %444 = memref.load %arg2[%443] : memref<1568xf32, #tpu.memory_space<smem>>
      %445 = vector.broadcast %444 : f32 to vector<16x38xf32>
      %446 = arith.mulf %445, %407 : vector<16x38xf32>
      %447 = arith.addf %387, %446 : vector<16x38xf32>
      %c32_i32_289 = arith.constant 32 : i32
      %448 = arith.muli %404, %c32_i32_289 : i32
      %c28_i32_290 = arith.constant 28 : i32
      %449 = arith.addi %448, %c28_i32_290 : i32
      %c1_i32_291 = arith.constant 1 : i32
      %450 = arith.addi %449, %c1_i32_291 : i32
      %451 = arith.index_cast %450 : i32 to index
      %452 = memref.load %arg2[%451] : memref<1568xf32, #tpu.memory_space<smem>>
      %453 = vector.broadcast %452 : f32 to vector<16x38xf32>
      %454 = arith.mulf %453, %410 : vector<16x38xf32>
      %455 = arith.addf %447, %454 : vector<16x38xf32>
      %c32_i32_292 = arith.constant 32 : i32
      %456 = arith.muli %404, %c32_i32_292 : i32
      %c30_i32_293 = arith.constant 30 : i32
      %457 = arith.addi %456, %c30_i32_293 : i32
      %458 = arith.index_cast %457 : i32 to index
      %459 = memref.load %arg2[%458] : memref<1568xf32, #tpu.memory_space<smem>>
      %460 = vector.broadcast %459 : f32 to vector<16x38xf32>
      %461 = arith.mulf %460, %407 : vector<16x38xf32>
      %462 = arith.addf %402, %461 : vector<16x38xf32>
      %c32_i32_294 = arith.constant 32 : i32
      %463 = arith.muli %404, %c32_i32_294 : i32
      %c30_i32_295 = arith.constant 30 : i32
      %464 = arith.addi %463, %c30_i32_295 : i32
      %c1_i32_296 = arith.constant 1 : i32
      %465 = arith.addi %464, %c1_i32_296 : i32
      %466 = arith.index_cast %465 : i32 to index
      %467 = memref.load %arg2[%466] : memref<1568xf32, #tpu.memory_space<smem>>
      %468 = vector.broadcast %467 : f32 to vector<16x38xf32>
      %469 = arith.mulf %468, %410 : vector<16x38xf32>
      %470 = arith.addf %462, %469 : vector<16x38xf32>
      %c7_i32_297 = arith.constant 7 : i32
      %471 = arith.muli %190, %c7_i32_297 : i32
      %c4_i32 = arith.constant 4 : i32
      %472 = arith.addi %471, %c4_i32 : i32
      %c0_298 = arith.constant 0 : index
      %473 = arith.index_cast %190 : i32 to index
      %c4_299 = arith.constant 4 : index
      %474 = vector.load %arg5[%c0_298, %473, %c4_299] : memref<2x22x44xf32, #tpu.memory_space<vmem>>, vector<1x16x38xf32>
      %475 = vector.shape_cast %474 : vector<1x16x38xf32> to vector<16x38xf32>
      %c1_300 = arith.constant 1 : index
      %476 = arith.index_cast %190 : i32 to index
      %c4_301 = arith.constant 4 : index
      %477 = vector.load %arg5[%c1_300, %476, %c4_301] : memref<2x22x44xf32, #tpu.memory_space<vmem>>, vector<1x16x38xf32>
      %478 = vector.shape_cast %477 : vector<1x16x38xf32> to vector<16x38xf32>
      %c32_i32_302 = arith.constant 32 : i32
      %479 = arith.muli %472, %c32_i32_302 : i32
      %c24_i32_303 = arith.constant 24 : i32
      %480 = arith.addi %479, %c24_i32_303 : i32
      %481 = arith.index_cast %480 : i32 to index
      %482 = memref.load %arg2[%481] : memref<1568xf32, #tpu.memory_space<smem>>
      %483 = vector.broadcast %482 : f32 to vector<16x38xf32>
      %484 = arith.mulf %483, %475 : vector<16x38xf32>
      %485 = arith.addf %425, %484 : vector<16x38xf32>
      %c32_i32_304 = arith.constant 32 : i32
      %486 = arith.muli %472, %c32_i32_304 : i32
      %c24_i32_305 = arith.constant 24 : i32
      %487 = arith.addi %486, %c24_i32_305 : i32
      %c1_i32_306 = arith.constant 1 : i32
      %488 = arith.addi %487, %c1_i32_306 : i32
      %489 = arith.index_cast %488 : i32 to index
      %490 = memref.load %arg2[%489] : memref<1568xf32, #tpu.memory_space<smem>>
      %491 = vector.broadcast %490 : f32 to vector<16x38xf32>
      %492 = arith.mulf %491, %478 : vector<16x38xf32>
      %493 = arith.addf %485, %492 : vector<16x38xf32>
      %c32_i32_307 = arith.constant 32 : i32
      %494 = arith.muli %472, %c32_i32_307 : i32
      %c26_i32_308 = arith.constant 26 : i32
      %495 = arith.addi %494, %c26_i32_308 : i32
      %496 = arith.index_cast %495 : i32 to index
      %497 = memref.load %arg2[%496] : memref<1568xf32, #tpu.memory_space<smem>>
      %498 = vector.broadcast %497 : f32 to vector<16x38xf32>
      %499 = arith.mulf %498, %475 : vector<16x38xf32>
      %500 = arith.addf %440, %499 : vector<16x38xf32>
      %c32_i32_309 = arith.constant 32 : i32
      %501 = arith.muli %472, %c32_i32_309 : i32
      %c26_i32_310 = arith.constant 26 : i32
      %502 = arith.addi %501, %c26_i32_310 : i32
      %c1_i32_311 = arith.constant 1 : i32
      %503 = arith.addi %502, %c1_i32_311 : i32
      %504 = arith.index_cast %503 : i32 to index
      %505 = memref.load %arg2[%504] : memref<1568xf32, #tpu.memory_space<smem>>
      %506 = vector.broadcast %505 : f32 to vector<16x38xf32>
      %507 = arith.mulf %506, %478 : vector<16x38xf32>
      %508 = arith.addf %500, %507 : vector<16x38xf32>
      %c32_i32_312 = arith.constant 32 : i32
      %509 = arith.muli %472, %c32_i32_312 : i32
      %c28_i32_313 = arith.constant 28 : i32
      %510 = arith.addi %509, %c28_i32_313 : i32
      %511 = arith.index_cast %510 : i32 to index
      %512 = memref.load %arg2[%511] : memref<1568xf32, #tpu.memory_space<smem>>
      %513 = vector.broadcast %512 : f32 to vector<16x38xf32>
      %514 = arith.mulf %513, %475 : vector<16x38xf32>
      %515 = arith.addf %455, %514 : vector<16x38xf32>
      %c32_i32_314 = arith.constant 32 : i32
      %516 = arith.muli %472, %c32_i32_314 : i32
      %c28_i32_315 = arith.constant 28 : i32
      %517 = arith.addi %516, %c28_i32_315 : i32
      %c1_i32_316 = arith.constant 1 : i32
      %518 = arith.addi %517, %c1_i32_316 : i32
      %519 = arith.index_cast %518 : i32 to index
      %520 = memref.load %arg2[%519] : memref<1568xf32, #tpu.memory_space<smem>>
      %521 = vector.broadcast %520 : f32 to vector<16x38xf32>
      %522 = arith.mulf %521, %478 : vector<16x38xf32>
      %523 = arith.addf %515, %522 : vector<16x38xf32>
      %c32_i32_317 = arith.constant 32 : i32
      %524 = arith.muli %472, %c32_i32_317 : i32
      %c30_i32_318 = arith.constant 30 : i32
      %525 = arith.addi %524, %c30_i32_318 : i32
      %526 = arith.index_cast %525 : i32 to index
      %527 = memref.load %arg2[%526] : memref<1568xf32, #tpu.memory_space<smem>>
      %528 = vector.broadcast %527 : f32 to vector<16x38xf32>
      %529 = arith.mulf %528, %475 : vector<16x38xf32>
      %530 = arith.addf %470, %529 : vector<16x38xf32>
      %c32_i32_319 = arith.constant 32 : i32
      %531 = arith.muli %472, %c32_i32_319 : i32
      %c30_i32_320 = arith.constant 30 : i32
      %532 = arith.addi %531, %c30_i32_320 : i32
      %c1_i32_321 = arith.constant 1 : i32
      %533 = arith.addi %532, %c1_i32_321 : i32
      %534 = arith.index_cast %533 : i32 to index
      %535 = memref.load %arg2[%534] : memref<1568xf32, #tpu.memory_space<smem>>
      %536 = vector.broadcast %535 : f32 to vector<16x38xf32>
      %537 = arith.mulf %536, %478 : vector<16x38xf32>
      %538 = arith.addf %530, %537 : vector<16x38xf32>
      %c7_i32_322 = arith.constant 7 : i32
      %539 = arith.muli %190, %c7_i32_322 : i32
      %c5_i32 = arith.constant 5 : i32
      %540 = arith.addi %539, %c5_i32 : i32
      %c0_323 = arith.constant 0 : index
      %541 = arith.index_cast %190 : i32 to index
      %c5_324 = arith.constant 5 : index
      %542 = vector.load %arg5[%c0_323, %541, %c5_324] : memref<2x22x44xf32, #tpu.memory_space<vmem>>, vector<1x16x38xf32>
      %543 = vector.shape_cast %542 : vector<1x16x38xf32> to vector<16x38xf32>
      %c1_325 = arith.constant 1 : index
      %544 = arith.index_cast %190 : i32 to index
      %c5_326 = arith.constant 5 : index
      %545 = vector.load %arg5[%c1_325, %544, %c5_326] : memref<2x22x44xf32, #tpu.memory_space<vmem>>, vector<1x16x38xf32>
      %546 = vector.shape_cast %545 : vector<1x16x38xf32> to vector<16x38xf32>
      %c32_i32_327 = arith.constant 32 : i32
      %547 = arith.muli %540, %c32_i32_327 : i32
      %c24_i32_328 = arith.constant 24 : i32
      %548 = arith.addi %547, %c24_i32_328 : i32
      %549 = arith.index_cast %548 : i32 to index
      %550 = memref.load %arg2[%549] : memref<1568xf32, #tpu.memory_space<smem>>
      %551 = vector.broadcast %550 : f32 to vector<16x38xf32>
      %552 = arith.mulf %551, %543 : vector<16x38xf32>
      %553 = arith.addf %493, %552 : vector<16x38xf32>
      %c32_i32_329 = arith.constant 32 : i32
      %554 = arith.muli %540, %c32_i32_329 : i32
      %c24_i32_330 = arith.constant 24 : i32
      %555 = arith.addi %554, %c24_i32_330 : i32
      %c1_i32_331 = arith.constant 1 : i32
      %556 = arith.addi %555, %c1_i32_331 : i32
      %557 = arith.index_cast %556 : i32 to index
      %558 = memref.load %arg2[%557] : memref<1568xf32, #tpu.memory_space<smem>>
      %559 = vector.broadcast %558 : f32 to vector<16x38xf32>
      %560 = arith.mulf %559, %546 : vector<16x38xf32>
      %561 = arith.addf %553, %560 : vector<16x38xf32>
      %c32_i32_332 = arith.constant 32 : i32
      %562 = arith.muli %540, %c32_i32_332 : i32
      %c26_i32_333 = arith.constant 26 : i32
      %563 = arith.addi %562, %c26_i32_333 : i32
      %564 = arith.index_cast %563 : i32 to index
      %565 = memref.load %arg2[%564] : memref<1568xf32, #tpu.memory_space<smem>>
      %566 = vector.broadcast %565 : f32 to vector<16x38xf32>
      %567 = arith.mulf %566, %543 : vector<16x38xf32>
      %568 = arith.addf %508, %567 : vector<16x38xf32>
      %c32_i32_334 = arith.constant 32 : i32
      %569 = arith.muli %540, %c32_i32_334 : i32
      %c26_i32_335 = arith.constant 26 : i32
      %570 = arith.addi %569, %c26_i32_335 : i32
      %c1_i32_336 = arith.constant 1 : i32
      %571 = arith.addi %570, %c1_i32_336 : i32
      %572 = arith.index_cast %571 : i32 to index
      %573 = memref.load %arg2[%572] : memref<1568xf32, #tpu.memory_space<smem>>
      %574 = vector.broadcast %573 : f32 to vector<16x38xf32>
      %575 = arith.mulf %574, %546 : vector<16x38xf32>
      %576 = arith.addf %568, %575 : vector<16x38xf32>
      %c32_i32_337 = arith.constant 32 : i32
      %577 = arith.muli %540, %c32_i32_337 : i32
      %c28_i32_338 = arith.constant 28 : i32
      %578 = arith.addi %577, %c28_i32_338 : i32
      %579 = arith.index_cast %578 : i32 to index
      %580 = memref.load %arg2[%579] : memref<1568xf32, #tpu.memory_space<smem>>
      %581 = vector.broadcast %580 : f32 to vector<16x38xf32>
      %582 = arith.mulf %581, %543 : vector<16x38xf32>
      %583 = arith.addf %523, %582 : vector<16x38xf32>
      %c32_i32_339 = arith.constant 32 : i32
      %584 = arith.muli %540, %c32_i32_339 : i32
      %c28_i32_340 = arith.constant 28 : i32
      %585 = arith.addi %584, %c28_i32_340 : i32
      %c1_i32_341 = arith.constant 1 : i32
      %586 = arith.addi %585, %c1_i32_341 : i32
      %587 = arith.index_cast %586 : i32 to index
      %588 = memref.load %arg2[%587] : memref<1568xf32, #tpu.memory_space<smem>>
      %589 = vector.broadcast %588 : f32 to vector<16x38xf32>
      %590 = arith.mulf %589, %546 : vector<16x38xf32>
      %591 = arith.addf %583, %590 : vector<16x38xf32>
      %c32_i32_342 = arith.constant 32 : i32
      %592 = arith.muli %540, %c32_i32_342 : i32
      %c30_i32_343 = arith.constant 30 : i32
      %593 = arith.addi %592, %c30_i32_343 : i32
      %594 = arith.index_cast %593 : i32 to index
      %595 = memref.load %arg2[%594] : memref<1568xf32, #tpu.memory_space<smem>>
      %596 = vector.broadcast %595 : f32 to vector<16x38xf32>
      %597 = arith.mulf %596, %543 : vector<16x38xf32>
      %598 = arith.addf %538, %597 : vector<16x38xf32>
      %c32_i32_344 = arith.constant 32 : i32
      %599 = arith.muli %540, %c32_i32_344 : i32
      %c30_i32_345 = arith.constant 30 : i32
      %600 = arith.addi %599, %c30_i32_345 : i32
      %c1_i32_346 = arith.constant 1 : i32
      %601 = arith.addi %600, %c1_i32_346 : i32
      %602 = arith.index_cast %601 : i32 to index
      %603 = memref.load %arg2[%602] : memref<1568xf32, #tpu.memory_space<smem>>
      %604 = vector.broadcast %603 : f32 to vector<16x38xf32>
      %605 = arith.mulf %604, %546 : vector<16x38xf32>
      %606 = arith.addf %598, %605 : vector<16x38xf32>
      %c7_i32_347 = arith.constant 7 : i32
      %607 = arith.muli %190, %c7_i32_347 : i32
      %c6_i32 = arith.constant 6 : i32
      %608 = arith.addi %607, %c6_i32 : i32
      %c0_348 = arith.constant 0 : index
      %609 = arith.index_cast %190 : i32 to index
      %c6_349 = arith.constant 6 : index
      %610 = vector.load %arg5[%c0_348, %609, %c6_349] : memref<2x22x44xf32, #tpu.memory_space<vmem>>, vector<1x16x38xf32>
      %611 = vector.shape_cast %610 : vector<1x16x38xf32> to vector<16x38xf32>
      %c1_350 = arith.constant 1 : index
      %612 = arith.index_cast %190 : i32 to index
      %c6_351 = arith.constant 6 : index
      %613 = vector.load %arg5[%c1_350, %612, %c6_351] : memref<2x22x44xf32, #tpu.memory_space<vmem>>, vector<1x16x38xf32>
      %614 = vector.shape_cast %613 : vector<1x16x38xf32> to vector<16x38xf32>
      %c32_i32_352 = arith.constant 32 : i32
      %615 = arith.muli %608, %c32_i32_352 : i32
      %c24_i32_353 = arith.constant 24 : i32
      %616 = arith.addi %615, %c24_i32_353 : i32
      %617 = arith.index_cast %616 : i32 to index
      %618 = memref.load %arg2[%617] : memref<1568xf32, #tpu.memory_space<smem>>
      %619 = vector.broadcast %618 : f32 to vector<16x38xf32>
      %620 = arith.mulf %619, %611 : vector<16x38xf32>
      %621 = arith.addf %561, %620 : vector<16x38xf32>
      %c32_i32_354 = arith.constant 32 : i32
      %622 = arith.muli %608, %c32_i32_354 : i32
      %c24_i32_355 = arith.constant 24 : i32
      %623 = arith.addi %622, %c24_i32_355 : i32
      %c1_i32_356 = arith.constant 1 : i32
      %624 = arith.addi %623, %c1_i32_356 : i32
      %625 = arith.index_cast %624 : i32 to index
      %626 = memref.load %arg2[%625] : memref<1568xf32, #tpu.memory_space<smem>>
      %627 = vector.broadcast %626 : f32 to vector<16x38xf32>
      %628 = arith.mulf %627, %614 : vector<16x38xf32>
      %629 = arith.addf %621, %628 : vector<16x38xf32>
      %c32_i32_357 = arith.constant 32 : i32
      %630 = arith.muli %608, %c32_i32_357 : i32
      %c26_i32_358 = arith.constant 26 : i32
      %631 = arith.addi %630, %c26_i32_358 : i32
      %632 = arith.index_cast %631 : i32 to index
      %633 = memref.load %arg2[%632] : memref<1568xf32, #tpu.memory_space<smem>>
      %634 = vector.broadcast %633 : f32 to vector<16x38xf32>
      %635 = arith.mulf %634, %611 : vector<16x38xf32>
      %636 = arith.addf %576, %635 : vector<16x38xf32>
      %c32_i32_359 = arith.constant 32 : i32
      %637 = arith.muli %608, %c32_i32_359 : i32
      %c26_i32_360 = arith.constant 26 : i32
      %638 = arith.addi %637, %c26_i32_360 : i32
      %c1_i32_361 = arith.constant 1 : i32
      %639 = arith.addi %638, %c1_i32_361 : i32
      %640 = arith.index_cast %639 : i32 to index
      %641 = memref.load %arg2[%640] : memref<1568xf32, #tpu.memory_space<smem>>
      %642 = vector.broadcast %641 : f32 to vector<16x38xf32>
      %643 = arith.mulf %642, %614 : vector<16x38xf32>
      %644 = arith.addf %636, %643 : vector<16x38xf32>
      %c32_i32_362 = arith.constant 32 : i32
      %645 = arith.muli %608, %c32_i32_362 : i32
      %c28_i32_363 = arith.constant 28 : i32
      %646 = arith.addi %645, %c28_i32_363 : i32
      %647 = arith.index_cast %646 : i32 to index
      %648 = memref.load %arg2[%647] : memref<1568xf32, #tpu.memory_space<smem>>
      %649 = vector.broadcast %648 : f32 to vector<16x38xf32>
      %650 = arith.mulf %649, %611 : vector<16x38xf32>
      %651 = arith.addf %591, %650 : vector<16x38xf32>
      %c32_i32_364 = arith.constant 32 : i32
      %652 = arith.muli %608, %c32_i32_364 : i32
      %c28_i32_365 = arith.constant 28 : i32
      %653 = arith.addi %652, %c28_i32_365 : i32
      %c1_i32_366 = arith.constant 1 : i32
      %654 = arith.addi %653, %c1_i32_366 : i32
      %655 = arith.index_cast %654 : i32 to index
      %656 = memref.load %arg2[%655] : memref<1568xf32, #tpu.memory_space<smem>>
      %657 = vector.broadcast %656 : f32 to vector<16x38xf32>
      %658 = arith.mulf %657, %614 : vector<16x38xf32>
      %659 = arith.addf %651, %658 : vector<16x38xf32>
      %c32_i32_367 = arith.constant 32 : i32
      %660 = arith.muli %608, %c32_i32_367 : i32
      %c30_i32_368 = arith.constant 30 : i32
      %661 = arith.addi %660, %c30_i32_368 : i32
      %662 = arith.index_cast %661 : i32 to index
      %663 = memref.load %arg2[%662] : memref<1568xf32, #tpu.memory_space<smem>>
      %664 = vector.broadcast %663 : f32 to vector<16x38xf32>
      %665 = arith.mulf %664, %611 : vector<16x38xf32>
      %666 = arith.addf %606, %665 : vector<16x38xf32>
      %c32_i32_369 = arith.constant 32 : i32
      %667 = arith.muli %608, %c32_i32_369 : i32
      %c30_i32_370 = arith.constant 30 : i32
      %668 = arith.addi %667, %c30_i32_370 : i32
      %c1_i32_371 = arith.constant 1 : i32
      %669 = arith.addi %668, %c1_i32_371 : i32
      %670 = arith.index_cast %669 : i32 to index
      %671 = memref.load %arg2[%670] : memref<1568xf32, #tpu.memory_space<smem>>
      %672 = vector.broadcast %671 : f32 to vector<16x38xf32>
      %673 = arith.mulf %672, %614 : vector<16x38xf32>
      %674 = arith.addf %666, %673 : vector<16x38xf32>
      %c0_372 = arith.constant 0 : index
      %c0_373 = arith.constant 0 : index
      %c0_374 = arith.constant 0 : index
      %675 = vector.load %arg7[%c0_372, %c0_373, %c0_374] : memref<4x16x38xf32, #tpu.memory_space<vmem>>, vector<1x16x38xf32>
      %676 = vector.shape_cast %675 : vector<1x16x38xf32> to vector<16x38xf32>
      %677 = vector.shape_cast %629 : vector<16x38xf32> to vector<1x16x38xf32>
      tpu.vector_store %arg7[%c0_372, %c0_373, %c0_374], %677 {strides = array<i32>} : memref<4x16x38xf32, #tpu.memory_space<vmem>>, vector<1x16x38xf32>,
      %c1_375 = arith.constant 1 : index
      %c0_376 = arith.constant 0 : index
      %c0_377 = arith.constant 0 : index
      %678 = vector.load %arg7[%c1_375, %c0_376, %c0_377] : memref<4x16x38xf32, #tpu.memory_space<vmem>>, vector<1x16x38xf32>
      %679 = vector.shape_cast %678 : vector<1x16x38xf32> to vector<16x38xf32>
      %680 = vector.shape_cast %644 : vector<16x38xf32> to vector<1x16x38xf32>
      tpu.vector_store %arg7[%c1_375, %c0_376, %c0_377], %680 {strides = array<i32>} : memref<4x16x38xf32, #tpu.memory_space<vmem>>, vector<1x16x38xf32>,
      %c2_378 = arith.constant 2 : index
      %c0_379 = arith.constant 0 : index
      %c0_380 = arith.constant 0 : index
      %681 = vector.load %arg7[%c2_378, %c0_379, %c0_380] : memref<4x16x38xf32, #tpu.memory_space<vmem>>, vector<1x16x38xf32>
      %682 = vector.shape_cast %681 : vector<1x16x38xf32> to vector<16x38xf32>
      %683 = vector.shape_cast %659 : vector<16x38xf32> to vector<1x16x38xf32>
      tpu.vector_store %arg7[%c2_378, %c0_379, %c0_380], %683 {strides = array<i32>} : memref<4x16x38xf32, #tpu.memory_space<vmem>>, vector<1x16x38xf32>,
      %c3_381 = arith.constant 3 : index
      %c0_382 = arith.constant 0 : index
      %c0_383 = arith.constant 0 : index
      %684 = vector.load %arg7[%c3_381, %c0_382, %c0_383] : memref<4x16x38xf32, #tpu.memory_space<vmem>>, vector<1x16x38xf32>
      %685 = vector.shape_cast %684 : vector<1x16x38xf32> to vector<16x38xf32>
      %686 = vector.shape_cast %674 : vector<16x38xf32> to vector<1x16x38xf32>
      tpu.vector_store %arg7[%c3_381, %c0_382, %c0_383], %686 {strides = array<i32>} : memref<4x16x38xf32, #tpu.memory_space<vmem>>, vector<1x16x38xf32>,
    }
    %c7_i32_143 = arith.constant 7 : i32
    %c0_144 = arith.constant 0 : index
    %c0_145 = arith.constant 0 : index
    %c0_146 = arith.constant 0 : index
    %144 = vector.load %arg7[%c0_144, %c0_145, %c0_146] : memref<4x16x38xf32, #tpu.memory_space<vmem>>, vector<1x16x38xf32>
    %145 = vector.shape_cast %144 : vector<1x16x38xf32> to vector<16x38xf32>
    %cst_147 = arith.constant 0.000000e+00 : f32
    %146 = vector.broadcast %cst_147 : f32 to vector<16x38xf32>
    %147 = arith.select %47, %145, %146 : vector<16x38xi1>, vector<16x38xf32>
    %c12 = arith.constant 12 : index
    %c3_148 = arith.constant 3 : index
    %c3_149 = arith.constant 3 : index
    %148 = vector.load %arg6[%c12, %c3_148, %c3_149] : memref<16x22x44xf32, #tpu.memory_space<vmem>>, vector<1x16x38xf32>
    %149 = vector.shape_cast %148 : vector<1x16x38xf32> to vector<16x38xf32>
    %150 = vector.shape_cast %147 : vector<16x38xf32> to vector<1x16x38xf32>
    tpu.vector_store %arg6[%c12, %c3_148, %c3_149], %150 {strides = array<i32>} : memref<16x22x44xf32, #tpu.memory_space<vmem>>, vector<1x16x38xf32>,
    %c1_150 = arith.constant 1 : index
    %c0_151 = arith.constant 0 : index
    %c0_152 = arith.constant 0 : index
    %151 = vector.load %arg7[%c1_150, %c0_151, %c0_152] : memref<4x16x38xf32, #tpu.memory_space<vmem>>, vector<1x16x38xf32>
    %152 = vector.shape_cast %151 : vector<1x16x38xf32> to vector<16x38xf32>
    %cst_153 = arith.constant 0.000000e+00 : f32
    %153 = vector.broadcast %cst_153 : f32 to vector<16x38xf32>
    %154 = arith.select %47, %152, %153 : vector<16x38xi1>, vector<16x38xf32>
    %c13 = arith.constant 13 : index
    %c3_154 = arith.constant 3 : index
    %c3_155 = arith.constant 3 : index
    %155 = vector.load %arg6[%c13, %c3_154, %c3_155] : memref<16x22x44xf32, #tpu.memory_space<vmem>>, vector<1x16x38xf32>
    %156 = vector.shape_cast %155 : vector<1x16x38xf32> to vector<16x38xf32>
    %157 = vector.shape_cast %154 : vector<16x38xf32> to vector<1x16x38xf32>
    tpu.vector_store %arg6[%c13, %c3_154, %c3_155], %157 {strides = array<i32>} : memref<16x22x44xf32, #tpu.memory_space<vmem>>, vector<1x16x38xf32>,
    %c2_156 = arith.constant 2 : index
    %c0_157 = arith.constant 0 : index
    %c0_158 = arith.constant 0 : index
    %158 = vector.load %arg7[%c2_156, %c0_157, %c0_158] : memref<4x16x38xf32, #tpu.memory_space<vmem>>, vector<1x16x38xf32>
    %159 = vector.shape_cast %158 : vector<1x16x38xf32> to vector<16x38xf32>
    %cst_159 = arith.constant 0.000000e+00 : f32
    %160 = vector.broadcast %cst_159 : f32 to vector<16x38xf32>
    %161 = arith.select %47, %159, %160 : vector<16x38xi1>, vector<16x38xf32>
    %c14 = arith.constant 14 : index
    %c3_160 = arith.constant 3 : index
    %c3_161 = arith.constant 3 : index
    %162 = vector.load %arg6[%c14, %c3_160, %c3_161] : memref<16x22x44xf32, #tpu.memory_space<vmem>>, vector<1x16x38xf32>
    %163 = vector.shape_cast %162 : vector<1x16x38xf32> to vector<16x38xf32>
    %164 = vector.shape_cast %161 : vector<16x38xf32> to vector<1x16x38xf32>
    tpu.vector_store %arg6[%c14, %c3_160, %c3_161], %164 {strides = array<i32>} : memref<16x22x44xf32, #tpu.memory_space<vmem>>, vector<1x16x38xf32>,
    %c3_162 = arith.constant 3 : index
    %c0_163 = arith.constant 0 : index
    %c0_164 = arith.constant 0 : index
    %165 = vector.load %arg7[%c3_162, %c0_163, %c0_164] : memref<4x16x38xf32, #tpu.memory_space<vmem>>, vector<1x16x38xf32>
    %166 = vector.shape_cast %165 : vector<1x16x38xf32> to vector<16x38xf32>
    %cst_165 = arith.constant 0.000000e+00 : f32
    %167 = vector.broadcast %cst_165 : f32 to vector<16x38xf32>
    %168 = arith.select %47, %166, %167 : vector<16x38xi1>, vector<16x38xf32>
    %c15 = arith.constant 15 : index
    %c3_166 = arith.constant 3 : index
    %c3_167 = arith.constant 3 : index
    %169 = vector.load %arg6[%c15, %c3_166, %c3_167] : memref<16x22x44xf32, #tpu.memory_space<vmem>>, vector<1x16x38xf32>
    %170 = vector.shape_cast %169 : vector<1x16x38xf32> to vector<16x38xf32>
    %171 = vector.shape_cast %168 : vector<16x38xf32> to vector<1x16x38xf32>
    tpu.vector_store %arg6[%c15, %c3_166, %c3_167], %171 {strides = array<i32>} : memref<16x22x44xf32, #tpu.memory_space<vmem>>, vector<1x16x38xf32>,
    %cst_168 = arith.constant 0.000000e+00 : f32
    %172 = vector.broadcast %cst_168 : f32 to vector<16x38xf32>
    %c0_169 = arith.constant 0 : index
    %c0_170 = arith.constant 0 : index
    %173 = vector.load %arg8[%c0_169, %c0_170] : memref<16x38xf32, #tpu.memory_space<vmem>>, vector<16x38xf32>
    tpu.vector_store %arg8[%c0_169, %c0_170], %172 {strides = array<i32>} : memref<16x38xf32, #tpu.memory_space<vmem>>, vector<16x38xf32>,
    %c0_i32_171 = arith.constant 0 : i32
    %c7_i32_172 = arith.constant 7 : i32
    %174 = arith.addi %c0_i32_171, %c7_i32_172 : i32
    %c1_i32_173 = arith.constant 1 : i32
    scf.for %arg9 = %c0_i32_171 to %174 step %c1_i32_173  : i32 {
      %c1_i32_186 = arith.constant 1 : i32
      %189 = arith.muli %arg9, %c1_i32_186 : i32
      %c0_i32_187 = arith.constant 0 : i32
      %190 = arith.addi %c0_i32_187, %189 : i32
      %c0_188 = arith.constant 0 : index
      %c0_189 = arith.constant 0 : index
      %191 = vector.load %arg8[%c0_188, %c0_189] : memref<16x38xf32, #tpu.memory_space<vmem>>, vector<16x38xf32>
      %c7_i32_190 = arith.constant 7 : i32
      %192 = arith.muli %190, %c7_i32_190 : i32
      %c0_i32_191 = arith.constant 0 : i32
      %193 = arith.addi %192, %c0_i32_191 : i32
      %c16_i32_192 = arith.constant 16 : i32
      %194 = arith.muli %193, %c16_i32_192 : i32
      %c0_i32_193 = arith.constant 0 : i32
      %195 = arith.addi %194, %c0_i32_193 : i32
      %196 = arith.index_cast %195 : i32 to index
      %197 = memref.load %arg3[%196] : memref<784xf32, #tpu.memory_space<smem>>
      %c0_194 = arith.constant 0 : index
      %198 = arith.index_cast %190 : i32 to index
      %c0_195 = arith.constant 0 : index
      %199 = vector.load %arg6[%c0_194, %198, %c0_195] : memref<16x22x44xf32, #tpu.memory_space<vmem>>, vector<1x16x38xf32>
      %200 = vector.shape_cast %199 : vector<1x16x38xf32> to vector<16x38xf32>
      %201 = vector.broadcast %197 : f32 to vector<16x38xf32>
      %202 = arith.mulf %201, %200 : vector<16x38xf32>
      %203 = arith.addf %191, %202 : vector<16x38xf32>
      %c16_i32_196 = arith.constant 16 : i32
      %204 = arith.muli %193, %c16_i32_196 : i32
      %c1_i32_197 = arith.constant 1 : i32
      %205 = arith.addi %204, %c1_i32_197 : i32
      %206 = arith.index_cast %205 : i32 to index
      %207 = memref.load %arg3[%206] : memref<784xf32, #tpu.memory_space<smem>>
      %c1_198 = arith.constant 1 : index
      %208 = arith.index_cast %190 : i32 to index
      %c0_199 = arith.constant 0 : index
      %209 = vector.load %arg6[%c1_198, %208, %c0_199] : memref<16x22x44xf32, #tpu.memory_space<vmem>>, vector<1x16x38xf32>
      %210 = vector.shape_cast %209 : vector<1x16x38xf32> to vector<16x38xf32>
      %211 = vector.broadcast %207 : f32 to vector<16x38xf32>
      %212 = arith.mulf %211, %210 : vector<16x38xf32>
      %213 = arith.addf %203, %212 : vector<16x38xf32>
      %c16_i32_200 = arith.constant 16 : i32
      %214 = arith.muli %193, %c16_i32_200 : i32
      %c2_i32 = arith.constant 2 : i32
      %215 = arith.addi %214, %c2_i32 : i32
      %216 = arith.index_cast %215 : i32 to index
      %217 = memref.load %arg3[%216] : memref<784xf32, #tpu.memory_space<smem>>
      %c2_201 = arith.constant 2 : index
      %218 = arith.index_cast %190 : i32 to index
      %c0_202 = arith.constant 0 : index
      %219 = vector.load %arg6[%c2_201, %218, %c0_202] : memref<16x22x44xf32, #tpu.memory_space<vmem>>, vector<1x16x38xf32>
      %220 = vector.shape_cast %219 : vector<1x16x38xf32> to vector<16x38xf32>
      %221 = vector.broadcast %217 : f32 to vector<16x38xf32>
      %222 = arith.mulf %221, %220 : vector<16x38xf32>
      %223 = arith.addf %213, %222 : vector<16x38xf32>
      %c16_i32_203 = arith.constant 16 : i32
      %224 = arith.muli %193, %c16_i32_203 : i32
      %c3_i32 = arith.constant 3 : i32
      %225 = arith.addi %224, %c3_i32 : i32
      %226 = arith.index_cast %225 : i32 to index
      %227 = memref.load %arg3[%226] : memref<784xf32, #tpu.memory_space<smem>>
      %c3_204 = arith.constant 3 : index
      %228 = arith.index_cast %190 : i32 to index
      %c0_205 = arith.constant 0 : index
      %229 = vector.load %arg6[%c3_204, %228, %c0_205] : memref<16x22x44xf32, #tpu.memory_space<vmem>>, vector<1x16x38xf32>
      %230 = vector.shape_cast %229 : vector<1x16x38xf32> to vector<16x38xf32>
      %231 = vector.broadcast %227 : f32 to vector<16x38xf32>
      %232 = arith.mulf %231, %230 : vector<16x38xf32>
      %233 = arith.addf %223, %232 : vector<16x38xf32>
      %c16_i32_206 = arith.constant 16 : i32
      %234 = arith.muli %193, %c16_i32_206 : i32
      %c4_i32 = arith.constant 4 : i32
      %235 = arith.addi %234, %c4_i32 : i32
      %236 = arith.index_cast %235 : i32 to index
      %237 = memref.load %arg3[%236] : memref<784xf32, #tpu.memory_space<smem>>
      %c4_207 = arith.constant 4 : index
      %238 = arith.index_cast %190 : i32 to index
      %c0_208 = arith.constant 0 : index
      %239 = vector.load %arg6[%c4_207, %238, %c0_208] : memref<16x22x44xf32, #tpu.memory_space<vmem>>, vector<1x16x38xf32>
      %240 = vector.shape_cast %239 : vector<1x16x38xf32> to vector<16x38xf32>
      %241 = vector.broadcast %237 : f32 to vector<16x38xf32>
      %242 = arith.mulf %241, %240 : vector<16x38xf32>
      %243 = arith.addf %233, %242 : vector<16x38xf32>
      %c16_i32_209 = arith.constant 16 : i32
      %244 = arith.muli %193, %c16_i32_209 : i32
      %c5_i32 = arith.constant 5 : i32
      %245 = arith.addi %244, %c5_i32 : i32
      %246 = arith.index_cast %245 : i32 to index
      %247 = memref.load %arg3[%246] : memref<784xf32, #tpu.memory_space<smem>>
      %c5_210 = arith.constant 5 : index
      %248 = arith.index_cast %190 : i32 to index
      %c0_211 = arith.constant 0 : index
      %249 = vector.load %arg6[%c5_210, %248, %c0_211] : memref<16x22x44xf32, #tpu.memory_space<vmem>>, vector<1x16x38xf32>
      %250 = vector.shape_cast %249 : vector<1x16x38xf32> to vector<16x38xf32>
      %251 = vector.broadcast %247 : f32 to vector<16x38xf32>
      %252 = arith.mulf %251, %250 : vector<16x38xf32>
      %253 = arith.addf %243, %252 : vector<16x38xf32>
      %c16_i32_212 = arith.constant 16 : i32
      %254 = arith.muli %193, %c16_i32_212 : i32
      %c6_i32 = arith.constant 6 : i32
      %255 = arith.addi %254, %c6_i32 : i32
      %256 = arith.index_cast %255 : i32 to index
      %257 = memref.load %arg3[%256] : memref<784xf32, #tpu.memory_space<smem>>
      %c6_213 = arith.constant 6 : index
      %258 = arith.index_cast %190 : i32 to index
      %c0_214 = arith.constant 0 : index
      %259 = vector.load %arg6[%c6_213, %258, %c0_214] : memref<16x22x44xf32, #tpu.memory_space<vmem>>, vector<1x16x38xf32>
      %260 = vector.shape_cast %259 : vector<1x16x38xf32> to vector<16x38xf32>
      %261 = vector.broadcast %257 : f32 to vector<16x38xf32>
      %262 = arith.mulf %261, %260 : vector<16x38xf32>
      %263 = arith.addf %253, %262 : vector<16x38xf32>
      %c16_i32_215 = arith.constant 16 : i32
      %264 = arith.muli %193, %c16_i32_215 : i32
      %c7_i32_216 = arith.constant 7 : i32
      %265 = arith.addi %264, %c7_i32_216 : i32
      %266 = arith.index_cast %265 : i32 to index
      %267 = memref.load %arg3[%266] : memref<784xf32, #tpu.memory_space<smem>>
      %c7_217 = arith.constant 7 : index
      %268 = arith.index_cast %190 : i32 to index
      %c0_218 = arith.constant 0 : index
      %269 = vector.load %arg6[%c7_217, %268, %c0_218] : memref<16x22x44xf32, #tpu.memory_space<vmem>>, vector<1x16x38xf32>
      %270 = vector.shape_cast %269 : vector<1x16x38xf32> to vector<16x38xf32>
      %271 = vector.broadcast %267 : f32 to vector<16x38xf32>
      %272 = arith.mulf %271, %270 : vector<16x38xf32>
      %273 = arith.addf %263, %272 : vector<16x38xf32>
      %c16_i32_219 = arith.constant 16 : i32
      %274 = arith.muli %193, %c16_i32_219 : i32
      %c8_i32 = arith.constant 8 : i32
      %275 = arith.addi %274, %c8_i32 : i32
      %276 = arith.index_cast %275 : i32 to index
      %277 = memref.load %arg3[%276] : memref<784xf32, #tpu.memory_space<smem>>
      %c8_220 = arith.constant 8 : index
      %278 = arith.index_cast %190 : i32 to index
      %c0_221 = arith.constant 0 : index
      %279 = vector.load %arg6[%c8_220, %278, %c0_221] : memref<16x22x44xf32, #tpu.memory_space<vmem>>, vector<1x16x38xf32>
      %280 = vector.shape_cast %279 : vector<1x16x38xf32> to vector<16x38xf32>
      %281 = vector.broadcast %277 : f32 to vector<16x38xf32>
      %282 = arith.mulf %281, %280 : vector<16x38xf32>
      %283 = arith.addf %273, %282 : vector<16x38xf32>
      %c16_i32_222 = arith.constant 16 : i32
      %284 = arith.muli %193, %c16_i32_222 : i32
      %c9_i32 = arith.constant 9 : i32
      %285 = arith.addi %284, %c9_i32 : i32
      %286 = arith.index_cast %285 : i32 to index
      %287 = memref.load %arg3[%286] : memref<784xf32, #tpu.memory_space<smem>>
      %c9_223 = arith.constant 9 : index
      %288 = arith.index_cast %190 : i32 to index
      %c0_224 = arith.constant 0 : index
      %289 = vector.load %arg6[%c9_223, %288, %c0_224] : memref<16x22x44xf32, #tpu.memory_space<vmem>>, vector<1x16x38xf32>
      %290 = vector.shape_cast %289 : vector<1x16x38xf32> to vector<16x38xf32>
      %291 = vector.broadcast %287 : f32 to vector<16x38xf32>
      %292 = arith.mulf %291, %290 : vector<16x38xf32>
      %293 = arith.addf %283, %292 : vector<16x38xf32>
      %c16_i32_225 = arith.constant 16 : i32
      %294 = arith.muli %193, %c16_i32_225 : i32
      %c10_i32 = arith.constant 10 : i32
      %295 = arith.addi %294, %c10_i32 : i32
      %296 = arith.index_cast %295 : i32 to index
      %297 = memref.load %arg3[%296] : memref<784xf32, #tpu.memory_space<smem>>
      %c10_226 = arith.constant 10 : index
      %298 = arith.index_cast %190 : i32 to index
      %c0_227 = arith.constant 0 : index
      %299 = vector.load %arg6[%c10_226, %298, %c0_227] : memref<16x22x44xf32, #tpu.memory_space<vmem>>, vector<1x16x38xf32>
      %300 = vector.shape_cast %299 : vector<1x16x38xf32> to vector<16x38xf32>
      %301 = vector.broadcast %297 : f32 to vector<16x38xf32>
      %302 = arith.mulf %301, %300 : vector<16x38xf32>
      %303 = arith.addf %293, %302 : vector<16x38xf32>
      %c16_i32_228 = arith.constant 16 : i32
      %304 = arith.muli %193, %c16_i32_228 : i32
      %c11_i32 = arith.constant 11 : i32
      %305 = arith.addi %304, %c11_i32 : i32
      %306 = arith.index_cast %305 : i32 to index
      %307 = memref.load %arg3[%306] : memref<784xf32, #tpu.memory_space<smem>>
      %c11_229 = arith.constant 11 : index
      %308 = arith.index_cast %190 : i32 to index
      %c0_230 = arith.constant 0 : index
      %309 = vector.load %arg6[%c11_229, %308, %c0_230] : memref<16x22x44xf32, #tpu.memory_space<vmem>>, vector<1x16x38xf32>
      %310 = vector.shape_cast %309 : vector<1x16x38xf32> to vector<16x38xf32>
      %311 = vector.broadcast %307 : f32 to vector<16x38xf32>
      %312 = arith.mulf %311, %310 : vector<16x38xf32>
      %313 = arith.addf %303, %312 : vector<16x38xf32>
      %c16_i32_231 = arith.constant 16 : i32
      %314 = arith.muli %193, %c16_i32_231 : i32
      %c12_i32 = arith.constant 12 : i32
      %315 = arith.addi %314, %c12_i32 : i32
      %316 = arith.index_cast %315 : i32 to index
      %317 = memref.load %arg3[%316] : memref<784xf32, #tpu.memory_space<smem>>
      %c12_232 = arith.constant 12 : index
      %318 = arith.index_cast %190 : i32 to index
      %c0_233 = arith.constant 0 : index
      %319 = vector.load %arg6[%c12_232, %318, %c0_233] : memref<16x22x44xf32, #tpu.memory_space<vmem>>, vector<1x16x38xf32>
      %320 = vector.shape_cast %319 : vector<1x16x38xf32> to vector<16x38xf32>
      %321 = vector.broadcast %317 : f32 to vector<16x38xf32>
      %322 = arith.mulf %321, %320 : vector<16x38xf32>
      %323 = arith.addf %313, %322 : vector<16x38xf32>
      %c16_i32_234 = arith.constant 16 : i32
      %324 = arith.muli %193, %c16_i32_234 : i32
      %c13_i32 = arith.constant 13 : i32
      %325 = arith.addi %324, %c13_i32 : i32
      %326 = arith.index_cast %325 : i32 to index
      %327 = memref.load %arg3[%326] : memref<784xf32, #tpu.memory_space<smem>>
      %c13_235 = arith.constant 13 : index
      %328 = arith.index_cast %190 : i32 to index
      %c0_236 = arith.constant 0 : index
      %329 = vector.load %arg6[%c13_235, %328, %c0_236] : memref<16x22x44xf32, #tpu.memory_space<vmem>>, vector<1x16x38xf32>
      %330 = vector.shape_cast %329 : vector<1x16x38xf32> to vector<16x38xf32>
      %331 = vector.broadcast %327 : f32 to vector<16x38xf32>
      %332 = arith.mulf %331, %330 : vector<16x38xf32>
      %333 = arith.addf %323, %332 : vector<16x38xf32>
      %c16_i32_237 = arith.constant 16 : i32
      %334 = arith.muli %193, %c16_i32_237 : i32
      %c14_i32 = arith.constant 14 : i32
      %335 = arith.addi %334, %c14_i32 : i32
      %336 = arith.index_cast %335 : i32 to index
      %337 = memref.load %arg3[%336] : memref<784xf32, #tpu.memory_space<smem>>
      %c14_238 = arith.constant 14 : index
      %338 = arith.index_cast %190 : i32 to index
      %c0_239 = arith.constant 0 : index
      %339 = vector.load %arg6[%c14_238, %338, %c0_239] : memref<16x22x44xf32, #tpu.memory_space<vmem>>, vector<1x16x38xf32>
      %340 = vector.shape_cast %339 : vector<1x16x38xf32> to vector<16x38xf32>
      %341 = vector.broadcast %337 : f32 to vector<16x38xf32>
      %342 = arith.mulf %341, %340 : vector<16x38xf32>
      %343 = arith.addf %333, %342 : vector<16x38xf32>
      %c16_i32_240 = arith.constant 16 : i32
      %344 = arith.muli %193, %c16_i32_240 : i32
      %c15_i32 = arith.constant 15 : i32
      %345 = arith.addi %344, %c15_i32 : i32
      %346 = arith.index_cast %345 : i32 to index
      %347 = memref.load %arg3[%346] : memref<784xf32, #tpu.memory_space<smem>>
      %c15_241 = arith.constant 15 : index
      %348 = arith.index_cast %190 : i32 to index
      %c0_242 = arith.constant 0 : index
      %349 = vector.load %arg6[%c15_241, %348, %c0_242] : memref<16x22x44xf32, #tpu.memory_space<vmem>>, vector<1x16x38xf32>
      %350 = vector.shape_cast %349 : vector<1x16x38xf32> to vector<16x38xf32>
      %351 = vector.broadcast %347 : f32 to vector<16x38xf32>
      %352 = arith.mulf %351, %350 : vector<16x38xf32>
      %353 = arith.addf %343, %352 : vector<16x38xf32>
      %c7_i32_243 = arith.constant 7 : i32
      %354 = arith.muli %190, %c7_i32_243 : i32
      %c1_i32_244 = arith.constant 1 : i32
      %355 = arith.addi %354, %c1_i32_244 : i32
      %c16_i32_245 = arith.constant 16 : i32
      %356 = arith.muli %355, %c16_i32_245 : i32
      %c0_i32_246 = arith.constant 0 : i32
      %357 = arith.addi %356, %c0_i32_246 : i32
      %358 = arith.index_cast %357 : i32 to index
      %359 = memref.load %arg3[%358] : memref<784xf32, #tpu.memory_space<smem>>
      %c0_247 = arith.constant 0 : index
      %360 = arith.index_cast %190 : i32 to index
      %c1_248 = arith.constant 1 : index
      %361 = vector.load %arg6[%c0_247, %360, %c1_248] : memref<16x22x44xf32, #tpu.memory_space<vmem>>, vector<1x16x38xf32>
      %362 = vector.shape_cast %361 : vector<1x16x38xf32> to vector<16x38xf32>
      %363 = vector.broadcast %359 : f32 to vector<16x38xf32>
      %364 = arith.mulf %363, %362 : vector<16x38xf32>
      %365 = arith.addf %353, %364 : vector<16x38xf32>
      %c16_i32_249 = arith.constant 16 : i32
      %366 = arith.muli %355, %c16_i32_249 : i32
      %c1_i32_250 = arith.constant 1 : i32
      %367 = arith.addi %366, %c1_i32_250 : i32
      %368 = arith.index_cast %367 : i32 to index
      %369 = memref.load %arg3[%368] : memref<784xf32, #tpu.memory_space<smem>>
      %c1_251 = arith.constant 1 : index
      %370 = arith.index_cast %190 : i32 to index
      %c1_252 = arith.constant 1 : index
      %371 = vector.load %arg6[%c1_251, %370, %c1_252] : memref<16x22x44xf32, #tpu.memory_space<vmem>>, vector<1x16x38xf32>
      %372 = vector.shape_cast %371 : vector<1x16x38xf32> to vector<16x38xf32>
      %373 = vector.broadcast %369 : f32 to vector<16x38xf32>
      %374 = arith.mulf %373, %372 : vector<16x38xf32>
      %375 = arith.addf %365, %374 : vector<16x38xf32>
      %c16_i32_253 = arith.constant 16 : i32
      %376 = arith.muli %355, %c16_i32_253 : i32
      %c2_i32_254 = arith.constant 2 : i32
      %377 = arith.addi %376, %c2_i32_254 : i32
      %378 = arith.index_cast %377 : i32 to index
      %379 = memref.load %arg3[%378] : memref<784xf32, #tpu.memory_space<smem>>
      %c2_255 = arith.constant 2 : index
      %380 = arith.index_cast %190 : i32 to index
      %c1_256 = arith.constant 1 : index
      %381 = vector.load %arg6[%c2_255, %380, %c1_256] : memref<16x22x44xf32, #tpu.memory_space<vmem>>, vector<1x16x38xf32>
      %382 = vector.shape_cast %381 : vector<1x16x38xf32> to vector<16x38xf32>
      %383 = vector.broadcast %379 : f32 to vector<16x38xf32>
      %384 = arith.mulf %383, %382 : vector<16x38xf32>
      %385 = arith.addf %375, %384 : vector<16x38xf32>
      %c16_i32_257 = arith.constant 16 : i32
      %386 = arith.muli %355, %c16_i32_257 : i32
      %c3_i32_258 = arith.constant 3 : i32
      %387 = arith.addi %386, %c3_i32_258 : i32
      %388 = arith.index_cast %387 : i32 to index
      %389 = memref.load %arg3[%388] : memref<784xf32, #tpu.memory_space<smem>>
      %c3_259 = arith.constant 3 : index
      %390 = arith.index_cast %190 : i32 to index
      %c1_260 = arith.constant 1 : index
      %391 = vector.load %arg6[%c3_259, %390, %c1_260] : memref<16x22x44xf32, #tpu.memory_space<vmem>>, vector<1x16x38xf32>
      %392 = vector.shape_cast %391 : vector<1x16x38xf32> to vector<16x38xf32>
      %393 = vector.broadcast %389 : f32 to vector<16x38xf32>
      %394 = arith.mulf %393, %392 : vector<16x38xf32>
      %395 = arith.addf %385, %394 : vector<16x38xf32>
      %c16_i32_261 = arith.constant 16 : i32
      %396 = arith.muli %355, %c16_i32_261 : i32
      %c4_i32_262 = arith.constant 4 : i32
      %397 = arith.addi %396, %c4_i32_262 : i32
      %398 = arith.index_cast %397 : i32 to index
      %399 = memref.load %arg3[%398] : memref<784xf32, #tpu.memory_space<smem>>
      %c4_263 = arith.constant 4 : index
      %400 = arith.index_cast %190 : i32 to index
      %c1_264 = arith.constant 1 : index
      %401 = vector.load %arg6[%c4_263, %400, %c1_264] : memref<16x22x44xf32, #tpu.memory_space<vmem>>, vector<1x16x38xf32>
      %402 = vector.shape_cast %401 : vector<1x16x38xf32> to vector<16x38xf32>
      %403 = vector.broadcast %399 : f32 to vector<16x38xf32>
      %404 = arith.mulf %403, %402 : vector<16x38xf32>
      %405 = arith.addf %395, %404 : vector<16x38xf32>
      %c16_i32_265 = arith.constant 16 : i32
      %406 = arith.muli %355, %c16_i32_265 : i32
      %c5_i32_266 = arith.constant 5 : i32
      %407 = arith.addi %406, %c5_i32_266 : i32
      %408 = arith.index_cast %407 : i32 to index
      %409 = memref.load %arg3[%408] : memref<784xf32, #tpu.memory_space<smem>>
      %c5_267 = arith.constant 5 : index
      %410 = arith.index_cast %190 : i32 to index
      %c1_268 = arith.constant 1 : index
      %411 = vector.load %arg6[%c5_267, %410, %c1_268] : memref<16x22x44xf32, #tpu.memory_space<vmem>>, vector<1x16x38xf32>
      %412 = vector.shape_cast %411 : vector<1x16x38xf32> to vector<16x38xf32>
      %413 = vector.broadcast %409 : f32 to vector<16x38xf32>
      %414 = arith.mulf %413, %412 : vector<16x38xf32>
      %415 = arith.addf %405, %414 : vector<16x38xf32>
      %c16_i32_269 = arith.constant 16 : i32
      %416 = arith.muli %355, %c16_i32_269 : i32
      %c6_i32_270 = arith.constant 6 : i32
      %417 = arith.addi %416, %c6_i32_270 : i32
      %418 = arith.index_cast %417 : i32 to index
      %419 = memref.load %arg3[%418] : memref<784xf32, #tpu.memory_space<smem>>
      %c6_271 = arith.constant 6 : index
      %420 = arith.index_cast %190 : i32 to index
      %c1_272 = arith.constant 1 : index
      %421 = vector.load %arg6[%c6_271, %420, %c1_272] : memref<16x22x44xf32, #tpu.memory_space<vmem>>, vector<1x16x38xf32>
      %422 = vector.shape_cast %421 : vector<1x16x38xf32> to vector<16x38xf32>
      %423 = vector.broadcast %419 : f32 to vector<16x38xf32>
      %424 = arith.mulf %423, %422 : vector<16x38xf32>
      %425 = arith.addf %415, %424 : vector<16x38xf32>
      %c16_i32_273 = arith.constant 16 : i32
      %426 = arith.muli %355, %c16_i32_273 : i32
      %c7_i32_274 = arith.constant 7 : i32
      %427 = arith.addi %426, %c7_i32_274 : i32
      %428 = arith.index_cast %427 : i32 to index
      %429 = memref.load %arg3[%428] : memref<784xf32, #tpu.memory_space<smem>>
      %c7_275 = arith.constant 7 : index
      %430 = arith.index_cast %190 : i32 to index
      %c1_276 = arith.constant 1 : index
      %431 = vector.load %arg6[%c7_275, %430, %c1_276] : memref<16x22x44xf32, #tpu.memory_space<vmem>>, vector<1x16x38xf32>
      %432 = vector.shape_cast %431 : vector<1x16x38xf32> to vector<16x38xf32>
      %433 = vector.broadcast %429 : f32 to vector<16x38xf32>
      %434 = arith.mulf %433, %432 : vector<16x38xf32>
      %435 = arith.addf %425, %434 : vector<16x38xf32>
      %c16_i32_277 = arith.constant 16 : i32
      %436 = arith.muli %355, %c16_i32_277 : i32
      %c8_i32_278 = arith.constant 8 : i32
      %437 = arith.addi %436, %c8_i32_278 : i32
      %438 = arith.index_cast %437 : i32 to index
      %439 = memref.load %arg3[%438] : memref<784xf32, #tpu.memory_space<smem>>
      %c8_279 = arith.constant 8 : index
      %440 = arith.index_cast %190 : i32 to index
      %c1_280 = arith.constant 1 : index
      %441 = vector.load %arg6[%c8_279, %440, %c1_280] : memref<16x22x44xf32, #tpu.memory_space<vmem>>, vector<1x16x38xf32>
      %442 = vector.shape_cast %441 : vector<1x16x38xf32> to vector<16x38xf32>
      %443 = vector.broadcast %439 : f32 to vector<16x38xf32>
      %444 = arith.mulf %443, %442 : vector<16x38xf32>
      %445 = arith.addf %435, %444 : vector<16x38xf32>
      %c16_i32_281 = arith.constant 16 : i32
      %446 = arith.muli %355, %c16_i32_281 : i32
      %c9_i32_282 = arith.constant 9 : i32
      %447 = arith.addi %446, %c9_i32_282 : i32
      %448 = arith.index_cast %447 : i32 to index
      %449 = memref.load %arg3[%448] : memref<784xf32, #tpu.memory_space<smem>>
      %c9_283 = arith.constant 9 : index
      %450 = arith.index_cast %190 : i32 to index
      %c1_284 = arith.constant 1 : index
      %451 = vector.load %arg6[%c9_283, %450, %c1_284] : memref<16x22x44xf32, #tpu.memory_space<vmem>>, vector<1x16x38xf32>
      %452 = vector.shape_cast %451 : vector<1x16x38xf32> to vector<16x38xf32>
      %453 = vector.broadcast %449 : f32 to vector<16x38xf32>
      %454 = arith.mulf %453, %452 : vector<16x38xf32>
      %455 = arith.addf %445, %454 : vector<16x38xf32>
      %c16_i32_285 = arith.constant 16 : i32
      %456 = arith.muli %355, %c16_i32_285 : i32
      %c10_i32_286 = arith.constant 10 : i32
      %457 = arith.addi %456, %c10_i32_286 : i32
      %458 = arith.index_cast %457 : i32 to index
      %459 = memref.load %arg3[%458] : memref<784xf32, #tpu.memory_space<smem>>
      %c10_287 = arith.constant 10 : index
      %460 = arith.index_cast %190 : i32 to index
      %c1_288 = arith.constant 1 : index
      %461 = vector.load %arg6[%c10_287, %460, %c1_288] : memref<16x22x44xf32, #tpu.memory_space<vmem>>, vector<1x16x38xf32>
      %462 = vector.shape_cast %461 : vector<1x16x38xf32> to vector<16x38xf32>
      %463 = vector.broadcast %459 : f32 to vector<16x38xf32>
      %464 = arith.mulf %463, %462 : vector<16x38xf32>
      %465 = arith.addf %455, %464 : vector<16x38xf32>
      %c16_i32_289 = arith.constant 16 : i32
      %466 = arith.muli %355, %c16_i32_289 : i32
      %c11_i32_290 = arith.constant 11 : i32
      %467 = arith.addi %466, %c11_i32_290 : i32
      %468 = arith.index_cast %467 : i32 to index
      %469 = memref.load %arg3[%468] : memref<784xf32, #tpu.memory_space<smem>>
      %c11_291 = arith.constant 11 : index
      %470 = arith.index_cast %190 : i32 to index
      %c1_292 = arith.constant 1 : index
      %471 = vector.load %arg6[%c11_291, %470, %c1_292] : memref<16x22x44xf32, #tpu.memory_space<vmem>>, vector<1x16x38xf32>
      %472 = vector.shape_cast %471 : vector<1x16x38xf32> to vector<16x38xf32>
      %473 = vector.broadcast %469 : f32 to vector<16x38xf32>
      %474 = arith.mulf %473, %472 : vector<16x38xf32>
      %475 = arith.addf %465, %474 : vector<16x38xf32>
      %c16_i32_293 = arith.constant 16 : i32
      %476 = arith.muli %355, %c16_i32_293 : i32
      %c12_i32_294 = arith.constant 12 : i32
      %477 = arith.addi %476, %c12_i32_294 : i32
      %478 = arith.index_cast %477 : i32 to index
      %479 = memref.load %arg3[%478] : memref<784xf32, #tpu.memory_space<smem>>
      %c12_295 = arith.constant 12 : index
      %480 = arith.index_cast %190 : i32 to index
      %c1_296 = arith.constant 1 : index
      %481 = vector.load %arg6[%c12_295, %480, %c1_296] : memref<16x22x44xf32, #tpu.memory_space<vmem>>, vector<1x16x38xf32>
      %482 = vector.shape_cast %481 : vector<1x16x38xf32> to vector<16x38xf32>
      %483 = vector.broadcast %479 : f32 to vector<16x38xf32>
      %484 = arith.mulf %483, %482 : vector<16x38xf32>
      %485 = arith.addf %475, %484 : vector<16x38xf32>
      %c16_i32_297 = arith.constant 16 : i32
      %486 = arith.muli %355, %c16_i32_297 : i32
      %c13_i32_298 = arith.constant 13 : i32
      %487 = arith.addi %486, %c13_i32_298 : i32
      %488 = arith.index_cast %487 : i32 to index
      %489 = memref.load %arg3[%488] : memref<784xf32, #tpu.memory_space<smem>>
      %c13_299 = arith.constant 13 : index
      %490 = arith.index_cast %190 : i32 to index
      %c1_300 = arith.constant 1 : index
      %491 = vector.load %arg6[%c13_299, %490, %c1_300] : memref<16x22x44xf32, #tpu.memory_space<vmem>>, vector<1x16x38xf32>
      %492 = vector.shape_cast %491 : vector<1x16x38xf32> to vector<16x38xf32>
      %493 = vector.broadcast %489 : f32 to vector<16x38xf32>
      %494 = arith.mulf %493, %492 : vector<16x38xf32>
      %495 = arith.addf %485, %494 : vector<16x38xf32>
      %c16_i32_301 = arith.constant 16 : i32
      %496 = arith.muli %355, %c16_i32_301 : i32
      %c14_i32_302 = arith.constant 14 : i32
      %497 = arith.addi %496, %c14_i32_302 : i32
      %498 = arith.index_cast %497 : i32 to index
      %499 = memref.load %arg3[%498] : memref<784xf32, #tpu.memory_space<smem>>
      %c14_303 = arith.constant 14 : index
      %500 = arith.index_cast %190 : i32 to index
      %c1_304 = arith.constant 1 : index
      %501 = vector.load %arg6[%c14_303, %500, %c1_304] : memref<16x22x44xf32, #tpu.memory_space<vmem>>, vector<1x16x38xf32>
      %502 = vector.shape_cast %501 : vector<1x16x38xf32> to vector<16x38xf32>
      %503 = vector.broadcast %499 : f32 to vector<16x38xf32>
      %504 = arith.mulf %503, %502 : vector<16x38xf32>
      %505 = arith.addf %495, %504 : vector<16x38xf32>
      %c16_i32_305 = arith.constant 16 : i32
      %506 = arith.muli %355, %c16_i32_305 : i32
      %c15_i32_306 = arith.constant 15 : i32
      %507 = arith.addi %506, %c15_i32_306 : i32
      %508 = arith.index_cast %507 : i32 to index
      %509 = memref.load %arg3[%508] : memref<784xf32, #tpu.memory_space<smem>>
      %c15_307 = arith.constant 15 : index
      %510 = arith.index_cast %190 : i32 to index
      %c1_308 = arith.constant 1 : index
      %511 = vector.load %arg6[%c15_307, %510, %c1_308] : memref<16x22x44xf32, #tpu.memory_space<vmem>>, vector<1x16x38xf32>
      %512 = vector.shape_cast %511 : vector<1x16x38xf32> to vector<16x38xf32>
      %513 = vector.broadcast %509 : f32 to vector<16x38xf32>
      %514 = arith.mulf %513, %512 : vector<16x38xf32>
      %515 = arith.addf %505, %514 : vector<16x38xf32>
      %c7_i32_309 = arith.constant 7 : i32
      %516 = arith.muli %190, %c7_i32_309 : i32
      %c2_i32_310 = arith.constant 2 : i32
      %517 = arith.addi %516, %c2_i32_310 : i32
      %c16_i32_311 = arith.constant 16 : i32
      %518 = arith.muli %517, %c16_i32_311 : i32
      %c0_i32_312 = arith.constant 0 : i32
      %519 = arith.addi %518, %c0_i32_312 : i32
      %520 = arith.index_cast %519 : i32 to index
      %521 = memref.load %arg3[%520] : memref<784xf32, #tpu.memory_space<smem>>
      %c0_313 = arith.constant 0 : index
      %522 = arith.index_cast %190 : i32 to index
      %c2_314 = arith.constant 2 : index
      %523 = vector.load %arg6[%c0_313, %522, %c2_314] : memref<16x22x44xf32, #tpu.memory_space<vmem>>, vector<1x16x38xf32>
      %524 = vector.shape_cast %523 : vector<1x16x38xf32> to vector<16x38xf32>
      %525 = vector.broadcast %521 : f32 to vector<16x38xf32>
      %526 = arith.mulf %525, %524 : vector<16x38xf32>
      %527 = arith.addf %515, %526 : vector<16x38xf32>
      %c16_i32_315 = arith.constant 16 : i32
      %528 = arith.muli %517, %c16_i32_315 : i32
      %c1_i32_316 = arith.constant 1 : i32
      %529 = arith.addi %528, %c1_i32_316 : i32
      %530 = arith.index_cast %529 : i32 to index
      %531 = memref.load %arg3[%530] : memref<784xf32, #tpu.memory_space<smem>>
      %c1_317 = arith.constant 1 : index
      %532 = arith.index_cast %190 : i32 to index
      %c2_318 = arith.constant 2 : index
      %533 = vector.load %arg6[%c1_317, %532, %c2_318] : memref<16x22x44xf32, #tpu.memory_space<vmem>>, vector<1x16x38xf32>
      %534 = vector.shape_cast %533 : vector<1x16x38xf32> to vector<16x38xf32>
      %535 = vector.broadcast %531 : f32 to vector<16x38xf32>
      %536 = arith.mulf %535, %534 : vector<16x38xf32>
      %537 = arith.addf %527, %536 : vector<16x38xf32>
      %c16_i32_319 = arith.constant 16 : i32
      %538 = arith.muli %517, %c16_i32_319 : i32
      %c2_i32_320 = arith.constant 2 : i32
      %539 = arith.addi %538, %c2_i32_320 : i32
      %540 = arith.index_cast %539 : i32 to index
      %541 = memref.load %arg3[%540] : memref<784xf32, #tpu.memory_space<smem>>
      %c2_321 = arith.constant 2 : index
      %542 = arith.index_cast %190 : i32 to index
      %c2_322 = arith.constant 2 : index
      %543 = vector.load %arg6[%c2_321, %542, %c2_322] : memref<16x22x44xf32, #tpu.memory_space<vmem>>, vector<1x16x38xf32>
      %544 = vector.shape_cast %543 : vector<1x16x38xf32> to vector<16x38xf32>
      %545 = vector.broadcast %541 : f32 to vector<16x38xf32>
      %546 = arith.mulf %545, %544 : vector<16x38xf32>
      %547 = arith.addf %537, %546 : vector<16x38xf32>
      %c16_i32_323 = arith.constant 16 : i32
      %548 = arith.muli %517, %c16_i32_323 : i32
      %c3_i32_324 = arith.constant 3 : i32
      %549 = arith.addi %548, %c3_i32_324 : i32
      %550 = arith.index_cast %549 : i32 to index
      %551 = memref.load %arg3[%550] : memref<784xf32, #tpu.memory_space<smem>>
      %c3_325 = arith.constant 3 : index
      %552 = arith.index_cast %190 : i32 to index
      %c2_326 = arith.constant 2 : index
      %553 = vector.load %arg6[%c3_325, %552, %c2_326] : memref<16x22x44xf32, #tpu.memory_space<vmem>>, vector<1x16x38xf32>
      %554 = vector.shape_cast %553 : vector<1x16x38xf32> to vector<16x38xf32>
      %555 = vector.broadcast %551 : f32 to vector<16x38xf32>
      %556 = arith.mulf %555, %554 : vector<16x38xf32>
      %557 = arith.addf %547, %556 : vector<16x38xf32>
      %c16_i32_327 = arith.constant 16 : i32
      %558 = arith.muli %517, %c16_i32_327 : i32
      %c4_i32_328 = arith.constant 4 : i32
      %559 = arith.addi %558, %c4_i32_328 : i32
      %560 = arith.index_cast %559 : i32 to index
      %561 = memref.load %arg3[%560] : memref<784xf32, #tpu.memory_space<smem>>
      %c4_329 = arith.constant 4 : index
      %562 = arith.index_cast %190 : i32 to index
      %c2_330 = arith.constant 2 : index
      %563 = vector.load %arg6[%c4_329, %562, %c2_330] : memref<16x22x44xf32, #tpu.memory_space<vmem>>, vector<1x16x38xf32>
      %564 = vector.shape_cast %563 : vector<1x16x38xf32> to vector<16x38xf32>
      %565 = vector.broadcast %561 : f32 to vector<16x38xf32>
      %566 = arith.mulf %565, %564 : vector<16x38xf32>
      %567 = arith.addf %557, %566 : vector<16x38xf32>
      %c16_i32_331 = arith.constant 16 : i32
      %568 = arith.muli %517, %c16_i32_331 : i32
      %c5_i32_332 = arith.constant 5 : i32
      %569 = arith.addi %568, %c5_i32_332 : i32
      %570 = arith.index_cast %569 : i32 to index
      %571 = memref.load %arg3[%570] : memref<784xf32, #tpu.memory_space<smem>>
      %c5_333 = arith.constant 5 : index
      %572 = arith.index_cast %190 : i32 to index
      %c2_334 = arith.constant 2 : index
      %573 = vector.load %arg6[%c5_333, %572, %c2_334] : memref<16x22x44xf32, #tpu.memory_space<vmem>>, vector<1x16x38xf32>
      %574 = vector.shape_cast %573 : vector<1x16x38xf32> to vector<16x38xf32>
      %575 = vector.broadcast %571 : f32 to vector<16x38xf32>
      %576 = arith.mulf %575, %574 : vector<16x38xf32>
      %577 = arith.addf %567, %576 : vector<16x38xf32>
      %c16_i32_335 = arith.constant 16 : i32
      %578 = arith.muli %517, %c16_i32_335 : i32
      %c6_i32_336 = arith.constant 6 : i32
      %579 = arith.addi %578, %c6_i32_336 : i32
      %580 = arith.index_cast %579 : i32 to index
      %581 = memref.load %arg3[%580] : memref<784xf32, #tpu.memory_space<smem>>
      %c6_337 = arith.constant 6 : index
      %582 = arith.index_cast %190 : i32 to index
      %c2_338 = arith.constant 2 : index
      %583 = vector.load %arg6[%c6_337, %582, %c2_338] : memref<16x22x44xf32, #tpu.memory_space<vmem>>, vector<1x16x38xf32>
      %584 = vector.shape_cast %583 : vector<1x16x38xf32> to vector<16x38xf32>
      %585 = vector.broadcast %581 : f32 to vector<16x38xf32>
      %586 = arith.mulf %585, %584 : vector<16x38xf32>
      %587 = arith.addf %577, %586 : vector<16x38xf32>
      %c16_i32_339 = arith.constant 16 : i32
      %588 = arith.muli %517, %c16_i32_339 : i32
      %c7_i32_340 = arith.constant 7 : i32
      %589 = arith.addi %588, %c7_i32_340 : i32
      %590 = arith.index_cast %589 : i32 to index
      %591 = memref.load %arg3[%590] : memref<784xf32, #tpu.memory_space<smem>>
      %c7_341 = arith.constant 7 : index
      %592 = arith.index_cast %190 : i32 to index
      %c2_342 = arith.constant 2 : index
      %593 = vector.load %arg6[%c7_341, %592, %c2_342] : memref<16x22x44xf32, #tpu.memory_space<vmem>>, vector<1x16x38xf32>
      %594 = vector.shape_cast %593 : vector<1x16x38xf32> to vector<16x38xf32>
      %595 = vector.broadcast %591 : f32 to vector<16x38xf32>
      %596 = arith.mulf %595, %594 : vector<16x38xf32>
      %597 = arith.addf %587, %596 : vector<16x38xf32>
      %c16_i32_343 = arith.constant 16 : i32
      %598 = arith.muli %517, %c16_i32_343 : i32
      %c8_i32_344 = arith.constant 8 : i32
      %599 = arith.addi %598, %c8_i32_344 : i32
      %600 = arith.index_cast %599 : i32 to index
      %601 = memref.load %arg3[%600] : memref<784xf32, #tpu.memory_space<smem>>
      %c8_345 = arith.constant 8 : index
      %602 = arith.index_cast %190 : i32 to index
      %c2_346 = arith.constant 2 : index
      %603 = vector.load %arg6[%c8_345, %602, %c2_346] : memref<16x22x44xf32, #tpu.memory_space<vmem>>, vector<1x16x38xf32>
      %604 = vector.shape_cast %603 : vector<1x16x38xf32> to vector<16x38xf32>
      %605 = vector.broadcast %601 : f32 to vector<16x38xf32>
      %606 = arith.mulf %605, %604 : vector<16x38xf32>
      %607 = arith.addf %597, %606 : vector<16x38xf32>
      %c16_i32_347 = arith.constant 16 : i32
      %608 = arith.muli %517, %c16_i32_347 : i32
      %c9_i32_348 = arith.constant 9 : i32
      %609 = arith.addi %608, %c9_i32_348 : i32
      %610 = arith.index_cast %609 : i32 to index
      %611 = memref.load %arg3[%610] : memref<784xf32, #tpu.memory_space<smem>>
      %c9_349 = arith.constant 9 : index
      %612 = arith.index_cast %190 : i32 to index
      %c2_350 = arith.constant 2 : index
      %613 = vector.load %arg6[%c9_349, %612, %c2_350] : memref<16x22x44xf32, #tpu.memory_space<vmem>>, vector<1x16x38xf32>
      %614 = vector.shape_cast %613 : vector<1x16x38xf32> to vector<16x38xf32>
      %615 = vector.broadcast %611 : f32 to vector<16x38xf32>
      %616 = arith.mulf %615, %614 : vector<16x38xf32>
      %617 = arith.addf %607, %616 : vector<16x38xf32>
      %c16_i32_351 = arith.constant 16 : i32
      %618 = arith.muli %517, %c16_i32_351 : i32
      %c10_i32_352 = arith.constant 10 : i32
      %619 = arith.addi %618, %c10_i32_352 : i32
      %620 = arith.index_cast %619 : i32 to index
      %621 = memref.load %arg3[%620] : memref<784xf32, #tpu.memory_space<smem>>
      %c10_353 = arith.constant 10 : index
      %622 = arith.index_cast %190 : i32 to index
      %c2_354 = arith.constant 2 : index
      %623 = vector.load %arg6[%c10_353, %622, %c2_354] : memref<16x22x44xf32, #tpu.memory_space<vmem>>, vector<1x16x38xf32>
      %624 = vector.shape_cast %623 : vector<1x16x38xf32> to vector<16x38xf32>
      %625 = vector.broadcast %621 : f32 to vector<16x38xf32>
      %626 = arith.mulf %625, %624 : vector<16x38xf32>
      %627 = arith.addf %617, %626 : vector<16x38xf32>
      %c16_i32_355 = arith.constant 16 : i32
      %628 = arith.muli %517, %c16_i32_355 : i32
      %c11_i32_356 = arith.constant 11 : i32
      %629 = arith.addi %628, %c11_i32_356 : i32
      %630 = arith.index_cast %629 : i32 to index
      %631 = memref.load %arg3[%630] : memref<784xf32, #tpu.memory_space<smem>>
      %c11_357 = arith.constant 11 : index
      %632 = arith.index_cast %190 : i32 to index
      %c2_358 = arith.constant 2 : index
      %633 = vector.load %arg6[%c11_357, %632, %c2_358] : memref<16x22x44xf32, #tpu.memory_space<vmem>>, vector<1x16x38xf32>
      %634 = vector.shape_cast %633 : vector<1x16x38xf32> to vector<16x38xf32>
      %635 = vector.broadcast %631 : f32 to vector<16x38xf32>
      %636 = arith.mulf %635, %634 : vector<16x38xf32>
      %637 = arith.addf %627, %636 : vector<16x38xf32>
      %c16_i32_359 = arith.constant 16 : i32
      %638 = arith.muli %517, %c16_i32_359 : i32
      %c12_i32_360 = arith.constant 12 : i32
      %639 = arith.addi %638, %c12_i32_360 : i32
      %640 = arith.index_cast %639 : i32 to index
      %641 = memref.load %arg3[%640] : memref<784xf32, #tpu.memory_space<smem>>
      %c12_361 = arith.constant 12 : index
      %642 = arith.index_cast %190 : i32 to index
      %c2_362 = arith.constant 2 : index
      %643 = vector.load %arg6[%c12_361, %642, %c2_362] : memref<16x22x44xf32, #tpu.memory_space<vmem>>, vector<1x16x38xf32>
      %644 = vector.shape_cast %643 : vector<1x16x38xf32> to vector<16x38xf32>
      %645 = vector.broadcast %641 : f32 to vector<16x38xf32>
      %646 = arith.mulf %645, %644 : vector<16x38xf32>
      %647 = arith.addf %637, %646 : vector<16x38xf32>
      %c16_i32_363 = arith.constant 16 : i32
      %648 = arith.muli %517, %c16_i32_363 : i32
      %c13_i32_364 = arith.constant 13 : i32
      %649 = arith.addi %648, %c13_i32_364 : i32
      %650 = arith.index_cast %649 : i32 to index
      %651 = memref.load %arg3[%650] : memref<784xf32, #tpu.memory_space<smem>>
      %c13_365 = arith.constant 13 : index
      %652 = arith.index_cast %190 : i32 to index
      %c2_366 = arith.constant 2 : index
      %653 = vector.load %arg6[%c13_365, %652, %c2_366] : memref<16x22x44xf32, #tpu.memory_space<vmem>>, vector<1x16x38xf32>
      %654 = vector.shape_cast %653 : vector<1x16x38xf32> to vector<16x38xf32>
      %655 = vector.broadcast %651 : f32 to vector<16x38xf32>
      %656 = arith.mulf %655, %654 : vector<16x38xf32>
      %657 = arith.addf %647, %656 : vector<16x38xf32>
      %c16_i32_367 = arith.constant 16 : i32
      %658 = arith.muli %517, %c16_i32_367 : i32
      %c14_i32_368 = arith.constant 14 : i32
      %659 = arith.addi %658, %c14_i32_368 : i32
      %660 = arith.index_cast %659 : i32 to index
      %661 = memref.load %arg3[%660] : memref<784xf32, #tpu.memory_space<smem>>
      %c14_369 = arith.constant 14 : index
      %662 = arith.index_cast %190 : i32 to index
      %c2_370 = arith.constant 2 : index
      %663 = vector.load %arg6[%c14_369, %662, %c2_370] : memref<16x22x44xf32, #tpu.memory_space<vmem>>, vector<1x16x38xf32>
      %664 = vector.shape_cast %663 : vector<1x16x38xf32> to vector<16x38xf32>
      %665 = vector.broadcast %661 : f32 to vector<16x38xf32>
      %666 = arith.mulf %665, %664 : vector<16x38xf32>
      %667 = arith.addf %657, %666 : vector<16x38xf32>
      %c16_i32_371 = arith.constant 16 : i32
      %668 = arith.muli %517, %c16_i32_371 : i32
      %c15_i32_372 = arith.constant 15 : i32
      %669 = arith.addi %668, %c15_i32_372 : i32
      %670 = arith.index_cast %669 : i32 to index
      %671 = memref.load %arg3[%670] : memref<784xf32, #tpu.memory_space<smem>>
      %c15_373 = arith.constant 15 : index
      %672 = arith.index_cast %190 : i32 to index
      %c2_374 = arith.constant 2 : index
      %673 = vector.load %arg6[%c15_373, %672, %c2_374] : memref<16x22x44xf32, #tpu.memory_space<vmem>>, vector<1x16x38xf32>
      %674 = vector.shape_cast %673 : vector<1x16x38xf32> to vector<16x38xf32>
      %675 = vector.broadcast %671 : f32 to vector<16x38xf32>
      %676 = arith.mulf %675, %674 : vector<16x38xf32>
      %677 = arith.addf %667, %676 : vector<16x38xf32>
      %c7_i32_375 = arith.constant 7 : i32
      %678 = arith.muli %190, %c7_i32_375 : i32
      %c3_i32_376 = arith.constant 3 : i32
      %679 = arith.addi %678, %c3_i32_376 : i32
      %c16_i32_377 = arith.constant 16 : i32
      %680 = arith.muli %679, %c16_i32_377 : i32
      %c0_i32_378 = arith.constant 0 : i32
      %681 = arith.addi %680, %c0_i32_378 : i32
      %682 = arith.index_cast %681 : i32 to index
      %683 = memref.load %arg3[%682] : memref<784xf32, #tpu.memory_space<smem>>
      %c0_379 = arith.constant 0 : index
      %684 = arith.index_cast %190 : i32 to index
      %c3_380 = arith.constant 3 : index
      %685 = vector.load %arg6[%c0_379, %684, %c3_380] : memref<16x22x44xf32, #tpu.memory_space<vmem>>, vector<1x16x38xf32>
      %686 = vector.shape_cast %685 : vector<1x16x38xf32> to vector<16x38xf32>
      %687 = vector.broadcast %683 : f32 to vector<16x38xf32>
      %688 = arith.mulf %687, %686 : vector<16x38xf32>
      %689 = arith.addf %677, %688 : vector<16x38xf32>
      %c16_i32_381 = arith.constant 16 : i32
      %690 = arith.muli %679, %c16_i32_381 : i32
      %c1_i32_382 = arith.constant 1 : i32
      %691 = arith.addi %690, %c1_i32_382 : i32
      %692 = arith.index_cast %691 : i32 to index
      %693 = memref.load %arg3[%692] : memref<784xf32, #tpu.memory_space<smem>>
      %c1_383 = arith.constant 1 : index
      %694 = arith.index_cast %190 : i32 to index
      %c3_384 = arith.constant 3 : index
      %695 = vector.load %arg6[%c1_383, %694, %c3_384] : memref<16x22x44xf32, #tpu.memory_space<vmem>>, vector<1x16x38xf32>
      %696 = vector.shape_cast %695 : vector<1x16x38xf32> to vector<16x38xf32>
      %697 = vector.broadcast %693 : f32 to vector<16x38xf32>
      %698 = arith.mulf %697, %696 : vector<16x38xf32>
      %699 = arith.addf %689, %698 : vector<16x38xf32>
      %c16_i32_385 = arith.constant 16 : i32
      %700 = arith.muli %679, %c16_i32_385 : i32
      %c2_i32_386 = arith.constant 2 : i32
      %701 = arith.addi %700, %c2_i32_386 : i32
      %702 = arith.index_cast %701 : i32 to index
      %703 = memref.load %arg3[%702] : memref<784xf32, #tpu.memory_space<smem>>
      %c2_387 = arith.constant 2 : index
      %704 = arith.index_cast %190 : i32 to index
      %c3_388 = arith.constant 3 : index
      %705 = vector.load %arg6[%c2_387, %704, %c3_388] : memref<16x22x44xf32, #tpu.memory_space<vmem>>, vector<1x16x38xf32>
      %706 = vector.shape_cast %705 : vector<1x16x38xf32> to vector<16x38xf32>
      %707 = vector.broadcast %703 : f32 to vector<16x38xf32>
      %708 = arith.mulf %707, %706 : vector<16x38xf32>
      %709 = arith.addf %699, %708 : vector<16x38xf32>
      %c16_i32_389 = arith.constant 16 : i32
      %710 = arith.muli %679, %c16_i32_389 : i32
      %c3_i32_390 = arith.constant 3 : i32
      %711 = arith.addi %710, %c3_i32_390 : i32
      %712 = arith.index_cast %711 : i32 to index
      %713 = memref.load %arg3[%712] : memref<784xf32, #tpu.memory_space<smem>>
      %c3_391 = arith.constant 3 : index
      %714 = arith.index_cast %190 : i32 to index
      %c3_392 = arith.constant 3 : index
      %715 = vector.load %arg6[%c3_391, %714, %c3_392] : memref<16x22x44xf32, #tpu.memory_space<vmem>>, vector<1x16x38xf32>
      %716 = vector.shape_cast %715 : vector<1x16x38xf32> to vector<16x38xf32>
      %717 = vector.broadcast %713 : f32 to vector<16x38xf32>
      %718 = arith.mulf %717, %716 : vector<16x38xf32>
      %719 = arith.addf %709, %718 : vector<16x38xf32>
      %c16_i32_393 = arith.constant 16 : i32
      %720 = arith.muli %679, %c16_i32_393 : i32
      %c4_i32_394 = arith.constant 4 : i32
      %721 = arith.addi %720, %c4_i32_394 : i32
      %722 = arith.index_cast %721 : i32 to index
      %723 = memref.load %arg3[%722] : memref<784xf32, #tpu.memory_space<smem>>
      %c4_395 = arith.constant 4 : index
      %724 = arith.index_cast %190 : i32 to index
      %c3_396 = arith.constant 3 : index
      %725 = vector.load %arg6[%c4_395, %724, %c3_396] : memref<16x22x44xf32, #tpu.memory_space<vmem>>, vector<1x16x38xf32>
      %726 = vector.shape_cast %725 : vector<1x16x38xf32> to vector<16x38xf32>
      %727 = vector.broadcast %723 : f32 to vector<16x38xf32>
      %728 = arith.mulf %727, %726 : vector<16x38xf32>
      %729 = arith.addf %719, %728 : vector<16x38xf32>
      %c16_i32_397 = arith.constant 16 : i32
      %730 = arith.muli %679, %c16_i32_397 : i32
      %c5_i32_398 = arith.constant 5 : i32
      %731 = arith.addi %730, %c5_i32_398 : i32
      %732 = arith.index_cast %731 : i32 to index
      %733 = memref.load %arg3[%732] : memref<784xf32, #tpu.memory_space<smem>>
      %c5_399 = arith.constant 5 : index
      %734 = arith.index_cast %190 : i32 to index
      %c3_400 = arith.constant 3 : index
      %735 = vector.load %arg6[%c5_399, %734, %c3_400] : memref<16x22x44xf32, #tpu.memory_space<vmem>>, vector<1x16x38xf32>
      %736 = vector.shape_cast %735 : vector<1x16x38xf32> to vector<16x38xf32>
      %737 = vector.broadcast %733 : f32 to vector<16x38xf32>
      %738 = arith.mulf %737, %736 : vector<16x38xf32>
      %739 = arith.addf %729, %738 : vector<16x38xf32>
      %c16_i32_401 = arith.constant 16 : i32
      %740 = arith.muli %679, %c16_i32_401 : i32
      %c6_i32_402 = arith.constant 6 : i32
      %741 = arith.addi %740, %c6_i32_402 : i32
      %742 = arith.index_cast %741 : i32 to index
      %743 = memref.load %arg3[%742] : memref<784xf32, #tpu.memory_space<smem>>
      %c6_403 = arith.constant 6 : index
      %744 = arith.index_cast %190 : i32 to index
      %c3_404 = arith.constant 3 : index
      %745 = vector.load %arg6[%c6_403, %744, %c3_404] : memref<16x22x44xf32, #tpu.memory_space<vmem>>, vector<1x16x38xf32>
      %746 = vector.shape_cast %745 : vector<1x16x38xf32> to vector<16x38xf32>
      %747 = vector.broadcast %743 : f32 to vector<16x38xf32>
      %748 = arith.mulf %747, %746 : vector<16x38xf32>
      %749 = arith.addf %739, %748 : vector<16x38xf32>
      %c16_i32_405 = arith.constant 16 : i32
      %750 = arith.muli %679, %c16_i32_405 : i32
      %c7_i32_406 = arith.constant 7 : i32
      %751 = arith.addi %750, %c7_i32_406 : i32
      %752 = arith.index_cast %751 : i32 to index
      %753 = memref.load %arg3[%752] : memref<784xf32, #tpu.memory_space<smem>>
      %c7_407 = arith.constant 7 : index
      %754 = arith.index_cast %190 : i32 to index
      %c3_408 = arith.constant 3 : index
      %755 = vector.load %arg6[%c7_407, %754, %c3_408] : memref<16x22x44xf32, #tpu.memory_space<vmem>>, vector<1x16x38xf32>
      %756 = vector.shape_cast %755 : vector<1x16x38xf32> to vector<16x38xf32>
      %757 = vector.broadcast %753 : f32 to vector<16x38xf32>
      %758 = arith.mulf %757, %756 : vector<16x38xf32>
      %759 = arith.addf %749, %758 : vector<16x38xf32>
      %c16_i32_409 = arith.constant 16 : i32
      %760 = arith.muli %679, %c16_i32_409 : i32
      %c8_i32_410 = arith.constant 8 : i32
      %761 = arith.addi %760, %c8_i32_410 : i32
      %762 = arith.index_cast %761 : i32 to index
      %763 = memref.load %arg3[%762] : memref<784xf32, #tpu.memory_space<smem>>
      %c8_411 = arith.constant 8 : index
      %764 = arith.index_cast %190 : i32 to index
      %c3_412 = arith.constant 3 : index
      %765 = vector.load %arg6[%c8_411, %764, %c3_412] : memref<16x22x44xf32, #tpu.memory_space<vmem>>, vector<1x16x38xf32>
      %766 = vector.shape_cast %765 : vector<1x16x38xf32> to vector<16x38xf32>
      %767 = vector.broadcast %763 : f32 to vector<16x38xf32>
      %768 = arith.mulf %767, %766 : vector<16x38xf32>
      %769 = arith.addf %759, %768 : vector<16x38xf32>
      %c16_i32_413 = arith.constant 16 : i32
      %770 = arith.muli %679, %c16_i32_413 : i32
      %c9_i32_414 = arith.constant 9 : i32
      %771 = arith.addi %770, %c9_i32_414 : i32
      %772 = arith.index_cast %771 : i32 to index
      %773 = memref.load %arg3[%772] : memref<784xf32, #tpu.memory_space<smem>>
      %c9_415 = arith.constant 9 : index
      %774 = arith.index_cast %190 : i32 to index
      %c3_416 = arith.constant 3 : index
      %775 = vector.load %arg6[%c9_415, %774, %c3_416] : memref<16x22x44xf32, #tpu.memory_space<vmem>>, vector<1x16x38xf32>
      %776 = vector.shape_cast %775 : vector<1x16x38xf32> to vector<16x38xf32>
      %777 = vector.broadcast %773 : f32 to vector<16x38xf32>
      %778 = arith.mulf %777, %776 : vector<16x38xf32>
      %779 = arith.addf %769, %778 : vector<16x38xf32>
      %c16_i32_417 = arith.constant 16 : i32
      %780 = arith.muli %679, %c16_i32_417 : i32
      %c10_i32_418 = arith.constant 10 : i32
      %781 = arith.addi %780, %c10_i32_418 : i32
      %782 = arith.index_cast %781 : i32 to index
      %783 = memref.load %arg3[%782] : memref<784xf32, #tpu.memory_space<smem>>
      %c10_419 = arith.constant 10 : index
      %784 = arith.index_cast %190 : i32 to index
      %c3_420 = arith.constant 3 : index
      %785 = vector.load %arg6[%c10_419, %784, %c3_420] : memref<16x22x44xf32, #tpu.memory_space<vmem>>, vector<1x16x38xf32>
      %786 = vector.shape_cast %785 : vector<1x16x38xf32> to vector<16x38xf32>
      %787 = vector.broadcast %783 : f32 to vector<16x38xf32>
      %788 = arith.mulf %787, %786 : vector<16x38xf32>
      %789 = arith.addf %779, %788 : vector<16x38xf32>
      %c16_i32_421 = arith.constant 16 : i32
      %790 = arith.muli %679, %c16_i32_421 : i32
      %c11_i32_422 = arith.constant 11 : i32
      %791 = arith.addi %790, %c11_i32_422 : i32
      %792 = arith.index_cast %791 : i32 to index
      %793 = memref.load %arg3[%792] : memref<784xf32, #tpu.memory_space<smem>>
      %c11_423 = arith.constant 11 : index
      %794 = arith.index_cast %190 : i32 to index
      %c3_424 = arith.constant 3 : index
      %795 = vector.load %arg6[%c11_423, %794, %c3_424] : memref<16x22x44xf32, #tpu.memory_space<vmem>>, vector<1x16x38xf32>
      %796 = vector.shape_cast %795 : vector<1x16x38xf32> to vector<16x38xf32>
      %797 = vector.broadcast %793 : f32 to vector<16x38xf32>
      %798 = arith.mulf %797, %796 : vector<16x38xf32>
      %799 = arith.addf %789, %798 : vector<16x38xf32>
      %c16_i32_425 = arith.constant 16 : i32
      %800 = arith.muli %679, %c16_i32_425 : i32
      %c12_i32_426 = arith.constant 12 : i32
      %801 = arith.addi %800, %c12_i32_426 : i32
      %802 = arith.index_cast %801 : i32 to index
      %803 = memref.load %arg3[%802] : memref<784xf32, #tpu.memory_space<smem>>
      %c12_427 = arith.constant 12 : index
      %804 = arith.index_cast %190 : i32 to index
      %c3_428 = arith.constant 3 : index
      %805 = vector.load %arg6[%c12_427, %804, %c3_428] : memref<16x22x44xf32, #tpu.memory_space<vmem>>, vector<1x16x38xf32>
      %806 = vector.shape_cast %805 : vector<1x16x38xf32> to vector<16x38xf32>
      %807 = vector.broadcast %803 : f32 to vector<16x38xf32>
      %808 = arith.mulf %807, %806 : vector<16x38xf32>
      %809 = arith.addf %799, %808 : vector<16x38xf32>
      %c16_i32_429 = arith.constant 16 : i32
      %810 = arith.muli %679, %c16_i32_429 : i32
      %c13_i32_430 = arith.constant 13 : i32
      %811 = arith.addi %810, %c13_i32_430 : i32
      %812 = arith.index_cast %811 : i32 to index
      %813 = memref.load %arg3[%812] : memref<784xf32, #tpu.memory_space<smem>>
      %c13_431 = arith.constant 13 : index
      %814 = arith.index_cast %190 : i32 to index
      %c3_432 = arith.constant 3 : index
      %815 = vector.load %arg6[%c13_431, %814, %c3_432] : memref<16x22x44xf32, #tpu.memory_space<vmem>>, vector<1x16x38xf32>
      %816 = vector.shape_cast %815 : vector<1x16x38xf32> to vector<16x38xf32>
      %817 = vector.broadcast %813 : f32 to vector<16x38xf32>
      %818 = arith.mulf %817, %816 : vector<16x38xf32>
      %819 = arith.addf %809, %818 : vector<16x38xf32>
      %c16_i32_433 = arith.constant 16 : i32
      %820 = arith.muli %679, %c16_i32_433 : i32
      %c14_i32_434 = arith.constant 14 : i32
      %821 = arith.addi %820, %c14_i32_434 : i32
      %822 = arith.index_cast %821 : i32 to index
      %823 = memref.load %arg3[%822] : memref<784xf32, #tpu.memory_space<smem>>
      %c14_435 = arith.constant 14 : index
      %824 = arith.index_cast %190 : i32 to index
      %c3_436 = arith.constant 3 : index
      %825 = vector.load %arg6[%c14_435, %824, %c3_436] : memref<16x22x44xf32, #tpu.memory_space<vmem>>, vector<1x16x38xf32>
      %826 = vector.shape_cast %825 : vector<1x16x38xf32> to vector<16x38xf32>
      %827 = vector.broadcast %823 : f32 to vector<16x38xf32>
      %828 = arith.mulf %827, %826 : vector<16x38xf32>
      %829 = arith.addf %819, %828 : vector<16x38xf32>
      %c16_i32_437 = arith.constant 16 : i32
      %830 = arith.muli %679, %c16_i32_437 : i32
      %c15_i32_438 = arith.constant 15 : i32
      %831 = arith.addi %830, %c15_i32_438 : i32
      %832 = arith.index_cast %831 : i32 to index
      %833 = memref.load %arg3[%832] : memref<784xf32, #tpu.memory_space<smem>>
      %c15_439 = arith.constant 15 : index
      %834 = arith.index_cast %190 : i32 to index
      %c3_440 = arith.constant 3 : index
      %835 = vector.load %arg6[%c15_439, %834, %c3_440] : memref<16x22x44xf32, #tpu.memory_space<vmem>>, vector<1x16x38xf32>
      %836 = vector.shape_cast %835 : vector<1x16x38xf32> to vector<16x38xf32>
      %837 = vector.broadcast %833 : f32 to vector<16x38xf32>
      %838 = arith.mulf %837, %836 : vector<16x38xf32>
      %839 = arith.addf %829, %838 : vector<16x38xf32>
      %c7_i32_441 = arith.constant 7 : i32
      %840 = arith.muli %190, %c7_i32_441 : i32
      %c4_i32_442 = arith.constant 4 : i32
      %841 = arith.addi %840, %c4_i32_442 : i32
      %c16_i32_443 = arith.constant 16 : i32
      %842 = arith.muli %841, %c16_i32_443 : i32
      %c0_i32_444 = arith.constant 0 : i32
      %843 = arith.addi %842, %c0_i32_444 : i32
      %844 = arith.index_cast %843 : i32 to index
      %845 = memref.load %arg3[%844] : memref<784xf32, #tpu.memory_space<smem>>
      %c0_445 = arith.constant 0 : index
      %846 = arith.index_cast %190 : i32 to index
      %c4_446 = arith.constant 4 : index
      %847 = vector.load %arg6[%c0_445, %846, %c4_446] : memref<16x22x44xf32, #tpu.memory_space<vmem>>, vector<1x16x38xf32>
      %848 = vector.shape_cast %847 : vector<1x16x38xf32> to vector<16x38xf32>
      %849 = vector.broadcast %845 : f32 to vector<16x38xf32>
      %850 = arith.mulf %849, %848 : vector<16x38xf32>
      %851 = arith.addf %839, %850 : vector<16x38xf32>
      %c16_i32_447 = arith.constant 16 : i32
      %852 = arith.muli %841, %c16_i32_447 : i32
      %c1_i32_448 = arith.constant 1 : i32
      %853 = arith.addi %852, %c1_i32_448 : i32
      %854 = arith.index_cast %853 : i32 to index
      %855 = memref.load %arg3[%854] : memref<784xf32, #tpu.memory_space<smem>>
      %c1_449 = arith.constant 1 : index
      %856 = arith.index_cast %190 : i32 to index
      %c4_450 = arith.constant 4 : index
      %857 = vector.load %arg6[%c1_449, %856, %c4_450] : memref<16x22x44xf32, #tpu.memory_space<vmem>>, vector<1x16x38xf32>
      %858 = vector.shape_cast %857 : vector<1x16x38xf32> to vector<16x38xf32>
      %859 = vector.broadcast %855 : f32 to vector<16x38xf32>
      %860 = arith.mulf %859, %858 : vector<16x38xf32>
      %861 = arith.addf %851, %860 : vector<16x38xf32>
      %c16_i32_451 = arith.constant 16 : i32
      %862 = arith.muli %841, %c16_i32_451 : i32
      %c2_i32_452 = arith.constant 2 : i32
      %863 = arith.addi %862, %c2_i32_452 : i32
      %864 = arith.index_cast %863 : i32 to index
      %865 = memref.load %arg3[%864] : memref<784xf32, #tpu.memory_space<smem>>
      %c2_453 = arith.constant 2 : index
      %866 = arith.index_cast %190 : i32 to index
      %c4_454 = arith.constant 4 : index
      %867 = vector.load %arg6[%c2_453, %866, %c4_454] : memref<16x22x44xf32, #tpu.memory_space<vmem>>, vector<1x16x38xf32>
      %868 = vector.shape_cast %867 : vector<1x16x38xf32> to vector<16x38xf32>
      %869 = vector.broadcast %865 : f32 to vector<16x38xf32>
      %870 = arith.mulf %869, %868 : vector<16x38xf32>
      %871 = arith.addf %861, %870 : vector<16x38xf32>
      %c16_i32_455 = arith.constant 16 : i32
      %872 = arith.muli %841, %c16_i32_455 : i32
      %c3_i32_456 = arith.constant 3 : i32
      %873 = arith.addi %872, %c3_i32_456 : i32
      %874 = arith.index_cast %873 : i32 to index
      %875 = memref.load %arg3[%874] : memref<784xf32, #tpu.memory_space<smem>>
      %c3_457 = arith.constant 3 : index
      %876 = arith.index_cast %190 : i32 to index
      %c4_458 = arith.constant 4 : index
      %877 = vector.load %arg6[%c3_457, %876, %c4_458] : memref<16x22x44xf32, #tpu.memory_space<vmem>>, vector<1x16x38xf32>
      %878 = vector.shape_cast %877 : vector<1x16x38xf32> to vector<16x38xf32>
      %879 = vector.broadcast %875 : f32 to vector<16x38xf32>
      %880 = arith.mulf %879, %878 : vector<16x38xf32>
      %881 = arith.addf %871, %880 : vector<16x38xf32>
      %c16_i32_459 = arith.constant 16 : i32
      %882 = arith.muli %841, %c16_i32_459 : i32
      %c4_i32_460 = arith.constant 4 : i32
      %883 = arith.addi %882, %c4_i32_460 : i32
      %884 = arith.index_cast %883 : i32 to index
      %885 = memref.load %arg3[%884] : memref<784xf32, #tpu.memory_space<smem>>
      %c4_461 = arith.constant 4 : index
      %886 = arith.index_cast %190 : i32 to index
      %c4_462 = arith.constant 4 : index
      %887 = vector.load %arg6[%c4_461, %886, %c4_462] : memref<16x22x44xf32, #tpu.memory_space<vmem>>, vector<1x16x38xf32>
      %888 = vector.shape_cast %887 : vector<1x16x38xf32> to vector<16x38xf32>
      %889 = vector.broadcast %885 : f32 to vector<16x38xf32>
      %890 = arith.mulf %889, %888 : vector<16x38xf32>
      %891 = arith.addf %881, %890 : vector<16x38xf32>
      %c16_i32_463 = arith.constant 16 : i32
      %892 = arith.muli %841, %c16_i32_463 : i32
      %c5_i32_464 = arith.constant 5 : i32
      %893 = arith.addi %892, %c5_i32_464 : i32
      %894 = arith.index_cast %893 : i32 to index
      %895 = memref.load %arg3[%894] : memref<784xf32, #tpu.memory_space<smem>>
      %c5_465 = arith.constant 5 : index
      %896 = arith.index_cast %190 : i32 to index
      %c4_466 = arith.constant 4 : index
      %897 = vector.load %arg6[%c5_465, %896, %c4_466] : memref<16x22x44xf32, #tpu.memory_space<vmem>>, vector<1x16x38xf32>
      %898 = vector.shape_cast %897 : vector<1x16x38xf32> to vector<16x38xf32>
      %899 = vector.broadcast %895 : f32 to vector<16x38xf32>
      %900 = arith.mulf %899, %898 : vector<16x38xf32>
      %901 = arith.addf %891, %900 : vector<16x38xf32>
      %c16_i32_467 = arith.constant 16 : i32
      %902 = arith.muli %841, %c16_i32_467 : i32
      %c6_i32_468 = arith.constant 6 : i32
      %903 = arith.addi %902, %c6_i32_468 : i32
      %904 = arith.index_cast %903 : i32 to index
      %905 = memref.load %arg3[%904] : memref<784xf32, #tpu.memory_space<smem>>
      %c6_469 = arith.constant 6 : index
      %906 = arith.index_cast %190 : i32 to index
      %c4_470 = arith.constant 4 : index
      %907 = vector.load %arg6[%c6_469, %906, %c4_470] : memref<16x22x44xf32, #tpu.memory_space<vmem>>, vector<1x16x38xf32>
      %908 = vector.shape_cast %907 : vector<1x16x38xf32> to vector<16x38xf32>
      %909 = vector.broadcast %905 : f32 to vector<16x38xf32>
      %910 = arith.mulf %909, %908 : vector<16x38xf32>
      %911 = arith.addf %901, %910 : vector<16x38xf32>
      %c16_i32_471 = arith.constant 16 : i32
      %912 = arith.muli %841, %c16_i32_471 : i32
      %c7_i32_472 = arith.constant 7 : i32
      %913 = arith.addi %912, %c7_i32_472 : i32
      %914 = arith.index_cast %913 : i32 to index
      %915 = memref.load %arg3[%914] : memref<784xf32, #tpu.memory_space<smem>>
      %c7_473 = arith.constant 7 : index
      %916 = arith.index_cast %190 : i32 to index
      %c4_474 = arith.constant 4 : index
      %917 = vector.load %arg6[%c7_473, %916, %c4_474] : memref<16x22x44xf32, #tpu.memory_space<vmem>>, vector<1x16x38xf32>
      %918 = vector.shape_cast %917 : vector<1x16x38xf32> to vector<16x38xf32>
      %919 = vector.broadcast %915 : f32 to vector<16x38xf32>
      %920 = arith.mulf %919, %918 : vector<16x38xf32>
      %921 = arith.addf %911, %920 : vector<16x38xf32>
      %c16_i32_475 = arith.constant 16 : i32
      %922 = arith.muli %841, %c16_i32_475 : i32
      %c8_i32_476 = arith.constant 8 : i32
      %923 = arith.addi %922, %c8_i32_476 : i32
      %924 = arith.index_cast %923 : i32 to index
      %925 = memref.load %arg3[%924] : memref<784xf32, #tpu.memory_space<smem>>
      %c8_477 = arith.constant 8 : index
      %926 = arith.index_cast %190 : i32 to index
      %c4_478 = arith.constant 4 : index
      %927 = vector.load %arg6[%c8_477, %926, %c4_478] : memref<16x22x44xf32, #tpu.memory_space<vmem>>, vector<1x16x38xf32>
      %928 = vector.shape_cast %927 : vector<1x16x38xf32> to vector<16x38xf32>
      %929 = vector.broadcast %925 : f32 to vector<16x38xf32>
      %930 = arith.mulf %929, %928 : vector<16x38xf32>
      %931 = arith.addf %921, %930 : vector<16x38xf32>
      %c16_i32_479 = arith.constant 16 : i32
      %932 = arith.muli %841, %c16_i32_479 : i32
      %c9_i32_480 = arith.constant 9 : i32
      %933 = arith.addi %932, %c9_i32_480 : i32
      %934 = arith.index_cast %933 : i32 to index
      %935 = memref.load %arg3[%934] : memref<784xf32, #tpu.memory_space<smem>>
      %c9_481 = arith.constant 9 : index
      %936 = arith.index_cast %190 : i32 to index
      %c4_482 = arith.constant 4 : index
      %937 = vector.load %arg6[%c9_481, %936, %c4_482] : memref<16x22x44xf32, #tpu.memory_space<vmem>>, vector<1x16x38xf32>
      %938 = vector.shape_cast %937 : vector<1x16x38xf32> to vector<16x38xf32>
      %939 = vector.broadcast %935 : f32 to vector<16x38xf32>
      %940 = arith.mulf %939, %938 : vector<16x38xf32>
      %941 = arith.addf %931, %940 : vector<16x38xf32>
      %c16_i32_483 = arith.constant 16 : i32
      %942 = arith.muli %841, %c16_i32_483 : i32
      %c10_i32_484 = arith.constant 10 : i32
      %943 = arith.addi %942, %c10_i32_484 : i32
      %944 = arith.index_cast %943 : i32 to index
      %945 = memref.load %arg3[%944] : memref<784xf32, #tpu.memory_space<smem>>
      %c10_485 = arith.constant 10 : index
      %946 = arith.index_cast %190 : i32 to index
      %c4_486 = arith.constant 4 : index
      %947 = vector.load %arg6[%c10_485, %946, %c4_486] : memref<16x22x44xf32, #tpu.memory_space<vmem>>, vector<1x16x38xf32>
      %948 = vector.shape_cast %947 : vector<1x16x38xf32> to vector<16x38xf32>
      %949 = vector.broadcast %945 : f32 to vector<16x38xf32>
      %950 = arith.mulf %949, %948 : vector<16x38xf32>
      %951 = arith.addf %941, %950 : vector<16x38xf32>
      %c16_i32_487 = arith.constant 16 : i32
      %952 = arith.muli %841, %c16_i32_487 : i32
      %c11_i32_488 = arith.constant 11 : i32
      %953 = arith.addi %952, %c11_i32_488 : i32
      %954 = arith.index_cast %953 : i32 to index
      %955 = memref.load %arg3[%954] : memref<784xf32, #tpu.memory_space<smem>>
      %c11_489 = arith.constant 11 : index
      %956 = arith.index_cast %190 : i32 to index
      %c4_490 = arith.constant 4 : index
      %957 = vector.load %arg6[%c11_489, %956, %c4_490] : memref<16x22x44xf32, #tpu.memory_space<vmem>>, vector<1x16x38xf32>
      %958 = vector.shape_cast %957 : vector<1x16x38xf32> to vector<16x38xf32>
      %959 = vector.broadcast %955 : f32 to vector<16x38xf32>
      %960 = arith.mulf %959, %958 : vector<16x38xf32>
      %961 = arith.addf %951, %960 : vector<16x38xf32>
      %c16_i32_491 = arith.constant 16 : i32
      %962 = arith.muli %841, %c16_i32_491 : i32
      %c12_i32_492 = arith.constant 12 : i32
      %963 = arith.addi %962, %c12_i32_492 : i32
      %964 = arith.index_cast %963 : i32 to index
      %965 = memref.load %arg3[%964] : memref<784xf32, #tpu.memory_space<smem>>
      %c12_493 = arith.constant 12 : index
      %966 = arith.index_cast %190 : i32 to index
      %c4_494 = arith.constant 4 : index
      %967 = vector.load %arg6[%c12_493, %966, %c4_494] : memref<16x22x44xf32, #tpu.memory_space<vmem>>, vector<1x16x38xf32>
      %968 = vector.shape_cast %967 : vector<1x16x38xf32> to vector<16x38xf32>
      %969 = vector.broadcast %965 : f32 to vector<16x38xf32>
      %970 = arith.mulf %969, %968 : vector<16x38xf32>
      %971 = arith.addf %961, %970 : vector<16x38xf32>
      %c16_i32_495 = arith.constant 16 : i32
      %972 = arith.muli %841, %c16_i32_495 : i32
      %c13_i32_496 = arith.constant 13 : i32
      %973 = arith.addi %972, %c13_i32_496 : i32
      %974 = arith.index_cast %973 : i32 to index
      %975 = memref.load %arg3[%974] : memref<784xf32, #tpu.memory_space<smem>>
      %c13_497 = arith.constant 13 : index
      %976 = arith.index_cast %190 : i32 to index
      %c4_498 = arith.constant 4 : index
      %977 = vector.load %arg6[%c13_497, %976, %c4_498] : memref<16x22x44xf32, #tpu.memory_space<vmem>>, vector<1x16x38xf32>
      %978 = vector.shape_cast %977 : vector<1x16x38xf32> to vector<16x38xf32>
      %979 = vector.broadcast %975 : f32 to vector<16x38xf32>
      %980 = arith.mulf %979, %978 : vector<16x38xf32>
      %981 = arith.addf %971, %980 : vector<16x38xf32>
      %c16_i32_499 = arith.constant 16 : i32
      %982 = arith.muli %841, %c16_i32_499 : i32
      %c14_i32_500 = arith.constant 14 : i32
      %983 = arith.addi %982, %c14_i32_500 : i32
      %984 = arith.index_cast %983 : i32 to index
      %985 = memref.load %arg3[%984] : memref<784xf32, #tpu.memory_space<smem>>
      %c14_501 = arith.constant 14 : index
      %986 = arith.index_cast %190 : i32 to index
      %c4_502 = arith.constant 4 : index
      %987 = vector.load %arg6[%c14_501, %986, %c4_502] : memref<16x22x44xf32, #tpu.memory_space<vmem>>, vector<1x16x38xf32>
      %988 = vector.shape_cast %987 : vector<1x16x38xf32> to vector<16x38xf32>
      %989 = vector.broadcast %985 : f32 to vector<16x38xf32>
      %990 = arith.mulf %989, %988 : vector<16x38xf32>
      %991 = arith.addf %981, %990 : vector<16x38xf32>
      %c16_i32_503 = arith.constant 16 : i32
      %992 = arith.muli %841, %c16_i32_503 : i32
      %c15_i32_504 = arith.constant 15 : i32
      %993 = arith.addi %992, %c15_i32_504 : i32
      %994 = arith.index_cast %993 : i32 to index
      %995 = memref.load %arg3[%994] : memref<784xf32, #tpu.memory_space<smem>>
      %c15_505 = arith.constant 15 : index
      %996 = arith.index_cast %190 : i32 to index
      %c4_506 = arith.constant 4 : index
      %997 = vector.load %arg6[%c15_505, %996, %c4_506] : memref<16x22x44xf32, #tpu.memory_space<vmem>>, vector<1x16x38xf32>
      %998 = vector.shape_cast %997 : vector<1x16x38xf32> to vector<16x38xf32>
      %999 = vector.broadcast %995 : f32 to vector<16x38xf32>
      %1000 = arith.mulf %999, %998 : vector<16x38xf32>
      %1001 = arith.addf %991, %1000 : vector<16x38xf32>
      %c7_i32_507 = arith.constant 7 : i32
      %1002 = arith.muli %190, %c7_i32_507 : i32
      %c5_i32_508 = arith.constant 5 : i32
      %1003 = arith.addi %1002, %c5_i32_508 : i32
      %c16_i32_509 = arith.constant 16 : i32
      %1004 = arith.muli %1003, %c16_i32_509 : i32
      %c0_i32_510 = arith.constant 0 : i32
      %1005 = arith.addi %1004, %c0_i32_510 : i32
      %1006 = arith.index_cast %1005 : i32 to index
      %1007 = memref.load %arg3[%1006] : memref<784xf32, #tpu.memory_space<smem>>
      %c0_511 = arith.constant 0 : index
      %1008 = arith.index_cast %190 : i32 to index
      %c5_512 = arith.constant 5 : index
      %1009 = vector.load %arg6[%c0_511, %1008, %c5_512] : memref<16x22x44xf32, #tpu.memory_space<vmem>>, vector<1x16x38xf32>
      %1010 = vector.shape_cast %1009 : vector<1x16x38xf32> to vector<16x38xf32>
      %1011 = vector.broadcast %1007 : f32 to vector<16x38xf32>
      %1012 = arith.mulf %1011, %1010 : vector<16x38xf32>
      %1013 = arith.addf %1001, %1012 : vector<16x38xf32>
      %c16_i32_513 = arith.constant 16 : i32
      %1014 = arith.muli %1003, %c16_i32_513 : i32
      %c1_i32_514 = arith.constant 1 : i32
      %1015 = arith.addi %1014, %c1_i32_514 : i32
      %1016 = arith.index_cast %1015 : i32 to index
      %1017 = memref.load %arg3[%1016] : memref<784xf32, #tpu.memory_space<smem>>
      %c1_515 = arith.constant 1 : index
      %1018 = arith.index_cast %190 : i32 to index
      %c5_516 = arith.constant 5 : index
      %1019 = vector.load %arg6[%c1_515, %1018, %c5_516] : memref<16x22x44xf32, #tpu.memory_space<vmem>>, vector<1x16x38xf32>
      %1020 = vector.shape_cast %1019 : vector<1x16x38xf32> to vector<16x38xf32>
      %1021 = vector.broadcast %1017 : f32 to vector<16x38xf32>
      %1022 = arith.mulf %1021, %1020 : vector<16x38xf32>
      %1023 = arith.addf %1013, %1022 : vector<16x38xf32>
      %c16_i32_517 = arith.constant 16 : i32
      %1024 = arith.muli %1003, %c16_i32_517 : i32
      %c2_i32_518 = arith.constant 2 : i32
      %1025 = arith.addi %1024, %c2_i32_518 : i32
      %1026 = arith.index_cast %1025 : i32 to index
      %1027 = memref.load %arg3[%1026] : memref<784xf32, #tpu.memory_space<smem>>
      %c2_519 = arith.constant 2 : index
      %1028 = arith.index_cast %190 : i32 to index
      %c5_520 = arith.constant 5 : index
      %1029 = vector.load %arg6[%c2_519, %1028, %c5_520] : memref<16x22x44xf32, #tpu.memory_space<vmem>>, vector<1x16x38xf32>
      %1030 = vector.shape_cast %1029 : vector<1x16x38xf32> to vector<16x38xf32>
      %1031 = vector.broadcast %1027 : f32 to vector<16x38xf32>
      %1032 = arith.mulf %1031, %1030 : vector<16x38xf32>
      %1033 = arith.addf %1023, %1032 : vector<16x38xf32>
      %c16_i32_521 = arith.constant 16 : i32
      %1034 = arith.muli %1003, %c16_i32_521 : i32
      %c3_i32_522 = arith.constant 3 : i32
      %1035 = arith.addi %1034, %c3_i32_522 : i32
      %1036 = arith.index_cast %1035 : i32 to index
      %1037 = memref.load %arg3[%1036] : memref<784xf32, #tpu.memory_space<smem>>
      %c3_523 = arith.constant 3 : index
      %1038 = arith.index_cast %190 : i32 to index
      %c5_524 = arith.constant 5 : index
      %1039 = vector.load %arg6[%c3_523, %1038, %c5_524] : memref<16x22x44xf32, #tpu.memory_space<vmem>>, vector<1x16x38xf32>
      %1040 = vector.shape_cast %1039 : vector<1x16x38xf32> to vector<16x38xf32>
      %1041 = vector.broadcast %1037 : f32 to vector<16x38xf32>
      %1042 = arith.mulf %1041, %1040 : vector<16x38xf32>
      %1043 = arith.addf %1033, %1042 : vector<16x38xf32>
      %c16_i32_525 = arith.constant 16 : i32
      %1044 = arith.muli %1003, %c16_i32_525 : i32
      %c4_i32_526 = arith.constant 4 : i32
      %1045 = arith.addi %1044, %c4_i32_526 : i32
      %1046 = arith.index_cast %1045 : i32 to index
      %1047 = memref.load %arg3[%1046] : memref<784xf32, #tpu.memory_space<smem>>
      %c4_527 = arith.constant 4 : index
      %1048 = arith.index_cast %190 : i32 to index
      %c5_528 = arith.constant 5 : index
      %1049 = vector.load %arg6[%c4_527, %1048, %c5_528] : memref<16x22x44xf32, #tpu.memory_space<vmem>>, vector<1x16x38xf32>
      %1050 = vector.shape_cast %1049 : vector<1x16x38xf32> to vector<16x38xf32>
      %1051 = vector.broadcast %1047 : f32 to vector<16x38xf32>
      %1052 = arith.mulf %1051, %1050 : vector<16x38xf32>
      %1053 = arith.addf %1043, %1052 : vector<16x38xf32>
      %c16_i32_529 = arith.constant 16 : i32
      %1054 = arith.muli %1003, %c16_i32_529 : i32
      %c5_i32_530 = arith.constant 5 : i32
      %1055 = arith.addi %1054, %c5_i32_530 : i32
      %1056 = arith.index_cast %1055 : i32 to index
      %1057 = memref.load %arg3[%1056] : memref<784xf32, #tpu.memory_space<smem>>
      %c5_531 = arith.constant 5 : index
      %1058 = arith.index_cast %190 : i32 to index
      %c5_532 = arith.constant 5 : index
      %1059 = vector.load %arg6[%c5_531, %1058, %c5_532] : memref<16x22x44xf32, #tpu.memory_space<vmem>>, vector<1x16x38xf32>
      %1060 = vector.shape_cast %1059 : vector<1x16x38xf32> to vector<16x38xf32>
      %1061 = vector.broadcast %1057 : f32 to vector<16x38xf32>
      %1062 = arith.mulf %1061, %1060 : vector<16x38xf32>
      %1063 = arith.addf %1053, %1062 : vector<16x38xf32>
      %c16_i32_533 = arith.constant 16 : i32
      %1064 = arith.muli %1003, %c16_i32_533 : i32
      %c6_i32_534 = arith.constant 6 : i32
      %1065 = arith.addi %1064, %c6_i32_534 : i32
      %1066 = arith.index_cast %1065 : i32 to index
      %1067 = memref.load %arg3[%1066] : memref<784xf32, #tpu.memory_space<smem>>
      %c6_535 = arith.constant 6 : index
      %1068 = arith.index_cast %190 : i32 to index
      %c5_536 = arith.constant 5 : index
      %1069 = vector.load %arg6[%c6_535, %1068, %c5_536] : memref<16x22x44xf32, #tpu.memory_space<vmem>>, vector<1x16x38xf32>
      %1070 = vector.shape_cast %1069 : vector<1x16x38xf32> to vector<16x38xf32>
      %1071 = vector.broadcast %1067 : f32 to vector<16x38xf32>
      %1072 = arith.mulf %1071, %1070 : vector<16x38xf32>
      %1073 = arith.addf %1063, %1072 : vector<16x38xf32>
      %c16_i32_537 = arith.constant 16 : i32
      %1074 = arith.muli %1003, %c16_i32_537 : i32
      %c7_i32_538 = arith.constant 7 : i32
      %1075 = arith.addi %1074, %c7_i32_538 : i32
      %1076 = arith.index_cast %1075 : i32 to index
      %1077 = memref.load %arg3[%1076] : memref<784xf32, #tpu.memory_space<smem>>
      %c7_539 = arith.constant 7 : index
      %1078 = arith.index_cast %190 : i32 to index
      %c5_540 = arith.constant 5 : index
      %1079 = vector.load %arg6[%c7_539, %1078, %c5_540] : memref<16x22x44xf32, #tpu.memory_space<vmem>>, vector<1x16x38xf32>
      %1080 = vector.shape_cast %1079 : vector<1x16x38xf32> to vector<16x38xf32>
      %1081 = vector.broadcast %1077 : f32 to vector<16x38xf32>
      %1082 = arith.mulf %1081, %1080 : vector<16x38xf32>
      %1083 = arith.addf %1073, %1082 : vector<16x38xf32>
      %c16_i32_541 = arith.constant 16 : i32
      %1084 = arith.muli %1003, %c16_i32_541 : i32
      %c8_i32_542 = arith.constant 8 : i32
      %1085 = arith.addi %1084, %c8_i32_542 : i32
      %1086 = arith.index_cast %1085 : i32 to index
      %1087 = memref.load %arg3[%1086] : memref<784xf32, #tpu.memory_space<smem>>
      %c8_543 = arith.constant 8 : index
      %1088 = arith.index_cast %190 : i32 to index
      %c5_544 = arith.constant 5 : index
      %1089 = vector.load %arg6[%c8_543, %1088, %c5_544] : memref<16x22x44xf32, #tpu.memory_space<vmem>>, vector<1x16x38xf32>
      %1090 = vector.shape_cast %1089 : vector<1x16x38xf32> to vector<16x38xf32>
      %1091 = vector.broadcast %1087 : f32 to vector<16x38xf32>
      %1092 = arith.mulf %1091, %1090 : vector<16x38xf32>
      %1093 = arith.addf %1083, %1092 : vector<16x38xf32>
      %c16_i32_545 = arith.constant 16 : i32
      %1094 = arith.muli %1003, %c16_i32_545 : i32
      %c9_i32_546 = arith.constant 9 : i32
      %1095 = arith.addi %1094, %c9_i32_546 : i32
      %1096 = arith.index_cast %1095 : i32 to index
      %1097 = memref.load %arg3[%1096] : memref<784xf32, #tpu.memory_space<smem>>
      %c9_547 = arith.constant 9 : index
      %1098 = arith.index_cast %190 : i32 to index
      %c5_548 = arith.constant 5 : index
      %1099 = vector.load %arg6[%c9_547, %1098, %c5_548] : memref<16x22x44xf32, #tpu.memory_space<vmem>>, vector<1x16x38xf32>
      %1100 = vector.shape_cast %1099 : vector<1x16x38xf32> to vector<16x38xf32>
      %1101 = vector.broadcast %1097 : f32 to vector<16x38xf32>
      %1102 = arith.mulf %1101, %1100 : vector<16x38xf32>
      %1103 = arith.addf %1093, %1102 : vector<16x38xf32>
      %c16_i32_549 = arith.constant 16 : i32
      %1104 = arith.muli %1003, %c16_i32_549 : i32
      %c10_i32_550 = arith.constant 10 : i32
      %1105 = arith.addi %1104, %c10_i32_550 : i32
      %1106 = arith.index_cast %1105 : i32 to index
      %1107 = memref.load %arg3[%1106] : memref<784xf32, #tpu.memory_space<smem>>
      %c10_551 = arith.constant 10 : index
      %1108 = arith.index_cast %190 : i32 to index
      %c5_552 = arith.constant 5 : index
      %1109 = vector.load %arg6[%c10_551, %1108, %c5_552] : memref<16x22x44xf32, #tpu.memory_space<vmem>>, vector<1x16x38xf32>
      %1110 = vector.shape_cast %1109 : vector<1x16x38xf32> to vector<16x38xf32>
      %1111 = vector.broadcast %1107 : f32 to vector<16x38xf32>
      %1112 = arith.mulf %1111, %1110 : vector<16x38xf32>
      %1113 = arith.addf %1103, %1112 : vector<16x38xf32>
      %c16_i32_553 = arith.constant 16 : i32
      %1114 = arith.muli %1003, %c16_i32_553 : i32
      %c11_i32_554 = arith.constant 11 : i32
      %1115 = arith.addi %1114, %c11_i32_554 : i32
      %1116 = arith.index_cast %1115 : i32 to index
      %1117 = memref.load %arg3[%1116] : memref<784xf32, #tpu.memory_space<smem>>
      %c11_555 = arith.constant 11 : index
      %1118 = arith.index_cast %190 : i32 to index
      %c5_556 = arith.constant 5 : index
      %1119 = vector.load %arg6[%c11_555, %1118, %c5_556] : memref<16x22x44xf32, #tpu.memory_space<vmem>>, vector<1x16x38xf32>
      %1120 = vector.shape_cast %1119 : vector<1x16x38xf32> to vector<16x38xf32>
      %1121 = vector.broadcast %1117 : f32 to vector<16x38xf32>
      %1122 = arith.mulf %1121, %1120 : vector<16x38xf32>
      %1123 = arith.addf %1113, %1122 : vector<16x38xf32>
      %c16_i32_557 = arith.constant 16 : i32
      %1124 = arith.muli %1003, %c16_i32_557 : i32
      %c12_i32_558 = arith.constant 12 : i32
      %1125 = arith.addi %1124, %c12_i32_558 : i32
      %1126 = arith.index_cast %1125 : i32 to index
      %1127 = memref.load %arg3[%1126] : memref<784xf32, #tpu.memory_space<smem>>
      %c12_559 = arith.constant 12 : index
      %1128 = arith.index_cast %190 : i32 to index
      %c5_560 = arith.constant 5 : index
      %1129 = vector.load %arg6[%c12_559, %1128, %c5_560] : memref<16x22x44xf32, #tpu.memory_space<vmem>>, vector<1x16x38xf32>
      %1130 = vector.shape_cast %1129 : vector<1x16x38xf32> to vector<16x38xf32>
      %1131 = vector.broadcast %1127 : f32 to vector<16x38xf32>
      %1132 = arith.mulf %1131, %1130 : vector<16x38xf32>
      %1133 = arith.addf %1123, %1132 : vector<16x38xf32>
      %c16_i32_561 = arith.constant 16 : i32
      %1134 = arith.muli %1003, %c16_i32_561 : i32
      %c13_i32_562 = arith.constant 13 : i32
      %1135 = arith.addi %1134, %c13_i32_562 : i32
      %1136 = arith.index_cast %1135 : i32 to index
      %1137 = memref.load %arg3[%1136] : memref<784xf32, #tpu.memory_space<smem>>
      %c13_563 = arith.constant 13 : index
      %1138 = arith.index_cast %190 : i32 to index
      %c5_564 = arith.constant 5 : index
      %1139 = vector.load %arg6[%c13_563, %1138, %c5_564] : memref<16x22x44xf32, #tpu.memory_space<vmem>>, vector<1x16x38xf32>
      %1140 = vector.shape_cast %1139 : vector<1x16x38xf32> to vector<16x38xf32>
      %1141 = vector.broadcast %1137 : f32 to vector<16x38xf32>
      %1142 = arith.mulf %1141, %1140 : vector<16x38xf32>
      %1143 = arith.addf %1133, %1142 : vector<16x38xf32>
      %c16_i32_565 = arith.constant 16 : i32
      %1144 = arith.muli %1003, %c16_i32_565 : i32
      %c14_i32_566 = arith.constant 14 : i32
      %1145 = arith.addi %1144, %c14_i32_566 : i32
      %1146 = arith.index_cast %1145 : i32 to index
      %1147 = memref.load %arg3[%1146] : memref<784xf32, #tpu.memory_space<smem>>
      %c14_567 = arith.constant 14 : index
      %1148 = arith.index_cast %190 : i32 to index
      %c5_568 = arith.constant 5 : index
      %1149 = vector.load %arg6[%c14_567, %1148, %c5_568] : memref<16x22x44xf32, #tpu.memory_space<vmem>>, vector<1x16x38xf32>
      %1150 = vector.shape_cast %1149 : vector<1x16x38xf32> to vector<16x38xf32>
      %1151 = vector.broadcast %1147 : f32 to vector<16x38xf32>
      %1152 = arith.mulf %1151, %1150 : vector<16x38xf32>
      %1153 = arith.addf %1143, %1152 : vector<16x38xf32>
      %c16_i32_569 = arith.constant 16 : i32
      %1154 = arith.muli %1003, %c16_i32_569 : i32
      %c15_i32_570 = arith.constant 15 : i32
      %1155 = arith.addi %1154, %c15_i32_570 : i32
      %1156 = arith.index_cast %1155 : i32 to index
      %1157 = memref.load %arg3[%1156] : memref<784xf32, #tpu.memory_space<smem>>
      %c15_571 = arith.constant 15 : index
      %1158 = arith.index_cast %190 : i32 to index
      %c5_572 = arith.constant 5 : index
      %1159 = vector.load %arg6[%c15_571, %1158, %c5_572] : memref<16x22x44xf32, #tpu.memory_space<vmem>>, vector<1x16x38xf32>
      %1160 = vector.shape_cast %1159 : vector<1x16x38xf32> to vector<16x38xf32>
      %1161 = vector.broadcast %1157 : f32 to vector<16x38xf32>
      %1162 = arith.mulf %1161, %1160 : vector<16x38xf32>
      %1163 = arith.addf %1153, %1162 : vector<16x38xf32>
      %c7_i32_573 = arith.constant 7 : i32
      %1164 = arith.muli %190, %c7_i32_573 : i32
      %c6_i32_574 = arith.constant 6 : i32
      %1165 = arith.addi %1164, %c6_i32_574 : i32
      %c16_i32_575 = arith.constant 16 : i32
      %1166 = arith.muli %1165, %c16_i32_575 : i32
      %c0_i32_576 = arith.constant 0 : i32
      %1167 = arith.addi %1166, %c0_i32_576 : i32
      %1168 = arith.index_cast %1167 : i32 to index
      %1169 = memref.load %arg3[%1168] : memref<784xf32, #tpu.memory_space<smem>>
      %c0_577 = arith.constant 0 : index
      %1170 = arith.index_cast %190 : i32 to index
      %c6_578 = arith.constant 6 : index
      %1171 = vector.load %arg6[%c0_577, %1170, %c6_578] : memref<16x22x44xf32, #tpu.memory_space<vmem>>, vector<1x16x38xf32>
      %1172 = vector.shape_cast %1171 : vector<1x16x38xf32> to vector<16x38xf32>
      %1173 = vector.broadcast %1169 : f32 to vector<16x38xf32>
      %1174 = arith.mulf %1173, %1172 : vector<16x38xf32>
      %1175 = arith.addf %1163, %1174 : vector<16x38xf32>
      %c16_i32_579 = arith.constant 16 : i32
      %1176 = arith.muli %1165, %c16_i32_579 : i32
      %c1_i32_580 = arith.constant 1 : i32
      %1177 = arith.addi %1176, %c1_i32_580 : i32
      %1178 = arith.index_cast %1177 : i32 to index
      %1179 = memref.load %arg3[%1178] : memref<784xf32, #tpu.memory_space<smem>>
      %c1_581 = arith.constant 1 : index
      %1180 = arith.index_cast %190 : i32 to index
      %c6_582 = arith.constant 6 : index
      %1181 = vector.load %arg6[%c1_581, %1180, %c6_582] : memref<16x22x44xf32, #tpu.memory_space<vmem>>, vector<1x16x38xf32>
      %1182 = vector.shape_cast %1181 : vector<1x16x38xf32> to vector<16x38xf32>
      %1183 = vector.broadcast %1179 : f32 to vector<16x38xf32>
      %1184 = arith.mulf %1183, %1182 : vector<16x38xf32>
      %1185 = arith.addf %1175, %1184 : vector<16x38xf32>
      %c16_i32_583 = arith.constant 16 : i32
      %1186 = arith.muli %1165, %c16_i32_583 : i32
      %c2_i32_584 = arith.constant 2 : i32
      %1187 = arith.addi %1186, %c2_i32_584 : i32
      %1188 = arith.index_cast %1187 : i32 to index
      %1189 = memref.load %arg3[%1188] : memref<784xf32, #tpu.memory_space<smem>>
      %c2_585 = arith.constant 2 : index
      %1190 = arith.index_cast %190 : i32 to index
      %c6_586 = arith.constant 6 : index
      %1191 = vector.load %arg6[%c2_585, %1190, %c6_586] : memref<16x22x44xf32, #tpu.memory_space<vmem>>, vector<1x16x38xf32>
      %1192 = vector.shape_cast %1191 : vector<1x16x38xf32> to vector<16x38xf32>
      %1193 = vector.broadcast %1189 : f32 to vector<16x38xf32>
      %1194 = arith.mulf %1193, %1192 : vector<16x38xf32>
      %1195 = arith.addf %1185, %1194 : vector<16x38xf32>
      %c16_i32_587 = arith.constant 16 : i32
      %1196 = arith.muli %1165, %c16_i32_587 : i32
      %c3_i32_588 = arith.constant 3 : i32
      %1197 = arith.addi %1196, %c3_i32_588 : i32
      %1198 = arith.index_cast %1197 : i32 to index
      %1199 = memref.load %arg3[%1198] : memref<784xf32, #tpu.memory_space<smem>>
      %c3_589 = arith.constant 3 : index
      %1200 = arith.index_cast %190 : i32 to index
      %c6_590 = arith.constant 6 : index
      %1201 = vector.load %arg6[%c3_589, %1200, %c6_590] : memref<16x22x44xf32, #tpu.memory_space<vmem>>, vector<1x16x38xf32>
      %1202 = vector.shape_cast %1201 : vector<1x16x38xf32> to vector<16x38xf32>
      %1203 = vector.broadcast %1199 : f32 to vector<16x38xf32>
      %1204 = arith.mulf %1203, %1202 : vector<16x38xf32>
      %1205 = arith.addf %1195, %1204 : vector<16x38xf32>
      %c16_i32_591 = arith.constant 16 : i32
      %1206 = arith.muli %1165, %c16_i32_591 : i32
      %c4_i32_592 = arith.constant 4 : i32
      %1207 = arith.addi %1206, %c4_i32_592 : i32
      %1208 = arith.index_cast %1207 : i32 to index
      %1209 = memref.load %arg3[%1208] : memref<784xf32, #tpu.memory_space<smem>>
      %c4_593 = arith.constant 4 : index
      %1210 = arith.index_cast %190 : i32 to index
      %c6_594 = arith.constant 6 : index
      %1211 = vector.load %arg6[%c4_593, %1210, %c6_594] : memref<16x22x44xf32, #tpu.memory_space<vmem>>, vector<1x16x38xf32>
      %1212 = vector.shape_cast %1211 : vector<1x16x38xf32> to vector<16x38xf32>
      %1213 = vector.broadcast %1209 : f32 to vector<16x38xf32>
      %1214 = arith.mulf %1213, %1212 : vector<16x38xf32>
      %1215 = arith.addf %1205, %1214 : vector<16x38xf32>
      %c16_i32_595 = arith.constant 16 : i32
      %1216 = arith.muli %1165, %c16_i32_595 : i32
      %c5_i32_596 = arith.constant 5 : i32
      %1217 = arith.addi %1216, %c5_i32_596 : i32
      %1218 = arith.index_cast %1217 : i32 to index
      %1219 = memref.load %arg3[%1218] : memref<784xf32, #tpu.memory_space<smem>>
      %c5_597 = arith.constant 5 : index
      %1220 = arith.index_cast %190 : i32 to index
      %c6_598 = arith.constant 6 : index
      %1221 = vector.load %arg6[%c5_597, %1220, %c6_598] : memref<16x22x44xf32, #tpu.memory_space<vmem>>, vector<1x16x38xf32>
      %1222 = vector.shape_cast %1221 : vector<1x16x38xf32> to vector<16x38xf32>
      %1223 = vector.broadcast %1219 : f32 to vector<16x38xf32>
      %1224 = arith.mulf %1223, %1222 : vector<16x38xf32>
      %1225 = arith.addf %1215, %1224 : vector<16x38xf32>
      %c16_i32_599 = arith.constant 16 : i32
      %1226 = arith.muli %1165, %c16_i32_599 : i32
      %c6_i32_600 = arith.constant 6 : i32
      %1227 = arith.addi %1226, %c6_i32_600 : i32
      %1228 = arith.index_cast %1227 : i32 to index
      %1229 = memref.load %arg3[%1228] : memref<784xf32, #tpu.memory_space<smem>>
      %c6_601 = arith.constant 6 : index
      %1230 = arith.index_cast %190 : i32 to index
      %c6_602 = arith.constant 6 : index
      %1231 = vector.load %arg6[%c6_601, %1230, %c6_602] : memref<16x22x44xf32, #tpu.memory_space<vmem>>, vector<1x16x38xf32>
      %1232 = vector.shape_cast %1231 : vector<1x16x38xf32> to vector<16x38xf32>
      %1233 = vector.broadcast %1229 : f32 to vector<16x38xf32>
      %1234 = arith.mulf %1233, %1232 : vector<16x38xf32>
      %1235 = arith.addf %1225, %1234 : vector<16x38xf32>
      %c16_i32_603 = arith.constant 16 : i32
      %1236 = arith.muli %1165, %c16_i32_603 : i32
      %c7_i32_604 = arith.constant 7 : i32
      %1237 = arith.addi %1236, %c7_i32_604 : i32
      %1238 = arith.index_cast %1237 : i32 to index
      %1239 = memref.load %arg3[%1238] : memref<784xf32, #tpu.memory_space<smem>>
      %c7_605 = arith.constant 7 : index
      %1240 = arith.index_cast %190 : i32 to index
      %c6_606 = arith.constant 6 : index
      %1241 = vector.load %arg6[%c7_605, %1240, %c6_606] : memref<16x22x44xf32, #tpu.memory_space<vmem>>, vector<1x16x38xf32>
      %1242 = vector.shape_cast %1241 : vector<1x16x38xf32> to vector<16x38xf32>
      %1243 = vector.broadcast %1239 : f32 to vector<16x38xf32>
      %1244 = arith.mulf %1243, %1242 : vector<16x38xf32>
      %1245 = arith.addf %1235, %1244 : vector<16x38xf32>
      %c16_i32_607 = arith.constant 16 : i32
      %1246 = arith.muli %1165, %c16_i32_607 : i32
      %c8_i32_608 = arith.constant 8 : i32
      %1247 = arith.addi %1246, %c8_i32_608 : i32
      %1248 = arith.index_cast %1247 : i32 to index
      %1249 = memref.load %arg3[%1248] : memref<784xf32, #tpu.memory_space<smem>>
      %c8_609 = arith.constant 8 : index
      %1250 = arith.index_cast %190 : i32 to index
      %c6_610 = arith.constant 6 : index
      %1251 = vector.load %arg6[%c8_609, %1250, %c6_610] : memref<16x22x44xf32, #tpu.memory_space<vmem>>, vector<1x16x38xf32>
      %1252 = vector.shape_cast %1251 : vector<1x16x38xf32> to vector<16x38xf32>
      %1253 = vector.broadcast %1249 : f32 to vector<16x38xf32>
      %1254 = arith.mulf %1253, %1252 : vector<16x38xf32>
      %1255 = arith.addf %1245, %1254 : vector<16x38xf32>
      %c16_i32_611 = arith.constant 16 : i32
      %1256 = arith.muli %1165, %c16_i32_611 : i32
      %c9_i32_612 = arith.constant 9 : i32
      %1257 = arith.addi %1256, %c9_i32_612 : i32
      %1258 = arith.index_cast %1257 : i32 to index
      %1259 = memref.load %arg3[%1258] : memref<784xf32, #tpu.memory_space<smem>>
      %c9_613 = arith.constant 9 : index
      %1260 = arith.index_cast %190 : i32 to index
      %c6_614 = arith.constant 6 : index
      %1261 = vector.load %arg6[%c9_613, %1260, %c6_614] : memref<16x22x44xf32, #tpu.memory_space<vmem>>, vector<1x16x38xf32>
      %1262 = vector.shape_cast %1261 : vector<1x16x38xf32> to vector<16x38xf32>
      %1263 = vector.broadcast %1259 : f32 to vector<16x38xf32>
      %1264 = arith.mulf %1263, %1262 : vector<16x38xf32>
      %1265 = arith.addf %1255, %1264 : vector<16x38xf32>
      %c16_i32_615 = arith.constant 16 : i32
      %1266 = arith.muli %1165, %c16_i32_615 : i32
      %c10_i32_616 = arith.constant 10 : i32
      %1267 = arith.addi %1266, %c10_i32_616 : i32
      %1268 = arith.index_cast %1267 : i32 to index
      %1269 = memref.load %arg3[%1268] : memref<784xf32, #tpu.memory_space<smem>>
      %c10_617 = arith.constant 10 : index
      %1270 = arith.index_cast %190 : i32 to index
      %c6_618 = arith.constant 6 : index
      %1271 = vector.load %arg6[%c10_617, %1270, %c6_618] : memref<16x22x44xf32, #tpu.memory_space<vmem>>, vector<1x16x38xf32>
      %1272 = vector.shape_cast %1271 : vector<1x16x38xf32> to vector<16x38xf32>
      %1273 = vector.broadcast %1269 : f32 to vector<16x38xf32>
      %1274 = arith.mulf %1273, %1272 : vector<16x38xf32>
      %1275 = arith.addf %1265, %1274 : vector<16x38xf32>
      %c16_i32_619 = arith.constant 16 : i32
      %1276 = arith.muli %1165, %c16_i32_619 : i32
      %c11_i32_620 = arith.constant 11 : i32
      %1277 = arith.addi %1276, %c11_i32_620 : i32
      %1278 = arith.index_cast %1277 : i32 to index
      %1279 = memref.load %arg3[%1278] : memref<784xf32, #tpu.memory_space<smem>>
      %c11_621 = arith.constant 11 : index
      %1280 = arith.index_cast %190 : i32 to index
      %c6_622 = arith.constant 6 : index
      %1281 = vector.load %arg6[%c11_621, %1280, %c6_622] : memref<16x22x44xf32, #tpu.memory_space<vmem>>, vector<1x16x38xf32>
      %1282 = vector.shape_cast %1281 : vector<1x16x38xf32> to vector<16x38xf32>
      %1283 = vector.broadcast %1279 : f32 to vector<16x38xf32>
      %1284 = arith.mulf %1283, %1282 : vector<16x38xf32>
      %1285 = arith.addf %1275, %1284 : vector<16x38xf32>
      %c16_i32_623 = arith.constant 16 : i32
      %1286 = arith.muli %1165, %c16_i32_623 : i32
      %c12_i32_624 = arith.constant 12 : i32
      %1287 = arith.addi %1286, %c12_i32_624 : i32
      %1288 = arith.index_cast %1287 : i32 to index
      %1289 = memref.load %arg3[%1288] : memref<784xf32, #tpu.memory_space<smem>>
      %c12_625 = arith.constant 12 : index
      %1290 = arith.index_cast %190 : i32 to index
      %c6_626 = arith.constant 6 : index
      %1291 = vector.load %arg6[%c12_625, %1290, %c6_626] : memref<16x22x44xf32, #tpu.memory_space<vmem>>, vector<1x16x38xf32>
      %1292 = vector.shape_cast %1291 : vector<1x16x38xf32> to vector<16x38xf32>
      %1293 = vector.broadcast %1289 : f32 to vector<16x38xf32>
      %1294 = arith.mulf %1293, %1292 : vector<16x38xf32>
      %1295 = arith.addf %1285, %1294 : vector<16x38xf32>
      %c16_i32_627 = arith.constant 16 : i32
      %1296 = arith.muli %1165, %c16_i32_627 : i32
      %c13_i32_628 = arith.constant 13 : i32
      %1297 = arith.addi %1296, %c13_i32_628 : i32
      %1298 = arith.index_cast %1297 : i32 to index
      %1299 = memref.load %arg3[%1298] : memref<784xf32, #tpu.memory_space<smem>>
      %c13_629 = arith.constant 13 : index
      %1300 = arith.index_cast %190 : i32 to index
      %c6_630 = arith.constant 6 : index
      %1301 = vector.load %arg6[%c13_629, %1300, %c6_630] : memref<16x22x44xf32, #tpu.memory_space<vmem>>, vector<1x16x38xf32>
      %1302 = vector.shape_cast %1301 : vector<1x16x38xf32> to vector<16x38xf32>
      %1303 = vector.broadcast %1299 : f32 to vector<16x38xf32>
      %1304 = arith.mulf %1303, %1302 : vector<16x38xf32>
      %1305 = arith.addf %1295, %1304 : vector<16x38xf32>
      %c16_i32_631 = arith.constant 16 : i32
      %1306 = arith.muli %1165, %c16_i32_631 : i32
      %c14_i32_632 = arith.constant 14 : i32
      %1307 = arith.addi %1306, %c14_i32_632 : i32
      %1308 = arith.index_cast %1307 : i32 to index
      %1309 = memref.load %arg3[%1308] : memref<784xf32, #tpu.memory_space<smem>>
      %c14_633 = arith.constant 14 : index
      %1310 = arith.index_cast %190 : i32 to index
      %c6_634 = arith.constant 6 : index
      %1311 = vector.load %arg6[%c14_633, %1310, %c6_634] : memref<16x22x44xf32, #tpu.memory_space<vmem>>, vector<1x16x38xf32>
      %1312 = vector.shape_cast %1311 : vector<1x16x38xf32> to vector<16x38xf32>
      %1313 = vector.broadcast %1309 : f32 to vector<16x38xf32>
      %1314 = arith.mulf %1313, %1312 : vector<16x38xf32>
      %1315 = arith.addf %1305, %1314 : vector<16x38xf32>
      %c16_i32_635 = arith.constant 16 : i32
      %1316 = arith.muli %1165, %c16_i32_635 : i32
      %c15_i32_636 = arith.constant 15 : i32
      %1317 = arith.addi %1316, %c15_i32_636 : i32
      %1318 = arith.index_cast %1317 : i32 to index
      %1319 = memref.load %arg3[%1318] : memref<784xf32, #tpu.memory_space<smem>>
      %c15_637 = arith.constant 15 : index
      %1320 = arith.index_cast %190 : i32 to index
      %c6_638 = arith.constant 6 : index
      %1321 = vector.load %arg6[%c15_637, %1320, %c6_638] : memref<16x22x44xf32, #tpu.memory_space<vmem>>, vector<1x16x38xf32>
      %1322 = vector.shape_cast %1321 : vector<1x16x38xf32> to vector<16x38xf32>
      %1323 = vector.broadcast %1319 : f32 to vector<16x38xf32>
      %1324 = arith.mulf %1323, %1322 : vector<16x38xf32>
      %1325 = arith.addf %1315, %1324 : vector<16x38xf32>
      %c0_639 = arith.constant 0 : index
      %c0_640 = arith.constant 0 : index
      %1326 = vector.load %arg8[%c0_639, %c0_640] : memref<16x38xf32, #tpu.memory_space<vmem>>, vector<16x38xf32>
      tpu.vector_store %arg8[%c0_639, %c0_640], %1325 {strides = array<i32>} : memref<16x38xf32, #tpu.memory_space<vmem>>, vector<16x38xf32>,
    }
    %c7_i32_174 = arith.constant 7 : i32
    %c0_175 = arith.constant 0 : index
    %c0_176 = arith.constant 0 : index
    %175 = vector.load %arg8[%c0_175, %c0_176] : memref<16x38xf32, #tpu.memory_space<vmem>>, vector<16x38xf32>
    %176 = arith.negf %175 : vector<16x38xf32>
    %177 = math.exp %176 : vector<16x38xf32>
    %cst_177 = arith.constant 1.000000e+00 : f32
    %178 = vector.broadcast %cst_177 : f32 to vector<16x38xf32>
    %179 = arith.addf %178, %177 : vector<16x38xf32>
    %180 = arith.divf %178, %179 : vector<16x38xf32>
    %181 = vector.extract_strided_slice %180 {offsets = [0, 0], sizes = [16, 16], strides = [1, 1]} : vector<16x38xf32> to vector<16x16xf32>
    %c0_178 = arith.constant 0 : index
    %c0_179 = arith.constant 0 : index
    %c0_180 = arith.constant 0 : index
    %c0_181 = arith.constant 0 : index
    %182 = vector.load %arg4[%c0_178, %c0_179, %c0_180, %c0_181] : memref<2x1x16x16xf32, #tpu.memory_space<vmem>>, vector<1x1x16x16xf32>
    %183 = vector.shape_cast %182 : vector<1x1x16x16xf32> to vector<16x16xf32>
    %184 = vector.shape_cast %181 : vector<16x16xf32> to vector<1x1x16x16xf32>
    tpu.vector_store %arg4[%c0_178, %c0_179, %c0_180, %c0_181], %184 {strides = array<i32>} : memref<2x1x16x16xf32, #tpu.memory_space<vmem>>, vector<1x1x16x16xf32>,
    %185 = vector.extract_strided_slice %180 {offsets = [0, 22], sizes = [16, 16], strides = [1, 1]} : vector<16x38xf32> to vector<16x16xf32>
    %c1_182 = arith.constant 1 : index
    %c0_183 = arith.constant 0 : index
    %c0_184 = arith.constant 0 : index
    %c0_185 = arith.constant 0 : index
    %186 = vector.load %arg4[%c1_182, %c0_183, %c0_184, %c0_185] : memref<2x1x16x16xf32, #tpu.memory_space<vmem>>, vector<1x1x16x16xf32>
    %187 = vector.shape_cast %186 : vector<1x1x16x16xf32> to vector<16x16xf32>
    %188 = vector.shape_cast %185 : vector<16x16xf32> to vector<1x1x16x16xf32>
    tpu.vector_store %arg4[%c1_182, %c0_183, %c0_184, %c0_185], %188 {strides = array<i32>} : memref<2x1x16x16xf32, #tpu.memory_space<vmem>>, vector<1x1x16x16xf32>,
    return
  }
  func.func @transform_0(%arg0: i32) -> (i32, i32, i32, i32) {
    %c0_i32 = arith.constant 0 : i32
    %c0_i32_0 = arith.constant 0 : i32
    %c0_i32_1 = arith.constant 0 : i32
    %c0_i32_2 = arith.constant 0 : i32
    return %arg0, %c0_i32, %c0_i32_0, %c0_i32_1 : i32, i32, i32, i32
  }
  func.func @transform_1(%arg0: i32) -> i32 {
    %c0_i32 = arith.constant 0 : i32
    %c0_i32_0 = arith.constant 0 : i32
    return %c0_i32 : i32
  }
  func.func @transform_2(%arg0: i32) -> i32 {
    %c0_i32 = arith.constant 0 : i32
    %c0_i32_0 = arith.constant 0 : i32
    return %c0_i32 : i32
  }
  func.func @transform_3(%arg0: i32) -> (i32, i32, i32, i32) {
    %c0_i32 = arith.constant 0 : i32
    %c0_i32_0 = arith.constant 0 : i32
    %c0_i32_1 = arith.constant 0 : i32
    %c0_i32_2 = arith.constant 0 : i32
    return %arg0, %c0_i32, %c0_i32_0, %c0_i32_1 : i32, i32, i32, i32
  }
}

</mosaic_0001>

<llo_original>
// kernel: tpu_custom_call.1
$region0: #{tpu_custom_call.1}
  #allocation0 [shape = 'u32[]', space=smem, size = 0x4, offset = 0x4, fixed_abs, tag = 'smem constant byte address 0x4 - core index']
  #allocation1 [shape = 'u32[144,128]{1,0:T(1,128)}', space=vmem, size = 0x12000, scoped, tag = 'internal scratch']
  #allocation2 [shape = 'f32[2,22,44]{2,1,0:T(8,128)}', space=vmem, size = 0x6000, scoped, tag = 'scratch operand']
  #allocation3 [shape = 'f32[16,22,44]{2,1,0:T(8,128)}', space=vmem, size = 0x30000, scoped, tag = 'scratch operand']
  #allocation4 [shape = 'f32[4,16,38]{2,1,0:T(8,128)}', space=vmem, size = 0x8000, scoped, tag = 'scratch operand']
  #allocation5 [shape = 'f32[16,38]{1,0:T(8,128)}', space=vmem, size = 0x2000, scoped, tag = 'scratch operand']
  %s0 = inlined_call_operand.hbm [shape: f32[2,4,16,16], index: 0, kind: input, shape index: {}]
  %s1 = inlined_call_operand.hbm [shape: f32[1568], index: 1, kind: input, shape index: {}]
  %s2 = inlined_call_operand.hbm [shape: f32[784], index: 2, kind: input, shape index: {}]
  %s3 = inlined_call_operand.hbm [shape: f32[2,1,16,16], index: 3, kind: output, shape index: {}]
  %s4 = sld [smem:[#allocation0]]
  $region69: #{tpu_custom_call.1} parent=0
    _
  %s6 = ssub.s32 1, %s4
  %s7 = scalar_select 0, %s6, %s4
  $region1: #{tpu_custom_call.1} parent=0
    #allocation6 [shape = 'u8[65536]{0}', space=vmem, size = 0x10000, scoped, tag = 'input window, operand 0, single buffered']
    #allocation7 [shape = 's32[1]{0}', space=sflag, size = 0x4, scoped, tag = 'scoped memory for tpu_custom_call.1']
    #allocation8 [shape = 's32[1]{0}', space=sflag, size = 0x4, scoped, tag = 'scoped memory for tpu_custom_call.1']
    #allocation9 [shape = 's32[1]{0}', space=sflag, size = 0x4, scoped, tag = 'scoped memory for tpu_custom_call.1']
    #allocation10 [shape = 'u8[6656]{0}', space=smem, size = 0x1a00, scoped, tag = 'input window, operand 1, single buffered']
    #allocation11 [shape = 'u8[3584]{0}', space=smem, size = 0xe00, scoped, tag = 'input window, operand 2, single buffered']
    #allocation12 [shape = 's32[1]{0}', space=sflag, size = 0x4, scoped, tag = 'scoped memory for tpu_custom_call.1']
    #allocation13 [shape = 'u8[16384]{0}', space=vmem, size = 0x4000, scoped, tag = 'output window, operand 0, single buffered']
    %8 = vsyncpa [#allocation7], 0
    %9 = vsyncpa [#allocation9], 0
    %10 = vsyncpa [#allocation12], 0
    %11 = vsyncpa [#allocation8], 0
    // Predicated region
    $region2: #{tpu_custom_call.1} parent=1 // pred_check
      _
    $region3: #{tpu_custom_call.1} parent=1 // pred_check_branch
      %13 = sbr.rel (0) target = $region5
    $region4: #{tpu_custom_call.1} parent=1 // pred_region
      %s15 = ssub.s32 2048, 2048
      %16 = vsyncadd [#allocation7], %s15
      %s17 = sshll.u32 [#allocation6], 4
      %s18 = int_to_ptr.vmem [resolvable:$true] %s17
      %23 = dma.hbm_to_vmem [thread:$0]  %s0, 2048, %s18, [#allocation7], 128, 128, 8
    $region5: #{tpu_custom_call.1} parent=1 // pred_fallthru
      _
    // Predicated region
    $region6: #{tpu_custom_call.1} parent=1 // pred_check
      _
    $region7: #{tpu_custom_call.1} parent=1 // pred_check_branch
      %25 = sbr.rel (0) target = $region9
    $region8: #{tpu_custom_call.1} parent=1 // pred_region
      %s27 = ssub.s32 208, 208
      %28 = vsyncadd [#allocation9], %s27
      %31 = dma.hbm_to_smem %s1, 208, [#allocation10], [#allocation9]
    $region9: #{tpu_custom_call.1} parent=1 // pred_fallthru
      _
    // Predicated region
    $region10: #{tpu_custom_call.1} parent=1 // pred_check
      _
    $region11: #{tpu_custom_call.1} parent=1 // pred_check_branch
      %33 = sbr.rel (0) target = $region13
    $region12: #{tpu_custom_call.1} parent=1 // pred_region
      %s35 = ssub.s32 112, 112
      %36 = vsyncadd [#allocation12], %s35
      %39 = dma.hbm_to_smem %s2, 112, [#allocation11], [#allocation12]
    $region13: #{tpu_custom_call.1} parent=1 // pred_fallthru
      _
    // Predicated region
    $region14: #{tpu_custom_call.1} parent=1 // pred_check
      _
    $region15: #{tpu_custom_call.1} parent=1 // pred_check_branch
      %41 = sbr.rel (0) target = $region17
    $region16: #{tpu_custom_call.1} parent=1 // pred_region
      %42 = dma.done [#allocation7], 2048
    $region17: #{tpu_custom_call.1} parent=1 // pred_fallthru
      _
    // Predicated region
    $region18: #{tpu_custom_call.1} parent=1 // pred_check
      _
    $region19: #{tpu_custom_call.1} parent=1 // pred_check_branch
      %44 = sbr.rel (0) target = $region21
    $region20: #{tpu_custom_call.1} parent=1 // pred_region
      %45 = dma.done [#allocation9], 208
    $region21: #{tpu_custom_call.1} parent=1 // pred_fallthru
      _
    // Predicated region
    $region22: #{tpu_custom_call.1} parent=1 // pred_check
      _
    $region23: #{tpu_custom_call.1} parent=1 // pred_check_branch
      %47 = sbr.rel (0) target = $region25
    $region24: #{tpu_custom_call.1} parent=1 // pred_region
      %48 = dma.done [#allocation12], 112
    $region25: #{tpu_custom_call.1} parent=1 // pred_fallthru
      _
    %49 = sfence
    %vm50 = vcmask 359424
    %51 = vst.msk [vmem:[#allocation2] sm:$0xff] %vm50, 0.0
    %52 = vst.msk [vmem:[#allocation2 + $0x8] sm:$0xff] %vm50, 0.0
    %vm53 = vcmask 357376
    %54 = vst.msk [vmem:[#allocation2 + $0x10] sm:$0x3f] %vm53, 0.0
    %55 = vst.msk [vmem:[#allocation2 + $0x18] sm:$0xff] %vm50, 0.0
    %56 = vst.msk [vmem:[#allocation2 + $0x20] sm:$0xff] %vm50, 0.0
    %57 = vst.msk [vmem:[#allocation2 + $0x28] sm:$0x3f] %vm53, 0.0
    %vm58 = vcmask 354304
    %59 = vst.msk [vmem:[#allocation3] sm:$0x7] %vm58, 0.0
    %60 = vst.msk [vmem:[#allocation3 + $0x18] sm:$0x7] %vm58, 0.0
    %61 = vst.msk [vmem:[#allocation3 + $0x30] sm:$0x7] %vm58, 0.0
    %62 = vst.msk [vmem:[#allocation3 + $0x48] sm:$0x7] %vm58, 0.0
    %63 = vst.msk [vmem:[#allocation3 + $0x60] sm:$0x7] %vm58, 0.0
    %64 = vst.msk [vmem:[#allocation3 + $0x78] sm:$0x7] %vm58, 0.0
    %65 = vst.msk [vmem:[#allocation3 + $0x90] sm:$0x7] %vm58, 0.0
    %66 = vst.msk [vmem:[#allocation3 + $0xa8] sm:$0x7] %vm58, 0.0
    %67 = vst.msk [vmem:[#allocation3 + $0xc0] sm:$0x7] %vm58, 0.0
    %68 = vst.msk [vmem:[#allocation3 + $0xd8] sm:$0x7] %vm58, 0.0
    %69 = vst.msk [vmem:[#allocation3 + $0xf0] sm:$0x7] %vm58, 0.0
    %70 = vst.msk [vmem:[#allocation3 + $0x108] sm:$0x7] %vm58, 0.0
    %71 = vst.msk [vmem:[#allocation3 + $0x120] sm:$0x7] %vm58, 0.0
    %72 = vst.msk [vmem:[#allocation3 + $0x138] sm:$0x7] %vm58, 0.0
    %73 = vst.msk [vmem:[#allocation3 + $0x150] sm:$0x7] %vm58, 0.0
    %74 = vst.msk [vmem:[#allocation3 + $0x168] sm:$0x7] %vm58, 0.0
    %75 = vst.msk [vmem:[#allocation3 + $0x13] sm:$0x7] %vm58, 0.0
    %76 = vst.msk [vmem:[#allocation3 + $0x2b] sm:$0x7] %vm58, 0.0
    %77 = vst.msk [vmem:[#allocation3 + $0x43] sm:$0x7] %vm58, 0.0
    %78 = vst.msk [vmem:[#allocation3 + $0x5b] sm:$0x7] %vm58, 0.0
    %79 = vst.msk [vmem:[#allocation3 + $0x73] sm:$0x7] %vm58, 0.0
    %80 = vst.msk [vmem:[#allocation3 + $0x8b] sm:$0x7] %vm58, 0.0
    %81 = vst.msk [vmem:[#allocation3 + $0xa3] sm:$0x7] %vm58, 0.0
    %82 = vst.msk [vmem:[#allocation3 + $0xbb] sm:$0x7] %vm58, 0.0
    %83 = vst.msk [vmem:[#allocation3 + $0xd3] sm:$0x7] %vm58, 0.0
    %84 = vst.msk [vmem:[#allocation3 + $0xeb] sm:$0x7] %vm58, 0.0
    %85 = vst.msk [vmem:[#allocation3 + $0x103] sm:$0x7] %vm58, 0.0
    %86 = vst.msk [vmem:[#allocation3 + $0x11b] sm:$0x7] %vm58, 0.0
    %87 = vst.msk [vmem:[#allocation3 + $0x133] sm:$0x7] %vm58, 0.0
    %88 = vst.msk [vmem:[#allocation3 + $0x14b] sm:$0x7] %vm58, 0.0
    %89 = vst.msk [vmem:[#allocation3 + $0x163] sm:$0x7] %vm58, 0.0
    %90 = vst.msk [vmem:[#allocation3 + $0x17b] sm:$0x7] %vm58, 0.0
    %vm91 = vcmask 23552
    %92 = vst.msk [vmem:[#allocation3] sm:$0xff] %vm91, 0.0
    %93 = vst.msk [vmem:[#allocation3 + $0x8] sm:$0xff] %vm91, 0.0
    %vm94 = vcmask 21504
    %95 = vst.msk [vmem:[#allocation3 + $0x10] sm:$0x3f] %vm94, 0.0
    %96 = vst.msk [vmem:[#allocation3 + $0x18] sm:$0xff] %vm91, 0.0
    %97 = vst.msk [vmem:[#allocation3 + $0x20] sm:$0xff] %vm91, 0.0
    %98 = vst.msk [vmem:[#allocation3 + $0x28] sm:$0x3f] %vm94, 0.0
    %99 = vst.msk [vmem:[#allocation3 + $0x30] sm:$0xff] %vm91, 0.0
    %100 = vst.msk [vmem:[#allocation3 + $0x38] sm:$0xff] %vm91, 0.0
    %101 = vst.msk [vmem:[#allocation3 + $0x40] sm:$0x3f] %vm94, 0.0
    %102 = vst.msk [vmem:[#allocation3 + $0x48] sm:$0xff] %vm91, 0.0
    %103 = vst.msk [vmem:[#allocation3 + $0x50] sm:$0xff] %vm91, 0.0
    %104 = vst.msk [vmem:[#allocation3 + $0x58] sm:$0x3f] %vm94, 0.0
    %105 = vst.msk [vmem:[#allocation3 + $0x60] sm:$0xff] %vm91, 0.0
    %106 = vst.msk [vmem:[#allocation3 + $0x68] sm:$0xff] %vm91, 0.0
    %107 = vst.msk [vmem:[#allocation3 + $0x70] sm:$0x3f] %vm94, 0.0
    %108 = vst.msk [vmem:[#allocation3 + $0x78] sm:$0xff] %vm91, 0.0
    %109 = vst.msk [vmem:[#allocation3 + $0x80] sm:$0xff] %vm91, 0.0
    %110 = vst.msk [vmem:[#allocation3 + $0x88] sm:$0x3f] %vm94, 0.0
    %111 = vst.msk [vmem:[#allocation3 + $0x90] sm:$0xff] %vm91, 0.0
    %112 = vst.msk [vmem:[#allocation3 + $0x98] sm:$0xff] %vm91, 0.0
    %113 = vst.msk [vmem:[#allocation3 + $0xa0] sm:$0x3f] %vm94, 0.0
    %114 = vst.msk [vmem:[#allocation3 + $0xa8] sm:$0xff] %vm91, 0.0
    %115 = vst.msk [vmem:[#allocation3 + $0xb0] sm:$0xff] %vm91, 0.0
    %116 = vst.msk [vmem:[#allocation3 + $0xb8] sm:$0x3f] %vm94, 0.0
    %117 = vst.msk [vmem:[#allocation3 + $0xc0] sm:$0xff] %vm91, 0.0
    %118 = vst.msk [vmem:[#allocation3 + $0xc8] sm:$0xff] %vm91, 0.0
    %119 = vst.msk [vmem:[#allocation3 + $0xd0] sm:$0x3f] %vm94, 0.0
    %120 = vst.msk [vmem:[#allocation3 + $0xd8] sm:$0xff] %vm91, 0.0
    %121 = vst.msk [vmem:[#allocation3 + $0xe0] sm:$0xff] %vm91, 0.0
    %122 = vst.msk [vmem:[#allocation3 + $0xe8] sm:$0x3f] %vm94, 0.0
    %123 = vst.msk [vmem:[#allocation3 + $0xf0] sm:$0xff] %vm91, 0.0
    %124 = vst.msk [vmem:[#allocation3 + $0xf8] sm:$0xff] %vm91, 0.0
    %125 = vst.msk [vmem:[#allocation3 + $0x100] sm:$0x3f] %vm94, 0.0
    %126 = vst.msk [vmem:[#allocation3 + $0x108] sm:$0xff] %vm91, 0.0
    %127 = vst.msk [vmem:[#allocation3 + $0x110] sm:$0xff] %vm91, 0.0
    %128 = vst.msk [vmem:[#allocation3 + $0x118] sm:$0x3f] %vm94, 0.0
    %129 = vst.msk [vmem:[#allocation3 + $0x120] sm:$0xff] %vm91, 0.0
    %130 = vst.msk [vmem:[#allocation3 + $0x128] sm:$0xff] %vm91, 0.0
    %131 = vst.msk [vmem:[#allocation3 + $0x130] sm:$0x3f] %vm94, 0.0
    %132 = vst.msk [vmem:[#allocation3 + $0x138] sm:$0xff] %vm91, 0.0
    %133 = vst.msk [vmem:[#allocation3 + $0x140] sm:$0xff] %vm91, 0.0
    %134 = vst.msk [vmem:[#allocation3 + $0x148] sm:$0x3f] %vm94, 0.0
    %135 = vst.msk [vmem:[#allocation3 + $0x150] sm:$0xff] %vm91, 0.0
    %136 = vst.msk [vmem:[#allocation3 + $0x158] sm:$0xff] %vm91, 0.0
    %137 = vst.msk [vmem:[#allocation3 + $0x160] sm:$0x3f] %vm94, 0.0
    %138 = vst.msk [vmem:[#allocation3 + $0x168] sm:$0xff] %vm91, 0.0
    %139 = vst.msk [vmem:[#allocation3 + $0x170] sm:$0xff] %vm91, 0.0
    %140 = vst.msk [vmem:[#allocation3 + $0x178] sm:$0x3f] %vm94, 0.0
    %vm141 = vcmask 359752
    %142 = vst.msk [vmem:[#allocation3] sm:$0xff] %vm141, 0.0
    %143 = vst.msk [vmem:[#allocation3 + $0x8] sm:$0xff] %vm141, 0.0
    %vm144 = vcmask 357704
    %145 = vst.msk [vmem:[#allocation3 + $0x10] sm:$0x3f] %vm144, 0.0
    %146 = vst.msk [vmem:[#allocation3 + $0x18] sm:$0xff] %vm141, 0.0
    %147 = vst.msk [vmem:[#allocation3 + $0x20] sm:$0xff] %vm141, 0.0
    %148 = vst.msk [vmem:[#allocation3 + $0x28] sm:$0x3f] %vm144, 0.0
    %149 = vst.msk [vmem:[#allocation3 + $0x30] sm:$0xff] %vm141, 0.0
    %150 = vst.msk [vmem:[#allocation3 + $0x38] sm:$0xff] %vm141, 0.0
    %151 = vst.msk [vmem:[#allocation3 + $0x40] sm:$0x3f] %vm144, 0.0
    %152 = vst.msk [vmem:[#allocation3 + $0x48] sm:$0xff] %vm141, 0.0
    %153 = vst.msk [vmem:[#allocation3 + $0x50] sm:$0xff] %vm141, 0.0
    %154 = vst.msk [vmem:[#allocation3 + $0x58] sm:$0x3f] %vm144, 0.0
    %155 = vst.msk [vmem:[#allocation3 + $0x60] sm:$0xff] %vm141, 0.0
    %156 = vst.msk [vmem:[#allocation3 + $0x68] sm:$0xff] %vm141, 0.0
    %157 = vst.msk [vmem:[#allocation3 + $0x70] sm:$0x3f] %vm144, 0.0
    %158 = vst.msk [vmem:[#allocation3 + $0x78] sm:$0xff] %vm141, 0.0
    %159 = vst.msk [vmem:[#allocation3 + $0x80] sm:$0xff] %vm141, 0.0
    %160 = vst.msk [vmem:[#allocation3 + $0x88] sm:$0x3f] %vm144, 0.0
    %161 = vst.msk [vmem:[#allocation3 + $0x90] sm:$0xff] %vm141, 0.0
    %162 = vst.msk [vmem:[#allocation3 + $0x98] sm:$0xff] %vm141, 0.0
    %163 = vst.msk [vmem:[#allocation3 + $0xa0] sm:$0x3f] %vm144, 0.0
    %164 = vst.msk [vmem:[#allocation3 + $0xa8] sm:$0xff] %vm141, 0.0
    %165 = vst.msk [vmem:[#allocation3 + $0xb0] sm:$0xff] %vm141, 0.0
    %166 = vst.msk [vmem:[#allocation3 + $0xb8] sm:$0x3f] %vm144, 0.0
    %167 = vst.msk [vmem:[#allocation3 + $0xc0] sm:$0xff] %vm141, 0.0
    %168 = vst.msk [vmem:[#allocation3 + $0xc8] sm:$0xff] %vm141, 0.0
    %169 = vst.msk [vmem:[#allocation3 + $0xd0] sm:$0x3f] %vm144, 0.0
    %170 = vst.msk [vmem:[#allocation3 + $0xd8] sm:$0xff] %vm141, 0.0
    %171 = vst.msk [vmem:[#allocation3 + $0xe0] sm:$0xff] %vm141, 0.0
    %172 = vst.msk [vmem:[#allocation3 + $0xe8] sm:$0x3f] %vm144, 0.0
    %173 = vst.msk [vmem:[#allocation3 + $0xf0] sm:$0xff] %vm141, 0.0
    %174 = vst.msk [vmem:[#allocation3 + $0xf8] sm:$0xff] %vm141, 0.0
    %175 = vst.msk [vmem:[#allocation3 + $0x100] sm:$0x3f] %vm144, 0.0
    %176 = vst.msk [vmem:[#allocation3 + $0x108] sm:$0xff] %vm141, 0.0
    %177 = vst.msk [vmem:[#allocation3 + $0x110] sm:$0xff] %vm141, 0.0
    %178 = vst.msk [vmem:[#allocation3 + $0x118] sm:$0x3f] %vm144, 0.0
    %179 = vst.msk [vmem:[#allocation3 + $0x120] sm:$0xff] %vm141, 0.0
    %180 = vst.msk [vmem:[#allocation3 + $0x128] sm:$0xff] %vm141, 0.0
    %181 = vst.msk [vmem:[#allocation3 + $0x130] sm:$0x3f] %vm144, 0.0
    %182 = vst.msk [vmem:[#allocation3 + $0x138] sm:$0xff] %vm141, 0.0
    %183 = vst.msk [vmem:[#allocation3 + $0x140] sm:$0xff] %vm141, 0.0
    %184 = vst.msk [vmem:[#allocation3 + $0x148] sm:$0x3f] %vm144, 0.0
    %185 = vst.msk [vmem:[#allocation3 + $0x150] sm:$0xff] %vm141, 0.0
    %186 = vst.msk [vmem:[#allocation3 + $0x158] sm:$0xff] %vm141, 0.0
    %187 = vst.msk [vmem:[#allocation3 + $0x160] sm:$0x3f] %vm144, 0.0
    %188 = vst.msk [vmem:[#allocation3 + $0x168] sm:$0xff] %vm141, 0.0
    %189 = vst.msk [vmem:[#allocation3 + $0x170] sm:$0xff] %vm141, 0.0
    %190 = vst.msk [vmem:[#allocation3 + $0x178] sm:$0x3f] %vm144, 0.0
    %v191 = vld [vmem:[#allocation6] sm:$0xff]
    %v192 = vld [vmem:[#allocation6 + $0x8] sm:$0xff]
    %v193 = vld [vmem:[#allocation6 + $0x10] sm:$0xff]
    %v194 = vld [vmem:[#allocation6 + $0x18] sm:$0xff]
    %v195 = vld [vmem:[#allocation6 + $0x20] sm:$0xff]
    %v196 = vld [vmem:[#allocation6 + $0x28] sm:$0xff]
    %v197 = vld [vmem:[#allocation6 + $0x30] sm:$0xff]
    %v198 = vld [vmem:[#allocation6 + $0x38] sm:$0xff]
    %vm199 = vcmask 130048
    %v200 = vsel %vm199, %v191, 0.0
    %v201 = vsel %vm199, %v193, 0.0
    %v202 = vadd.f32 %v200, %v201
    %v203 = vsel %vm199, %v195, 0.0
    %v204 = vadd.f32 %v202, %v203
    %v205 = vsel %vm199, %v197, 0.0
    %v206 = vadd.f32 %v204, %v205
    %v207 = vsel %vm199, %v192, 0.0
    %v208 = vsel %vm199, %v194, 0.0
    %v209 = vadd.f32 %v207, %v208
    %v210 = vsel %vm199, %v196, 0.0
    %v211 = vadd.f32 %v209, %v210
    %v212 = vsel %vm199, %v198, 0.0
    %v213 = vadd.f32 %v211, %v212
    %v214 = vrcp.pop 4.0
    %v215 = vmul.f32 %v206, %v214
    %v216 = vmul.f32 %v213, %v214
    %219 = vrot.lane.b32.xlu0 %v215, 3
    %v220 = vpop.permute.xlu0 %219
    %221 = vrot.lane.b32.xlu0 %v216, 3
    %v222 = vpop.permute.xlu0 %221
    %vm225 = vcmask 154648
    %226 = vst.msk [vmem:[#allocation2 + $0x3] sm:$0xff] %vm225, %v220
    %227 = vst.msk [vmem:[#allocation2 + $0xb] sm:$0xff] %vm225, %v222
    %v228 = vsel %vm199, %v191, -inf
    %v229 = vsel %vm199, %v193, -inf
    %v230 = vsel %vm199, %v195, -inf
    %v231 = vmax.f32 %v228, %v230
    %v232 = vsel %vm199, %v197, -inf
    %v233 = vmax.f32 %v229, %v232
    %v234 = vmax.f32 %v231, %v233
    %v235 = vsel %vm199, %v192, -inf
    %v236 = vsel %vm199, %v194, -inf
    %v237 = vsel %vm199, %v196, -inf
    %v238 = vmax.f32 %v235, %v237
    %v239 = vsel %vm199, %v198, -inf
    %v240 = vmax.f32 %v236, %v239
    %v241 = vmax.f32 %v238, %v240
    %244 = vrot.lane.b32.xlu0 %v234, 3
    %v245 = vpop.permute.xlu0 %244
    %246 = vrot.lane.b32.xlu0 %v241, 3
    %v247 = vpop.permute.xlu0 %246
    %s250 = scalar_lea.vmem [#allocation2], 24
    %251 = vst.msk [vmem:[%s250 + $0x3] sm:$0xff] %vm225, %v245
    %252 = vst.msk [vmem:[%s250 + $0xb] sm:$0xff] %vm225, %v247
    %s253 = scalar_lea.vmem [#allocation6], 64
    %v254 = vld [vmem:[%s253] sm:$0xff]
    %v255 = vld [vmem:[%s253 + $0x8] sm:$0xff]
    %v256 = vld [vmem:[%s253 + $0x10] sm:$0xff]
    %v257 = vld [vmem:[%s253 + $0x18] sm:$0xff]
    %v258 = vld [vmem:[%s253 + $0x20] sm:$0xff]
    %v259 = vld [vmem:[%s253 + $0x28] sm:$0xff]
    %v260 = vld [vmem:[%s253 + $0x30] sm:$0xff]
    %v261 = vld [vmem:[%s253 + $0x38] sm:$0xff]
    %v262 = vsel %vm199, %v254, 0.0
    %v263 = vsel %vm199, %v256, 0.0
    %v264 = vadd.f32 %v262, %v263
    %v265 = vsel %vm199, %v258, 0.0
    %v266 = vadd.f32 %v264, %v265
    %v267 = vsel %vm199, %v260, 0.0
    %v268 = vadd.f32 %v266, %v267
    %v269 = vsel %vm199, %v255, 0.0
    %v270 = vsel %vm199, %v257, 0.0
    %v271 = vadd.f32 %v269, %v270
    %v272 = vsel %vm199, %v259, 0.0
    %v273 = vadd.f32 %v271, %v272
    %v274 = vsel %vm199, %v261, 0.0
    %v275 = vadd.f32 %v273, %v274
    %v276 = vmul.f32 %v268, %v214
    %v277 = vmul.f32 %v275, %v214
    %280 = vrot.lane.b32.xlu0 %v276, 25
    %v281 = vpop.permute.xlu0 %280
    %282 = vrot.lane.b32.xlu0 %v277, 25
    %v283 = vpop.permute.xlu0 %282
    %vm286 = vcmask 335048
    %287 = vst.msk [vmem:[#allocation2 + $0x3] sm:$0xff] %vm286, %v281
    %288 = vst.msk [vmem:[#allocation2 + $0xb] sm:$0xff] %vm286, %v283
    %v289 = vsel %vm199, %v254, -inf
    %v290 = vsel %vm199, %v256, -inf
    %v291 = vsel %vm199, %v258, -inf
    %v292 = vmax.f32 %v289, %v291
    %v293 = vsel %vm199, %v260, -inf
    %v294 = vmax.f32 %v290, %v293
    %v295 = vmax.f32 %v292, %v294
    %v296 = vsel %vm199, %v255, -inf
    %v297 = vsel %vm199, %v257, -inf
    %v298 = vsel %vm199, %v259, -inf
    %v299 = vmax.f32 %v296, %v298
    %v300 = vsel %vm199, %v261, -inf
    %v301 = vmax.f32 %v297, %v300
    %v302 = vmax.f32 %v299, %v301
    %305 = vrot.lane.b32.xlu0 %v295, 25
    %v306 = vpop.permute.xlu0 %305
    %307 = vrot.lane.b32.xlu0 %v302, 25
    %v308 = vpop.permute.xlu0 %307
    %311 = vst.msk [vmem:[%s250 + $0x3] sm:$0xff] %vm286, %v306
    %312 = vst.msk [vmem:[%s250 + $0xb] sm:$0xff] %vm286, %v308
    %v313 = vlaneseq
    %v314 = vand.u32 %v313, 127
    %vm315 = vcmp.ge.s32.totalorder %v314, 0
    %vm316 = vcmp.lt.s32.totalorder %v314, 16
    %vm317 = vmand %vm315, %vm316
    %vm318 = vcmp.ge.s32.totalorder %v314, 22
    %vm319 = vcmp.lt.s32.totalorder %v314, 38
    %vm320 = vmand %vm318, %vm319
    %vm321 = vmor %vm317, %vm320
    %vm322 = vcmask 310272
    %323 = vst.msk [vmem:[#allocation4] sm:$0xff] %vm322, 0.0
    %324 = vst.msk [vmem:[#allocation4 + $0x8] sm:$0xff] %vm322, 0.0
    %325 = vst.msk [vmem:[#allocation4 + $0x10] sm:$0xff] %vm322, 0.0
    %326 = vst.msk [vmem:[#allocation4 + $0x18] sm:$0xff] %vm322, 0.0
    %327 = vst.msk [vmem:[#allocation4 + $0x20] sm:$0xff] %vm322, 0.0
    %328 = vst.msk [vmem:[#allocation4 + $0x28] sm:$0xff] %vm322, 0.0
    %329 = vst.msk [vmem:[#allocation4 + $0x30] sm:$0xff] %vm322, 0.0
    %330 = vst.msk [vmem:[#allocation4 + $0x38] sm:$0xff] %vm322, 0.0
    loop: start=0, step=1, limit=7
    $region26: #{tpu_custom_call.1} parent=1 // loop_pre_header
      _
    $region27: #{tpu_custom_call.1} parent=1 // loop_header
      %s332 = sphi 0, %s336
      %p333 = scmp.ge.s32.totalorder %s332, 7
    $region28: #{tpu_custom_call.1} parent=1 // loop_header_branch
      %335 = sbr.rel (%p333) target = $region32
    $region29: #{tpu_custom_call.1} parent=1 // loop_body
      %v337 = vld [vmem:[#allocation4] sm:$0xff]
      %v338 = vld [vmem:[#allocation4 + $0x8] sm:$0xff]
      %s339 = scalar_lea.vmem [#allocation4], 16
      %v340 = vld [vmem:[%s339] sm:$0xff]
      %v341 = vld [vmem:[%s339 + $0x8] sm:$0xff]
      %s342 = scalar_lea.vmem [#allocation4], 32
      %v343 = vld [vmem:[%s342] sm:$0xff]
      %v344 = vld [vmem:[%s342 + $0x8] sm:$0xff]
      %s345 = scalar_lea.vmem [#allocation4], 48
      %v346 = vld [vmem:[%s345] sm:$0xff]
      %v347 = vld [vmem:[%s345 + $0x8] sm:$0xff]
      %s348 = scalar_lea.vmem [#allocation2], %s332
      %v349 = vld [vmem:[%s348] sm:$0xff]
      %v350 = vld [vmem:[%s348 + $0x8] sm:$0xff]
      %s351 = sadd.s32 %s332, 24
      %s352 = scalar_lea.vmem [#allocation2], %s351
      %v353 = vld [vmem:[%s352] sm:$0xff]
      %v354 = vld [vmem:[%s352 + $0x8] sm:$0xff]
      %s355 = smul.u32 %s332, 224
      %s356 = sld [smem:[#allocation10 + %s355]]
      %v357 = vstv %s356
      %v358 = vmul.f32 %v357, %v349
      %v359 = vmul.f32 %v357, %v350
      %v360 = vadd.f32 %v337, %v358
      %v361 = vadd.f32 %v338, %v359
      %s362 = sadd.s32 %s355, 1
      %s363 = sld [smem:[#allocation10 + %s362]]
      %v364 = vstv %s363
      %v365 = vmul.f32 %v364, %v353
      %v366 = vmul.f32 %v364, %v354
      %v367 = vadd.f32 %v360, %v365
      %v368 = vadd.f32 %v361, %v366
      %s369 = sadd.s32 %s355, 2
      %s370 = sld [smem:[#allocation10 + %s369]]
      %v371 = vstv %s370
      %v372 = vmul.f32 %v371, %v349
      %v373 = vmul.f32 %v371, %v350
      %v374 = vadd.f32 %v340, %v372
      %v375 = vadd.f32 %v341, %v373
      %s376 = sadd.s32 %s355, 3
      %s377 = sld [smem:[#allocation10 + %s376]]
      %v378 = vstv %s377
      %v379 = vmul.f32 %v378, %v353
      %v380 = vmul.f32 %v378, %v354
      %v381 = vadd.f32 %v374, %v379
      %v382 = vadd.f32 %v375, %v380
      %s383 = sadd.s32 %s355, 4
      %s384 = sld [smem:[#allocation10 + %s383]]
      %v385 = vstv %s384
      %v386 = vmul.f32 %v385, %v349
      %v387 = vmul.f32 %v385, %v350
      %v388 = vadd.f32 %v343, %v386
      %v389 = vadd.f32 %v344, %v387
      %s390 = sadd.s32 %s355, 5
      %s391 = sld [smem:[#allocation10 + %s390]]
      %v392 = vstv %s391
      %v393 = vmul.f32 %v392, %v353
      %v394 = vmul.f32 %v392, %v354
      %v395 = vadd.f32 %v388, %v393
      %v396 = vadd.f32 %v389, %v394
      %s397 = sadd.s32 %s355, 6
      %s398 = sld [smem:[#allocation10 + %s397]]
      %v399 = vstv %s398
      %v400 = vmul.f32 %v399, %v349
      %v401 = vmul.f32 %v399, %v350
      %v402 = vadd.f32 %v346, %v400
      %v403 = vadd.f32 %v347, %v401
      %s404 = sadd.s32 %s355, 7
      %s405 = sld [smem:[#allocation10 + %s404]]
      %v406 = vstv %s405
      %v407 = vmul.f32 %v406, %v353
      %v408 = vmul.f32 %v406, %v354
      %v409 = vadd.f32 %v402, %v407
      %v410 = vadd.f32 %v403, %v408
      %s411 = smul.u32 %s332, 7
      %s412 = sadd.s32 %s411, 1
      %s413 = smul.u32 %s412, 32
      %s414 = sld [smem:[#allocation10 + %s413]]
      %v415 = vstv %s414
      %v416 = vmul.f32 %v415, %v349
      %v417 = vmul.f32 %v415, %v350
      %420 = vrot.lane.b32.xlu0 %v416, 127
      %v421 = vpop.permute.xlu0 %420
      %422 = vrot.lane.b32.xlu0 %v417, 127
      %v423 = vpop.permute.xlu0 %422
      %v426 = vadd.f32 %v367, %v421
      %v427 = vadd.f32 %v368, %v423
      %s428 = sadd.s32 %s413, 1
      %s429 = sld [smem:[#allocation10 + %s428]]
      %v430 = vstv %s429
      %v431 = vmul.f32 %v430, %v353
      %v432 = vmul.f32 %v430, %v354
      %435 = vrot.lane.b32.xlu0 %v431, 127
      %v436 = vpop.permute.xlu0 %435
      %437 = vrot.lane.b32.xlu0 %v432, 127
      %v438 = vpop.permute.xlu0 %437
      %v441 = vadd.f32 %v426, %v436
      %v442 = vadd.f32 %v427, %v438
      %s443 = sadd.s32 %s413, 2
      %s444 = sld [smem:[#allocation10 + %s443]]
      %v445 = vstv %s444
      %v446 = vmul.f32 %v445, %v349
      %v447 = vmul.f32 %v445, %v350
      %450 = vrot.lane.b32.xlu0 %v446, 127
      %v451 = vpop.permute.xlu0 %450
      %452 = vrot.lane.b32.xlu0 %v447, 127
      %v453 = vpop.permute.xlu0 %452
      %v456 = vadd.f32 %v381, %v451
      %v457 = vadd.f32 %v382, %v453
      %s458 = sadd.s32 %s413, 3
      %s459 = sld [smem:[#allocation10 + %s458]]
      %v460 = vstv %s459
      %v461 = vmul.f32 %v460, %v353
      %v462 = vmul.f32 %v460, %v354
      %465 = vrot.lane.b32.xlu0 %v461, 127
      %v466 = vpop.permute.xlu0 %465
      %467 = vrot.lane.b32.xlu0 %v462, 127
      %v468 = vpop.permute.xlu0 %467
      %v471 = vadd.f32 %v456, %v466
      %v472 = vadd.f32 %v457, %v468
      %s473 = sadd.s32 %s413, 4
      %s474 = sld [smem:[#allocation10 + %s473]]
      %v475 = vstv %s474
      %v476 = vmul.f32 %v475, %v349
      %v477 = vmul.f32 %v475, %v350
      %480 = vrot.lane.b32.xlu0 %v476, 127
      %v481 = vpop.permute.xlu0 %480
      %482 = vrot.lane.b32.xlu0 %v477, 127
      %v483 = vpop.permute.xlu0 %482
      %v486 = vadd.f32 %v395, %v481
      %v487 = vadd.f32 %v396, %v483
      %s488 = sadd.s32 %s413, 5
      %s489 = sld [smem:[#allocation10 + %s488]]
      %v490 = vstv %s489
      %v491 = vmul.f32 %v490, %v353
      %v492 = vmul.f32 %v490, %v354
      %495 = vrot.lane.b32.xlu0 %v491, 127
      %v496 = vpop.permute.xlu0 %495
      %497 = vrot.lane.b32.xlu0 %v492, 127
      %v498 = vpop.permute.xlu0 %497
      %v501 = vadd.f32 %v486, %v496
      %v502 = vadd.f32 %v487, %v498
      %s503 = sadd.s32 %s413, 6
      %s504 = sld [smem:[#allocation10 + %s503]]
      %v505 = vstv %s504
      %v506 = vmul.f32 %v505, %v349
      %v507 = vmul.f32 %v505, %v350
      %510 = vrot.lane.b32.xlu0 %v506, 127
      %v511 = vpop.permute.xlu0 %510
      %512 = vrot.lane.b32.xlu0 %v507, 127
      %v513 = vpop.permute.xlu0 %512
      %v516 = vadd.f32 %v409, %v511
      %v517 = vadd.f32 %v410, %v513
      %s518 = sadd.s32 %s413, 7
      %s519 = sld [smem:[#allocation10 + %s518]]
      %v520 = vstv %s519
      %v521 = vmul.f32 %v520, %v353
      %v522 = vmul.f32 %v520, %v354
      %525 = vrot.lane.b32.xlu0 %v521, 127
      %v526 = vpop.permute.xlu0 %525
      %527 = vrot.lane.b32.xlu0 %v522, 127
      %v528 = vpop.permute.xlu0 %527
      %v531 = vadd.f32 %v516, %v526
      %v532 = vadd.f32 %v517, %v528
      %s533 = sadd.s32 %s411, 2
      %s534 = smul.u32 %s533, 32
      %s535 = sld [smem:[#allocation10 + %s534]]
      %v536 = vstv %s535
      %v537 = vmul.f32 %v536, %v349
      %v538 = vmul.f32 %v536, %v350
      %541 = vrot.lane.b32.xlu0 %v537, 126
      %v542 = vpop.permute.xlu0 %541
      %543 = vrot.lane.b32.xlu0 %v538, 126
      %v544 = vpop.permute.xlu0 %543
      %v547 = vadd.f32 %v441, %v542
      %v548 = vadd.f32 %v442, %v544
      %s549 = sadd.s32 %s534, 1
      %s550 = sld [smem:[#allocation10 + %s549]]
      %v551 = vstv %s550
      %v552 = vmul.f32 %v551, %v353
      %v553 = vmul.f32 %v551, %v354
      %556 = vrot.lane.b32.xlu0 %v552, 126
      %v557 = vpop.permute.xlu0 %556
      %558 = vrot.lane.b32.xlu0 %v553, 126
      %v559 = vpop.permute.xlu0 %558
      %v562 = vadd.f32 %v547, %v557
      %v563 = vadd.f32 %v548, %v559
      %s564 = sadd.s32 %s534, 2
      %s565 = sld [smem:[#allocation10 + %s564]]
      %v566 = vstv %s565
      %v567 = vmul.f32 %v566, %v349
      %v568 = vmul.f32 %v566, %v350
      %571 = vrot.lane.b32.xlu0 %v567, 126
      %v572 = vpop.permute.xlu0 %571
      %573 = vrot.lane.b32.xlu0 %v568, 126
      %v574 = vpop.permute.xlu0 %573
      %v577 = vadd.f32 %v471, %v572
      %v578 = vadd.f32 %v472, %v574
      %s579 = sadd.s32 %s534, 3
      %s580 = sld [smem:[#allocation10 + %s579]]
      %v581 = vstv %s580
      %v582 = vmul.f32 %v581, %v353
      %v583 = vmul.f32 %v581, %v354
      %586 = vrot.lane.b32.xlu0 %v582, 126
      %v587 = vpop.permute.xlu0 %586
      %588 = vrot.lane.b32.xlu0 %v583, 126
      %v589 = vpop.permute.xlu0 %588
      %v592 = vadd.f32 %v577, %v587
      %v593 = vadd.f32 %v578, %v589
      %s594 = sadd.s32 %s534, 4
      %s595 = sld [smem:[#allocation10 + %s594]]
      %v596 = vstv %s595
      %v597 = vmul.f32 %v596, %v349
      %v598 = vmul.f32 %v596, %v350
      %601 = vrot.lane.b32.xlu0 %v597, 126
      %v602 = vpop.permute.xlu0 %601
      %603 = vrot.lane.b32.xlu0 %v598, 126
      %v604 = vpop.permute.xlu0 %603
      %v607 = vadd.f32 %v501, %v602
      %v608 = vadd.f32 %v502, %v604
      %s609 = sadd.s32 %s534, 5
      %s610 = sld [smem:[#allocation10 + %s609]]
      %v611 = vstv %s610
      %v612 = vmul.f32 %v611, %v353
      %v613 = vmul.f32 %v611, %v354
      %616 = vrot.lane.b32.xlu0 %v612, 126
      %v617 = vpop.permute.xlu0 %616
      %618 = vrot.lane.b32.xlu0 %v613, 126
      %v619 = vpop.permute.xlu0 %618
      %v622 = vadd.f32 %v607, %v617
      %v623 = vadd.f32 %v608, %v619
      %s624 = sadd.s32 %s534, 6
      %s625 = sld [smem:[#allocation10 + %s624]]
      %v626 = vstv %s625
      %v627 = vmul.f32 %v626, %v349
      %v628 = vmul.f32 %v626, %v350
      %631 = vrot.lane.b32.xlu0 %v627, 126
      %v632 = vpop.permute.xlu0 %631
      %633 = vrot.lane.b32.xlu0 %v628, 126
      %v634 = vpop.permute.xlu0 %633
      %v637 = vadd.f32 %v531, %v632
      %v638 = vadd.f32 %v532, %v634
      %s639 = sadd.s32 %s534, 7
      %s640 = sld [smem:[#allocation10 + %s639]]
      %v641 = vstv %s640
      %v642 = vmul.f32 %v641, %v353
      %v643 = vmul.f32 %v641, %v354
      %646 = vrot.lane.b32.xlu0 %v642, 126
      %v647 = vpop.permute.xlu0 %646
      %648 = vrot.lane.b32.xlu0 %v643, 126
      %v649 = vpop.permute.xlu0 %648
      %v652 = vadd.f32 %v637, %v647
      %v653 = vadd.f32 %v638, %v649
      %s654 = sadd.s32 %s411, 3
      %s655 = smul.u32 %s654, 32
      %s656 = sld [smem:[#allocation10 + %s655]]
      %v657 = vstv %s656
      %v658 = vmul.f32 %v657, %v349
      %v659 = vmul.f32 %v657, %v350
      %662 = vrot.lane.b32.xlu0 %v658, 125
      %v663 = vpop.permute.xlu0 %662
      %664 = vrot.lane.b32.xlu0 %v659, 125
      %v665 = vpop.permute.xlu0 %664
      %v668 = vadd.f32 %v562, %v663
      %v669 = vadd.f32 %v563, %v665
      %s670 = sadd.s32 %s655, 1
      %s671 = sld [smem:[#allocation10 + %s670]]
      %v672 = vstv %s671
      %v673 = vmul.f32 %v672, %v353
      %v674 = vmul.f32 %v672, %v354
      %677 = vrot.lane.b32.xlu0 %v673, 125
      %v678 = vpop.permute.xlu0 %677
      %679 = vrot.lane.b32.xlu0 %v674, 125
      %v680 = vpop.permute.xlu0 %679
      %v683 = vadd.f32 %v668, %v678
      %v684 = vadd.f32 %v669, %v680
      %s685 = sadd.s32 %s655, 2
      %s686 = sld [smem:[#allocation10 + %s685]]
      %v687 = vstv %s686
      %v688 = vmul.f32 %v687, %v349
      %v689 = vmul.f32 %v687, %v350
      %692 = vrot.lane.b32.xlu0 %v688, 125
      %v693 = vpop.permute.xlu0 %692
      %694 = vrot.lane.b32.xlu0 %v689, 125
      %v695 = vpop.permute.xlu0 %694
      %v698 = vadd.f32 %v592, %v693
      %v699 = vadd.f32 %v593, %v695
      %s700 = sadd.s32 %s655, 3
      %s701 = sld [smem:[#allocation10 + %s700]]
      %v702 = vstv %s701
      %v703 = vmul.f32 %v702, %v353
      %v704 = vmul.f32 %v702, %v354
      %707 = vrot.lane.b32.xlu0 %v703, 125
      %v708 = vpop.permute.xlu0 %707
      %709 = vrot.lane.b32.xlu0 %v704, 125
      %v710 = vpop.permute.xlu0 %709
      %v713 = vadd.f32 %v698, %v708
      %v714 = vadd.f32 %v699, %v710
      %s715 = sadd.s32 %s655, 4
      %s716 = sld [smem:[#allocation10 + %s715]]
      %v717 = vstv %s716
      %v718 = vmul.f32 %v717, %v349
      %v719 = vmul.f32 %v717, %v350
      %722 = vrot.lane.b32.xlu0 %v718, 125
      %v723 = vpop.permute.xlu0 %722
      %724 = vrot.lane.b32.xlu0 %v719, 125
      %v725 = vpop.permute.xlu0 %724
      %v728 = vadd.f32 %v622, %v723
      %v729 = vadd.f32 %v623, %v725
      %s730 = sadd.s32 %s655, 5
      %s731 = sld [smem:[#allocation10 + %s730]]
      %v732 = vstv %s731
      %v733 = vmul.f32 %v732, %v353
      %v734 = vmul.f32 %v732, %v354
      %737 = vrot.lane.b32.xlu0 %v733, 125
      %v738 = vpop.permute.xlu0 %737
      %739 = vrot.lane.b32.xlu0 %v734, 125
      %v740 = vpop.permute.xlu0 %739
      %v743 = vadd.f32 %v728, %v738
      %v744 = vadd.f32 %v729, %v740
      %s745 = sadd.s32 %s655, 6
      %s746 = sld [smem:[#allocation10 + %s745]]
      %v747 = vstv %s746
      %v748 = vmul.f32 %v747, %v349
      %v749 = vmul.f32 %v747, %v350
      %752 = vrot.lane.b32.xlu0 %v748, 125
      %v753 = vpop.permute.xlu0 %752
      %754 = vrot.lane.b32.xlu0 %v749, 125
      %v755 = vpop.permute.xlu0 %754
      %v758 = vadd.f32 %v652, %v753
      %v759 = vadd.f32 %v653, %v755
      %s760 = sadd.s32 %s655, 7
      %s761 = sld [smem:[#allocation10 + %s760]]
      %v762 = vstv %s761
      %v763 = vmul.f32 %v762, %v353
      %v764 = vmul.f32 %v762, %v354
      %767 = vrot.lane.b32.xlu0 %v763, 125
      %v768 = vpop.permute.xlu0 %767
      %769 = vrot.lane.b32.xlu0 %v764, 125
      %v770 = vpop.permute.xlu0 %769
      %v773 = vadd.f32 %v758, %v768
      %v774 = vadd.f32 %v759, %v770
      %s775 = sadd.s32 %s411, 4
      %s776 = smul.u32 %s775, 32
      %s777 = sld [smem:[#allocation10 + %s776]]
      %v778 = vstv %s777
      %v779 = vmul.f32 %v778, %v349
      %v780 = vmul.f32 %v778, %v350
      %783 = vrot.lane.b32.xlu0 %v779, 124
      %v784 = vpop.permute.xlu0 %783
      %785 = vrot.lane.b32.xlu0 %v780, 124
      %v786 = vpop.permute.xlu0 %785
      %v789 = vadd.f32 %v683, %v784
      %v790 = vadd.f32 %v684, %v786
      %s791 = sadd.s32 %s776, 1
      %s792 = sld [smem:[#allocation10 + %s791]]
      %v793 = vstv %s792
      %v794 = vmul.f32 %v793, %v353
      %v795 = vmul.f32 %v793, %v354
      %798 = vrot.lane.b32.xlu0 %v794, 124
      %v799 = vpop.permute.xlu0 %798
      %800 = vrot.lane.b32.xlu0 %v795, 124
      %v801 = vpop.permute.xlu0 %800
      %v804 = vadd.f32 %v789, %v799
      %v805 = vadd.f32 %v790, %v801
      %s806 = sadd.s32 %s776, 2
      %s807 = sld [smem:[#allocation10 + %s806]]
      %v808 = vstv %s807
      %v809 = vmul.f32 %v808, %v349
      %v810 = vmul.f32 %v808, %v350
      %813 = vrot.lane.b32.xlu0 %v809, 124
      %v814 = vpop.permute.xlu0 %813
      %815 = vrot.lane.b32.xlu0 %v810, 124
      %v816 = vpop.permute.xlu0 %815
      %v819 = vadd.f32 %v713, %v814
      %v820 = vadd.f32 %v714, %v816
      %s821 = sadd.s32 %s776, 3
      %s822 = sld [smem:[#allocation10 + %s821]]
      %v823 = vstv %s822
      %v824 = vmul.f32 %v823, %v353
      %v825 = vmul.f32 %v823, %v354
      %828 = vrot.lane.b32.xlu0 %v824, 124
      %v829 = vpop.permute.xlu0 %828
      %830 = vrot.lane.b32.xlu0 %v825, 124
      %v831 = vpop.permute.xlu0 %830
      %v834 = vadd.f32 %v819, %v829
      %v835 = vadd.f32 %v820, %v831
      %s836 = sadd.s32 %s776, 4
      %s837 = sld [smem:[#allocation10 + %s836]]
      %v838 = vstv %s837
      %v839 = vmul.f32 %v838, %v349
      %v840 = vmul.f32 %v838, %v350
      %843 = vrot.lane.b32.xlu0 %v839, 124
      %v844 = vpop.permute.xlu0 %843
      %845 = vrot.lane.b32.xlu0 %v840, 124
      %v846 = vpop.permute.xlu0 %845
      %v849 = vadd.f32 %v743, %v844
      %v850 = vadd.f32 %v744, %v846
      %s851 = sadd.s32 %s776, 5
      %s852 = sld [smem:[#allocation10 + %s851]]
      %v853 = vstv %s852
      %v854 = vmul.f32 %v853, %v353
      %v855 = vmul.f32 %v853, %v354
      %858 = vrot.lane.b32.xlu0 %v854, 124
      %v859 = vpop.permute.xlu0 %858
      %860 = vrot.lane.b32.xlu0 %v855, 124
      %v861 = vpop.permute.xlu0 %860
      %v864 = vadd.f32 %v849, %v859
      %v865 = vadd.f32 %v850, %v861
      %s866 = sadd.s32 %s776, 6
      %s867 = sld [smem:[#allocation10 + %s866]]
      %v868 = vstv %s867
      %v869 = vmul.f32 %v868, %v349
      %v870 = vmul.f32 %v868, %v350
      %873 = vrot.lane.b32.xlu0 %v869, 124
      %v874 = vpop.permute.xlu0 %873
      %875 = vrot.lane.b32.xlu0 %v870, 124
      %v876 = vpop.permute.xlu0 %875
      %v879 = vadd.f32 %v773, %v874
      %v880 = vadd.f32 %v774, %v876
      %s881 = sadd.s32 %s776, 7
      %s882 = sld [smem:[#allocation10 + %s881]]
      %v883 = vstv %s882
      %v884 = vmul.f32 %v883, %v353
      %v885 = vmul.f32 %v883, %v354
      %888 = vrot.lane.b32.xlu0 %v884, 124
      %v889 = vpop.permute.xlu0 %888
      %890 = vrot.lane.b32.xlu0 %v885, 124
      %v891 = vpop.permute.xlu0 %890
      %v894 = vadd.f32 %v879, %v889
      %v895 = vadd.f32 %v880, %v891
      %s896 = sadd.s32 %s411, 5
      %s897 = smul.u32 %s896, 32
      %s898 = sld [smem:[#allocation10 + %s897]]
      %v899 = vstv %s898
      %v900 = vmul.f32 %v899, %v349
      %v901 = vmul.f32 %v899, %v350
      %904 = vrot.lane.b32.xlu0 %v900, 123
      %v905 = vpop.permute.xlu0 %904
      %906 = vrot.lane.b32.xlu0 %v901, 123
      %v907 = vpop.permute.xlu0 %906
      %v910 = vadd.f32 %v804, %v905
      %v911 = vadd.f32 %v805, %v907
      %s912 = sadd.s32 %s897, 1
      %s913 = sld [smem:[#allocation10 + %s912]]
      %v914 = vstv %s913
      %v915 = vmul.f32 %v914, %v353
      %v916 = vmul.f32 %v914, %v354
      %919 = vrot.lane.b32.xlu0 %v915, 123
      %v920 = vpop.permute.xlu0 %919
      %921 = vrot.lane.b32.xlu0 %v916, 123
      %v922 = vpop.permute.xlu0 %921
      %v925 = vadd.f32 %v910, %v920
      %v926 = vadd.f32 %v911, %v922
      %s927 = sadd.s32 %s897, 2
      %s928 = sld [smem:[#allocation10 + %s927]]
      %v929 = vstv %s928
      %v930 = vmul.f32 %v929, %v349
      %v931 = vmul.f32 %v929, %v350
      %934 = vrot.lane.b32.xlu0 %v930, 123
      %v935 = vpop.permute.xlu0 %934
      %936 = vrot.lane.b32.xlu0 %v931, 123
      %v937 = vpop.permute.xlu0 %936
      %v940 = vadd.f32 %v834, %v935
      %v941 = vadd.f32 %v835, %v937
      %s942 = sadd.s32 %s897, 3
      %s943 = sld [smem:[#allocation10 + %s942]]
      %v944 = vstv %s943
      %v945 = vmul.f32 %v944, %v353
      %v946 = vmul.f32 %v944, %v354
      %949 = vrot.lane.b32.xlu0 %v945, 123
      %v950 = vpop.permute.xlu0 %949
      %951 = vrot.lane.b32.xlu0 %v946, 123
      %v952 = vpop.permute.xlu0 %951
      %v955 = vadd.f32 %v940, %v950
      %v956 = vadd.f32 %v941, %v952
      %s957 = sadd.s32 %s897, 4
      %s958 = sld [smem:[#allocation10 + %s957]]
      %v959 = vstv %s958
      %v960 = vmul.f32 %v959, %v349
      %v961 = vmul.f32 %v959, %v350
      %964 = vrot.lane.b32.xlu0 %v960, 123
      %v965 = vpop.permute.xlu0 %964
      %966 = vrot.lane.b32.xlu0 %v961, 123
      %v967 = vpop.permute.xlu0 %966
      %v970 = vadd.f32 %v864, %v965
      %v971 = vadd.f32 %v865, %v967
      %s972 = sadd.s32 %s897, 5
      %s973 = sld [smem:[#allocation10 + %s972]]
      %v974 = vstv %s973
      %v975 = vmul.f32 %v974, %v353
      %v976 = vmul.f32 %v974, %v354
      %979 = vrot.lane.b32.xlu0 %v975, 123
      %v980 = vpop.permute.xlu0 %979
      %981 = vrot.lane.b32.xlu0 %v976, 123
      %v982 = vpop.permute.xlu0 %981
      %v985 = vadd.f32 %v970, %v980
      %v986 = vadd.f32 %v971, %v982
      %s987 = sadd.s32 %s897, 6
      %s988 = sld [smem:[#allocation10 + %s987]]
      %v989 = vstv %s988
      %v990 = vmul.f32 %v989, %v349
      %v991 = vmul.f32 %v989, %v350
      %994 = vrot.lane.b32.xlu0 %v990, 123
      %v995 = vpop.permute.xlu0 %994
      %996 = vrot.lane.b32.xlu0 %v991, 123
      %v997 = vpop.permute.xlu0 %996
      %v1000 = vadd.f32 %v894, %v995
      %v1001 = vadd.f32 %v895, %v997
      %s1002 = sadd.s32 %s897, 7
      %s1003 = sld [smem:[#allocation10 + %s1002]]
      %v1004 = vstv %s1003
      %v1005 = vmul.f32 %v1004, %v353
      %v1006 = vmul.f32 %v1004, %v354
      %1009 = vrot.lane.b32.xlu0 %v1005, 123
      %v1010 = vpop.permute.xlu0 %1009
      %1011 = vrot.lane.b32.xlu0 %v1006, 123
      %v1012 = vpop.permute.xlu0 %1011
      %v1015 = vadd.f32 %v1000, %v1010
      %v1016 = vadd.f32 %v1001, %v1012
      %s1017 = sadd.s32 %s411, 6
      %s1018 = smul.u32 %s1017, 32
      %s1019 = sld [smem:[#allocation10 + %s1018]]
      %v1020 = vstv %s1019
      %v1021 = vmul.f32 %v1020, %v349
      %v1022 = vmul.f32 %v1020, %v350
      %1025 = vrot.lane.b32.xlu0 %v1021, 122
      %v1026 = vpop.permute.xlu0 %1025
      %1027 = vrot.lane.b32.xlu0 %v1022, 122
      %v1028 = vpop.permute.xlu0 %1027
      %v1031 = vadd.f32 %v925, %v1026
      %v1032 = vadd.f32 %v926, %v1028
      %s1033 = sadd.s32 %s1018, 1
      %s1034 = sld [smem:[#allocation10 + %s1033]]
      %v1035 = vstv %s1034
      %v1036 = vmul.f32 %v1035, %v353
      %v1037 = vmul.f32 %v1035, %v354
      %1040 = vrot.lane.b32.xlu0 %v1036, 122
      %v1041 = vpop.permute.xlu0 %1040
      %1042 = vrot.lane.b32.xlu0 %v1037, 122
      %v1043 = vpop.permute.xlu0 %1042
      %v1046 = vadd.f32 %v1031, %v1041
      %v1047 = vadd.f32 %v1032, %v1043
      %s1048 = sadd.s32 %s1018, 2
      %s1049 = sld [smem:[#allocation10 + %s1048]]
      %v1050 = vstv %s1049
      %v1051 = vmul.f32 %v1050, %v349
      %v1052 = vmul.f32 %v1050, %v350
      %1055 = vrot.lane.b32.xlu0 %v1051, 122
      %v1056 = vpop.permute.xlu0 %1055
      %1057 = vrot.lane.b32.xlu0 %v1052, 122
      %v1058 = vpop.permute.xlu0 %1057
      %v1061 = vadd.f32 %v955, %v1056
      %v1062 = vadd.f32 %v956, %v1058
      %s1063 = sadd.s32 %s1018, 3
      %s1064 = sld [smem:[#allocation10 + %s1063]]
      %v1065 = vstv %s1064
      %v1066 = vmul.f32 %v1065, %v353
      %v1067 = vmul.f32 %v1065, %v354
      %1070 = vrot.lane.b32.xlu0 %v1066, 122
      %v1071 = vpop.permute.xlu0 %1070
      %1072 = vrot.lane.b32.xlu0 %v1067, 122
      %v1073 = vpop.permute.xlu0 %1072
      %v1076 = vadd.f32 %v1061, %v1071
      %v1077 = vadd.f32 %v1062, %v1073
      %s1078 = sadd.s32 %s1018, 4
      %s1079 = sld [smem:[#allocation10 + %s1078]]
      %v1080 = vstv %s1079
      %v1081 = vmul.f32 %v1080, %v349
      %v1082 = vmul.f32 %v1080, %v350
      %1085 = vrot.lane.b32.xlu0 %v1081, 122
      %v1086 = vpop.permute.xlu0 %1085
      %1087 = vrot.lane.b32.xlu0 %v1082, 122
      %v1088 = vpop.permute.xlu0 %1087
      %v1091 = vadd.f32 %v985, %v1086
      %v1092 = vadd.f32 %v986, %v1088
      %s1093 = sadd.s32 %s1018, 5
      %s1094 = sld [smem:[#allocation10 + %s1093]]
      %v1095 = vstv %s1094
      %v1096 = vmul.f32 %v1095, %v353
      %v1097 = vmul.f32 %v1095, %v354
      %1100 = vrot.lane.b32.xlu0 %v1096, 122
      %v1101 = vpop.permute.xlu0 %1100
      %1102 = vrot.lane.b32.xlu0 %v1097, 122
      %v1103 = vpop.permute.xlu0 %1102
      %v1106 = vadd.f32 %v1091, %v1101
      %v1107 = vadd.f32 %v1092, %v1103
      %s1108 = sadd.s32 %s1018, 6
      %s1109 = sld [smem:[#allocation10 + %s1108]]
      %v1110 = vstv %s1109
      %v1111 = vmul.f32 %v1110, %v349
      %v1112 = vmul.f32 %v1110, %v350
      %1115 = vrot.lane.b32.xlu0 %v1111, 122
      %v1116 = vpop.permute.xlu0 %1115
      %1117 = vrot.lane.b32.xlu0 %v1112, 122
      %v1118 = vpop.permute.xlu0 %1117
      %v1121 = vadd.f32 %v1015, %v1116
      %v1122 = vadd.f32 %v1016, %v1118
      %s1123 = sadd.s32 %s1018, 7
      %s1124 = sld [smem:[#allocation10 + %s1123]]
      %v1125 = vstv %s1124
      %v1126 = vmul.f32 %v1125, %v353
      %v1127 = vmul.f32 %v1125, %v354
      %1130 = vrot.lane.b32.xlu0 %v1126, 122
      %v1131 = vpop.permute.xlu0 %1130
      %1132 = vrot.lane.b32.xlu0 %v1127, 122
      %v1133 = vpop.permute.xlu0 %1132
      %v1136 = vadd.f32 %v1121, %v1131
      %v1137 = vadd.f32 %v1122, %v1133
      %1138 = vst.msk [vmem:[#allocation4] sm:$0xff] %vm322, %v1046
      %1139 = vst.msk [vmem:[#allocation4 + $0x8] sm:$0xff] %vm322, %v1047
      %1140 = vst.msk [vmem:[%s339] sm:$0xff] %vm322, %v1076
      %1141 = vst.msk [vmem:[%s339 + $0x8] sm:$0xff] %vm322, %v1077
      %1142 = vst.msk [vmem:[%s342] sm:$0xff] %vm322, %v1106
      %1143 = vst.msk [vmem:[%s342 + $0x8] sm:$0xff] %vm322, %v1107
      %1144 = vst.msk [vmem:[%s345] sm:$0xff] %vm322, %v1136
      %1145 = vst.msk [vmem:[%s345 + $0x8] sm:$0xff] %vm322, %v1137
    $region30: #{tpu_custom_call.1} parent=1 // loop_footer
      %s336 = sadd.s32 1, %s332
    $region31: #{tpu_custom_call.1} parent=1 // loop_footer_branch
      %331 = sbr.rel target = $region27
    $region32: #{tpu_custom_call.1} parent=1 // loop_exit
      _
    %v1146 = vld [vmem:[#allocation4] sm:$0xff]
    %v1147 = vld [vmem:[#allocation4 + $0x8] sm:$0xff]
    %v1148 = vsel %vm321, %v1146, 0.0
    %v1149 = vsel %vm321, %v1147, 0.0
    %1152 = vrot.lane.b32.xlu0 %v1148, 3
    %v1153 = vpop.permute.xlu0 %1152
    %1154 = vrot.lane.b32.xlu0 %v1149, 3
    %v1155 = vpop.permute.xlu0 %1154
    %vm1158 = vcmask 334872
    %1159 = vst.msk [vmem:[#allocation3 + $0x3] sm:$0xff] %vm1158, %v1153
    %1160 = vst.msk [vmem:[#allocation3 + $0xb] sm:$0xff] %vm1158, %v1155
    %s1161 = scalar_lea.vmem [#allocation4], 16
    %v1162 = vld [vmem:[%s1161] sm:$0xff]
    %v1163 = vld [vmem:[%s1161 + $0x8] sm:$0xff]
    %v1164 = vsel %vm321, %v1162, 0.0
    %v1165 = vsel %vm321, %v1163, 0.0
    %1168 = vrot.lane.b32.xlu0 %v1164, 3
    %v1169 = vpop.permute.xlu0 %1168
    %1170 = vrot.lane.b32.xlu0 %v1165, 3
    %v1171 = vpop.permute.xlu0 %1170
    %s1174 = scalar_lea.vmem [#allocation3], 24
    %1175 = vst.msk [vmem:[%s1174 + $0x3] sm:$0xff] %vm1158, %v1169
    %1176 = vst.msk [vmem:[%s1174 + $0xb] sm:$0xff] %vm1158, %v1171
    %s1177 = scalar_lea.vmem [#allocation4], 32
    %v1178 = vld [vmem:[%s1177] sm:$0xff]
    %v1179 = vld [vmem:[%s1177 + $0x8] sm:$0xff]
    %v1180 = vsel %vm321, %v1178, 0.0
    %v1181 = vsel %vm321, %v1179, 0.0
    %1184 = vrot.lane.b32.xlu0 %v1180, 3
    %v1185 = vpop.permute.xlu0 %1184
    %1186 = vrot.lane.b32.xlu0 %v1181, 3
    %v1187 = vpop.permute.xlu0 %1186
    %s1190 = scalar_lea.vmem [#allocation3], 48
    %1191 = vst.msk [vmem:[%s1190 + $0x3] sm:$0xff] %vm1158, %v1185
    %1192 = vst.msk [vmem:[%s1190 + $0xb] sm:$0xff] %vm1158, %v1187
    %s1193 = scalar_lea.vmem [#allocation4], 48
    %v1194 = vld [vmem:[%s1193] sm:$0xff]
    %v1195 = vld [vmem:[%s1193 + $0x8] sm:$0xff]
    %v1196 = vsel %vm321, %v1194, 0.0
    %v1197 = vsel %vm321, %v1195, 0.0
    %1200 = vrot.lane.b32.xlu0 %v1196, 3
    %v1201 = vpop.permute.xlu0 %1200
    %1202 = vrot.lane.b32.xlu0 %v1197, 3
    %v1203 = vpop.permute.xlu0 %1202
    %s1206 = scalar_lea.vmem [#allocation3], 72
    %1207 = vst.msk [vmem:[%s1206 + $0x3] sm:$0xff] %vm1158, %v1201
    %1208 = vst.msk [vmem:[%s1206 + $0xb] sm:$0xff] %vm1158, %v1203
    %1209 = vst.msk [vmem:[#allocation4] sm:$0xff] %vm322, 0.0
    %1210 = vst.msk [vmem:[#allocation4 + $0x8] sm:$0xff] %vm322, 0.0
    %1211 = vst.msk [vmem:[#allocation4 + $0x10] sm:$0xff] %vm322, 0.0
    %1212 = vst.msk [vmem:[#allocation4 + $0x18] sm:$0xff] %vm322, 0.0
    %1213 = vst.msk [vmem:[#allocation4 + $0x20] sm:$0xff] %vm322, 0.0
    %1214 = vst.msk [vmem:[#allocation4 + $0x28] sm:$0xff] %vm322, 0.0
    %1215 = vst.msk [vmem:[#allocation4 + $0x30] sm:$0xff] %vm322, 0.0
    %1216 = vst.msk [vmem:[#allocation4 + $0x38] sm:$0xff] %vm322, 0.0
    loop: start=0, step=1, limit=7
    $region33: #{tpu_custom_call.1} parent=1 // loop_pre_header
      _
    $region34: #{tpu_custom_call.1} parent=1 // loop_header
      %s1218 = sphi 0, %s1222
      %p1219 = scmp.ge.s32.totalorder %s1218, 7
    $region35: #{tpu_custom_call.1} parent=1 // loop_header_branch
      %1221 = sbr.rel (%p1219) target = $region39
    $region36: #{tpu_custom_call.1} parent=1 // loop_body
      %v1223 = vld [vmem:[#allocation4] sm:$0xff]
      %v1224 = vld [vmem:[#allocation4 + $0x8] sm:$0xff]
      %v1225 = vld [vmem:[%s1161] sm:$0xff]
      %v1226 = vld [vmem:[%s1161 + $0x8] sm:$0xff]
      %v1227 = vld [vmem:[%s1177] sm:$0xff]
      %v1228 = vld [vmem:[%s1177 + $0x8] sm:$0xff]
      %v1229 = vld [vmem:[%s1193] sm:$0xff]
      %v1230 = vld [vmem:[%s1193 + $0x8] sm:$0xff]
      %s1231 = scalar_lea.vmem [#allocation2], %s1218
      %v1232 = vld [vmem:[%s1231] sm:$0xff]
      %v1233 = vld [vmem:[%s1231 + $0x8] sm:$0xff]
      %s1234 = sadd.s32 %s1218, 24
      %s1235 = scalar_lea.vmem [#allocation2], %s1234
      %v1236 = vld [vmem:[%s1235] sm:$0xff]
      %v1237 = vld [vmem:[%s1235 + $0x8] sm:$0xff]
      %s1238 = smul.u32 %s1218, 224
      %s1239 = sadd.s32 %s1238, 8
      %s1240 = sld [smem:[#allocation10 + %s1239]]
      %v1241 = vstv %s1240
      %v1242 = vmul.f32 %v1241, %v1232
      %v1243 = vmul.f32 %v1241, %v1233
      %v1244 = vadd.f32 %v1223, %v1242
      %v1245 = vadd.f32 %v1224, %v1243
      %s1246 = sadd.s32 %s1238, 9
      %s1247 = sld [smem:[#allocation10 + %s1246]]
      %v1248 = vstv %s1247
      %v1249 = vmul.f32 %v1248, %v1236
      %v1250 = vmul.f32 %v1248, %v1237
      %v1251 = vadd.f32 %v1244, %v1249
      %v1252 = vadd.f32 %v1245, %v1250
      %s1253 = sadd.s32 %s1238, 10
      %s1254 = sld [smem:[#allocation10 + %s1253]]
      %v1255 = vstv %s1254
      %v1256 = vmul.f32 %v1255, %v1232
      %v1257 = vmul.f32 %v1255, %v1233
      %v1258 = vadd.f32 %v1225, %v1256
      %v1259 = vadd.f32 %v1226, %v1257
      %s1260 = sadd.s32 %s1238, 11
      %s1261 = sld [smem:[#allocation10 + %s1260]]
      %v1262 = vstv %s1261
      %v1263 = vmul.f32 %v1262, %v1236
      %v1264 = vmul.f32 %v1262, %v1237
      %v1265 = vadd.f32 %v1258, %v1263
      %v1266 = vadd.f32 %v1259, %v1264
      %s1267 = sadd.s32 %s1238, 12
      %s1268 = sld [smem:[#allocation10 + %s1267]]
      %v1269 = vstv %s1268
      %v1270 = vmul.f32 %v1269, %v1232
      %v1271 = vmul.f32 %v1269, %v1233
      %v1272 = vadd.f32 %v1227, %v1270
      %v1273 = vadd.f32 %v1228, %v1271
      %s1274 = sadd.s32 %s1238, 13
      %s1275 = sld [smem:[#allocation10 + %s1274]]
      %v1276 = vstv %s1275
      %v1277 = vmul.f32 %v1276, %v1236
      %v1278 = vmul.f32 %v1276, %v1237
      %v1279 = vadd.f32 %v1272, %v1277
      %v1280 = vadd.f32 %v1273, %v1278
      %s1281 = sadd.s32 %s1238, 14
      %s1282 = sld [smem:[#allocation10 + %s1281]]
      %v1283 = vstv %s1282
      %v1284 = vmul.f32 %v1283, %v1232
      %v1285 = vmul.f32 %v1283, %v1233
      %v1286 = vadd.f32 %v1229, %v1284
      %v1287 = vadd.f32 %v1230, %v1285
      %s1288 = sadd.s32 %s1238, 15
      %s1289 = sld [smem:[#allocation10 + %s1288]]
      %v1290 = vstv %s1289
      %v1291 = vmul.f32 %v1290, %v1236
      %v1292 = vmul.f32 %v1290, %v1237
      %v1293 = vadd.f32 %v1286, %v1291
      %v1294 = vadd.f32 %v1287, %v1292
      %s1295 = smul.u32 %s1218, 7
      %s1296 = sadd.s32 %s1295, 1
      %s1297 = smul.u32 %s1296, 32
      %s1298 = sadd.s32 %s1297, 8
      %s1299 = sld [smem:[#allocation10 + %s1298]]
      %v1300 = vstv %s1299
      %v1301 = vmul.f32 %v1300, %v1232
      %v1302 = vmul.f32 %v1300, %v1233
      %1305 = vrot.lane.b32.xlu0 %v1301, 127
      %v1306 = vpop.permute.xlu0 %1305
      %1307 = vrot.lane.b32.xlu0 %v1302, 127
      %v1308 = vpop.permute.xlu0 %1307
      %v1311 = vadd.f32 %v1251, %v1306
      %v1312 = vadd.f32 %v1252, %v1308
      %s1313 = sadd.s32 %s1297, 9
      %s1314 = sld [smem:[#allocation10 + %s1313]]
      %v1315 = vstv %s1314
      %v1316 = vmul.f32 %v1315, %v1236
      %v1317 = vmul.f32 %v1315, %v1237
      %1320 = vrot.lane.b32.xlu0 %v1316, 127
      %v1321 = vpop.permute.xlu0 %1320
      %1322 = vrot.lane.b32.xlu0 %v1317, 127
      %v1323 = vpop.permute.xlu0 %1322
      %v1326 = vadd.f32 %v1311, %v1321
      %v1327 = vadd.f32 %v1312, %v1323
      %s1328 = sadd.s32 %s1297, 10
      %s1329 = sld [smem:[#allocation10 + %s1328]]
      %v1330 = vstv %s1329
      %v1331 = vmul.f32 %v1330, %v1232
      %v1332 = vmul.f32 %v1330, %v1233
      %1335 = vrot.lane.b32.xlu0 %v1331, 127
      %v1336 = vpop.permute.xlu0 %1335
      %1337 = vrot.lane.b32.xlu0 %v1332, 127
      %v1338 = vpop.permute.xlu0 %1337
      %v1341 = vadd.f32 %v1265, %v1336
      %v1342 = vadd.f32 %v1266, %v1338
      %s1343 = sadd.s32 %s1297, 11
      %s1344 = sld [smem:[#allocation10 + %s1343]]
      %v1345 = vstv %s1344
      %v1346 = vmul.f32 %v1345, %v1236
      %v1347 = vmul.f32 %v1345, %v1237
      %1350 = vrot.lane.b32.xlu0 %v1346, 127
      %v1351 = vpop.permute.xlu0 %1350
      %1352 = vrot.lane.b32.xlu0 %v1347, 127
      %v1353 = vpop.permute.xlu0 %1352
      %v1356 = vadd.f32 %v1341, %v1351
      %v1357 = vadd.f32 %v1342, %v1353
      %s1358 = sadd.s32 %s1297, 12
      %s1359 = sld [smem:[#allocation10 + %s1358]]
      %v1360 = vstv %s1359
      %v1361 = vmul.f32 %v1360, %v1232
      %v1362 = vmul.f32 %v1360, %v1233
      %1365 = vrot.lane.b32.xlu0 %v1361, 127
      %v1366 = vpop.permute.xlu0 %1365
      %1367 = vrot.lane.b32.xlu0 %v1362, 127
      %v1368 = vpop.permute.xlu0 %1367
      %v1371 = vadd.f32 %v1279, %v1366
      %v1372 = vadd.f32 %v1280, %v1368
      %s1373 = sadd.s32 %s1297, 13
      %s1374 = sld [smem:[#allocation10 + %s1373]]
      %v1375 = vstv %s1374
      %v1376 = vmul.f32 %v1375, %v1236
      %v1377 = vmul.f32 %v1375, %v1237
      %1380 = vrot.lane.b32.xlu0 %v1376, 127
      %v1381 = vpop.permute.xlu0 %1380
      %1382 = vrot.lane.b32.xlu0 %v1377, 127
      %v1383 = vpop.permute.xlu0 %1382
      %v1386 = vadd.f32 %v1371, %v1381
      %v1387 = vadd.f32 %v1372, %v1383
      %s1388 = sadd.s32 %s1297, 14
      %s1389 = sld [smem:[#allocation10 + %s1388]]
      %v1390 = vstv %s1389
      %v1391 = vmul.f32 %v1390, %v1232
      %v1392 = vmul.f32 %v1390, %v1233
      %1395 = vrot.lane.b32.xlu0 %v1391, 127
      %v1396 = vpop.permute.xlu0 %1395
      %1397 = vrot.lane.b32.xlu0 %v1392, 127
      %v1398 = vpop.permute.xlu0 %1397
      %v1401 = vadd.f32 %v1293, %v1396
      %v1402 = vadd.f32 %v1294, %v1398
      %s1403 = sadd.s32 %s1297, 15
      %s1404 = sld [smem:[#allocation10 + %s1403]]
      %v1405 = vstv %s1404
      %v1406 = vmul.f32 %v1405, %v1236
      %v1407 = vmul.f32 %v1405, %v1237
      %1410 = vrot.lane.b32.xlu0 %v1406, 127
      %v1411 = vpop.permute.xlu0 %1410
      %1412 = vrot.lane.b32.xlu0 %v1407, 127
      %v1413 = vpop.permute.xlu0 %1412
      %v1416 = vadd.f32 %v1401, %v1411
      %v1417 = vadd.f32 %v1402, %v1413
      %s1418 = sadd.s32 %s1295, 2
      %s1419 = smul.u32 %s1418, 32
      %s1420 = sadd.s32 %s1419, 8
      %s1421 = sld [smem:[#allocation10 + %s1420]]
      %v1422 = vstv %s1421
      %v1423 = vmul.f32 %v1422, %v1232
      %v1424 = vmul.f32 %v1422, %v1233
      %1427 = vrot.lane.b32.xlu0 %v1423, 126
      %v1428 = vpop.permute.xlu0 %1427
      %1429 = vrot.lane.b32.xlu0 %v1424, 126
      %v1430 = vpop.permute.xlu0 %1429
      %v1433 = vadd.f32 %v1326, %v1428
      %v1434 = vadd.f32 %v1327, %v1430
      %s1435 = sadd.s32 %s1419, 9
      %s1436 = sld [smem:[#allocation10 + %s1435]]
      %v1437 = vstv %s1436
      %v1438 = vmul.f32 %v1437, %v1236
      %v1439 = vmul.f32 %v1437, %v1237
      %1442 = vrot.lane.b32.xlu0 %v1438, 126
      %v1443 = vpop.permute.xlu0 %1442
      %1444 = vrot.lane.b32.xlu0 %v1439, 126
      %v1445 = vpop.permute.xlu0 %1444
      %v1448 = vadd.f32 %v1433, %v1443
      %v1449 = vadd.f32 %v1434, %v1445
      %s1450 = sadd.s32 %s1419, 10
      %s1451 = sld [smem:[#allocation10 + %s1450]]
      %v1452 = vstv %s1451
      %v1453 = vmul.f32 %v1452, %v1232
      %v1454 = vmul.f32 %v1452, %v1233
      %1457 = vrot.lane.b32.xlu0 %v1453, 126
      %v1458 = vpop.permute.xlu0 %1457
      %1459 = vrot.lane.b32.xlu0 %v1454, 126
      %v1460 = vpop.permute.xlu0 %1459
      %v1463 = vadd.f32 %v1356, %v1458
      %v1464 = vadd.f32 %v1357, %v1460
      %s1465 = sadd.s32 %s1419, 11
      %s1466 = sld [smem:[#allocation10 + %s1465]]
      %v1467 = vstv %s1466
      %v1468 = vmul.f32 %v1467, %v1236
      %v1469 = vmul.f32 %v1467, %v1237
      %1472 = vrot.lane.b32.xlu0 %v1468, 126
      %v1473 = vpop.permute.xlu0 %1472
      %1474 = vrot.lane.b32.xlu0 %v1469, 126
      %v1475 = vpop.permute.xlu0 %1474
      %v1478 = vadd.f32 %v1463, %v1473
      %v1479 = vadd.f32 %v1464, %v1475
      %s1480 = sadd.s32 %s1419, 12
      %s1481 = sld [smem:[#allocation10 + %s1480]]
      %v1482 = vstv %s1481
      %v1483 = vmul.f32 %v1482, %v1232
      %v1484 = vmul.f32 %v1482, %v1233
      %1487 = vrot.lane.b32.xlu0 %v1483, 126
      %v1488 = vpop.permute.xlu0 %1487
      %1489 = vrot.lane.b32.xlu0 %v1484, 126
      %v1490 = vpop.permute.xlu0 %1489
      %v1493 = vadd.f32 %v1386, %v1488
      %v1494 = vadd.f32 %v1387, %v1490
      %s1495 = sadd.s32 %s1419, 13
      %s1496 = sld [smem:[#allocation10 + %s1495]]
      %v1497 = vstv %s1496
      %v1498 = vmul.f32 %v1497, %v1236
      %v1499 = vmul.f32 %v1497, %v1237
      %1502 = vrot.lane.b32.xlu0 %v1498, 126
      %v1503 = vpop.permute.xlu0 %1502
      %1504 = vrot.lane.b32.xlu0 %v1499, 126
      %v1505 = vpop.permute.xlu0 %1504
      %v1508 = vadd.f32 %v1493, %v1503
      %v1509 = vadd.f32 %v1494, %v1505
      %s1510 = sadd.s32 %s1419, 14
      %s1511 = sld [smem:[#allocation10 + %s1510]]
      %v1512 = vstv %s1511
      %v1513 = vmul.f32 %v1512, %v1232
      %v1514 = vmul.f32 %v1512, %v1233
      %1517 = vrot.lane.b32.xlu0 %v1513, 126
      %v1518 = vpop.permute.xlu0 %1517
      %1519 = vrot.lane.b32.xlu0 %v1514, 126
      %v1520 = vpop.permute.xlu0 %1519
      %v1523 = vadd.f32 %v1416, %v1518
      %v1524 = vadd.f32 %v1417, %v1520
      %s1525 = sadd.s32 %s1419, 15
      %s1526 = sld [smem:[#allocation10 + %s1525]]
      %v1527 = vstv %s1526
      %v1528 = vmul.f32 %v1527, %v1236
      %v1529 = vmul.f32 %v1527, %v1237
      %1532 = vrot.lane.b32.xlu0 %v1528, 126
      %v1533 = vpop.permute.xlu0 %1532
      %1534 = vrot.lane.b32.xlu0 %v1529, 126
      %v1535 = vpop.permute.xlu0 %1534
      %v1538 = vadd.f32 %v1523, %v1533
      %v1539 = vadd.f32 %v1524, %v1535
      %s1540 = sadd.s32 %s1295, 3
      %s1541 = smul.u32 %s1540, 32
      %s1542 = sadd.s32 %s1541, 8
      %s1543 = sld [smem:[#allocation10 + %s1542]]
      %v1544 = vstv %s1543
      %v1545 = vmul.f32 %v1544, %v1232
      %v1546 = vmul.f32 %v1544, %v1233
      %1549 = vrot.lane.b32.xlu0 %v1545, 125
      %v1550 = vpop.permute.xlu0 %1549
      %1551 = vrot.lane.b32.xlu0 %v1546, 125
      %v1552 = vpop.permute.xlu0 %1551
      %v1555 = vadd.f32 %v1448, %v1550
      %v1556 = vadd.f32 %v1449, %v1552
      %s1557 = sadd.s32 %s1541, 9
      %s1558 = sld [smem:[#allocation10 + %s1557]]
      %v1559 = vstv %s1558
      %v1560 = vmul.f32 %v1559, %v1236
      %v1561 = vmul.f32 %v1559, %v1237
      %1564 = vrot.lane.b32.xlu0 %v1560, 125
      %v1565 = vpop.permute.xlu0 %1564
      %1566 = vrot.lane.b32.xlu0 %v1561, 125
      %v1567 = vpop.permute.xlu0 %1566
      %v1570 = vadd.f32 %v1555, %v1565
      %v1571 = vadd.f32 %v1556, %v1567
      %s1572 = sadd.s32 %s1541, 10
      %s1573 = sld [smem:[#allocation10 + %s1572]]
      %v1574 = vstv %s1573
      %v1575 = vmul.f32 %v1574, %v1232
      %v1576 = vmul.f32 %v1574, %v1233
      %1579 = vrot.lane.b32.xlu0 %v1575, 125
      %v1580 = vpop.permute.xlu0 %1579
      %1581 = vrot.lane.b32.xlu0 %v1576, 125
      %v1582 = vpop.permute.xlu0 %1581
      %v1585 = vadd.f32 %v1478, %v1580
      %v1586 = vadd.f32 %v1479, %v1582
      %s1587 = sadd.s32 %s1541, 11
      %s1588 = sld [smem:[#allocation10 + %s1587]]
      %v1589 = vstv %s1588
      %v1590 = vmul.f32 %v1589, %v1236
      %v1591 = vmul.f32 %v1589, %v1237
      %1594 = vrot.lane.b32.xlu0 %v1590, 125
      %v1595 = vpop.permute.xlu0 %1594
      %1596 = vrot.lane.b32.xlu0 %v1591, 125
      %v1597 = vpop.permute.xlu0 %1596
      %v1600 = vadd.f32 %v1585, %v1595
      %v1601 = vadd.f32 %v1586, %v1597
      %s1602 = sadd.s32 %s1541, 12
      %s1603 = sld [smem:[#allocation10 + %s1602]]
      %v1604 = vstv %s1603
      %v1605 = vmul.f32 %v1604, %v1232
      %v1606 = vmul.f32 %v1604, %v1233
      %1609 = vrot.lane.b32.xlu0 %v1605, 125
      %v1610 = vpop.permute.xlu0 %1609
      %1611 = vrot.lane.b32.xlu0 %v1606, 125
      %v1612 = vpop.permute.xlu0 %1611
      %v1615 = vadd.f32 %v1508, %v1610
      %v1616 = vadd.f32 %v1509, %v1612
      %s1617 = sadd.s32 %s1541, 13
      %s1618 = sld [smem:[#allocation10 + %s1617]]
      %v1619 = vstv %s1618
      %v1620 = vmul.f32 %v1619, %v1236
      %v1621 = vmul.f32 %v1619, %v1237
      %1624 = vrot.lane.b32.xlu0 %v1620, 125
      %v1625 = vpop.permute.xlu0 %1624
      %1626 = vrot.lane.b32.xlu0 %v1621, 125
      %v1627 = vpop.permute.xlu0 %1626
      %v1630 = vadd.f32 %v1615, %v1625
      %v1631 = vadd.f32 %v1616, %v1627
      %s1632 = sadd.s32 %s1541, 14
      %s1633 = sld [smem:[#allocation10 + %s1632]]
      %v1634 = vstv %s1633
      %v1635 = vmul.f32 %v1634, %v1232
      %v1636 = vmul.f32 %v1634, %v1233
      %1639 = vrot.lane.b32.xlu0 %v1635, 125
      %v1640 = vpop.permute.xlu0 %1639
      %1641 = vrot.lane.b32.xlu0 %v1636, 125
      %v1642 = vpop.permute.xlu0 %1641
      %v1645 = vadd.f32 %v1538, %v1640
      %v1646 = vadd.f32 %v1539, %v1642
      %s1647 = sadd.s32 %s1541, 15
      %s1648 = sld [smem:[#allocation10 + %s1647]]
      %v1649 = vstv %s1648
      %v1650 = vmul.f32 %v1649, %v1236
      %v1651 = vmul.f32 %v1649, %v1237
      %1654 = vrot.lane.b32.xlu0 %v1650, 125
      %v1655 = vpop.permute.xlu0 %1654
      %1656 = vrot.lane.b32.xlu0 %v1651, 125
      %v1657 = vpop.permute.xlu0 %1656
      %v1660 = vadd.f32 %v1645, %v1655
      %v1661 = vadd.f32 %v1646, %v1657
      %s1662 = sadd.s32 %s1295, 4
      %s1663 = smul.u32 %s1662, 32
      %s1664 = sadd.s32 %s1663, 8
      %s1665 = sld [smem:[#allocation10 + %s1664]]
      %v1666 = vstv %s1665
      %v1667 = vmul.f32 %v1666, %v1232
      %v1668 = vmul.f32 %v1666, %v1233
      %1671 = vrot.lane.b32.xlu0 %v1667, 124
      %v1672 = vpop.permute.xlu0 %1671
      %1673 = vrot.lane.b32.xlu0 %v1668, 124
      %v1674 = vpop.permute.xlu0 %1673
      %v1677 = vadd.f32 %v1570, %v1672
      %v1678 = vadd.f32 %v1571, %v1674
      %s1679 = sadd.s32 %s1663, 9
      %s1680 = sld [smem:[#allocation10 + %s1679]]
      %v1681 = vstv %s1680
      %v1682 = vmul.f32 %v1681, %v1236
      %v1683 = vmul.f32 %v1681, %v1237
      %1686 = vrot.lane.b32.xlu0 %v1682, 124
      %v1687 = vpop.permute.xlu0 %1686
      %1688 = vrot.lane.b32.xlu0 %v1683, 124
      %v1689 = vpop.permute.xlu0 %1688
      %v1692 = vadd.f32 %v1677, %v1687
      %v1693 = vadd.f32 %v1678, %v1689
      %s1694 = sadd.s32 %s1663, 10
      %s1695 = sld [smem:[#allocation10 + %s1694]]
      %v1696 = vstv %s1695
      %v1697 = vmul.f32 %v1696, %v1232
      %v1698 = vmul.f32 %v1696, %v1233
      %1701 = vrot.lane.b32.xlu0 %v1697, 124
      %v1702 = vpop.permute.xlu0 %1701
      %1703 = vrot.lane.b32.xlu0 %v1698, 124
      %v1704 = vpop.permute.xlu0 %1703
      %v1707 = vadd.f32 %v1600, %v1702
      %v1708 = vadd.f32 %v1601, %v1704
      %s1709 = sadd.s32 %s1663, 11
      %s1710 = sld [smem:[#allocation10 + %s1709]]
      %v1711 = vstv %s1710
      %v1712 = vmul.f32 %v1711, %v1236
      %v1713 = vmul.f32 %v1711, %v1237
      %1716 = vrot.lane.b32.xlu0 %v1712, 124
      %v1717 = vpop.permute.xlu0 %1716
      %1718 = vrot.lane.b32.xlu0 %v1713, 124
      %v1719 = vpop.permute.xlu0 %1718
      %v1722 = vadd.f32 %v1707, %v1717
      %v1723 = vadd.f32 %v1708, %v1719
      %s1724 = sadd.s32 %s1663, 12
      %s1725 = sld [smem:[#allocation10 + %s1724]]
      %v1726 = vstv %s1725
      %v1727 = vmul.f32 %v1726, %v1232
      %v1728 = vmul.f32 %v1726, %v1233
      %1731 = vrot.lane.b32.xlu0 %v1727, 124
      %v1732 = vpop.permute.xlu0 %1731
      %1733 = vrot.lane.b32.xlu0 %v1728, 124
      %v1734 = vpop.permute.xlu0 %1733
      %v1737 = vadd.f32 %v1630, %v1732
      %v1738 = vadd.f32 %v1631, %v1734
      %s1739 = sadd.s32 %s1663, 13
      %s1740 = sld [smem:[#allocation10 + %s1739]]
      %v1741 = vstv %s1740
      %v1742 = vmul.f32 %v1741, %v1236
      %v1743 = vmul.f32 %v1741, %v1237
      %1746 = vrot.lane.b32.xlu0 %v1742, 124
      %v1747 = vpop.permute.xlu0 %1746
      %1748 = vrot.lane.b32.xlu0 %v1743, 124
      %v1749 = vpop.permute.xlu0 %1748
      %v1752 = vadd.f32 %v1737, %v1747
      %v1753 = vadd.f32 %v1738, %v1749
      %s1754 = sadd.s32 %s1663, 14
      %s1755 = sld [smem:[#allocation10 + %s1754]]
      %v1756 = vstv %s1755
      %v1757 = vmul.f32 %v1756, %v1232
      %v1758 = vmul.f32 %v1756, %v1233
      %1761 = vrot.lane.b32.xlu0 %v1757, 124
      %v1762 = vpop.permute.xlu0 %1761
      %1763 = vrot.lane.b32.xlu0 %v1758, 124
      %v1764 = vpop.permute.xlu0 %1763
      %v1767 = vadd.f32 %v1660, %v1762
      %v1768 = vadd.f32 %v1661, %v1764
      %s1769 = sadd.s32 %s1663, 15
      %s1770 = sld [smem:[#allocation10 + %s1769]]
      %v1771 = vstv %s1770
      %v1772 = vmul.f32 %v1771, %v1236
      %v1773 = vmul.f32 %v1771, %v1237
      %1776 = vrot.lane.b32.xlu0 %v1772, 124
      %v1777 = vpop.permute.xlu0 %1776
      %1778 = vrot.lane.b32.xlu0 %v1773, 124
      %v1779 = vpop.permute.xlu0 %1778
      %v1782 = vadd.f32 %v1767, %v1777
      %v1783 = vadd.f32 %v1768, %v1779
      %s1784 = sadd.s32 %s1295, 5
      %s1785 = smul.u32 %s1784, 32
      %s1786 = sadd.s32 %s1785, 8
      %s1787 = sld [smem:[#allocation10 + %s1786]]
      %v1788 = vstv %s1787
      %v1789 = vmul.f32 %v1788, %v1232
      %v1790 = vmul.f32 %v1788, %v1233
      %1793 = vrot.lane.b32.xlu0 %v1789, 123
      %v1794 = vpop.permute.xlu0 %1793
      %1795 = vrot.lane.b32.xlu0 %v1790, 123
      %v1796 = vpop.permute.xlu0 %1795
      %v1799 = vadd.f32 %v1692, %v1794
      %v1800 = vadd.f32 %v1693, %v1796
      %s1801 = sadd.s32 %s1785, 9
      %s1802 = sld [smem:[#allocation10 + %s1801]]
      %v1803 = vstv %s1802
      %v1804 = vmul.f32 %v1803, %v1236
      %v1805 = vmul.f32 %v1803, %v1237
      %1808 = vrot.lane.b32.xlu0 %v1804, 123
      %v1809 = vpop.permute.xlu0 %1808
      %1810 = vrot.lane.b32.xlu0 %v1805, 123
      %v1811 = vpop.permute.xlu0 %1810
      %v1814 = vadd.f32 %v1799, %v1809
      %v1815 = vadd.f32 %v1800, %v1811
      %s1816 = sadd.s32 %s1785, 10
      %s1817 = sld [smem:[#allocation10 + %s1816]]
      %v1818 = vstv %s1817
      %v1819 = vmul.f32 %v1818, %v1232
      %v1820 = vmul.f32 %v1818, %v1233
      %1823 = vrot.lane.b32.xlu0 %v1819, 123
      %v1824 = vpop.permute.xlu0 %1823
      %1825 = vrot.lane.b32.xlu0 %v1820, 123
      %v1826 = vpop.permute.xlu0 %1825
      %v1829 = vadd.f32 %v1722, %v1824
      %v1830 = vadd.f32 %v1723, %v1826
      %s1831 = sadd.s32 %s1785, 11
      %s1832 = sld [smem:[#allocation10 + %s1831]]
      %v1833 = vstv %s1832
      %v1834 = vmul.f32 %v1833, %v1236
      %v1835 = vmul.f32 %v1833, %v1237
      %1838 = vrot.lane.b32.xlu0 %v1834, 123
      %v1839 = vpop.permute.xlu0 %1838
      %1840 = vrot.lane.b32.xlu0 %v1835, 123
      %v1841 = vpop.permute.xlu0 %1840
      %v1844 = vadd.f32 %v1829, %v1839
      %v1845 = vadd.f32 %v1830, %v1841
      %s1846 = sadd.s32 %s1785, 12
      %s1847 = sld [smem:[#allocation10 + %s1846]]
      %v1848 = vstv %s1847
      %v1849 = vmul.f32 %v1848, %v1232
      %v1850 = vmul.f32 %v1848, %v1233
      %1853 = vrot.lane.b32.xlu0 %v1849, 123
      %v1854 = vpop.permute.xlu0 %1853
      %1855 = vrot.lane.b32.xlu0 %v1850, 123
      %v1856 = vpop.permute.xlu0 %1855
      %v1859 = vadd.f32 %v1752, %v1854
      %v1860 = vadd.f32 %v1753, %v1856
      %s1861 = sadd.s32 %s1785, 13
      %s1862 = sld [smem:[#allocation10 + %s1861]]
      %v1863 = vstv %s1862
      %v1864 = vmul.f32 %v1863, %v1236
      %v1865 = vmul.f32 %v1863, %v1237
      %1868 = vrot.lane.b32.xlu0 %v1864, 123
      %v1869 = vpop.permute.xlu0 %1868
      %1870 = vrot.lane.b32.xlu0 %v1865, 123
      %v1871 = vpop.permute.xlu0 %1870
      %v1874 = vadd.f32 %v1859, %v1869
      %v1875 = vadd.f32 %v1860, %v1871
      %s1876 = sadd.s32 %s1785, 14
      %s1877 = sld [smem:[#allocation10 + %s1876]]
      %v1878 = vstv %s1877
      %v1879 = vmul.f32 %v1878, %v1232
      %v1880 = vmul.f32 %v1878, %v1233
      %1883 = vrot.lane.b32.xlu0 %v1879, 123
      %v1884 = vpop.permute.xlu0 %1883
      %1885 = vrot.lane.b32.xlu0 %v1880, 123
      %v1886 = vpop.permute.xlu0 %1885
      %v1889 = vadd.f32 %v1782, %v1884
      %v1890 = vadd.f32 %v1783, %v1886
      %s1891 = sadd.s32 %s1785, 15
      %s1892 = sld [smem:[#allocation10 + %s1891]]
      %v1893 = vstv %s1892
      %v1894 = vmul.f32 %v1893, %v1236
      %v1895 = vmul.f32 %v1893, %v1237
      %1898 = vrot.lane.b32.xlu0 %v1894, 123
      %v1899 = vpop.permute.xlu0 %1898
      %1900 = vrot.lane.b32.xlu0 %v1895, 123
      %v1901 = vpop.permute.xlu0 %1900
      %v1904 = vadd.f32 %v1889, %v1899
      %v1905 = vadd.f32 %v1890, %v1901
      %s1906 = sadd.s32 %s1295, 6
      %s1907 = smul.u32 %s1906, 32
      %s1908 = sadd.s32 %s1907, 8
      %s1909 = sld [smem:[#allocation10 + %s1908]]
      %v1910 = vstv %s1909
      %v1911 = vmul.f32 %v1910, %v1232
      %v1912 = vmul.f32 %v1910, %v1233
      %1915 = vrot.lane.b32.xlu0 %v1911, 122
      %v1916 = vpop.permute.xlu0 %1915
      %1917 = vrot.lane.b32.xlu0 %v1912, 122
      %v1918 = vpop.permute.xlu0 %1917
      %v1921 = vadd.f32 %v1814, %v1916
      %v1922 = vadd.f32 %v1815, %v1918
      %s1923 = sadd.s32 %s1907, 9
      %s1924 = sld [smem:[#allocation10 + %s1923]]
      %v1925 = vstv %s1924
      %v1926 = vmul.f32 %v1925, %v1236
      %v1927 = vmul.f32 %v1925, %v1237
      %1930 = vrot.lane.b32.xlu0 %v1926, 122
      %v1931 = vpop.permute.xlu0 %1930
      %1932 = vrot.lane.b32.xlu0 %v1927, 122
      %v1933 = vpop.permute.xlu0 %1932
      %v1936 = vadd.f32 %v1921, %v1931
      %v1937 = vadd.f32 %v1922, %v1933
      %s1938 = sadd.s32 %s1907, 10
      %s1939 = sld [smem:[#allocation10 + %s1938]]
      %v1940 = vstv %s1939
      %v1941 = vmul.f32 %v1940, %v1232
      %v1942 = vmul.f32 %v1940, %v1233
      %1945 = vrot.lane.b32.xlu0 %v1941, 122
      %v1946 = vpop.permute.xlu0 %1945
      %1947 = vrot.lane.b32.xlu0 %v1942, 122
      %v1948 = vpop.permute.xlu0 %1947
      %v1951 = vadd.f32 %v1844, %v1946
      %v1952 = vadd.f32 %v1845, %v1948
      %s1953 = sadd.s32 %s1907, 11
      %s1954 = sld [smem:[#allocation10 + %s1953]]
      %v1955 = vstv %s1954
      %v1956 = vmul.f32 %v1955, %v1236
      %v1957 = vmul.f32 %v1955, %v1237
      %1960 = vrot.lane.b32.xlu0 %v1956, 122
      %v1961 = vpop.permute.xlu0 %1960
      %1962 = vrot.lane.b32.xlu0 %v1957, 122
      %v1963 = vpop.permute.xlu0 %1962
      %v1966 = vadd.f32 %v1951, %v1961
      %v1967 = vadd.f32 %v1952, %v1963
      %s1968 = sadd.s32 %s1907, 12
      %s1969 = sld [smem:[#allocation10 + %s1968]]
      %v1970 = vstv %s1969
      %v1971 = vmul.f32 %v1970, %v1232
      %v1972 = vmul.f32 %v1970, %v1233
      %1975 = vrot.lane.b32.xlu0 %v1971, 122
      %v1976 = vpop.permute.xlu0 %1975
      %1977 = vrot.lane.b32.xlu0 %v1972, 122
      %v1978 = vpop.permute.xlu0 %1977
      %v1981 = vadd.f32 %v1874, %v1976
      %v1982 = vadd.f32 %v1875, %v1978
      %s1983 = sadd.s32 %s1907, 13
      %s1984 = sld [smem:[#allocation10 + %s1983]]
      %v1985 = vstv %s1984
      %v1986 = vmul.f32 %v1985, %v1236
      %v1987 = vmul.f32 %v1985, %v1237
      %1990 = vrot.lane.b32.xlu0 %v1986, 122
      %v1991 = vpop.permute.xlu0 %1990
      %1992 = vrot.lane.b32.xlu0 %v1987, 122
      %v1993 = vpop.permute.xlu0 %1992
      %v1996 = vadd.f32 %v1981, %v1991
      %v1997 = vadd.f32 %v1982, %v1993
      %s1998 = sadd.s32 %s1907, 14
      %s1999 = sld [smem:[#allocation10 + %s1998]]
      %v2000 = vstv %s1999
      %v2001 = vmul.f32 %v2000, %v1232
      %v2002 = vmul.f32 %v2000, %v1233
      %2005 = vrot.lane.b32.xlu0 %v2001, 122
      %v2006 = vpop.permute.xlu0 %2005
      %2007 = vrot.lane.b32.xlu0 %v2002, 122
      %v2008 = vpop.permute.xlu0 %2007
      %v2011 = vadd.f32 %v1904, %v2006
      %v2012 = vadd.f32 %v1905, %v2008
      %s2013 = sadd.s32 %s1907, 15
      %s2014 = sld [smem:[#allocation10 + %s2013]]
      %v2015 = vstv %s2014
      %v2016 = vmul.f32 %v2015, %v1236
      %v2017 = vmul.f32 %v2015, %v1237
      %2020 = vrot.lane.b32.xlu0 %v2016, 122
      %v2021 = vpop.permute.xlu0 %2020
      %2022 = vrot.lane.b32.xlu0 %v2017, 122
      %v2023 = vpop.permute.xlu0 %2022
      %v2026 = vadd.f32 %v2011, %v2021
      %v2027 = vadd.f32 %v2012, %v2023
      %2028 = vst.msk [vmem:[#allocation4] sm:$0xff] %vm322, %v1936
      %2029 = vst.msk [vmem:[#allocation4 + $0x8] sm:$0xff] %vm322, %v1937
      %2030 = vst.msk [vmem:[%s1161] sm:$0xff] %vm322, %v1966
      %2031 = vst.msk [vmem:[%s1161 + $0x8] sm:$0xff] %vm322, %v1967
      %2032 = vst.msk [vmem:[%s1177] sm:$0xff] %vm322, %v1996
      %2033 = vst.msk [vmem:[%s1177 + $0x8] sm:$0xff] %vm322, %v1997
      %2034 = vst.msk [vmem:[%s1193] sm:$0xff] %vm322, %v2026
      %2035 = vst.msk [vmem:[%s1193 + $0x8] sm:$0xff] %vm322, %v2027
    $region37: #{tpu_custom_call.1} parent=1 // loop_footer
      %s1222 = sadd.s32 1, %s1218
    $region38: #{tpu_custom_call.1} parent=1 // loop_footer_branch
      %1217 = sbr.rel target = $region34
    $region39: #{tpu_custom_call.1} parent=1 // loop_exit
      _
    %v2036 = vld [vmem:[#allocation4] sm:$0xff]
    %v2037 = vld [vmem:[#allocation4 + $0x8] sm:$0xff]
    %v2038 = vsel %vm321, %v2036, 0.0
    %v2039 = vsel %vm321, %v2037, 0.0
    %2042 = vrot.lane.b32.xlu0 %v2038, 3
    %v2043 = vpop.permute.xlu0 %2042
    %2044 = vrot.lane.b32.xlu0 %v2039, 3
    %v2045 = vpop.permute.xlu0 %2044
    %s2048 = scalar_lea.vmem [#allocation3], 96
    %2049 = vst.msk [vmem:[%s2048 + $0x3] sm:$0xff] %vm1158, %v2043
    %2050 = vst.msk [vmem:[%s2048 + $0xb] sm:$0xff] %vm1158, %v2045
    %v2051 = vld [vmem:[%s1161] sm:$0xff]
    %v2052 = vld [vmem:[%s1161 + $0x8] sm:$0xff]
    %v2053 = vsel %vm321, %v2051, 0.0
    %v2054 = vsel %vm321, %v2052, 0.0
    %2057 = vrot.lane.b32.xlu0 %v2053, 3
    %v2058 = vpop.permute.xlu0 %2057
    %2059 = vrot.lane.b32.xlu0 %v2054, 3
    %v2060 = vpop.permute.xlu0 %2059
    %s2063 = scalar_lea.vmem [#allocation3], 120
    %2064 = vst.msk [vmem:[%s2063 + $0x3] sm:$0xff] %vm1158, %v2058
    %2065 = vst.msk [vmem:[%s2063 + $0xb] sm:$0xff] %vm1158, %v2060
    %v2066 = vld [vmem:[%s1177] sm:$0xff]
    %v2067 = vld [vmem:[%s1177 + $0x8] sm:$0xff]
    %v2068 = vsel %vm321, %v2066, 0.0
    %v2069 = vsel %vm321, %v2067, 0.0
    %2072 = vrot.lane.b32.xlu0 %v2068, 3
    %v2073 = vpop.permute.xlu0 %2072
    %2074 = vrot.lane.b32.xlu0 %v2069, 3
    %v2075 = vpop.permute.xlu0 %2074
    %s2078 = scalar_lea.vmem [#allocation3], 144
    %2079 = vst.msk [vmem:[%s2078 + $0x3] sm:$0xff] %vm1158, %v2073
    %2080 = vst.msk [vmem:[%s2078 + $0xb] sm:$0xff] %vm1158, %v2075
    %v2081 = vld [vmem:[%s1193] sm:$0xff]
    %v2082 = vld [vmem:[%s1193 + $0x8] sm:$0xff]
    %v2083 = vsel %vm321, %v2081, 0.0
    %v2084 = vsel %vm321, %v2082, 0.0
    %2087 = vrot.lane.b32.xlu0 %v2083, 3
    %v2088 = vpop.permute.xlu0 %2087
    %2089 = vrot.lane.b32.xlu0 %v2084, 3
    %v2090 = vpop.permute.xlu0 %2089
    %s2093 = scalar_lea.vmem [#allocation3], 168
    %2094 = vst.msk [vmem:[%s2093 + $0x3] sm:$0xff] %vm1158, %v2088
    %2095 = vst.msk [vmem:[%s2093 + $0xb] sm:$0xff] %vm1158, %v2090
    %2096 = vst.msk [vmem:[#allocation4] sm:$0xff] %vm322, 0.0
    %2097 = vst.msk [vmem:[#allocation4 + $0x8] sm:$0xff] %vm322, 0.0
    %2098 = vst.msk [vmem:[#allocation4 + $0x10] sm:$0xff] %vm322, 0.0
    %2099 = vst.msk [vmem:[#allocation4 + $0x18] sm:$0xff] %vm322, 0.0
    %2100 = vst.msk [vmem:[#allocation4 + $0x20] sm:$0xff] %vm322, 0.0
    %2101 = vst.msk [vmem:[#allocation4 + $0x28] sm:$0xff] %vm322, 0.0
    %2102 = vst.msk [vmem:[#allocation4 + $0x30] sm:$0xff] %vm322, 0.0
    %2103 = vst.msk [vmem:[#allocation4 + $0x38] sm:$0xff] %vm322, 0.0
    loop: start=0, step=1, limit=7
    $region40: #{tpu_custom_call.1} parent=1 // loop_pre_header
      _
    $region41: #{tpu_custom_call.1} parent=1 // loop_header
      %s2105 = sphi 0, %s2109
      %p2106 = scmp.ge.s32.totalorder %s2105, 7
    $region42: #{tpu_custom_call.1} parent=1 // loop_header_branch
      %2108 = sbr.rel (%p2106) target = $region46
    $region43: #{tpu_custom_call.1} parent=1 // loop_body
      %v2110 = vld [vmem:[#allocation4] sm:$0xff]
      %v2111 = vld [vmem:[#allocation4 + $0x8] sm:$0xff]
      %v2112 = vld [vmem:[%s1161] sm:$0xff]
      %v2113 = vld [vmem:[%s1161 + $0x8] sm:$0xff]
      %v2114 = vld [vmem:[%s1177] sm:$0xff]
      %v2115 = vld [vmem:[%s1177 + $0x8] sm:$0xff]
      %v2116 = vld [vmem:[%s1193] sm:$0xff]
      %v2117 = vld [vmem:[%s1193 + $0x8] sm:$0xff]
      %s2118 = scalar_lea.vmem [#allocation2], %s2105
      %v2119 = vld [vmem:[%s2118] sm:$0xff]
      %v2120 = vld [vmem:[%s2118 + $0x8] sm:$0xff]
      %s2121 = sadd.s32 %s2105, 24
      %s2122 = scalar_lea.vmem [#allocation2], %s2121
      %v2123 = vld [vmem:[%s2122] sm:$0xff]
      %v2124 = vld [vmem:[%s2122 + $0x8] sm:$0xff]
      %s2125 = smul.u32 %s2105, 224
      %s2126 = sadd.s32 %s2125, 16
      %s2127 = sld [smem:[#allocation10 + %s2126]]
      %v2128 = vstv %s2127
      %v2129 = vmul.f32 %v2128, %v2119
      %v2130 = vmul.f32 %v2128, %v2120
      %v2131 = vadd.f32 %v2110, %v2129
      %v2132 = vadd.f32 %v2111, %v2130
      %s2133 = sadd.s32 %s2125, 17
      %s2134 = sld [smem:[#allocation10 + %s2133]]
      %v2135 = vstv %s2134
      %v2136 = vmul.f32 %v2135, %v2123
      %v2137 = vmul.f32 %v2135, %v2124
      %v2138 = vadd.f32 %v2131, %v2136
      %v2139 = vadd.f32 %v2132, %v2137
      %s2140 = sadd.s32 %s2125, 18
      %s2141 = sld [smem:[#allocation10 + %s2140]]
      %v2142 = vstv %s2141
      %v2143 = vmul.f32 %v2142, %v2119
      %v2144 = vmul.f32 %v2142, %v2120
      %v2145 = vadd.f32 %v2112, %v2143
      %v2146 = vadd.f32 %v2113, %v2144
      %s2147 = sadd.s32 %s2125, 19
      %s2148 = sld [smem:[#allocation10 + %s2147]]
      %v2149 = vstv %s2148
      %v2150 = vmul.f32 %v2149, %v2123
      %v2151 = vmul.f32 %v2149, %v2124
      %v2152 = vadd.f32 %v2145, %v2150
      %v2153 = vadd.f32 %v2146, %v2151
      %s2154 = sadd.s32 %s2125, 20
      %s2155 = sld [smem:[#allocation10 + %s2154]]
      %v2156 = vstv %s2155
      %v2157 = vmul.f32 %v2156, %v2119
      %v2158 = vmul.f32 %v2156, %v2120
      %v2159 = vadd.f32 %v2114, %v2157
      %v2160 = vadd.f32 %v2115, %v2158
      %s2161 = sadd.s32 %s2125, 21
      %s2162 = sld [smem:[#allocation10 + %s2161]]
      %v2163 = vstv %s2162
      %v2164 = vmul.f32 %v2163, %v2123
      %v2165 = vmul.f32 %v2163, %v2124
      %v2166 = vadd.f32 %v2159, %v2164
      %v2167 = vadd.f32 %v2160, %v2165
      %s2168 = sadd.s32 %s2125, 22
      %s2169 = sld [smem:[#allocation10 + %s2168]]
      %v2170 = vstv %s2169
      %v2171 = vmul.f32 %v2170, %v2119
      %v2172 = vmul.f32 %v2170, %v2120
      %v2173 = vadd.f32 %v2116, %v2171
      %v2174 = vadd.f32 %v2117, %v2172
      %s2175 = sadd.s32 %s2125, 23
      %s2176 = sld [smem:[#allocation10 + %s2175]]
      %v2177 = vstv %s2176
      %v2178 = vmul.f32 %v2177, %v2123
      %v2179 = vmul.f32 %v2177, %v2124
      %v2180 = vadd.f32 %v2173, %v2178
      %v2181 = vadd.f32 %v2174, %v2179
      %s2182 = smul.u32 %s2105, 7
      %s2183 = sadd.s32 %s2182, 1
      %s2184 = smul.u32 %s2183, 32
      %s2185 = sadd.s32 %s2184, 16
      %s2186 = sld [smem:[#allocation10 + %s2185]]
      %v2187 = vstv %s2186
      %v2188 = vmul.f32 %v2187, %v2119
      %v2189 = vmul.f32 %v2187, %v2120
      %2192 = vrot.lane.b32.xlu0 %v2188, 127
      %v2193 = vpop.permute.xlu0 %2192
      %2194 = vrot.lane.b32.xlu0 %v2189, 127
      %v2195 = vpop.permute.xlu0 %2194
      %v2198 = vadd.f32 %v2138, %v2193
      %v2199 = vadd.f32 %v2139, %v2195
      %s2200 = sadd.s32 %s2184, 17
      %s2201 = sld [smem:[#allocation10 + %s2200]]
      %v2202 = vstv %s2201
      %v2203 = vmul.f32 %v2202, %v2123
      %v2204 = vmul.f32 %v2202, %v2124
      %2207 = vrot.lane.b32.xlu0 %v2203, 127
      %v2208 = vpop.permute.xlu0 %2207
      %2209 = vrot.lane.b32.xlu0 %v2204, 127
      %v2210 = vpop.permute.xlu0 %2209
      %v2213 = vadd.f32 %v2198, %v2208
      %v2214 = vadd.f32 %v2199, %v2210
      %s2215 = sadd.s32 %s2184, 18
      %s2216 = sld [smem:[#allocation10 + %s2215]]
      %v2217 = vstv %s2216
      %v2218 = vmul.f32 %v2217, %v2119
      %v2219 = vmul.f32 %v2217, %v2120
      %2222 = vrot.lane.b32.xlu0 %v2218, 127
      %v2223 = vpop.permute.xlu0 %2222
      %2224 = vrot.lane.b32.xlu0 %v2219, 127
      %v2225 = vpop.permute.xlu0 %2224
      %v2228 = vadd.f32 %v2152, %v2223
      %v2229 = vadd.f32 %v2153, %v2225
      %s2230 = sadd.s32 %s2184, 19
      %s2231 = sld [smem:[#allocation10 + %s2230]]
      %v2232 = vstv %s2231
      %v2233 = vmul.f32 %v2232, %v2123
      %v2234 = vmul.f32 %v2232, %v2124
      %2237 = vrot.lane.b32.xlu0 %v2233, 127
      %v2238 = vpop.permute.xlu0 %2237
      %2239 = vrot.lane.b32.xlu0 %v2234, 127
      %v2240 = vpop.permute.xlu0 %2239
      %v2243 = vadd.f32 %v2228, %v2238
      %v2244 = vadd.f32 %v2229, %v2240
      %s2245 = sadd.s32 %s2184, 20
      %s2246 = sld [smem:[#allocation10 + %s2245]]
      %v2247 = vstv %s2246
      %v2248 = vmul.f32 %v2247, %v2119
      %v2249 = vmul.f32 %v2247, %v2120
      %2252 = vrot.lane.b32.xlu0 %v2248, 127
      %v2253 = vpop.permute.xlu0 %2252
      %2254 = vrot.lane.b32.xlu0 %v2249, 127
      %v2255 = vpop.permute.xlu0 %2254
      %v2258 = vadd.f32 %v2166, %v2253
      %v2259 = vadd.f32 %v2167, %v2255
      %s2260 = sadd.s32 %s2184, 21
      %s2261 = sld [smem:[#allocation10 + %s2260]]
      %v2262 = vstv %s2261
      %v2263 = vmul.f32 %v2262, %v2123
      %v2264 = vmul.f32 %v2262, %v2124
      %2267 = vrot.lane.b32.xlu0 %v2263, 127
      %v2268 = vpop.permute.xlu0 %2267
      %2269 = vrot.lane.b32.xlu0 %v2264, 127
      %v2270 = vpop.permute.xlu0 %2269
      %v2273 = vadd.f32 %v2258, %v2268
      %v2274 = vadd.f32 %v2259, %v2270
      %s2275 = sadd.s32 %s2184, 22
      %s2276 = sld [smem:[#allocation10 + %s2275]]
      %v2277 = vstv %s2276
      %v2278 = vmul.f32 %v2277, %v2119
      %v2279 = vmul.f32 %v2277, %v2120
      %2282 = vrot.lane.b32.xlu0 %v2278, 127
      %v2283 = vpop.permute.xlu0 %2282
      %2284 = vrot.lane.b32.xlu0 %v2279, 127
      %v2285 = vpop.permute.xlu0 %2284
      %v2288 = vadd.f32 %v2180, %v2283
      %v2289 = vadd.f32 %v2181, %v2285
      %s2290 = sadd.s32 %s2184, 23
      %s2291 = sld [smem:[#allocation10 + %s2290]]
      %v2292 = vstv %s2291
      %v2293 = vmul.f32 %v2292, %v2123
      %v2294 = vmul.f32 %v2292, %v2124
      %2297 = vrot.lane.b32.xlu0 %v2293, 127
      %v2298 = vpop.permute.xlu0 %2297
      %2299 = vrot.lane.b32.xlu0 %v2294, 127
      %v2300 = vpop.permute.xlu0 %2299
      %v2303 = vadd.f32 %v2288, %v2298
      %v2304 = vadd.f32 %v2289, %v2300
      %s2305 = sadd.s32 %s2182, 2
      %s2306 = smul.u32 %s2305, 32
      %s2307 = sadd.s32 %s2306, 16
      %s2308 = sld [smem:[#allocation10 + %s2307]]
      %v2309 = vstv %s2308
      %v2310 = vmul.f32 %v2309, %v2119
      %v2311 = vmul.f32 %v2309, %v2120
      %2314 = vrot.lane.b32.xlu0 %v2310, 126
      %v2315 = vpop.permute.xlu0 %2314
      %2316 = vrot.lane.b32.xlu0 %v2311, 126
      %v2317 = vpop.permute.xlu0 %2316
      %v2320 = vadd.f32 %v2213, %v2315
      %v2321 = vadd.f32 %v2214, %v2317
      %s2322 = sadd.s32 %s2306, 17
      %s2323 = sld [smem:[#allocation10 + %s2322]]
      %v2324 = vstv %s2323
      %v2325 = vmul.f32 %v2324, %v2123
      %v2326 = vmul.f32 %v2324, %v2124
      %2329 = vrot.lane.b32.xlu0 %v2325, 126
      %v2330 = vpop.permute.xlu0 %2329
      %2331 = vrot.lane.b32.xlu0 %v2326, 126
      %v2332 = vpop.permute.xlu0 %2331
      %v2335 = vadd.f32 %v2320, %v2330
      %v2336 = vadd.f32 %v2321, %v2332
      %s2337 = sadd.s32 %s2306, 18
      %s2338 = sld [smem:[#allocation10 + %s2337]]
      %v2339 = vstv %s2338
      %v2340 = vmul.f32 %v2339, %v2119
      %v2341 = vmul.f32 %v2339, %v2120
      %2344 = vrot.lane.b32.xlu0 %v2340, 126
      %v2345 = vpop.permute.xlu0 %2344
      %2346 = vrot.lane.b32.xlu0 %v2341, 126
      %v2347 = vpop.permute.xlu0 %2346
      %v2350 = vadd.f32 %v2243, %v2345
      %v2351 = vadd.f32 %v2244, %v2347
      %s2352 = sadd.s32 %s2306, 19
      %s2353 = sld [smem:[#allocation10 + %s2352]]
      %v2354 = vstv %s2353
      %v2355 = vmul.f32 %v2354, %v2123
      %v2356 = vmul.f32 %v2354, %v2124
      %2359 = vrot.lane.b32.xlu0 %v2355, 126
      %v2360 = vpop.permute.xlu0 %2359
      %2361 = vrot.lane.b32.xlu0 %v2356, 126
      %v2362 = vpop.permute.xlu0 %2361
      %v2365 = vadd.f32 %v2350, %v2360
      %v2366 = vadd.f32 %v2351, %v2362
      %s2367 = sadd.s32 %s2306, 20
      %s2368 = sld [smem:[#allocation10 + %s2367]]
      %v2369 = vstv %s2368
      %v2370 = vmul.f32 %v2369, %v2119
      %v2371 = vmul.f32 %v2369, %v2120
      %2374 = vrot.lane.b32.xlu0 %v2370, 126
      %v2375 = vpop.permute.xlu0 %2374
      %2376 = vrot.lane.b32.xlu0 %v2371, 126
      %v2377 = vpop.permute.xlu0 %2376
      %v2380 = vadd.f32 %v2273, %v2375
      %v2381 = vadd.f32 %v2274, %v2377
      %s2382 = sadd.s32 %s2306, 21
      %s2383 = sld [smem:[#allocation10 + %s2382]]
      %v2384 = vstv %s2383
      %v2385 = vmul.f32 %v2384, %v2123
      %v2386 = vmul.f32 %v2384, %v2124
      %2389 = vrot.lane.b32.xlu0 %v2385, 126
      %v2390 = vpop.permute.xlu0 %2389
      %2391 = vrot.lane.b32.xlu0 %v2386, 126
      %v2392 = vpop.permute.xlu0 %2391
      %v2395 = vadd.f32 %v2380, %v2390
      %v2396 = vadd.f32 %v2381, %v2392
      %s2397 = sadd.s32 %s2306, 22
      %s2398 = sld [smem:[#allocation10 + %s2397]]
      %v2399 = vstv %s2398
      %v2400 = vmul.f32 %v2399, %v2119
      %v2401 = vmul.f32 %v2399, %v2120
      %2404 = vrot.lane.b32.xlu0 %v2400, 126
      %v2405 = vpop.permute.xlu0 %2404
      %2406 = vrot.lane.b32.xlu0 %v2401, 126
      %v2407 = vpop.permute.xlu0 %2406
      %v2410 = vadd.f32 %v2303, %v2405
      %v2411 = vadd.f32 %v2304, %v2407
      %s2412 = sadd.s32 %s2306, 23
      %s2413 = sld [smem:[#allocation10 + %s2412]]
      %v2414 = vstv %s2413
      %v2415 = vmul.f32 %v2414, %v2123
      %v2416 = vmul.f32 %v2414, %v2124
      %2419 = vrot.lane.b32.xlu0 %v2415, 126
      %v2420 = vpop.permute.xlu0 %2419
      %2421 = vrot.lane.b32.xlu0 %v2416, 126
      %v2422 = vpop.permute.xlu0 %2421
      %v2425 = vadd.f32 %v2410, %v2420
      %v2426 = vadd.f32 %v2411, %v2422
      %s2427 = sadd.s32 %s2182, 3
      %s2428 = smul.u32 %s2427, 32
      %s2429 = sadd.s32 %s2428, 16
      %s2430 = sld [smem:[#allocation10 + %s2429]]
      %v2431 = vstv %s2430
      %v2432 = vmul.f32 %v2431, %v2119
      %v2433 = vmul.f32 %v2431, %v2120
      %2436 = vrot.lane.b32.xlu0 %v2432, 125
      %v2437 = vpop.permute.xlu0 %2436
      %2438 = vrot.lane.b32.xlu0 %v2433, 125
      %v2439 = vpop.permute.xlu0 %2438
      %v2442 = vadd.f32 %v2335, %v2437
      %v2443 = vadd.f32 %v2336, %v2439
      %s2444 = sadd.s32 %s2428, 17
      %s2445 = sld [smem:[#allocation10 + %s2444]]
      %v2446 = vstv %s2445
      %v2447 = vmul.f32 %v2446, %v2123
      %v2448 = vmul.f32 %v2446, %v2124
      %2451 = vrot.lane.b32.xlu0 %v2447, 125
      %v2452 = vpop.permute.xlu0 %2451
      %2453 = vrot.lane.b32.xlu0 %v2448, 125
      %v2454 = vpop.permute.xlu0 %2453
      %v2457 = vadd.f32 %v2442, %v2452
      %v2458 = vadd.f32 %v2443, %v2454
      %s2459 = sadd.s32 %s2428, 18
      %s2460 = sld [smem:[#allocation10 + %s2459]]
      %v2461 = vstv %s2460
      %v2462 = vmul.f32 %v2461, %v2119
      %v2463 = vmul.f32 %v2461, %v2120
      %2466 = vrot.lane.b32.xlu0 %v2462, 125
      %v2467 = vpop.permute.xlu0 %2466
      %2468 = vrot.lane.b32.xlu0 %v2463, 125
      %v2469 = vpop.permute.xlu0 %2468
      %v2472 = vadd.f32 %v2365, %v2467
      %v2473 = vadd.f32 %v2366, %v2469
      %s2474 = sadd.s32 %s2428, 19
      %s2475 = sld [smem:[#allocation10 + %s2474]]
      %v2476 = vstv %s2475
      %v2477 = vmul.f32 %v2476, %v2123
      %v2478 = vmul.f32 %v2476, %v2124
      %2481 = vrot.lane.b32.xlu0 %v2477, 125
      %v2482 = vpop.permute.xlu0 %2481
      %2483 = vrot.lane.b32.xlu0 %v2478, 125
      %v2484 = vpop.permute.xlu0 %2483
      %v2487 = vadd.f32 %v2472, %v2482
      %v2488 = vadd.f32 %v2473, %v2484
      %s2489 = sadd.s32 %s2428, 20
      %s2490 = sld [smem:[#allocation10 + %s2489]]
      %v2491 = vstv %s2490
      %v2492 = vmul.f32 %v2491, %v2119
      %v2493 = vmul.f32 %v2491, %v2120
      %2496 = vrot.lane.b32.xlu0 %v2492, 125
      %v2497 = vpop.permute.xlu0 %2496
      %2498 = vrot.lane.b32.xlu0 %v2493, 125
      %v2499 = vpop.permute.xlu0 %2498
      %v2502 = vadd.f32 %v2395, %v2497
      %v2503 = vadd.f32 %v2396, %v2499
      %s2504 = sadd.s32 %s2428, 21
      %s2505 = sld [smem:[#allocation10 + %s2504]]
      %v2506 = vstv %s2505
      %v2507 = vmul.f32 %v2506, %v2123
      %v2508 = vmul.f32 %v2506, %v2124
      %2511 = vrot.lane.b32.xlu0 %v2507, 125
      %v2512 = vpop.permute.xlu0 %2511
      %2513 = vrot.lane.b32.xlu0 %v2508, 125
      %v2514 = vpop.permute.xlu0 %2513
      %v2517 = vadd.f32 %v2502, %v2512
      %v2518 = vadd.f32 %v2503, %v2514
      %s2519 = sadd.s32 %s2428, 22
      %s2520 = sld [smem:[#allocation10 + %s2519]]
      %v2521 = vstv %s2520
      %v2522 = vmul.f32 %v2521, %v2119
      %v2523 = vmul.f32 %v2521, %v2120
      %2526 = vrot.lane.b32.xlu0 %v2522, 125
      %v2527 = vpop.permute.xlu0 %2526
      %2528 = vrot.lane.b32.xlu0 %v2523, 125
      %v2529 = vpop.permute.xlu0 %2528
      %v2532 = vadd.f32 %v2425, %v2527
      %v2533 = vadd.f32 %v2426, %v2529
      %s2534 = sadd.s32 %s2428, 23
      %s2535 = sld [smem:[#allocation10 + %s2534]]
      %v2536 = vstv %s2535
      %v2537 = vmul.f32 %v2536, %v2123
      %v2538 = vmul.f32 %v2536, %v2124
      %2541 = vrot.lane.b32.xlu0 %v2537, 125
      %v2542 = vpop.permute.xlu0 %2541
      %2543 = vrot.lane.b32.xlu0 %v2538, 125
      %v2544 = vpop.permute.xlu0 %2543
      %v2547 = vadd.f32 %v2532, %v2542
      %v2548 = vadd.f32 %v2533, %v2544
      %s2549 = sadd.s32 %s2182, 4
      %s2550 = smul.u32 %s2549, 32
      %s2551 = sadd.s32 %s2550, 16
      %s2552 = sld [smem:[#allocation10 + %s2551]]
      %v2553 = vstv %s2552
      %v2554 = vmul.f32 %v2553, %v2119
      %v2555 = vmul.f32 %v2553, %v2120
      %2558 = vrot.lane.b32.xlu0 %v2554, 124
      %v2559 = vpop.permute.xlu0 %2558
      %2560 = vrot.lane.b32.xlu0 %v2555, 124
      %v2561 = vpop.permute.xlu0 %2560
      %v2564 = vadd.f32 %v2457, %v2559
      %v2565 = vadd.f32 %v2458, %v2561
      %s2566 = sadd.s32 %s2550, 17
      %s2567 = sld [smem:[#allocation10 + %s2566]]
      %v2568 = vstv %s2567
      %v2569 = vmul.f32 %v2568, %v2123
      %v2570 = vmul.f32 %v2568, %v2124
      %2573 = vrot.lane.b32.xlu0 %v2569, 124
      %v2574 = vpop.permute.xlu0 %2573
      %2575 = vrot.lane.b32.xlu0 %v2570, 124
      %v2576 = vpop.permute.xlu0 %2575
      %v2579 = vadd.f32 %v2564, %v2574
      %v2580 = vadd.f32 %v2565, %v2576
      %s2581 = sadd.s32 %s2550, 18
      %s2582 = sld [smem:[#allocation10 + %s2581]]
      %v2583 = vstv %s2582
      %v2584 = vmul.f32 %v2583, %v2119
      %v2585 = vmul.f32 %v2583, %v2120
      %2588 = vrot.lane.b32.xlu0 %v2584, 124
      %v2589 = vpop.permute.xlu0 %2588
      %2590 = vrot.lane.b32.xlu0 %v2585, 124
      %v2591 = vpop.permute.xlu0 %2590
      %v2594 = vadd.f32 %v2487, %v2589
      %v2595 = vadd.f32 %v2488, %v2591
      %s2596 = sadd.s32 %s2550, 19
      %s2597 = sld [smem:[#allocation10 + %s2596]]
      %v2598 = vstv %s2597
      %v2599 = vmul.f32 %v2598, %v2123
      %v2600 = vmul.f32 %v2598, %v2124
      %2603 = vrot.lane.b32.xlu0 %v2599, 124
      %v2604 = vpop.permute.xlu0 %2603
      %2605 = vrot.lane.b32.xlu0 %v2600, 124
      %v2606 = vpop.permute.xlu0 %2605
      %v2609 = vadd.f32 %v2594, %v2604
      %v2610 = vadd.f32 %v2595, %v2606
      %s2611 = sadd.s32 %s2550, 20
      %s2612 = sld [smem:[#allocation10 + %s2611]]
      %v2613 = vstv %s2612
      %v2614 = vmul.f32 %v2613, %v2119
      %v2615 = vmul.f32 %v2613, %v2120
      %2618 = vrot.lane.b32.xlu0 %v2614, 124
      %v2619 = vpop.permute.xlu0 %2618
      %2620 = vrot.lane.b32.xlu0 %v2615, 124
      %v2621 = vpop.permute.xlu0 %2620
      %v2624 = vadd.f32 %v2517, %v2619
      %v2625 = vadd.f32 %v2518, %v2621
      %s2626 = sadd.s32 %s2550, 21
      %s2627 = sld [smem:[#allocation10 + %s2626]]
      %v2628 = vstv %s2627
      %v2629 = vmul.f32 %v2628, %v2123
      %v2630 = vmul.f32 %v2628, %v2124
      %2633 = vrot.lane.b32.xlu0 %v2629, 124
      %v2634 = vpop.permute.xlu0 %2633
      %2635 = vrot.lane.b32.xlu0 %v2630, 124
      %v2636 = vpop.permute.xlu0 %2635
      %v2639 = vadd.f32 %v2624, %v2634
      %v2640 = vadd.f32 %v2625, %v2636
      %s2641 = sadd.s32 %s2550, 22
      %s2642 = sld [smem:[#allocation10 + %s2641]]
      %v2643 = vstv %s2642
      %v2644 = vmul.f32 %v2643, %v2119
      %v2645 = vmul.f32 %v2643, %v2120
      %2648 = vrot.lane.b32.xlu0 %v2644, 124
      %v2649 = vpop.permute.xlu0 %2648
      %2650 = vrot.lane.b32.xlu0 %v2645, 124
      %v2651 = vpop.permute.xlu0 %2650
      %v2654 = vadd.f32 %v2547, %v2649
      %v2655 = vadd.f32 %v2548, %v2651
      %s2656 = sadd.s32 %s2550, 23
      %s2657 = sld [smem:[#allocation10 + %s2656]]
      %v2658 = vstv %s2657
      %v2659 = vmul.f32 %v2658, %v2123
      %v2660 = vmul.f32 %v2658, %v2124
      %2663 = vrot.lane.b32.xlu0 %v2659, 124
      %v2664 = vpop.permute.xlu0 %2663
      %2665 = vrot.lane.b32.xlu0 %v2660, 124
      %v2666 = vpop.permute.xlu0 %2665
      %v2669 = vadd.f32 %v2654, %v2664
      %v2670 = vadd.f32 %v2655, %v2666
      %s2671 = sadd.s32 %s2182, 5
      %s2672 = smul.u32 %s2671, 32
      %s2673 = sadd.s32 %s2672, 16
      %s2674 = sld [smem:[#allocation10 + %s2673]]
      %v2675 = vstv %s2674
      %v2676 = vmul.f32 %v2675, %v2119
      %v2677 = vmul.f32 %v2675, %v2120
      %2680 = vrot.lane.b32.xlu0 %v2676, 123
      %v2681 = vpop.permute.xlu0 %2680
      %2682 = vrot.lane.b32.xlu0 %v2677, 123
      %v2683 = vpop.permute.xlu0 %2682
      %v2686 = vadd.f32 %v2579, %v2681
      %v2687 = vadd.f32 %v2580, %v2683
      %s2688 = sadd.s32 %s2672, 17
      %s2689 = sld [smem:[#allocation10 + %s2688]]
      %v2690 = vstv %s2689
      %v2691 = vmul.f32 %v2690, %v2123
      %v2692 = vmul.f32 %v2690, %v2124
      %2695 = vrot.lane.b32.xlu0 %v2691, 123
      %v2696 = vpop.permute.xlu0 %2695
      %2697 = vrot.lane.b32.xlu0 %v2692, 123
      %v2698 = vpop.permute.xlu0 %2697
      %v2701 = vadd.f32 %v2686, %v2696
      %v2702 = vadd.f32 %v2687, %v2698
      %s2703 = sadd.s32 %s2672, 18
      %s2704 = sld [smem:[#allocation10 + %s2703]]
      %v2705 = vstv %s2704
      %v2706 = vmul.f32 %v2705, %v2119
      %v2707 = vmul.f32 %v2705, %v2120
      %2710 = vrot.lane.b32.xlu0 %v2706, 123
      %v2711 = vpop.permute.xlu0 %2710
      %2712 = vrot.lane.b32.xlu0 %v2707, 123
      %v2713 = vpop.permute.xlu0 %2712
      %v2716 = vadd.f32 %v2609, %v2711
      %v2717 = vadd.f32 %v2610, %v2713
      %s2718 = sadd.s32 %s2672, 19
      %s2719 = sld [smem:[#allocation10 + %s2718]]
      %v2720 = vstv %s2719
      %v2721 = vmul.f32 %v2720, %v2123
      %v2722 = vmul.f32 %v2720, %v2124
      %2725 = vrot.lane.b32.xlu0 %v2721, 123
      %v2726 = vpop.permute.xlu0 %2725
      %2727 = vrot.lane.b32.xlu0 %v2722, 123
      %v2728 = vpop.permute.xlu0 %2727
      %v2731 = vadd.f32 %v2716, %v2726
      %v2732 = vadd.f32 %v2717, %v2728
      %s2733 = sadd.s32 %s2672, 20
      %s2734 = sld [smem:[#allocation10 + %s2733]]
      %v2735 = vstv %s2734
      %v2736 = vmul.f32 %v2735, %v2119
      %v2737 = vmul.f32 %v2735, %v2120
      %2740 = vrot.lane.b32.xlu0 %v2736, 123
      %v2741 = vpop.permute.xlu0 %2740
      %2742 = vrot.lane.b32.xlu0 %v2737, 123
      %v2743 = vpop.permute.xlu0 %2742
      %v2746 = vadd.f32 %v2639, %v2741
      %v2747 = vadd.f32 %v2640, %v2743
      %s2748 = sadd.s32 %s2672, 21
      %s2749 = sld [smem:[#allocation10 + %s2748]]
      %v2750 = vstv %s2749
      %v2751 = vmul.f32 %v2750, %v2123
      %v2752 = vmul.f32 %v2750, %v2124
      %2755 = vrot.lane.b32.xlu0 %v2751, 123
      %v2756 = vpop.permute.xlu0 %2755
      %2757 = vrot.lane.b32.xlu0 %v2752, 123
      %v2758 = vpop.permute.xlu0 %2757
      %v2761 = vadd.f32 %v2746, %v2756
      %v2762 = vadd.f32 %v2747, %v2758
      %s2763 = sadd.s32 %s2672, 22
      %s2764 = sld [smem:[#allocation10 + %s2763]]
      %v2765 = vstv %s2764
      %v2766 = vmul.f32 %v2765, %v2119
      %v2767 = vmul.f32 %v2765, %v2120
      %2770 = vrot.lane.b32.xlu0 %v2766, 123
      %v2771 = vpop.permute.xlu0 %2770
      %2772 = vrot.lane.b32.xlu0 %v2767, 123
      %v2773 = vpop.permute.xlu0 %2772
      %v2776 = vadd.f32 %v2669, %v2771
      %v2777 = vadd.f32 %v2670, %v2773
      %s2778 = sadd.s32 %s2672, 23
      %s2779 = sld [smem:[#allocation10 + %s2778]]
      %v2780 = vstv %s2779
      %v2781 = vmul.f32 %v2780, %v2123
      %v2782 = vmul.f32 %v2780, %v2124
      %2785 = vrot.lane.b32.xlu0 %v2781, 123
      %v2786 = vpop.permute.xlu0 %2785
      %2787 = vrot.lane.b32.xlu0 %v2782, 123
      %v2788 = vpop.permute.xlu0 %2787
      %v2791 = vadd.f32 %v2776, %v2786
      %v2792 = vadd.f32 %v2777, %v2788
      %s2793 = sadd.s32 %s2182, 6
      %s2794 = smul.u32 %s2793, 32
      %s2795 = sadd.s32 %s2794, 16
      %s2796 = sld [smem:[#allocation10 + %s2795]]
      %v2797 = vstv %s2796
      %v2798 = vmul.f32 %v2797, %v2119
      %v2799 = vmul.f32 %v2797, %v2120
      %2802 = vrot.lane.b32.xlu0 %v2798, 122
      %v2803 = vpop.permute.xlu0 %2802
      %2804 = vrot.lane.b32.xlu0 %v2799, 122
      %v2805 = vpop.permute.xlu0 %2804
      %v2808 = vadd.f32 %v2701, %v2803
      %v2809 = vadd.f32 %v2702, %v2805
      %s2810 = sadd.s32 %s2794, 17
      %s2811 = sld [smem:[#allocation10 + %s2810]]
      %v2812 = vstv %s2811
      %v2813 = vmul.f32 %v2812, %v2123
      %v2814 = vmul.f32 %v2812, %v2124
      %2817 = vrot.lane.b32.xlu0 %v2813, 122
      %v2818 = vpop.permute.xlu0 %2817
      %2819 = vrot.lane.b32.xlu0 %v2814, 122
      %v2820 = vpop.permute.xlu0 %2819
      %v2823 = vadd.f32 %v2808, %v2818
      %v2824 = vadd.f32 %v2809, %v2820
      %s2825 = sadd.s32 %s2794, 18
      %s2826 = sld [smem:[#allocation10 + %s2825]]
      %v2827 = vstv %s2826
      %v2828 = vmul.f32 %v2827, %v2119
      %v2829 = vmul.f32 %v2827, %v2120
      %2832 = vrot.lane.b32.xlu0 %v2828, 122
      %v2833 = vpop.permute.xlu0 %2832
      %2834 = vrot.lane.b32.xlu0 %v2829, 122
      %v2835 = vpop.permute.xlu0 %2834
      %v2838 = vadd.f32 %v2731, %v2833
      %v2839 = vadd.f32 %v2732, %v2835
      %s2840 = sadd.s32 %s2794, 19
      %s2841 = sld [smem:[#allocation10 + %s2840]]
      %v2842 = vstv %s2841
      %v2843 = vmul.f32 %v2842, %v2123
      %v2844 = vmul.f32 %v2842, %v2124
      %2847 = vrot.lane.b32.xlu0 %v2843, 122
      %v2848 = vpop.permute.xlu0 %2847
      %2849 = vrot.lane.b32.xlu0 %v2844, 122
      %v2850 = vpop.permute.xlu0 %2849
      %v2853 = vadd.f32 %v2838, %v2848
      %v2854 = vadd.f32 %v2839, %v2850
      %s2855 = sadd.s32 %s2794, 20
      %s2856 = sld [smem:[#allocation10 + %s2855]]
      %v2857 = vstv %s2856
      %v2858 = vmul.f32 %v2857, %v2119
      %v2859 = vmul.f32 %v2857, %v2120
      %2862 = vrot.lane.b32.xlu0 %v2858, 122
      %v2863 = vpop.permute.xlu0 %2862
      %2864 = vrot.lane.b32.xlu0 %v2859, 122
      %v2865 = vpop.permute.xlu0 %2864
      %v2868 = vadd.f32 %v2761, %v2863
      %v2869 = vadd.f32 %v2762, %v2865
      %s2870 = sadd.s32 %s2794, 21
      %s2871 = sld [smem:[#allocation10 + %s2870]]
      %v2872 = vstv %s2871
      %v2873 = vmul.f32 %v2872, %v2123
      %v2874 = vmul.f32 %v2872, %v2124
      %2877 = vrot.lane.b32.xlu0 %v2873, 122
      %v2878 = vpop.permute.xlu0 %2877
      %2879 = vrot.lane.b32.xlu0 %v2874, 122
      %v2880 = vpop.permute.xlu0 %2879
      %v2883 = vadd.f32 %v2868, %v2878
      %v2884 = vadd.f32 %v2869, %v2880
      %s2885 = sadd.s32 %s2794, 22
      %s2886 = sld [smem:[#allocation10 + %s2885]]
      %v2887 = vstv %s2886
      %v2888 = vmul.f32 %v2887, %v2119
      %v2889 = vmul.f32 %v2887, %v2120
      %2892 = vrot.lane.b32.xlu0 %v2888, 122
      %v2893 = vpop.permute.xlu0 %2892
      %2894 = vrot.lane.b32.xlu0 %v2889, 122
      %v2895 = vpop.permute.xlu0 %2894
      %v2898 = vadd.f32 %v2791, %v2893
      %v2899 = vadd.f32 %v2792, %v2895
      %s2900 = sadd.s32 %s2794, 23
      %s2901 = sld [smem:[#allocation10 + %s2900]]
      %v2902 = vstv %s2901
      %v2903 = vmul.f32 %v2902, %v2123
      %v2904 = vmul.f32 %v2902, %v2124
      %2907 = vrot.lane.b32.xlu0 %v2903, 122
      %v2908 = vpop.permute.xlu0 %2907
      %2909 = vrot.lane.b32.xlu0 %v2904, 122
      %v2910 = vpop.permute.xlu0 %2909
      %v2913 = vadd.f32 %v2898, %v2908
      %v2914 = vadd.f32 %v2899, %v2910
      %2915 = vst.msk [vmem:[#allocation4] sm:$0xff] %vm322, %v2823
      %2916 = vst.msk [vmem:[#allocation4 + $0x8] sm:$0xff] %vm322, %v2824
      %2917 = vst.msk [vmem:[%s1161] sm:$0xff] %vm322, %v2853
      %2918 = vst.msk [vmem:[%s1161 + $0x8] sm:$0xff] %vm322, %v2854
      %2919 = vst.msk [vmem:[%s1177] sm:$0xff] %vm322, %v2883
      %2920 = vst.msk [vmem:[%s1177 + $0x8] sm:$0xff] %vm322, %v2884
      %2921 = vst.msk [vmem:[%s1193] sm:$0xff] %vm322, %v2913
      %2922 = vst.msk [vmem:[%s1193 + $0x8] sm:$0xff] %vm322, %v2914
    $region44: #{tpu_custom_call.1} parent=1 // loop_footer
      %s2109 = sadd.s32 1, %s2105
    $region45: #{tpu_custom_call.1} parent=1 // loop_footer_branch
      %2104 = sbr.rel target = $region41
    $region46: #{tpu_custom_call.1} parent=1 // loop_exit
      _
    %v2923 = vld [vmem:[#allocation4] sm:$0xff]
    %v2924 = vld [vmem:[#allocation4 + $0x8] sm:$0xff]
    %v2925 = vsel %vm321, %v2923, 0.0
    %v2926 = vsel %vm321, %v2924, 0.0
    %2929 = vrot.lane.b32.xlu0 %v2925, 3
    %v2930 = vpop.permute.xlu0 %2929
    %2931 = vrot.lane.b32.xlu0 %v2926, 3
    %v2932 = vpop.permute.xlu0 %2931
    %s2935 = scalar_lea.vmem [#allocation3], 192
    %2936 = vst.msk [vmem:[%s2935 + $0x3] sm:$0xff] %vm1158, %v2930
    %2937 = vst.msk [vmem:[%s2935 + $0xb] sm:$0xff] %vm1158, %v2932
    %v2938 = vld [vmem:[%s1161] sm:$0xff]
    %v2939 = vld [vmem:[%s1161 + $0x8] sm:$0xff]
    %v2940 = vsel %vm321, %v2938, 0.0
    %v2941 = vsel %vm321, %v2939, 0.0
    %2944 = vrot.lane.b32.xlu0 %v2940, 3
    %v2945 = vpop.permute.xlu0 %2944
    %2946 = vrot.lane.b32.xlu0 %v2941, 3
    %v2947 = vpop.permute.xlu0 %2946
    %s2950 = scalar_lea.vmem [#allocation3], 216
    %2951 = vst.msk [vmem:[%s2950 + $0x3] sm:$0xff] %vm1158, %v2945
    %2952 = vst.msk [vmem:[%s2950 + $0xb] sm:$0xff] %vm1158, %v2947
    %v2953 = vld [vmem:[%s1177] sm:$0xff]
    %v2954 = vld [vmem:[%s1177 + $0x8] sm:$0xff]
    %v2955 = vsel %vm321, %v2953, 0.0
    %v2956 = vsel %vm321, %v2954, 0.0
    %2959 = vrot.lane.b32.xlu0 %v2955, 3
    %v2960 = vpop.permute.xlu0 %2959
    %2961 = vrot.lane.b32.xlu0 %v2956, 3
    %v2962 = vpop.permute.xlu0 %2961
    %s2965 = scalar_lea.vmem [#allocation3], 240
    %2966 = vst.msk [vmem:[%s2965 + $0x3] sm:$0xff] %vm1158, %v2960
    %2967 = vst.msk [vmem:[%s2965 + $0xb] sm:$0xff] %vm1158, %v2962
    %v2968 = vld [vmem:[%s1193] sm:$0xff]
    %v2969 = vld [vmem:[%s1193 + $0x8] sm:$0xff]
    %v2970 = vsel %vm321, %v2968, 0.0
    %v2971 = vsel %vm321, %v2969, 0.0
    %2974 = vrot.lane.b32.xlu0 %v2970, 3
    %v2975 = vpop.permute.xlu0 %2974
    %2976 = vrot.lane.b32.xlu0 %v2971, 3
    %v2977 = vpop.permute.xlu0 %2976
    %s2980 = scalar_lea.vmem [#allocation3], 264
    %2981 = vst.msk [vmem:[%s2980 + $0x3] sm:$0xff] %vm1158, %v2975
    %2982 = vst.msk [vmem:[%s2980 + $0xb] sm:$0xff] %vm1158, %v2977
    %2983 = vst.msk [vmem:[#allocation4] sm:$0xff] %vm322, 0.0
    %2984 = vst.msk [vmem:[#allocation4 + $0x8] sm:$0xff] %vm322, 0.0
    %2985 = vst.msk [vmem:[#allocation4 + $0x10] sm:$0xff] %vm322, 0.0
    %2986 = vst.msk [vmem:[#allocation4 + $0x18] sm:$0xff] %vm322, 0.0
    %2987 = vst.msk [vmem:[#allocation4 + $0x20] sm:$0xff] %vm322, 0.0
    %2988 = vst.msk [vmem:[#allocation4 + $0x28] sm:$0xff] %vm322, 0.0
    %2989 = vst.msk [vmem:[#allocation4 + $0x30] sm:$0xff] %vm322, 0.0
    %2990 = vst.msk [vmem:[#allocation4 + $0x38] sm:$0xff] %vm322, 0.0
    loop: start=0, step=1, limit=7
    $region47: #{tpu_custom_call.1} parent=1 // loop_pre_header
      _
    $region48: #{tpu_custom_call.1} parent=1 // loop_header
      %s2992 = sphi 0, %s2996
      %p2993 = scmp.ge.s32.totalorder %s2992, 7
    $region49: #{tpu_custom_call.1} parent=1 // loop_header_branch
      %2995 = sbr.rel (%p2993) target = $region53
    $region50: #{tpu_custom_call.1} parent=1 // loop_body
      %v2997 = vld [vmem:[#allocation4] sm:$0xff]
      %v2998 = vld [vmem:[#allocation4 + $0x8] sm:$0xff]
      %v2999 = vld [vmem:[%s1161] sm:$0xff]
      %v3000 = vld [vmem:[%s1161 + $0x8] sm:$0xff]
      %v3001 = vld [vmem:[%s1177] sm:$0xff]
      %v3002 = vld [vmem:[%s1177 + $0x8] sm:$0xff]
      %v3003 = vld [vmem:[%s1193] sm:$0xff]
      %v3004 = vld [vmem:[%s1193 + $0x8] sm:$0xff]
      %s3005 = scalar_lea.vmem [#allocation2], %s2992
      %v3006 = vld [vmem:[%s3005] sm:$0xff]
      %v3007 = vld [vmem:[%s3005 + $0x8] sm:$0xff]
      %s3008 = sadd.s32 %s2992, 24
      %s3009 = scalar_lea.vmem [#allocation2], %s3008
      %v3010 = vld [vmem:[%s3009] sm:$0xff]
      %v3011 = vld [vmem:[%s3009 + $0x8] sm:$0xff]
      %s3012 = smul.u32 %s2992, 224
      %s3013 = sadd.s32 %s3012, 24
      %s3014 = sld [smem:[#allocation10 + %s3013]]
      %v3015 = vstv %s3014
      %v3016 = vmul.f32 %v3015, %v3006
      %v3017 = vmul.f32 %v3015, %v3007
      %v3018 = vadd.f32 %v2997, %v3016
      %v3019 = vadd.f32 %v2998, %v3017
      %s3020 = sadd.s32 %s3012, 25
      %s3021 = sld [smem:[#allocation10 + %s3020]]
      %v3022 = vstv %s3021
      %v3023 = vmul.f32 %v3022, %v3010
      %v3024 = vmul.f32 %v3022, %v3011
      %v3025 = vadd.f32 %v3018, %v3023
      %v3026 = vadd.f32 %v3019, %v3024
      %s3027 = sadd.s32 %s3012, 26
      %s3028 = sld [smem:[#allocation10 + %s3027]]
      %v3029 = vstv %s3028
      %v3030 = vmul.f32 %v3029, %v3006
      %v3031 = vmul.f32 %v3029, %v3007
      %v3032 = vadd.f32 %v2999, %v3030
      %v3033 = vadd.f32 %v3000, %v3031
      %s3034 = sadd.s32 %s3012, 27
      %s3035 = sld [smem:[#allocation10 + %s3034]]
      %v3036 = vstv %s3035
      %v3037 = vmul.f32 %v3036, %v3010
      %v3038 = vmul.f32 %v3036, %v3011
      %v3039 = vadd.f32 %v3032, %v3037
      %v3040 = vadd.f32 %v3033, %v3038
      %s3041 = sadd.s32 %s3012, 28
      %s3042 = sld [smem:[#allocation10 + %s3041]]
      %v3043 = vstv %s3042
      %v3044 = vmul.f32 %v3043, %v3006
      %v3045 = vmul.f32 %v3043, %v3007
      %v3046 = vadd.f32 %v3001, %v3044
      %v3047 = vadd.f32 %v3002, %v3045
      %s3048 = sadd.s32 %s3012, 29
      %s3049 = sld [smem:[#allocation10 + %s3048]]
      %v3050 = vstv %s3049
      %v3051 = vmul.f32 %v3050, %v3010
      %v3052 = vmul.f32 %v3050, %v3011
      %v3053 = vadd.f32 %v3046, %v3051
      %v3054 = vadd.f32 %v3047, %v3052
      %s3055 = sadd.s32 %s3012, 30
      %s3056 = sld [smem:[#allocation10 + %s3055]]
      %v3057 = vstv %s3056
      %v3058 = vmul.f32 %v3057, %v3006
      %v3059 = vmul.f32 %v3057, %v3007
      %v3060 = vadd.f32 %v3003, %v3058
      %v3061 = vadd.f32 %v3004, %v3059
      %s3062 = sadd.s32 %s3012, 31
      %s3063 = sld [smem:[#allocation10 + %s3062]]
      %v3064 = vstv %s3063
      %v3065 = vmul.f32 %v3064, %v3010
      %v3066 = vmul.f32 %v3064, %v3011
      %v3067 = vadd.f32 %v3060, %v3065
      %v3068 = vadd.f32 %v3061, %v3066
      %s3069 = smul.u32 %s2992, 7
      %s3070 = sadd.s32 %s3069, 1
      %s3071 = smul.u32 %s3070, 32
      %s3072 = sadd.s32 %s3071, 24
      %s3073 = sld [smem:[#allocation10 + %s3072]]
      %v3074 = vstv %s3073
      %v3075 = vmul.f32 %v3074, %v3006
      %v3076 = vmul.f32 %v3074, %v3007
      %3079 = vrot.lane.b32.xlu0 %v3075, 127
      %v3080 = vpop.permute.xlu0 %3079
      %3081 = vrot.lane.b32.xlu0 %v3076, 127
      %v3082 = vpop.permute.xlu0 %3081
      %v3085 = vadd.f32 %v3025, %v3080
      %v3086 = vadd.f32 %v3026, %v3082
      %s3087 = sadd.s32 %s3071, 25
      %s3088 = sld [smem:[#allocation10 + %s3087]]
      %v3089 = vstv %s3088
      %v3090 = vmul.f32 %v3089, %v3010
      %v3091 = vmul.f32 %v3089, %v3011
      %3094 = vrot.lane.b32.xlu0 %v3090, 127
      %v3095 = vpop.permute.xlu0 %3094
      %3096 = vrot.lane.b32.xlu0 %v3091, 127
      %v3097 = vpop.permute.xlu0 %3096
      %v3100 = vadd.f32 %v3085, %v3095
      %v3101 = vadd.f32 %v3086, %v3097
      %s3102 = sadd.s32 %s3071, 26
      %s3103 = sld [smem:[#allocation10 + %s3102]]
      %v3104 = vstv %s3103
      %v3105 = vmul.f32 %v3104, %v3006
      %v3106 = vmul.f32 %v3104, %v3007
      %3109 = vrot.lane.b32.xlu0 %v3105, 127
      %v3110 = vpop.permute.xlu0 %3109
      %3111 = vrot.lane.b32.xlu0 %v3106, 127
      %v3112 = vpop.permute.xlu0 %3111
      %v3115 = vadd.f32 %v3039, %v3110
      %v3116 = vadd.f32 %v3040, %v3112
      %s3117 = sadd.s32 %s3071, 27
      %s3118 = sld [smem:[#allocation10 + %s3117]]
      %v3119 = vstv %s3118
      %v3120 = vmul.f32 %v3119, %v3010
      %v3121 = vmul.f32 %v3119, %v3011
      %3124 = vrot.lane.b32.xlu0 %v3120, 127
      %v3125 = vpop.permute.xlu0 %3124
      %3126 = vrot.lane.b32.xlu0 %v3121, 127
      %v3127 = vpop.permute.xlu0 %3126
      %v3130 = vadd.f32 %v3115, %v3125
      %v3131 = vadd.f32 %v3116, %v3127
      %s3132 = sadd.s32 %s3071, 28
      %s3133 = sld [smem:[#allocation10 + %s3132]]
      %v3134 = vstv %s3133
      %v3135 = vmul.f32 %v3134, %v3006
      %v3136 = vmul.f32 %v3134, %v3007
      %3139 = vrot.lane.b32.xlu0 %v3135, 127
      %v3140 = vpop.permute.xlu0 %3139
      %3141 = vrot.lane.b32.xlu0 %v3136, 127
      %v3142 = vpop.permute.xlu0 %3141
      %v3145 = vadd.f32 %v3053, %v3140
      %v3146 = vadd.f32 %v3054, %v3142
      %s3147 = sadd.s32 %s3071, 29
      %s3148 = sld [smem:[#allocation10 + %s3147]]
      %v3149 = vstv %s3148
      %v3150 = vmul.f32 %v3149, %v3010
      %v3151 = vmul.f32 %v3149, %v3011
      %3154 = vrot.lane.b32.xlu0 %v3150, 127
      %v3155 = vpop.permute.xlu0 %3154
      %3156 = vrot.lane.b32.xlu0 %v3151, 127
      %v3157 = vpop.permute.xlu0 %3156
      %v3160 = vadd.f32 %v3145, %v3155
      %v3161 = vadd.f32 %v3146, %v3157
      %s3162 = sadd.s32 %s3071, 30
      %s3163 = sld [smem:[#allocation10 + %s3162]]
      %v3164 = vstv %s3163
      %v3165 = vmul.f32 %v3164, %v3006
      %v3166 = vmul.f32 %v3164, %v3007
      %3169 = vrot.lane.b32.xlu0 %v3165, 127
      %v3170 = vpop.permute.xlu0 %3169
      %3171 = vrot.lane.b32.xlu0 %v3166, 127
      %v3172 = vpop.permute.xlu0 %3171
      %v3175 = vadd.f32 %v3067, %v3170
      %v3176 = vadd.f32 %v3068, %v3172
      %s3177 = sadd.s32 %s3071, 31
      %s3178 = sld [smem:[#allocation10 + %s3177]]
      %v3179 = vstv %s3178
      %v3180 = vmul.f32 %v3179, %v3010
      %v3181 = vmul.f32 %v3179, %v3011
      %3184 = vrot.lane.b32.xlu0 %v3180, 127
      %v3185 = vpop.permute.xlu0 %3184
      %3186 = vrot.lane.b32.xlu0 %v3181, 127
      %v3187 = vpop.permute.xlu0 %3186
      %v3190 = vadd.f32 %v3175, %v3185
      %v3191 = vadd.f32 %v3176, %v3187
      %s3192 = sadd.s32 %s3069, 2
      %s3193 = smul.u32 %s3192, 32
      %s3194 = sadd.s32 %s3193, 24
      %s3195 = sld [smem:[#allocation10 + %s3194]]
      %v3196 = vstv %s3195
      %v3197 = vmul.f32 %v3196, %v3006
      %v3198 = vmul.f32 %v3196, %v3007
      %3201 = vrot.lane.b32.xlu0 %v3197, 126
      %v3202 = vpop.permute.xlu0 %3201
      %3203 = vrot.lane.b32.xlu0 %v3198, 126
      %v3204 = vpop.permute.xlu0 %3203
      %v3207 = vadd.f32 %v3100, %v3202
      %v3208 = vadd.f32 %v3101, %v3204
      %s3209 = sadd.s32 %s3193, 25
      %s3210 = sld [smem:[#allocation10 + %s3209]]
      %v3211 = vstv %s3210
      %v3212 = vmul.f32 %v3211, %v3010
      %v3213 = vmul.f32 %v3211, %v3011
      %3216 = vrot.lane.b32.xlu0 %v3212, 126
      %v3217 = vpop.permute.xlu0 %3216
      %3218 = vrot.lane.b32.xlu0 %v3213, 126
      %v3219 = vpop.permute.xlu0 %3218
      %v3222 = vadd.f32 %v3207, %v3217
      %v3223 = vadd.f32 %v3208, %v3219
      %s3224 = sadd.s32 %s3193, 26
      %s3225 = sld [smem:[#allocation10 + %s3224]]
      %v3226 = vstv %s3225
      %v3227 = vmul.f32 %v3226, %v3006
      %v3228 = vmul.f32 %v3226, %v3007
      %3231 = vrot.lane.b32.xlu0 %v3227, 126
      %v3232 = vpop.permute.xlu0 %3231
      %3233 = vrot.lane.b32.xlu0 %v3228, 126
      %v3234 = vpop.permute.xlu0 %3233
      %v3237 = vadd.f32 %v3130, %v3232
      %v3238 = vadd.f32 %v3131, %v3234
      %s3239 = sadd.s32 %s3193, 27
      %s3240 = sld [smem:[#allocation10 + %s3239]]
      %v3241 = vstv %s3240
      %v3242 = vmul.f32 %v3241, %v3010
      %v3243 = vmul.f32 %v3241, %v3011
      %3246 = vrot.lane.b32.xlu0 %v3242, 126
      %v3247 = vpop.permute.xlu0 %3246
      %3248 = vrot.lane.b32.xlu0 %v3243, 126
      %v3249 = vpop.permute.xlu0 %3248
      %v3252 = vadd.f32 %v3237, %v3247
      %v3253 = vadd.f32 %v3238, %v3249
      %s3254 = sadd.s32 %s3193, 28
      %s3255 = sld [smem:[#allocation10 + %s3254]]
      %v3256 = vstv %s3255
      %v3257 = vmul.f32 %v3256, %v3006
      %v3258 = vmul.f32 %v3256, %v3007
      %3261 = vrot.lane.b32.xlu0 %v3257, 126
      %v3262 = vpop.permute.xlu0 %3261
      %3263 = vrot.lane.b32.xlu0 %v3258, 126
      %v3264 = vpop.permute.xlu0 %3263
      %v3267 = vadd.f32 %v3160, %v3262
      %v3268 = vadd.f32 %v3161, %v3264
      %s3269 = sadd.s32 %s3193, 29
      %s3270 = sld [smem:[#allocation10 + %s3269]]
      %v3271 = vstv %s3270
      %v3272 = vmul.f32 %v3271, %v3010
      %v3273 = vmul.f32 %v3271, %v3011
      %3276 = vrot.lane.b32.xlu0 %v3272, 126
      %v3277 = vpop.permute.xlu0 %3276
      %3278 = vrot.lane.b32.xlu0 %v3273, 126
      %v3279 = vpop.permute.xlu0 %3278
      %v3282 = vadd.f32 %v3267, %v3277
      %v3283 = vadd.f32 %v3268, %v3279
      %s3284 = sadd.s32 %s3193, 30
      %s3285 = sld [smem:[#allocation10 + %s3284]]
      %v3286 = vstv %s3285
      %v3287 = vmul.f32 %v3286, %v3006
      %v3288 = vmul.f32 %v3286, %v3007
      %3291 = vrot.lane.b32.xlu0 %v3287, 126
      %v3292 = vpop.permute.xlu0 %3291
      %3293 = vrot.lane.b32.xlu0 %v3288, 126
      %v3294 = vpop.permute.xlu0 %3293
      %v3297 = vadd.f32 %v3190, %v3292
      %v3298 = vadd.f32 %v3191, %v3294
      %s3299 = sadd.s32 %s3193, 31
      %s3300 = sld [smem:[#allocation10 + %s3299]]
      %v3301 = vstv %s3300
      %v3302 = vmul.f32 %v3301, %v3010
      %v3303 = vmul.f32 %v3301, %v3011
      %3306 = vrot.lane.b32.xlu0 %v3302, 126
      %v3307 = vpop.permute.xlu0 %3306
      %3308 = vrot.lane.b32.xlu0 %v3303, 126
      %v3309 = vpop.permute.xlu0 %3308
      %v3312 = vadd.f32 %v3297, %v3307
      %v3313 = vadd.f32 %v3298, %v3309
      %s3314 = sadd.s32 %s3069, 3
      %s3315 = smul.u32 %s3314, 32
      %s3316 = sadd.s32 %s3315, 24
      %s3317 = sld [smem:[#allocation10 + %s3316]]
      %v3318 = vstv %s3317
      %v3319 = vmul.f32 %v3318, %v3006
      %v3320 = vmul.f32 %v3318, %v3007
      %3323 = vrot.lane.b32.xlu0 %v3319, 125
      %v3324 = vpop.permute.xlu0 %3323
      %3325 = vrot.lane.b32.xlu0 %v3320, 125
      %v3326 = vpop.permute.xlu0 %3325
      %v3329 = vadd.f32 %v3222, %v3324
      %v3330 = vadd.f32 %v3223, %v3326
      %s3331 = sadd.s32 %s3315, 25
      %s3332 = sld [smem:[#allocation10 + %s3331]]
      %v3333 = vstv %s3332
      %v3334 = vmul.f32 %v3333, %v3010
      %v3335 = vmul.f32 %v3333, %v3011
      %3338 = vrot.lane.b32.xlu0 %v3334, 125
      %v3339 = vpop.permute.xlu0 %3338
      %3340 = vrot.lane.b32.xlu0 %v3335, 125
      %v3341 = vpop.permute.xlu0 %3340
      %v3344 = vadd.f32 %v3329, %v3339
      %v3345 = vadd.f32 %v3330, %v3341
      %s3346 = sadd.s32 %s3315, 26
      %s3347 = sld [smem:[#allocation10 + %s3346]]
      %v3348 = vstv %s3347
      %v3349 = vmul.f32 %v3348, %v3006
      %v3350 = vmul.f32 %v3348, %v3007
      %3353 = vrot.lane.b32.xlu0 %v3349, 125
      %v3354 = vpop.permute.xlu0 %3353
      %3355 = vrot.lane.b32.xlu0 %v3350, 125
      %v3356 = vpop.permute.xlu0 %3355
      %v3359 = vadd.f32 %v3252, %v3354
      %v3360 = vadd.f32 %v3253, %v3356
      %s3361 = sadd.s32 %s3315, 27
      %s3362 = sld [smem:[#allocation10 + %s3361]]
      %v3363 = vstv %s3362
      %v3364 = vmul.f32 %v3363, %v3010
      %v3365 = vmul.f32 %v3363, %v3011
      %3368 = vrot.lane.b32.xlu0 %v3364, 125
      %v3369 = vpop.permute.xlu0 %3368
      %3370 = vrot.lane.b32.xlu0 %v3365, 125
      %v3371 = vpop.permute.xlu0 %3370
      %v3374 = vadd.f32 %v3359, %v3369
      %v3375 = vadd.f32 %v3360, %v3371
      %s3376 = sadd.s32 %s3315, 28
      %s3377 = sld [smem:[#allocation10 + %s3376]]
      %v3378 = vstv %s3377
      %v3379 = vmul.f32 %v3378, %v3006
      %v3380 = vmul.f32 %v3378, %v3007
      %3383 = vrot.lane.b32.xlu0 %v3379, 125
      %v3384 = vpop.permute.xlu0 %3383
      %3385 = vrot.lane.b32.xlu0 %v3380, 125
      %v3386 = vpop.permute.xlu0 %3385
      %v3389 = vadd.f32 %v3282, %v3384
      %v3390 = vadd.f32 %v3283, %v3386
      %s3391 = sadd.s32 %s3315, 29
      %s3392 = sld [smem:[#allocation10 + %s3391]]
      %v3393 = vstv %s3392
      %v3394 = vmul.f32 %v3393, %v3010
      %v3395 = vmul.f32 %v3393, %v3011
      %3398 = vrot.lane.b32.xlu0 %v3394, 125
      %v3399 = vpop.permute.xlu0 %3398
      %3400 = vrot.lane.b32.xlu0 %v3395, 125
      %v3401 = vpop.permute.xlu0 %3400
      %v3404 = vadd.f32 %v3389, %v3399
      %v3405 = vadd.f32 %v3390, %v3401
      %s3406 = sadd.s32 %s3315, 30
      %s3407 = sld [smem:[#allocation10 + %s3406]]
      %v3408 = vstv %s3407
      %v3409 = vmul.f32 %v3408, %v3006
      %v3410 = vmul.f32 %v3408, %v3007
      %3413 = vrot.lane.b32.xlu0 %v3409, 125
      %v3414 = vpop.permute.xlu0 %3413
      %3415 = vrot.lane.b32.xlu0 %v3410, 125
      %v3416 = vpop.permute.xlu0 %3415
      %v3419 = vadd.f32 %v3312, %v3414
      %v3420 = vadd.f32 %v3313, %v3416
      %s3421 = sadd.s32 %s3315, 31
      %s3422 = sld [smem:[#allocation10 + %s3421]]
      %v3423 = vstv %s3422
      %v3424 = vmul.f32 %v3423, %v3010
      %v3425 = vmul.f32 %v3423, %v3011
      %3428 = vrot.lane.b32.xlu0 %v3424, 125
      %v3429 = vpop.permute.xlu0 %3428
      %3430 = vrot.lane.b32.xlu0 %v3425, 125
      %v3431 = vpop.permute.xlu0 %3430
      %v3434 = vadd.f32 %v3419, %v3429
      %v3435 = vadd.f32 %v3420, %v3431
      %s3436 = sadd.s32 %s3069, 4
      %s3437 = smul.u32 %s3436, 32
      %s3438 = sadd.s32 %s3437, 24
      %s3439 = sld [smem:[#allocation10 + %s3438]]
      %v3440 = vstv %s3439
      %v3441 = vmul.f32 %v3440, %v3006
      %v3442 = vmul.f32 %v3440, %v3007
      %3445 = vrot.lane.b32.xlu0 %v3441, 124
      %v3446 = vpop.permute.xlu0 %3445
      %3447 = vrot.lane.b32.xlu0 %v3442, 124
      %v3448 = vpop.permute.xlu0 %3447
      %v3451 = vadd.f32 %v3344, %v3446
      %v3452 = vadd.f32 %v3345, %v3448
      %s3453 = sadd.s32 %s3437, 25
      %s3454 = sld [smem:[#allocation10 + %s3453]]
      %v3455 = vstv %s3454
      %v3456 = vmul.f32 %v3455, %v3010
      %v3457 = vmul.f32 %v3455, %v3011
      %3460 = vrot.lane.b32.xlu0 %v3456, 124
      %v3461 = vpop.permute.xlu0 %3460
      %3462 = vrot.lane.b32.xlu0 %v3457, 124
      %v3463 = vpop.permute.xlu0 %3462
      %v3466 = vadd.f32 %v3451, %v3461
      %v3467 = vadd.f32 %v3452, %v3463
      %s3468 = sadd.s32 %s3437, 26
      %s3469 = sld [smem:[#allocation10 + %s3468]]
      %v3470 = vstv %s3469
      %v3471 = vmul.f32 %v3470, %v3006
      %v3472 = vmul.f32 %v3470, %v3007
      %3475 = vrot.lane.b32.xlu0 %v3471, 124
      %v3476 = vpop.permute.xlu0 %3475
      %3477 = vrot.lane.b32.xlu0 %v3472, 124
      %v3478 = vpop.permute.xlu0 %3477
      %v3481 = vadd.f32 %v3374, %v3476
      %v3482 = vadd.f32 %v3375, %v3478
      %s3483 = sadd.s32 %s3437, 27
      %s3484 = sld [smem:[#allocation10 + %s3483]]
      %v3485 = vstv %s3484
      %v3486 = vmul.f32 %v3485, %v3010
      %v3487 = vmul.f32 %v3485, %v3011
      %3490 = vrot.lane.b32.xlu0 %v3486, 124
      %v3491 = vpop.permute.xlu0 %3490
      %3492 = vrot.lane.b32.xlu0 %v3487, 124
      %v3493 = vpop.permute.xlu0 %3492
      %v3496 = vadd.f32 %v3481, %v3491
      %v3497 = vadd.f32 %v3482, %v3493
      %s3498 = sadd.s32 %s3437, 28
      %s3499 = sld [smem:[#allocation10 + %s3498]]
      %v3500 = vstv %s3499
      %v3501 = vmul.f32 %v3500, %v3006
      %v3502 = vmul.f32 %v3500, %v3007
      %3505 = vrot.lane.b32.xlu0 %v3501, 124
      %v3506 = vpop.permute.xlu0 %3505
      %3507 = vrot.lane.b32.xlu0 %v3502, 124
      %v3508 = vpop.permute.xlu0 %3507
      %v3511 = vadd.f32 %v3404, %v3506
      %v3512 = vadd.f32 %v3405, %v3508
      %s3513 = sadd.s32 %s3437, 29
      %s3514 = sld [smem:[#allocation10 + %s3513]]
      %v3515 = vstv %s3514
      %v3516 = vmul.f32 %v3515, %v3010
      %v3517 = vmul.f32 %v3515, %v3011
      %3520 = vrot.lane.b32.xlu0 %v3516, 124
      %v3521 = vpop.permute.xlu0 %3520
      %3522 = vrot.lane.b32.xlu0 %v3517, 124
      %v3523 = vpop.permute.xlu0 %3522
      %v3526 = vadd.f32 %v3511, %v3521
      %v3527 = vadd.f32 %v3512, %v3523
      %s3528 = sadd.s32 %s3437, 30
      %s3529 = sld [smem:[#allocation10 + %s3528]]
      %v3530 = vstv %s3529
      %v3531 = vmul.f32 %v3530, %v3006
      %v3532 = vmul.f32 %v3530, %v3007
      %3535 = vrot.lane.b32.xlu0 %v3531, 124
      %v3536 = vpop.permute.xlu0 %3535
      %3537 = vrot.lane.b32.xlu0 %v3532, 124
      %v3538 = vpop.permute.xlu0 %3537
      %v3541 = vadd.f32 %v3434, %v3536
      %v3542 = vadd.f32 %v3435, %v3538
      %s3543 = sadd.s32 %s3437, 31
      %s3544 = sld [smem:[#allocation10 + %s3543]]
      %v3545 = vstv %s3544
      %v3546 = vmul.f32 %v3545, %v3010
      %v3547 = vmul.f32 %v3545, %v3011
      %3550 = vrot.lane.b32.xlu0 %v3546, 124
      %v3551 = vpop.permute.xlu0 %3550
      %3552 = vrot.lane.b32.xlu0 %v3547, 124
      %v3553 = vpop.permute.xlu0 %3552
      %v3556 = vadd.f32 %v3541, %v3551
      %v3557 = vadd.f32 %v3542, %v3553
      %s3558 = sadd.s32 %s3069, 5
      %s3559 = smul.u32 %s3558, 32
      %s3560 = sadd.s32 %s3559, 24
      %s3561 = sld [smem:[#allocation10 + %s3560]]
      %v3562 = vstv %s3561
      %v3563 = vmul.f32 %v3562, %v3006
      %v3564 = vmul.f32 %v3562, %v3007
      %3567 = vrot.lane.b32.xlu0 %v3563, 123
      %v3568 = vpop.permute.xlu0 %3567
      %3569 = vrot.lane.b32.xlu0 %v3564, 123
      %v3570 = vpop.permute.xlu0 %3569
      %v3573 = vadd.f32 %v3466, %v3568
      %v3574 = vadd.f32 %v3467, %v3570
      %s3575 = sadd.s32 %s3559, 25
      %s3576 = sld [smem:[#allocation10 + %s3575]]
      %v3577 = vstv %s3576
      %v3578 = vmul.f32 %v3577, %v3010
      %v3579 = vmul.f32 %v3577, %v3011
      %3582 = vrot.lane.b32.xlu0 %v3578, 123
      %v3583 = vpop.permute.xlu0 %3582
      %3584 = vrot.lane.b32.xlu0 %v3579, 123
      %v3585 = vpop.permute.xlu0 %3584
      %v3588 = vadd.f32 %v3573, %v3583
      %v3589 = vadd.f32 %v3574, %v3585
      %s3590 = sadd.s32 %s3559, 26
      %s3591 = sld [smem:[#allocation10 + %s3590]]
      %v3592 = vstv %s3591
      %v3593 = vmul.f32 %v3592, %v3006
      %v3594 = vmul.f32 %v3592, %v3007
      %3597 = vrot.lane.b32.xlu0 %v3593, 123
      %v3598 = vpop.permute.xlu0 %3597
      %3599 = vrot.lane.b32.xlu0 %v3594, 123
      %v3600 = vpop.permute.xlu0 %3599
      %v3603 = vadd.f32 %v3496, %v3598
      %v3604 = vadd.f32 %v3497, %v3600
      %s3605 = sadd.s32 %s3559, 27
      %s3606 = sld [smem:[#allocation10 + %s3605]]
      %v3607 = vstv %s3606
      %v3608 = vmul.f32 %v3607, %v3010
      %v3609 = vmul.f32 %v3607, %v3011
      %3612 = vrot.lane.b32.xlu0 %v3608, 123
      %v3613 = vpop.permute.xlu0 %3612
      %3614 = vrot.lane.b32.xlu0 %v3609, 123
      %v3615 = vpop.permute.xlu0 %3614
      %v3618 = vadd.f32 %v3603, %v3613
      %v3619 = vadd.f32 %v3604, %v3615
      %s3620 = sadd.s32 %s3559, 28
      %s3621 = sld [smem:[#allocation10 + %s3620]]
      %v3622 = vstv %s3621
      %v3623 = vmul.f32 %v3622, %v3006
      %v3624 = vmul.f32 %v3622, %v3007
      %3627 = vrot.lane.b32.xlu0 %v3623, 123
      %v3628 = vpop.permute.xlu0 %3627
      %3629 = vrot.lane.b32.xlu0 %v3624, 123
      %v3630 = vpop.permute.xlu0 %3629
      %v3633 = vadd.f32 %v3526, %v3628
      %v3634 = vadd.f32 %v3527, %v3630
      %s3635 = sadd.s32 %s3559, 29
      %s3636 = sld [smem:[#allocation10 + %s3635]]
      %v3637 = vstv %s3636
      %v3638 = vmul.f32 %v3637, %v3010
      %v3639 = vmul.f32 %v3637, %v3011
      %3642 = vrot.lane.b32.xlu0 %v3638, 123
      %v3643 = vpop.permute.xlu0 %3642
      %3644 = vrot.lane.b32.xlu0 %v3639, 123
      %v3645 = vpop.permute.xlu0 %3644
      %v3648 = vadd.f32 %v3633, %v3643
      %v3649 = vadd.f32 %v3634, %v3645
      %s3650 = sadd.s32 %s3559, 30
      %s3651 = sld [smem:[#allocation10 + %s3650]]
      %v3652 = vstv %s3651
      %v3653 = vmul.f32 %v3652, %v3006
      %v3654 = vmul.f32 %v3652, %v3007
      %3657 = vrot.lane.b32.xlu0 %v3653, 123
      %v3658 = vpop.permute.xlu0 %3657
      %3659 = vrot.lane.b32.xlu0 %v3654, 123
      %v3660 = vpop.permute.xlu0 %3659
      %v3663 = vadd.f32 %v3556, %v3658
      %v3664 = vadd.f32 %v3557, %v3660
      %s3665 = sadd.s32 %s3559, 31
      %s3666 = sld [smem:[#allocation10 + %s3665]]
      %v3667 = vstv %s3666
      %v3668 = vmul.f32 %v3667, %v3010
      %v3669 = vmul.f32 %v3667, %v3011
      %3672 = vrot.lane.b32.xlu0 %v3668, 123
      %v3673 = vpop.permute.xlu0 %3672
      %3674 = vrot.lane.b32.xlu0 %v3669, 123
      %v3675 = vpop.permute.xlu0 %3674
      %v3678 = vadd.f32 %v3663, %v3673
      %v3679 = vadd.f32 %v3664, %v3675
      %s3680 = sadd.s32 %s3069, 6
      %s3681 = smul.u32 %s3680, 32
      %s3682 = sadd.s32 %s3681, 24
      %s3683 = sld [smem:[#allocation10 + %s3682]]
      %v3684 = vstv %s3683
      %v3685 = vmul.f32 %v3684, %v3006
      %v3686 = vmul.f32 %v3684, %v3007
      %3689 = vrot.lane.b32.xlu0 %v3685, 122
      %v3690 = vpop.permute.xlu0 %3689
      %3691 = vrot.lane.b32.xlu0 %v3686, 122
      %v3692 = vpop.permute.xlu0 %3691
      %v3695 = vadd.f32 %v3588, %v3690
      %v3696 = vadd.f32 %v3589, %v3692
      %s3697 = sadd.s32 %s3681, 25
      %s3698 = sld [smem:[#allocation10 + %s3697]]
      %v3699 = vstv %s3698
      %v3700 = vmul.f32 %v3699, %v3010
      %v3701 = vmul.f32 %v3699, %v3011
      %3704 = vrot.lane.b32.xlu0 %v3700, 122
      %v3705 = vpop.permute.xlu0 %3704
      %3706 = vrot.lane.b32.xlu0 %v3701, 122
      %v3707 = vpop.permute.xlu0 %3706
      %v3710 = vadd.f32 %v3695, %v3705
      %v3711 = vadd.f32 %v3696, %v3707
      %s3712 = sadd.s32 %s3681, 26
      %s3713 = sld [smem:[#allocation10 + %s3712]]
      %v3714 = vstv %s3713
      %v3715 = vmul.f32 %v3714, %v3006
      %v3716 = vmul.f32 %v3714, %v3007
      %3719 = vrot.lane.b32.xlu0 %v3715, 122
      %v3720 = vpop.permute.xlu0 %3719
      %3721 = vrot.lane.b32.xlu0 %v3716, 122
      %v3722 = vpop.permute.xlu0 %3721
      %v3725 = vadd.f32 %v3618, %v3720
      %v3726 = vadd.f32 %v3619, %v3722
      %s3727 = sadd.s32 %s3681, 27
      %s3728 = sld [smem:[#allocation10 + %s3727]]
      %v3729 = vstv %s3728
      %v3730 = vmul.f32 %v3729, %v3010
      %v3731 = vmul.f32 %v3729, %v3011
      %3734 = vrot.lane.b32.xlu0 %v3730, 122
      %v3735 = vpop.permute.xlu0 %3734
      %3736 = vrot.lane.b32.xlu0 %v3731, 122
      %v3737 = vpop.permute.xlu0 %3736
      %v3740 = vadd.f32 %v3725, %v3735
      %v3741 = vadd.f32 %v3726, %v3737
      %s3742 = sadd.s32 %s3681, 28
      %s3743 = sld [smem:[#allocation10 + %s3742]]
      %v3744 = vstv %s3743
      %v3745 = vmul.f32 %v3744, %v3006
      %v3746 = vmul.f32 %v3744, %v3007
      %3749 = vrot.lane.b32.xlu0 %v3745, 122
      %v3750 = vpop.permute.xlu0 %3749
      %3751 = vrot.lane.b32.xlu0 %v3746, 122
      %v3752 = vpop.permute.xlu0 %3751
      %v3755 = vadd.f32 %v3648, %v3750
      %v3756 = vadd.f32 %v3649, %v3752
      %s3757 = sadd.s32 %s3681, 29
      %s3758 = sld [smem:[#allocation10 + %s3757]]
      %v3759 = vstv %s3758
      %v3760 = vmul.f32 %v3759, %v3010
      %v3761 = vmul.f32 %v3759, %v3011
      %3764 = vrot.lane.b32.xlu0 %v3760, 122
      %v3765 = vpop.permute.xlu0 %3764
      %3766 = vrot.lane.b32.xlu0 %v3761, 122
      %v3767 = vpop.permute.xlu0 %3766
      %v3770 = vadd.f32 %v3755, %v3765
      %v3771 = vadd.f32 %v3756, %v3767
      %s3772 = sadd.s32 %s3681, 30
      %s3773 = sld [smem:[#allocation10 + %s3772]]
      %v3774 = vstv %s3773
      %v3775 = vmul.f32 %v3774, %v3006
      %v3776 = vmul.f32 %v3774, %v3007
      %3779 = vrot.lane.b32.xlu0 %v3775, 122
      %v3780 = vpop.permute.xlu0 %3779
      %3781 = vrot.lane.b32.xlu0 %v3776, 122
      %v3782 = vpop.permute.xlu0 %3781
      %v3785 = vadd.f32 %v3678, %v3780
      %v3786 = vadd.f32 %v3679, %v3782
      %s3787 = sadd.s32 %s3681, 31
      %s3788 = sld [smem:[#allocation10 + %s3787]]
      %v3789 = vstv %s3788
      %v3790 = vmul.f32 %v3789, %v3010
      %v3791 = vmul.f32 %v3789, %v3011
      %3794 = vrot.lane.b32.xlu0 %v3790, 122
      %v3795 = vpop.permute.xlu0 %3794
      %3796 = vrot.lane.b32.xlu0 %v3791, 122
      %v3797 = vpop.permute.xlu0 %3796
      %v3800 = vadd.f32 %v3785, %v3795
      %v3801 = vadd.f32 %v3786, %v3797
      %3802 = vst.msk [vmem:[#allocation4] sm:$0xff] %vm322, %v3710
      %3803 = vst.msk [vmem:[#allocation4 + $0x8] sm:$0xff] %vm322, %v3711
      %3804 = vst.msk [vmem:[%s1161] sm:$0xff] %vm322, %v3740
      %3805 = vst.msk [vmem:[%s1161 + $0x8] sm:$0xff] %vm322, %v3741
      %3806 = vst.msk [vmem:[%s1177] sm:$0xff] %vm322, %v3770
      %3807 = vst.msk [vmem:[%s1177 + $0x8] sm:$0xff] %vm322, %v3771
      %3808 = vst.msk [vmem:[%s1193] sm:$0xff] %vm322, %v3800
      %3809 = vst.msk [vmem:[%s1193 + $0x8] sm:$0xff] %vm322, %v3801
    $region51: #{tpu_custom_call.1} parent=1 // loop_footer
      %s2996 = sadd.s32 1, %s2992
    $region52: #{tpu_custom_call.1} parent=1 // loop_footer_branch
      %2991 = sbr.rel target = $region48
    $region53: #{tpu_custom_call.1} parent=1 // loop_exit
      _
    %v3810 = vld [vmem:[#allocation4] sm:$0xff]
    %v3811 = vld [vmem:[#allocation4 + $0x8] sm:$0xff]
    %v3812 = vsel %vm321, %v3810, 0.0
    %v3813 = vsel %vm321, %v3811, 0.0
    %3816 = vrot.lane.b32.xlu0 %v3812, 3
    %v3817 = vpop.permute.xlu0 %3816
    %3818 = vrot.lane.b32.xlu0 %v3813, 3
    %v3819 = vpop.permute.xlu0 %3818
    %s3822 = scalar_lea.vmem [#allocation3], 288
    %3823 = vst.msk [vmem:[%s3822 + $0x3] sm:$0xff] %vm1158, %v3817
    %3824 = vst.msk [vmem:[%s3822 + $0xb] sm:$0xff] %vm1158, %v3819
    %v3825 = vld [vmem:[%s1161] sm:$0xff]
    %v3826 = vld [vmem:[%s1161 + $0x8] sm:$0xff]
    %v3827 = vsel %vm321, %v3825, 0.0
    %v3828 = vsel %vm321, %v3826, 0.0
    %3831 = vrot.lane.b32.xlu0 %v3827, 3
    %v3832 = vpop.permute.xlu0 %3831
    %3833 = vrot.lane.b32.xlu0 %v3828, 3
    %v3834 = vpop.permute.xlu0 %3833
    %s3837 = scalar_lea.vmem [#allocation3], 312
    %3838 = vst.msk [vmem:[%s3837 + $0x3] sm:$0xff] %vm1158, %v3832
    %3839 = vst.msk [vmem:[%s3837 + $0xb] sm:$0xff] %vm1158, %v3834
    %v3840 = vld [vmem:[%s1177] sm:$0xff]
    %v3841 = vld [vmem:[%s1177 + $0x8] sm:$0xff]
    %v3842 = vsel %vm321, %v3840, 0.0
    %v3843 = vsel %vm321, %v3841, 0.0
    %3846 = vrot.lane.b32.xlu0 %v3842, 3
    %v3847 = vpop.permute.xlu0 %3846
    %3848 = vrot.lane.b32.xlu0 %v3843, 3
    %v3849 = vpop.permute.xlu0 %3848
    %s3852 = scalar_lea.vmem [#allocation3], 336
    %3853 = vst.msk [vmem:[%s3852 + $0x3] sm:$0xff] %vm1158, %v3847
    %3854 = vst.msk [vmem:[%s3852 + $0xb] sm:$0xff] %vm1158, %v3849
    %v3855 = vld [vmem:[%s1193] sm:$0xff]
    %v3856 = vld [vmem:[%s1193 + $0x8] sm:$0xff]
    %v3857 = vsel %vm321, %v3855, 0.0
    %v3858 = vsel %vm321, %v3856, 0.0
    %3861 = vrot.lane.b32.xlu0 %v3857, 3
    %v3862 = vpop.permute.xlu0 %3861
    %3863 = vrot.lane.b32.xlu0 %v3858, 3
    %v3864 = vpop.permute.xlu0 %3863
    %s3867 = scalar_lea.vmem [#allocation3], 360
    %3868 = vst.msk [vmem:[%s3867 + $0x3] sm:$0xff] %vm1158, %v3862
    %3869 = vst.msk [vmem:[%s3867 + $0xb] sm:$0xff] %vm1158, %v3864
    %3870 = vst.msk [vmem:[#allocation5] sm:$0xff] %vm322, 0.0
    %3871 = vst.msk [vmem:[#allocation5 + $0x8] sm:$0xff] %vm322, 0.0
    loop: start=0, step=1, limit=7
    $region54: #{tpu_custom_call.1} parent=1 // loop_pre_header
      _
    $region55: #{tpu_custom_call.1} parent=1 // loop_header
      %s3873 = sphi 0, %s3877
      %p3874 = scmp.ge.s32.totalorder %s3873, 7
    $region56: #{tpu_custom_call.1} parent=1 // loop_header_branch
      %3876 = sbr.rel (%p3874) target = $region60
    $region57: #{tpu_custom_call.1} parent=1 // loop_body
      %v3878 = vld [vmem:[#allocation5] sm:$0xff]
      %v3879 = vld [vmem:[#allocation5 + $0x8] sm:$0xff]
      %s3880 = smul.u32 %s3873, 112
      %s3881 = sld [smem:[#allocation11 + %s3880]]
      %s3882 = scalar_lea.vmem [#allocation3], %s3873
      %v3883 = vld [vmem:[%s3882] sm:$0xff]
      %v3884 = vld [vmem:[%s3882 + $0x8] sm:$0xff]
      %v3885 = vstv %s3881
      %v3886 = vmul.f32 %v3885, %v3883
      %v3887 = vmul.f32 %v3885, %v3884
      %v3888 = vadd.f32 %v3878, %v3886
      %v3889 = vadd.f32 %v3879, %v3887
      %s3890 = sadd.s32 %s3880, 1
      %s3891 = sld [smem:[#allocation11 + %s3890]]
      %s3892 = sadd.s32 %s3873, 24
      %s3893 = scalar_lea.vmem [#allocation3], %s3892
      %v3894 = vld [vmem:[%s3893] sm:$0xff]
      %v3895 = vld [vmem:[%s3893 + $0x8] sm:$0xff]
      %v3896 = vstv %s3891
      %v3897 = vmul.f32 %v3896, %v3894
      %v3898 = vmul.f32 %v3896, %v3895
      %v3899 = vadd.f32 %v3888, %v3897
      %v3900 = vadd.f32 %v3889, %v3898
      %s3901 = sadd.s32 %s3880, 2
      %s3902 = sld [smem:[#allocation11 + %s3901]]
      %s3903 = sadd.s32 %s3873, 48
      %s3904 = scalar_lea.vmem [#allocation3], %s3903
      %v3905 = vld [vmem:[%s3904] sm:$0xff]
      %v3906 = vld [vmem:[%s3904 + $0x8] sm:$0xff]
      %v3907 = vstv %s3902
      %v3908 = vmul.f32 %v3907, %v3905
      %v3909 = vmul.f32 %v3907, %v3906
      %v3910 = vadd.f32 %v3899, %v3908
      %v3911 = vadd.f32 %v3900, %v3909
      %s3912 = sadd.s32 %s3880, 3
      %s3913 = sld [smem:[#allocation11 + %s3912]]
      %s3914 = sadd.s32 %s3873, 72
      %s3915 = scalar_lea.vmem [#allocation3], %s3914
      %v3916 = vld [vmem:[%s3915] sm:$0xff]
      %v3917 = vld [vmem:[%s3915 + $0x8] sm:$0xff]
      %v3918 = vstv %s3913
      %v3919 = vmul.f32 %v3918, %v3916
      %v3920 = vmul.f32 %v3918, %v3917
      %v3921 = vadd.f32 %v3910, %v3919
      %v3922 = vadd.f32 %v3911, %v3920
      %s3923 = sadd.s32 %s3880, 4
      %s3924 = sld [smem:[#allocation11 + %s3923]]
      %s3925 = sadd.s32 %s3873, 96
      %s3926 = scalar_lea.vmem [#allocation3], %s3925
      %v3927 = vld [vmem:[%s3926] sm:$0xff]
      %v3928 = vld [vmem:[%s3926 + $0x8] sm:$0xff]
      %v3929 = vstv %s3924
      %v3930 = vmul.f32 %v3929, %v3927
      %v3931 = vmul.f32 %v3929, %v3928
      %v3932 = vadd.f32 %v3921, %v3930
      %v3933 = vadd.f32 %v3922, %v3931
      %s3934 = sadd.s32 %s3880, 5
      %s3935 = sld [smem:[#allocation11 + %s3934]]
      %s3936 = sadd.s32 %s3873, 120
      %s3937 = scalar_lea.vmem [#allocation3], %s3936
      %v3938 = vld [vmem:[%s3937] sm:$0xff]
      %v3939 = vld [vmem:[%s3937 + $0x8] sm:$0xff]
      %v3940 = vstv %s3935
      %v3941 = vmul.f32 %v3940, %v3938
      %v3942 = vmul.f32 %v3940, %v3939
      %v3943 = vadd.f32 %v3932, %v3941
      %v3944 = vadd.f32 %v3933, %v3942
      %s3945 = sadd.s32 %s3880, 6
      %s3946 = sld [smem:[#allocation11 + %s3945]]
      %s3947 = sadd.s32 %s3873, 144
      %s3948 = scalar_lea.vmem [#allocation3], %s3947
      %v3949 = vld [vmem:[%s3948] sm:$0xff]
      %v3950 = vld [vmem:[%s3948 + $0x8] sm:$0xff]
      %v3951 = vstv %s3946
      %v3952 = vmul.f32 %v3951, %v3949
      %v3953 = vmul.f32 %v3951, %v3950
      %v3954 = vadd.f32 %v3943, %v3952
      %v3955 = vadd.f32 %v3944, %v3953
      %s3956 = sadd.s32 %s3880, 7
      %s3957 = sld [smem:[#allocation11 + %s3956]]
      %s3958 = sadd.s32 %s3873, 168
      %s3959 = scalar_lea.vmem [#allocation3], %s3958
      %v3960 = vld [vmem:[%s3959] sm:$0xff]
      %v3961 = vld [vmem:[%s3959 + $0x8] sm:$0xff]
      %v3962 = vstv %s3957
      %v3963 = vmul.f32 %v3962, %v3960
      %v3964 = vmul.f32 %v3962, %v3961
      %v3965 = vadd.f32 %v3954, %v3963
      %v3966 = vadd.f32 %v3955, %v3964
      %s3967 = sadd.s32 %s3880, 8
      %s3968 = sld [smem:[#allocation11 + %s3967]]
      %s3969 = sadd.s32 %s3873, 192
      %s3970 = scalar_lea.vmem [#allocation3], %s3969
      %v3971 = vld [vmem:[%s3970] sm:$0xff]
      %v3972 = vld [vmem:[%s3970 + $0x8] sm:$0xff]
      %v3973 = vstv %s3968
      %v3974 = vmul.f32 %v3973, %v3971
      %v3975 = vmul.f32 %v3973, %v3972
      %v3976 = vadd.f32 %v3965, %v3974
      %v3977 = vadd.f32 %v3966, %v3975
      %s3978 = sadd.s32 %s3880, 9
      %s3979 = sld [smem:[#allocation11 + %s3978]]
      %s3980 = sadd.s32 %s3873, 216
      %s3981 = scalar_lea.vmem [#allocation3], %s3980
      %v3982 = vld [vmem:[%s3981] sm:$0xff]
      %v3983 = vld [vmem:[%s3981 + $0x8] sm:$0xff]
      %v3984 = vstv %s3979
      %v3985 = vmul.f32 %v3984, %v3982
      %v3986 = vmul.f32 %v3984, %v3983
      %v3987 = vadd.f32 %v3976, %v3985
      %v3988 = vadd.f32 %v3977, %v3986
      %s3989 = sadd.s32 %s3880, 10
      %s3990 = sld [smem:[#allocation11 + %s3989]]
      %s3991 = sadd.s32 %s3873, 240
      %s3992 = scalar_lea.vmem [#allocation3], %s3991
      %v3993 = vld [vmem:[%s3992] sm:$0xff]
      %v3994 = vld [vmem:[%s3992 + $0x8] sm:$0xff]
      %v3995 = vstv %s3990
      %v3996 = vmul.f32 %v3995, %v3993
      %v3997 = vmul.f32 %v3995, %v3994
      %v3998 = vadd.f32 %v3987, %v3996
      %v3999 = vadd.f32 %v3988, %v3997
      %s4000 = sadd.s32 %s3880, 11
      %s4001 = sld [smem:[#allocation11 + %s4000]]
      %s4002 = sadd.s32 %s3873, 264
      %s4003 = scalar_lea.vmem [#allocation3], %s4002
      %v4004 = vld [vmem:[%s4003] sm:$0xff]
      %v4005 = vld [vmem:[%s4003 + $0x8] sm:$0xff]
      %v4006 = vstv %s4001
      %v4007 = vmul.f32 %v4006, %v4004
      %v4008 = vmul.f32 %v4006, %v4005
      %v4009 = vadd.f32 %v3998, %v4007
      %v4010 = vadd.f32 %v3999, %v4008
      %s4011 = sadd.s32 %s3880, 12
      %s4012 = sld [smem:[#allocation11 + %s4011]]
      %s4013 = sadd.s32 %s3873, 288
      %s4014 = scalar_lea.vmem [#allocation3], %s4013
      %v4015 = vld [vmem:[%s4014] sm:$0xff]
      %v4016 = vld [vmem:[%s4014 + $0x8] sm:$0xff]
      %v4017 = vstv %s4012
      %v4018 = vmul.f32 %v4017, %v4015
      %v4019 = vmul.f32 %v4017, %v4016
      %v4020 = vadd.f32 %v4009, %v4018
      %v4021 = vadd.f32 %v4010, %v4019
      %s4022 = sadd.s32 %s3880, 13
      %s4023 = sld [smem:[#allocation11 + %s4022]]
      %s4024 = sadd.s32 %s3873, 312
      %s4025 = scalar_lea.vmem [#allocation3], %s4024
      %v4026 = vld [vmem:[%s4025] sm:$0xff]
      %v4027 = vld [vmem:[%s4025 + $0x8] sm:$0xff]
      %v4028 = vstv %s4023
      %v4029 = vmul.f32 %v4028, %v4026
      %v4030 = vmul.f32 %v4028, %v4027
      %v4031 = vadd.f32 %v4020, %v4029
      %v4032 = vadd.f32 %v4021, %v4030
      %s4033 = sadd.s32 %s3880, 14
      %s4034 = sld [smem:[#allocation11 + %s4033]]
      %s4035 = sadd.s32 %s3873, 336
      %s4036 = scalar_lea.vmem [#allocation3], %s4035
      %v4037 = vld [vmem:[%s4036] sm:$0xff]
      %v4038 = vld [vmem:[%s4036 + $0x8] sm:$0xff]
      %v4039 = vstv %s4034
      %v4040 = vmul.f32 %v4039, %v4037
      %v4041 = vmul.f32 %v4039, %v4038
      %v4042 = vadd.f32 %v4031, %v4040
      %v4043 = vadd.f32 %v4032, %v4041
      %s4044 = sadd.s32 %s3880, 15
      %s4045 = sld [smem:[#allocation11 + %s4044]]
      %s4046 = sadd.s32 %s3873, 360
      %s4047 = scalar_lea.vmem [#allocation3], %s4046
      %v4048 = vld [vmem:[%s4047] sm:$0xff]
      %v4049 = vld [vmem:[%s4047 + $0x8] sm:$0xff]
      %v4050 = vstv %s4045
      %v4051 = vmul.f32 %v4050, %v4048
      %v4052 = vmul.f32 %v4050, %v4049
      %v4053 = vadd.f32 %v4042, %v4051
      %v4054 = vadd.f32 %v4043, %v4052
      %s4055 = smul.u32 %s3873, 7
      %s4056 = sadd.s32 %s4055, 1
      %s4057 = smul.u32 %s4056, 16
      %s4058 = sld [smem:[#allocation11 + %s4057]]
      %v4059 = vstv %s4058
      %v4060 = vmul.f32 %v4059, %v3883
      %v4061 = vmul.f32 %v4059, %v3884
      %4064 = vrot.lane.b32.xlu0 %v4060, 127
      %v4065 = vpop.permute.xlu0 %4064
      %4066 = vrot.lane.b32.xlu0 %v4061, 127
      %v4067 = vpop.permute.xlu0 %4066
      %v4070 = vadd.f32 %v4053, %v4065
      %v4071 = vadd.f32 %v4054, %v4067
      %s4072 = sadd.s32 %s4057, 1
      %s4073 = sld [smem:[#allocation11 + %s4072]]
      %v4074 = vstv %s4073
      %v4075 = vmul.f32 %v4074, %v3894
      %v4076 = vmul.f32 %v4074, %v3895
      %4079 = vrot.lane.b32.xlu0 %v4075, 127
      %v4080 = vpop.permute.xlu0 %4079
      %4081 = vrot.lane.b32.xlu0 %v4076, 127
      %v4082 = vpop.permute.xlu0 %4081
      %v4085 = vadd.f32 %v4070, %v4080
      %v4086 = vadd.f32 %v4071, %v4082
      %s4087 = sadd.s32 %s4057, 2
      %s4088 = sld [smem:[#allocation11 + %s4087]]
      %v4089 = vstv %s4088
      %v4090 = vmul.f32 %v4089, %v3905
      %v4091 = vmul.f32 %v4089, %v3906
      %4094 = vrot.lane.b32.xlu0 %v4090, 127
      %v4095 = vpop.permute.xlu0 %4094
      %4096 = vrot.lane.b32.xlu0 %v4091, 127
      %v4097 = vpop.permute.xlu0 %4096
      %v4100 = vadd.f32 %v4085, %v4095
      %v4101 = vadd.f32 %v4086, %v4097
      %s4102 = sadd.s32 %s4057, 3
      %s4103 = sld [smem:[#allocation11 + %s4102]]
      %v4104 = vstv %s4103
      %v4105 = vmul.f32 %v4104, %v3916
      %v4106 = vmul.f32 %v4104, %v3917
      %4109 = vrot.lane.b32.xlu0 %v4105, 127
      %v4110 = vpop.permute.xlu0 %4109
      %4111 = vrot.lane.b32.xlu0 %v4106, 127
      %v4112 = vpop.permute.xlu0 %4111
      %v4115 = vadd.f32 %v4100, %v4110
      %v4116 = vadd.f32 %v4101, %v4112
      %s4117 = sadd.s32 %s4057, 4
      %s4118 = sld [smem:[#allocation11 + %s4117]]
      %v4119 = vstv %s4118
      %v4120 = vmul.f32 %v4119, %v3927
      %v4121 = vmul.f32 %v4119, %v3928
      %4124 = vrot.lane.b32.xlu0 %v4120, 127
      %v4125 = vpop.permute.xlu0 %4124
      %4126 = vrot.lane.b32.xlu0 %v4121, 127
      %v4127 = vpop.permute.xlu0 %4126
      %v4130 = vadd.f32 %v4115, %v4125
      %v4131 = vadd.f32 %v4116, %v4127
      %s4132 = sadd.s32 %s4057, 5
      %s4133 = sld [smem:[#allocation11 + %s4132]]
      %v4134 = vstv %s4133
      %v4135 = vmul.f32 %v4134, %v3938
      %v4136 = vmul.f32 %v4134, %v3939
      %4139 = vrot.lane.b32.xlu0 %v4135, 127
      %v4140 = vpop.permute.xlu0 %4139
      %4141 = vrot.lane.b32.xlu0 %v4136, 127
      %v4142 = vpop.permute.xlu0 %4141
      %v4145 = vadd.f32 %v4130, %v4140
      %v4146 = vadd.f32 %v4131, %v4142
      %s4147 = sadd.s32 %s4057, 6
      %s4148 = sld [smem:[#allocation11 + %s4147]]
      %v4149 = vstv %s4148
      %v4150 = vmul.f32 %v4149, %v3949
      %v4151 = vmul.f32 %v4149, %v3950
      %4154 = vrot.lane.b32.xlu0 %v4150, 127
      %v4155 = vpop.permute.xlu0 %4154
      %4156 = vrot.lane.b32.xlu0 %v4151, 127
      %v4157 = vpop.permute.xlu0 %4156
      %v4160 = vadd.f32 %v4145, %v4155
      %v4161 = vadd.f32 %v4146, %v4157
      %s4162 = sadd.s32 %s4057, 7
      %s4163 = sld [smem:[#allocation11 + %s4162]]
      %v4164 = vstv %s4163
      %v4165 = vmul.f32 %v4164, %v3960
      %v4166 = vmul.f32 %v4164, %v3961
      %4169 = vrot.lane.b32.xlu0 %v4165, 127
      %v4170 = vpop.permute.xlu0 %4169
      %4171 = vrot.lane.b32.xlu0 %v4166, 127
      %v4172 = vpop.permute.xlu0 %4171
      %v4175 = vadd.f32 %v4160, %v4170
      %v4176 = vadd.f32 %v4161, %v4172
      %s4177 = sadd.s32 %s4057, 8
      %s4178 = sld [smem:[#allocation11 + %s4177]]
      %v4179 = vstv %s4178
      %v4180 = vmul.f32 %v4179, %v3971
      %v4181 = vmul.f32 %v4179, %v3972
      %4184 = vrot.lane.b32.xlu0 %v4180, 127
      %v4185 = vpop.permute.xlu0 %4184
      %4186 = vrot.lane.b32.xlu0 %v4181, 127
      %v4187 = vpop.permute.xlu0 %4186
      %v4190 = vadd.f32 %v4175, %v4185
      %v4191 = vadd.f32 %v4176, %v4187
      %s4192 = sadd.s32 %s4057, 9
      %s4193 = sld [smem:[#allocation11 + %s4192]]
      %v4194 = vstv %s4193
      %v4195 = vmul.f32 %v4194, %v3982
      %v4196 = vmul.f32 %v4194, %v3983
      %4199 = vrot.lane.b32.xlu0 %v4195, 127
      %v4200 = vpop.permute.xlu0 %4199
      %4201 = vrot.lane.b32.xlu0 %v4196, 127
      %v4202 = vpop.permute.xlu0 %4201
      %v4205 = vadd.f32 %v4190, %v4200
      %v4206 = vadd.f32 %v4191, %v4202
      %s4207 = sadd.s32 %s4057, 10
      %s4208 = sld [smem:[#allocation11 + %s4207]]
      %v4209 = vstv %s4208
      %v4210 = vmul.f32 %v4209, %v3993
      %v4211 = vmul.f32 %v4209, %v3994
      %4214 = vrot.lane.b32.xlu0 %v4210, 127
      %v4215 = vpop.permute.xlu0 %4214
      %4216 = vrot.lane.b32.xlu0 %v4211, 127
      %v4217 = vpop.permute.xlu0 %4216
      %v4220 = vadd.f32 %v4205, %v4215
      %v4221 = vadd.f32 %v4206, %v4217
      %s4222 = sadd.s32 %s4057, 11
      %s4223 = sld [smem:[#allocation11 + %s4222]]
      %v4224 = vstv %s4223
      %v4225 = vmul.f32 %v4224, %v4004
      %v4226 = vmul.f32 %v4224, %v4005
      %4229 = vrot.lane.b32.xlu0 %v4225, 127
      %v4230 = vpop.permute.xlu0 %4229
      %4231 = vrot.lane.b32.xlu0 %v4226, 127
      %v4232 = vpop.permute.xlu0 %4231
      %v4235 = vadd.f32 %v4220, %v4230
      %v4236 = vadd.f32 %v4221, %v4232
      %s4237 = sadd.s32 %s4057, 12
      %s4238 = sld [smem:[#allocation11 + %s4237]]
      %v4239 = vstv %s4238
      %v4240 = vmul.f32 %v4239, %v4015
      %v4241 = vmul.f32 %v4239, %v4016
      %4244 = vrot.lane.b32.xlu0 %v4240, 127
      %v4245 = vpop.permute.xlu0 %4244
      %4246 = vrot.lane.b32.xlu0 %v4241, 127
      %v4247 = vpop.permute.xlu0 %4246
      %v4250 = vadd.f32 %v4235, %v4245
      %v4251 = vadd.f32 %v4236, %v4247
      %s4252 = sadd.s32 %s4057, 13
      %s4253 = sld [smem:[#allocation11 + %s4252]]
      %v4254 = vstv %s4253
      %v4255 = vmul.f32 %v4254, %v4026
      %v4256 = vmul.f32 %v4254, %v4027
      %4259 = vrot.lane.b32.xlu0 %v4255, 127
      %v4260 = vpop.permute.xlu0 %4259
      %4261 = vrot.lane.b32.xlu0 %v4256, 127
      %v4262 = vpop.permute.xlu0 %4261
      %v4265 = vadd.f32 %v4250, %v4260
      %v4266 = vadd.f32 %v4251, %v4262
      %s4267 = sadd.s32 %s4057, 14
      %s4268 = sld [smem:[#allocation11 + %s4267]]
      %v4269 = vstv %s4268
      %v4270 = vmul.f32 %v4269, %v4037
      %v4271 = vmul.f32 %v4269, %v4038
      %4274 = vrot.lane.b32.xlu0 %v4270, 127
      %v4275 = vpop.permute.xlu0 %4274
      %4276 = vrot.lane.b32.xlu0 %v4271, 127
      %v4277 = vpop.permute.xlu0 %4276
      %v4280 = vadd.f32 %v4265, %v4275
      %v4281 = vadd.f32 %v4266, %v4277
      %s4282 = sadd.s32 %s4057, 15
      %s4283 = sld [smem:[#allocation11 + %s4282]]
      %v4284 = vstv %s4283
      %v4285 = vmul.f32 %v4284, %v4048
      %v4286 = vmul.f32 %v4284, %v4049
      %4289 = vrot.lane.b32.xlu0 %v4285, 127
      %v4290 = vpop.permute.xlu0 %4289
      %4291 = vrot.lane.b32.xlu0 %v4286, 127
      %v4292 = vpop.permute.xlu0 %4291
      %v4295 = vadd.f32 %v4280, %v4290
      %v4296 = vadd.f32 %v4281, %v4292
      %s4297 = sadd.s32 %s4055, 2
      %s4298 = smul.u32 %s4297, 16
      %s4299 = sld [smem:[#allocation11 + %s4298]]
      %v4300 = vstv %s4299
      %v4301 = vmul.f32 %v4300, %v3883
      %v4302 = vmul.f32 %v4300, %v3884
      %4305 = vrot.lane.b32.xlu0 %v4301, 126
      %v4306 = vpop.permute.xlu0 %4305
      %4307 = vrot.lane.b32.xlu0 %v4302, 126
      %v4308 = vpop.permute.xlu0 %4307
      %v4311 = vadd.f32 %v4295, %v4306
      %v4312 = vadd.f32 %v4296, %v4308
      %s4313 = sadd.s32 %s4298, 1
      %s4314 = sld [smem:[#allocation11 + %s4313]]
      %v4315 = vstv %s4314
      %v4316 = vmul.f32 %v4315, %v3894
      %v4317 = vmul.f32 %v4315, %v3895
      %4320 = vrot.lane.b32.xlu0 %v4316, 126
      %v4321 = vpop.permute.xlu0 %4320
      %4322 = vrot.lane.b32.xlu0 %v4317, 126
      %v4323 = vpop.permute.xlu0 %4322
      %v4326 = vadd.f32 %v4311, %v4321
      %v4327 = vadd.f32 %v4312, %v4323
      %s4328 = sadd.s32 %s4298, 2
      %s4329 = sld [smem:[#allocation11 + %s4328]]
      %v4330 = vstv %s4329
      %v4331 = vmul.f32 %v4330, %v3905
      %v4332 = vmul.f32 %v4330, %v3906
      %4335 = vrot.lane.b32.xlu0 %v4331, 126
      %v4336 = vpop.permute.xlu0 %4335
      %4337 = vrot.lane.b32.xlu0 %v4332, 126
      %v4338 = vpop.permute.xlu0 %4337
      %v4341 = vadd.f32 %v4326, %v4336
      %v4342 = vadd.f32 %v4327, %v4338
      %s4343 = sadd.s32 %s4298, 3
      %s4344 = sld [smem:[#allocation11 + %s4343]]
      %v4345 = vstv %s4344
      %v4346 = vmul.f32 %v4345, %v3916
      %v4347 = vmul.f32 %v4345, %v3917
      %4350 = vrot.lane.b32.xlu0 %v4346, 126
      %v4351 = vpop.permute.xlu0 %4350
      %4352 = vrot.lane.b32.xlu0 %v4347, 126
      %v4353 = vpop.permute.xlu0 %4352
      %v4356 = vadd.f32 %v4341, %v4351
      %v4357 = vadd.f32 %v4342, %v4353
      %s4358 = sadd.s32 %s4298, 4
      %s4359 = sld [smem:[#allocation11 + %s4358]]
      %v4360 = vstv %s4359
      %v4361 = vmul.f32 %v4360, %v3927
      %v4362 = vmul.f32 %v4360, %v3928
      %4365 = vrot.lane.b32.xlu0 %v4361, 126
      %v4366 = vpop.permute.xlu0 %4365
      %4367 = vrot.lane.b32.xlu0 %v4362, 126
      %v4368 = vpop.permute.xlu0 %4367
      %v4371 = vadd.f32 %v4356, %v4366
      %v4372 = vadd.f32 %v4357, %v4368
      %s4373 = sadd.s32 %s4298, 5
      %s4374 = sld [smem:[#allocation11 + %s4373]]
      %v4375 = vstv %s4374
      %v4376 = vmul.f32 %v4375, %v3938
      %v4377 = vmul.f32 %v4375, %v3939
      %4380 = vrot.lane.b32.xlu0 %v4376, 126
      %v4381 = vpop.permute.xlu0 %4380
      %4382 = vrot.lane.b32.xlu0 %v4377, 126
      %v4383 = vpop.permute.xlu0 %4382
      %v4386 = vadd.f32 %v4371, %v4381
      %v4387 = vadd.f32 %v4372, %v4383
      %s4388 = sadd.s32 %s4298, 6
      %s4389 = sld [smem:[#allocation11 + %s4388]]
      %v4390 = vstv %s4389
      %v4391 = vmul.f32 %v4390, %v3949
      %v4392 = vmul.f32 %v4390, %v3950
      %4395 = vrot.lane.b32.xlu0 %v4391, 126
      %v4396 = vpop.permute.xlu0 %4395
      %4397 = vrot.lane.b32.xlu0 %v4392, 126
      %v4398 = vpop.permute.xlu0 %4397
      %v4401 = vadd.f32 %v4386, %v4396
      %v4402 = vadd.f32 %v4387, %v4398
      %s4403 = sadd.s32 %s4298, 7
      %s4404 = sld [smem:[#allocation11 + %s4403]]
      %v4405 = vstv %s4404
      %v4406 = vmul.f32 %v4405, %v3960
      %v4407 = vmul.f32 %v4405, %v3961
      %4410 = vrot.lane.b32.xlu0 %v4406, 126
      %v4411 = vpop.permute.xlu0 %4410
      %4412 = vrot.lane.b32.xlu0 %v4407, 126
      %v4413 = vpop.permute.xlu0 %4412
      %v4416 = vadd.f32 %v4401, %v4411
      %v4417 = vadd.f32 %v4402, %v4413
      %s4418 = sadd.s32 %s4298, 8
      %s4419 = sld [smem:[#allocation11 + %s4418]]
      %v4420 = vstv %s4419
      %v4421 = vmul.f32 %v4420, %v3971
      %v4422 = vmul.f32 %v4420, %v3972
      %4425 = vrot.lane.b32.xlu0 %v4421, 126
      %v4426 = vpop.permute.xlu0 %4425
      %4427 = vrot.lane.b32.xlu0 %v4422, 126
      %v4428 = vpop.permute.xlu0 %4427
      %v4431 = vadd.f32 %v4416, %v4426
      %v4432 = vadd.f32 %v4417, %v4428
      %s4433 = sadd.s32 %s4298, 9
      %s4434 = sld [smem:[#allocation11 + %s4433]]
      %v4435 = vstv %s4434
      %v4436 = vmul.f32 %v4435, %v3982
      %v4437 = vmul.f32 %v4435, %v3983
      %4440 = vrot.lane.b32.xlu0 %v4436, 126
      %v4441 = vpop.permute.xlu0 %4440
      %4442 = vrot.lane.b32.xlu0 %v4437, 126
      %v4443 = vpop.permute.xlu0 %4442
      %v4446 = vadd.f32 %v4431, %v4441
      %v4447 = vadd.f32 %v4432, %v4443
      %s4448 = sadd.s32 %s4298, 10
      %s4449 = sld [smem:[#allocation11 + %s4448]]
      %v4450 = vstv %s4449
      %v4451 = vmul.f32 %v4450, %v3993
      %v4452 = vmul.f32 %v4450, %v3994
      %4455 = vrot.lane.b32.xlu0 %v4451, 126
      %v4456 = vpop.permute.xlu0 %4455
      %4457 = vrot.lane.b32.xlu0 %v4452, 126
      %v4458 = vpop.permute.xlu0 %4457
      %v4461 = vadd.f32 %v4446, %v4456
      %v4462 = vadd.f32 %v4447, %v4458
      %s4463 = sadd.s32 %s4298, 11
      %s4464 = sld [smem:[#allocation11 + %s4463]]
      %v4465 = vstv %s4464
      %v4466 = vmul.f32 %v4465, %v4004
      %v4467 = vmul.f32 %v4465, %v4005
      %4470 = vrot.lane.b32.xlu0 %v4466, 126
      %v4471 = vpop.permute.xlu0 %4470
      %4472 = vrot.lane.b32.xlu0 %v4467, 126
      %v4473 = vpop.permute.xlu0 %4472
      %v4476 = vadd.f32 %v4461, %v4471
      %v4477 = vadd.f32 %v4462, %v4473
      %s4478 = sadd.s32 %s4298, 12
      %s4479 = sld [smem:[#allocation11 + %s4478]]
      %v4480 = vstv %s4479
      %v4481 = vmul.f32 %v4480, %v4015
      %v4482 = vmul.f32 %v4480, %v4016
      %4485 = vrot.lane.b32.xlu0 %v4481, 126
      %v4486 = vpop.permute.xlu0 %4485
      %4487 = vrot.lane.b32.xlu0 %v4482, 126
      %v4488 = vpop.permute.xlu0 %4487
      %v4491 = vadd.f32 %v4476, %v4486
      %v4492 = vadd.f32 %v4477, %v4488
      %s4493 = sadd.s32 %s4298, 13
      %s4494 = sld [smem:[#allocation11 + %s4493]]
      %v4495 = vstv %s4494
      %v4496 = vmul.f32 %v4495, %v4026
      %v4497 = vmul.f32 %v4495, %v4027
      %4500 = vrot.lane.b32.xlu0 %v4496, 126
      %v4501 = vpop.permute.xlu0 %4500
      %4502 = vrot.lane.b32.xlu0 %v4497, 126
      %v4503 = vpop.permute.xlu0 %4502
      %v4506 = vadd.f32 %v4491, %v4501
      %v4507 = vadd.f32 %v4492, %v4503
      %s4508 = sadd.s32 %s4298, 14
      %s4509 = sld [smem:[#allocation11 + %s4508]]
      %v4510 = vstv %s4509
      %v4511 = vmul.f32 %v4510, %v4037
      %v4512 = vmul.f32 %v4510, %v4038
      %4515 = vrot.lane.b32.xlu0 %v4511, 126
      %v4516 = vpop.permute.xlu0 %4515
      %4517 = vrot.lane.b32.xlu0 %v4512, 126
      %v4518 = vpop.permute.xlu0 %4517
      %v4521 = vadd.f32 %v4506, %v4516
      %v4522 = vadd.f32 %v4507, %v4518
      %s4523 = sadd.s32 %s4298, 15
      %s4524 = sld [smem:[#allocation11 + %s4523]]
      %v4525 = vstv %s4524
      %v4526 = vmul.f32 %v4525, %v4048
      %v4527 = vmul.f32 %v4525, %v4049
      %4530 = vrot.lane.b32.xlu0 %v4526, 126
      %v4531 = vpop.permute.xlu0 %4530
      %4532 = vrot.lane.b32.xlu0 %v4527, 126
      %v4533 = vpop.permute.xlu0 %4532
      %v4536 = vadd.f32 %v4521, %v4531
      %v4537 = vadd.f32 %v4522, %v4533
      %s4538 = sadd.s32 %s4055, 3
      %s4539 = smul.u32 %s4538, 16
      %s4540 = sld [smem:[#allocation11 + %s4539]]
      %v4541 = vstv %s4540
      %v4542 = vmul.f32 %v4541, %v3883
      %v4543 = vmul.f32 %v4541, %v3884
      %4546 = vrot.lane.b32.xlu0 %v4542, 125
      %v4547 = vpop.permute.xlu0 %4546
      %4548 = vrot.lane.b32.xlu0 %v4543, 125
      %v4549 = vpop.permute.xlu0 %4548
      %v4552 = vadd.f32 %v4536, %v4547
      %v4553 = vadd.f32 %v4537, %v4549
      %s4554 = sadd.s32 %s4539, 1
      %s4555 = sld [smem:[#allocation11 + %s4554]]
      %v4556 = vstv %s4555
      %v4557 = vmul.f32 %v4556, %v3894
      %v4558 = vmul.f32 %v4556, %v3895
      %4561 = vrot.lane.b32.xlu0 %v4557, 125
      %v4562 = vpop.permute.xlu0 %4561
      %4563 = vrot.lane.b32.xlu0 %v4558, 125
      %v4564 = vpop.permute.xlu0 %4563
      %v4567 = vadd.f32 %v4552, %v4562
      %v4568 = vadd.f32 %v4553, %v4564
      %s4569 = sadd.s32 %s4539, 2
      %s4570 = sld [smem:[#allocation11 + %s4569]]
      %v4571 = vstv %s4570
      %v4572 = vmul.f32 %v4571, %v3905
      %v4573 = vmul.f32 %v4571, %v3906
      %4576 = vrot.lane.b32.xlu0 %v4572, 125
      %v4577 = vpop.permute.xlu0 %4576
      %4578 = vrot.lane.b32.xlu0 %v4573, 125
      %v4579 = vpop.permute.xlu0 %4578
      %v4582 = vadd.f32 %v4567, %v4577
      %v4583 = vadd.f32 %v4568, %v4579
      %s4584 = sadd.s32 %s4539, 3
      %s4585 = sld [smem:[#allocation11 + %s4584]]
      %v4586 = vstv %s4585
      %v4587 = vmul.f32 %v4586, %v3916
      %v4588 = vmul.f32 %v4586, %v3917
      %4591 = vrot.lane.b32.xlu0 %v4587, 125
      %v4592 = vpop.permute.xlu0 %4591
      %4593 = vrot.lane.b32.xlu0 %v4588, 125
      %v4594 = vpop.permute.xlu0 %4593
      %v4597 = vadd.f32 %v4582, %v4592
      %v4598 = vadd.f32 %v4583, %v4594
      %s4599 = sadd.s32 %s4539, 4
      %s4600 = sld [smem:[#allocation11 + %s4599]]
      %v4601 = vstv %s4600
      %v4602 = vmul.f32 %v4601, %v3927
      %v4603 = vmul.f32 %v4601, %v3928
      %4606 = vrot.lane.b32.xlu0 %v4602, 125
      %v4607 = vpop.permute.xlu0 %4606
      %4608 = vrot.lane.b32.xlu0 %v4603, 125
      %v4609 = vpop.permute.xlu0 %4608
      %v4612 = vadd.f32 %v4597, %v4607
      %v4613 = vadd.f32 %v4598, %v4609
      %s4614 = sadd.s32 %s4539, 5
      %s4615 = sld [smem:[#allocation11 + %s4614]]
      %v4616 = vstv %s4615
      %v4617 = vmul.f32 %v4616, %v3938
      %v4618 = vmul.f32 %v4616, %v3939
      %4621 = vrot.lane.b32.xlu0 %v4617, 125
      %v4622 = vpop.permute.xlu0 %4621
      %4623 = vrot.lane.b32.xlu0 %v4618, 125
      %v4624 = vpop.permute.xlu0 %4623
      %v4627 = vadd.f32 %v4612, %v4622
      %v4628 = vadd.f32 %v4613, %v4624
      %s4629 = sadd.s32 %s4539, 6
      %s4630 = sld [smem:[#allocation11 + %s4629]]
      %v4631 = vstv %s4630
      %v4632 = vmul.f32 %v4631, %v3949
      %v4633 = vmul.f32 %v4631, %v3950
      %4636 = vrot.lane.b32.xlu0 %v4632, 125
      %v4637 = vpop.permute.xlu0 %4636
      %4638 = vrot.lane.b32.xlu0 %v4633, 125
      %v4639 = vpop.permute.xlu0 %4638
      %v4642 = vadd.f32 %v4627, %v4637
      %v4643 = vadd.f32 %v4628, %v4639
      %s4644 = sadd.s32 %s4539, 7
      %s4645 = sld [smem:[#allocation11 + %s4644]]
      %v4646 = vstv %s4645
      %v4647 = vmul.f32 %v4646, %v3960
      %v4648 = vmul.f32 %v4646, %v3961
      %4651 = vrot.lane.b32.xlu0 %v4647, 125
      %v4652 = vpop.permute.xlu0 %4651
      %4653 = vrot.lane.b32.xlu0 %v4648, 125
      %v4654 = vpop.permute.xlu0 %4653
      %v4657 = vadd.f32 %v4642, %v4652
      %v4658 = vadd.f32 %v4643, %v4654
      %s4659 = sadd.s32 %s4539, 8
      %s4660 = sld [smem:[#allocation11 + %s4659]]
      %v4661 = vstv %s4660
      %v4662 = vmul.f32 %v4661, %v3971
      %v4663 = vmul.f32 %v4661, %v3972
      %4666 = vrot.lane.b32.xlu0 %v4662, 125
      %v4667 = vpop.permute.xlu0 %4666
      %4668 = vrot.lane.b32.xlu0 %v4663, 125
      %v4669 = vpop.permute.xlu0 %4668
      %v4672 = vadd.f32 %v4657, %v4667
      %v4673 = vadd.f32 %v4658, %v4669
      %s4674 = sadd.s32 %s4539, 9
      %s4675 = sld [smem:[#allocation11 + %s4674]]
      %v4676 = vstv %s4675
      %v4677 = vmul.f32 %v4676, %v3982
      %v4678 = vmul.f32 %v4676, %v3983
      %4681 = vrot.lane.b32.xlu0 %v4677, 125
      %v4682 = vpop.permute.xlu0 %4681
      %4683 = vrot.lane.b32.xlu0 %v4678, 125
      %v4684 = vpop.permute.xlu0 %4683
      %v4687 = vadd.f32 %v4672, %v4682
      %v4688 = vadd.f32 %v4673, %v4684
      %s4689 = sadd.s32 %s4539, 10
      %s4690 = sld [smem:[#allocation11 + %s4689]]
      %v4691 = vstv %s4690
      %v4692 = vmul.f32 %v4691, %v3993
      %v4693 = vmul.f32 %v4691, %v3994
      %4696 = vrot.lane.b32.xlu0 %v4692, 125
      %v4697 = vpop.permute.xlu0 %4696
      %4698 = vrot.lane.b32.xlu0 %v4693, 125
      %v4699 = vpop.permute.xlu0 %4698
      %v4702 = vadd.f32 %v4687, %v4697
      %v4703 = vadd.f32 %v4688, %v4699
      %s4704 = sadd.s32 %s4539, 11
      %s4705 = sld [smem:[#allocation11 + %s4704]]
      %v4706 = vstv %s4705
      %v4707 = vmul.f32 %v4706, %v4004
      %v4708 = vmul.f32 %v4706, %v4005
      %4711 = vrot.lane.b32.xlu0 %v4707, 125
      %v4712 = vpop.permute.xlu0 %4711
      %4713 = vrot.lane.b32.xlu0 %v4708, 125
      %v4714 = vpop.permute.xlu0 %4713
      %v4717 = vadd.f32 %v4702, %v4712
      %v4718 = vadd.f32 %v4703, %v4714
      %s4719 = sadd.s32 %s4539, 12
      %s4720 = sld [smem:[#allocation11 + %s4719]]
      %v4721 = vstv %s4720
      %v4722 = vmul.f32 %v4721, %v4015
      %v4723 = vmul.f32 %v4721, %v4016
      %4726 = vrot.lane.b32.xlu0 %v4722, 125
      %v4727 = vpop.permute.xlu0 %4726
      %4728 = vrot.lane.b32.xlu0 %v4723, 125
      %v4729 = vpop.permute.xlu0 %4728
      %v4732 = vadd.f32 %v4717, %v4727
      %v4733 = vadd.f32 %v4718, %v4729
      %s4734 = sadd.s32 %s4539, 13
      %s4735 = sld [smem:[#allocation11 + %s4734]]
      %v4736 = vstv %s4735
      %v4737 = vmul.f32 %v4736, %v4026
      %v4738 = vmul.f32 %v4736, %v4027
      %4741 = vrot.lane.b32.xlu0 %v4737, 125
      %v4742 = vpop.permute.xlu0 %4741
      %4743 = vrot.lane.b32.xlu0 %v4738, 125
      %v4744 = vpop.permute.xlu0 %4743
      %v4747 = vadd.f32 %v4732, %v4742
      %v4748 = vadd.f32 %v4733, %v4744
      %s4749 = sadd.s32 %s4539, 14
      %s4750 = sld [smem:[#allocation11 + %s4749]]
      %v4751 = vstv %s4750
      %v4752 = vmul.f32 %v4751, %v4037
      %v4753 = vmul.f32 %v4751, %v4038
      %4756 = vrot.lane.b32.xlu0 %v4752, 125
      %v4757 = vpop.permute.xlu0 %4756
      %4758 = vrot.lane.b32.xlu0 %v4753, 125
      %v4759 = vpop.permute.xlu0 %4758
      %v4762 = vadd.f32 %v4747, %v4757
      %v4763 = vadd.f32 %v4748, %v4759
      %s4764 = sadd.s32 %s4539, 15
      %s4765 = sld [smem:[#allocation11 + %s4764]]
      %v4766 = vstv %s4765
      %v4767 = vmul.f32 %v4766, %v4048
      %v4768 = vmul.f32 %v4766, %v4049
      %4771 = vrot.lane.b32.xlu0 %v4767, 125
      %v4772 = vpop.permute.xlu0 %4771
      %4773 = vrot.lane.b32.xlu0 %v4768, 125
      %v4774 = vpop.permute.xlu0 %4773
      %v4777 = vadd.f32 %v4762, %v4772
      %v4778 = vadd.f32 %v4763, %v4774
      %s4779 = sadd.s32 %s4055, 4
      %s4780 = smul.u32 %s4779, 16
      %s4781 = sld [smem:[#allocation11 + %s4780]]
      %v4782 = vstv %s4781
      %v4783 = vmul.f32 %v4782, %v3883
      %v4784 = vmul.f32 %v4782, %v3884
      %4787 = vrot.lane.b32.xlu0 %v4783, 124
      %v4788 = vpop.permute.xlu0 %4787
      %4789 = vrot.lane.b32.xlu0 %v4784, 124
      %v4790 = vpop.permute.xlu0 %4789
      %v4793 = vadd.f32 %v4777, %v4788
      %v4794 = vadd.f32 %v4778, %v4790
      %s4795 = sadd.s32 %s4780, 1
      %s4796 = sld [smem:[#allocation11 + %s4795]]
      %v4797 = vstv %s4796
      %v4798 = vmul.f32 %v4797, %v3894
      %v4799 = vmul.f32 %v4797, %v3895
      %4802 = vrot.lane.b32.xlu0 %v4798, 124
      %v4803 = vpop.permute.xlu0 %4802
      %4804 = vrot.lane.b32.xlu0 %v4799, 124
      %v4805 = vpop.permute.xlu0 %4804
      %v4808 = vadd.f32 %v4793, %v4803
      %v4809 = vadd.f32 %v4794, %v4805
      %s4810 = sadd.s32 %s4780, 2
      %s4811 = sld [smem:[#allocation11 + %s4810]]
      %v4812 = vstv %s4811
      %v4813 = vmul.f32 %v4812, %v3905
      %v4814 = vmul.f32 %v4812, %v3906
      %4817 = vrot.lane.b32.xlu0 %v4813, 124
      %v4818 = vpop.permute.xlu0 %4817
      %4819 = vrot.lane.b32.xlu0 %v4814, 124
      %v4820 = vpop.permute.xlu0 %4819
      %v4823 = vadd.f32 %v4808, %v4818
      %v4824 = vadd.f32 %v4809, %v4820
      %s4825 = sadd.s32 %s4780, 3
      %s4826 = sld [smem:[#allocation11 + %s4825]]
      %v4827 = vstv %s4826
      %v4828 = vmul.f32 %v4827, %v3916
      %v4829 = vmul.f32 %v4827, %v3917
      %4832 = vrot.lane.b32.xlu0 %v4828, 124
      %v4833 = vpop.permute.xlu0 %4832
      %4834 = vrot.lane.b32.xlu0 %v4829, 124
      %v4835 = vpop.permute.xlu0 %4834
      %v4838 = vadd.f32 %v4823, %v4833
      %v4839 = vadd.f32 %v4824, %v4835
      %s4840 = sadd.s32 %s4780, 4
      %s4841 = sld [smem:[#allocation11 + %s4840]]
      %v4842 = vstv %s4841
      %v4843 = vmul.f32 %v4842, %v3927
      %v4844 = vmul.f32 %v4842, %v3928
      %4847 = vrot.lane.b32.xlu0 %v4843, 124
      %v4848 = vpop.permute.xlu0 %4847
      %4849 = vrot.lane.b32.xlu0 %v4844, 124
      %v4850 = vpop.permute.xlu0 %4849
      %v4853 = vadd.f32 %v4838, %v4848
      %v4854 = vadd.f32 %v4839, %v4850
      %s4855 = sadd.s32 %s4780, 5
      %s4856 = sld [smem:[#allocation11 + %s4855]]
      %v4857 = vstv %s4856
      %v4858 = vmul.f32 %v4857, %v3938
      %v4859 = vmul.f32 %v4857, %v3939
      %4862 = vrot.lane.b32.xlu0 %v4858, 124
      %v4863 = vpop.permute.xlu0 %4862
      %4864 = vrot.lane.b32.xlu0 %v4859, 124
      %v4865 = vpop.permute.xlu0 %4864
      %v4868 = vadd.f32 %v4853, %v4863
      %v4869 = vadd.f32 %v4854, %v4865
      %s4870 = sadd.s32 %s4780, 6
      %s4871 = sld [smem:[#allocation11 + %s4870]]
      %v4872 = vstv %s4871
      %v4873 = vmul.f32 %v4872, %v3949
      %v4874 = vmul.f32 %v4872, %v3950
      %4877 = vrot.lane.b32.xlu0 %v4873, 124
      %v4878 = vpop.permute.xlu0 %4877
      %4879 = vrot.lane.b32.xlu0 %v4874, 124
      %v4880 = vpop.permute.xlu0 %4879
      %v4883 = vadd.f32 %v4868, %v4878
      %v4884 = vadd.f32 %v4869, %v4880
      %s4885 = sadd.s32 %s4780, 7
      %s4886 = sld [smem:[#allocation11 + %s4885]]
      %v4887 = vstv %s4886
      %v4888 = vmul.f32 %v4887, %v3960
      %v4889 = vmul.f32 %v4887, %v3961
      %4892 = vrot.lane.b32.xlu0 %v4888, 124
      %v4893 = vpop.permute.xlu0 %4892
      %4894 = vrot.lane.b32.xlu0 %v4889, 124
      %v4895 = vpop.permute.xlu0 %4894
      %v4898 = vadd.f32 %v4883, %v4893
      %v4899 = vadd.f32 %v4884, %v4895
      %s4900 = sadd.s32 %s4780, 8
      %s4901 = sld [smem:[#allocation11 + %s4900]]
      %v4902 = vstv %s4901
      %v4903 = vmul.f32 %v4902, %v3971
      %v4904 = vmul.f32 %v4902, %v3972
      %4907 = vrot.lane.b32.xlu0 %v4903, 124
      %v4908 = vpop.permute.xlu0 %4907
      %4909 = vrot.lane.b32.xlu0 %v4904, 124
      %v4910 = vpop.permute.xlu0 %4909
      %v4913 = vadd.f32 %v4898, %v4908
      %v4914 = vadd.f32 %v4899, %v4910
      %s4915 = sadd.s32 %s4780, 9
      %s4916 = sld [smem:[#allocation11 + %s4915]]
      %v4917 = vstv %s4916
      %v4918 = vmul.f32 %v4917, %v3982
      %v4919 = vmul.f32 %v4917, %v3983
      %4922 = vrot.lane.b32.xlu0 %v4918, 124
      %v4923 = vpop.permute.xlu0 %4922
      %4924 = vrot.lane.b32.xlu0 %v4919, 124
      %v4925 = vpop.permute.xlu0 %4924
      %v4928 = vadd.f32 %v4913, %v4923
      %v4929 = vadd.f32 %v4914, %v4925
      %s4930 = sadd.s32 %s4780, 10
      %s4931 = sld [smem:[#allocation11 + %s4930]]
      %v4932 = vstv %s4931
      %v4933 = vmul.f32 %v4932, %v3993
      %v4934 = vmul.f32 %v4932, %v3994
      %4937 = vrot.lane.b32.xlu0 %v4933, 124
      %v4938 = vpop.permute.xlu0 %4937
      %4939 = vrot.lane.b32.xlu0 %v4934, 124
      %v4940 = vpop.permute.xlu0 %4939
      %v4943 = vadd.f32 %v4928, %v4938
      %v4944 = vadd.f32 %v4929, %v4940
      %s4945 = sadd.s32 %s4780, 11
      %s4946 = sld [smem:[#allocation11 + %s4945]]
      %v4947 = vstv %s4946
      %v4948 = vmul.f32 %v4947, %v4004
      %v4949 = vmul.f32 %v4947, %v4005
      %4952 = vrot.lane.b32.xlu0 %v4948, 124
      %v4953 = vpop.permute.xlu0 %4952
      %4954 = vrot.lane.b32.xlu0 %v4949, 124
      %v4955 = vpop.permute.xlu0 %4954
      %v4958 = vadd.f32 %v4943, %v4953
      %v4959 = vadd.f32 %v4944, %v4955
      %s4960 = sadd.s32 %s4780, 12
      %s4961 = sld [smem:[#allocation11 + %s4960]]
      %v4962 = vstv %s4961
      %v4963 = vmul.f32 %v4962, %v4015
      %v4964 = vmul.f32 %v4962, %v4016
      %4967 = vrot.lane.b32.xlu0 %v4963, 124
      %v4968 = vpop.permute.xlu0 %4967
      %4969 = vrot.lane.b32.xlu0 %v4964, 124
      %v4970 = vpop.permute.xlu0 %4969
      %v4973 = vadd.f32 %v4958, %v4968
      %v4974 = vadd.f32 %v4959, %v4970
      %s4975 = sadd.s32 %s4780, 13
      %s4976 = sld [smem:[#allocation11 + %s4975]]
      %v4977 = vstv %s4976
      %v4978 = vmul.f32 %v4977, %v4026
      %v4979 = vmul.f32 %v4977, %v4027
      %4982 = vrot.lane.b32.xlu0 %v4978, 124
      %v4983 = vpop.permute.xlu0 %4982
      %4984 = vrot.lane.b32.xlu0 %v4979, 124
      %v4985 = vpop.permute.xlu0 %4984
      %v4988 = vadd.f32 %v4973, %v4983
      %v4989 = vadd.f32 %v4974, %v4985
      %s4990 = sadd.s32 %s4780, 14
      %s4991 = sld [smem:[#allocation11 + %s4990]]
      %v4992 = vstv %s4991
      %v4993 = vmul.f32 %v4992, %v4037
      %v4994 = vmul.f32 %v4992, %v4038
      %4997 = vrot.lane.b32.xlu0 %v4993, 124
      %v4998 = vpop.permute.xlu0 %4997
      %4999 = vrot.lane.b32.xlu0 %v4994, 124
      %v5000 = vpop.permute.xlu0 %4999
      %v5003 = vadd.f32 %v4988, %v4998
      %v5004 = vadd.f32 %v4989, %v5000
      %s5005 = sadd.s32 %s4780, 15
      %s5006 = sld [smem:[#allocation11 + %s5005]]
      %v5007 = vstv %s5006
      %v5008 = vmul.f32 %v5007, %v4048
      %v5009 = vmul.f32 %v5007, %v4049
      %5012 = vrot.lane.b32.xlu0 %v5008, 124
      %v5013 = vpop.permute.xlu0 %5012
      %5014 = vrot.lane.b32.xlu0 %v5009, 124
      %v5015 = vpop.permute.xlu0 %5014
      %v5018 = vadd.f32 %v5003, %v5013
      %v5019 = vadd.f32 %v5004, %v5015
      %s5020 = sadd.s32 %s4055, 5
      %s5021 = smul.u32 %s5020, 16
      %s5022 = sld [smem:[#allocation11 + %s5021]]
      %v5023 = vstv %s5022
      %v5024 = vmul.f32 %v5023, %v3883
      %v5025 = vmul.f32 %v5023, %v3884
      %5028 = vrot.lane.b32.xlu0 %v5024, 123
      %v5029 = vpop.permute.xlu0 %5028
      %5030 = vrot.lane.b32.xlu0 %v5025, 123
      %v5031 = vpop.permute.xlu0 %5030
      %v5034 = vadd.f32 %v5018, %v5029
      %v5035 = vadd.f32 %v5019, %v5031
      %s5036 = sadd.s32 %s5021, 1
      %s5037 = sld [smem:[#allocation11 + %s5036]]
      %v5038 = vstv %s5037
      %v5039 = vmul.f32 %v5038, %v3894
      %v5040 = vmul.f32 %v5038, %v3895
      %5043 = vrot.lane.b32.xlu0 %v5039, 123
      %v5044 = vpop.permute.xlu0 %5043
      %5045 = vrot.lane.b32.xlu0 %v5040, 123
      %v5046 = vpop.permute.xlu0 %5045
      %v5049 = vadd.f32 %v5034, %v5044
      %v5050 = vadd.f32 %v5035, %v5046
      %s5051 = sadd.s32 %s5021, 2
      %s5052 = sld [smem:[#allocation11 + %s5051]]
      %v5053 = vstv %s5052
      %v5054 = vmul.f32 %v5053, %v3905
      %v5055 = vmul.f32 %v5053, %v3906
      %5058 = vrot.lane.b32.xlu0 %v5054, 123
      %v5059 = vpop.permute.xlu0 %5058
      %5060 = vrot.lane.b32.xlu0 %v5055, 123
      %v5061 = vpop.permute.xlu0 %5060
      %v5064 = vadd.f32 %v5049, %v5059
      %v5065 = vadd.f32 %v5050, %v5061
      %s5066 = sadd.s32 %s5021, 3
      %s5067 = sld [smem:[#allocation11 + %s5066]]
      %v5068 = vstv %s5067
      %v5069 = vmul.f32 %v5068, %v3916
      %v5070 = vmul.f32 %v5068, %v3917
      %5073 = vrot.lane.b32.xlu0 %v5069, 123
      %v5074 = vpop.permute.xlu0 %5073
      %5075 = vrot.lane.b32.xlu0 %v5070, 123
      %v5076 = vpop.permute.xlu0 %5075
      %v5079 = vadd.f32 %v5064, %v5074
      %v5080 = vadd.f32 %v5065, %v5076
      %s5081 = sadd.s32 %s5021, 4
      %s5082 = sld [smem:[#allocation11 + %s5081]]
      %v5083 = vstv %s5082
      %v5084 = vmul.f32 %v5083, %v3927
      %v5085 = vmul.f32 %v5083, %v3928
      %5088 = vrot.lane.b32.xlu0 %v5084, 123
      %v5089 = vpop.permute.xlu0 %5088
      %5090 = vrot.lane.b32.xlu0 %v5085, 123
      %v5091 = vpop.permute.xlu0 %5090
      %v5094 = vadd.f32 %v5079, %v5089
      %v5095 = vadd.f32 %v5080, %v5091
      %s5096 = sadd.s32 %s5021, 5
      %s5097 = sld [smem:[#allocation11 + %s5096]]
      %v5098 = vstv %s5097
      %v5099 = vmul.f32 %v5098, %v3938
      %v5100 = vmul.f32 %v5098, %v3939
      %5103 = vrot.lane.b32.xlu0 %v5099, 123
      %v5104 = vpop.permute.xlu0 %5103
      %5105 = vrot.lane.b32.xlu0 %v5100, 123
      %v5106 = vpop.permute.xlu0 %5105
      %v5109 = vadd.f32 %v5094, %v5104
      %v5110 = vadd.f32 %v5095, %v5106
      %s5111 = sadd.s32 %s5021, 6
      %s5112 = sld [smem:[#allocation11 + %s5111]]
      %v5113 = vstv %s5112
      %v5114 = vmul.f32 %v5113, %v3949
      %v5115 = vmul.f32 %v5113, %v3950
      %5118 = vrot.lane.b32.xlu0 %v5114, 123
      %v5119 = vpop.permute.xlu0 %5118
      %5120 = vrot.lane.b32.xlu0 %v5115, 123
      %v5121 = vpop.permute.xlu0 %5120
      %v5124 = vadd.f32 %v5109, %v5119
      %v5125 = vadd.f32 %v5110, %v5121
      %s5126 = sadd.s32 %s5021, 7
      %s5127 = sld [smem:[#allocation11 + %s5126]]
      %v5128 = vstv %s5127
      %v5129 = vmul.f32 %v5128, %v3960
      %v5130 = vmul.f32 %v5128, %v3961
      %5133 = vrot.lane.b32.xlu0 %v5129, 123
      %v5134 = vpop.permute.xlu0 %5133
      %5135 = vrot.lane.b32.xlu0 %v5130, 123
      %v5136 = vpop.permute.xlu0 %5135
      %v5139 = vadd.f32 %v5124, %v5134
      %v5140 = vadd.f32 %v5125, %v5136
      %s5141 = sadd.s32 %s5021, 8
      %s5142 = sld [smem:[#allocation11 + %s5141]]
      %v5143 = vstv %s5142
      %v5144 = vmul.f32 %v5143, %v3971
      %v5145 = vmul.f32 %v5143, %v3972
      %5148 = vrot.lane.b32.xlu0 %v5144, 123
      %v5149 = vpop.permute.xlu0 %5148
      %5150 = vrot.lane.b32.xlu0 %v5145, 123
      %v5151 = vpop.permute.xlu0 %5150
      %v5154 = vadd.f32 %v5139, %v5149
      %v5155 = vadd.f32 %v5140, %v5151
      %s5156 = sadd.s32 %s5021, 9
      %s5157 = sld [smem:[#allocation11 + %s5156]]
      %v5158 = vstv %s5157
      %v5159 = vmul.f32 %v5158, %v3982
      %v5160 = vmul.f32 %v5158, %v3983
      %5163 = vrot.lane.b32.xlu0 %v5159, 123
      %v5164 = vpop.permute.xlu0 %5163
      %5165 = vrot.lane.b32.xlu0 %v5160, 123
      %v5166 = vpop.permute.xlu0 %5165
      %v5169 = vadd.f32 %v5154, %v5164
      %v5170 = vadd.f32 %v5155, %v5166
      %s5171 = sadd.s32 %s5021, 10
      %s5172 = sld [smem:[#allocation11 + %s5171]]
      %v5173 = vstv %s5172
      %v5174 = vmul.f32 %v5173, %v3993
      %v5175 = vmul.f32 %v5173, %v3994
      %5178 = vrot.lane.b32.xlu0 %v5174, 123
      %v5179 = vpop.permute.xlu0 %5178
      %5180 = vrot.lane.b32.xlu0 %v5175, 123
      %v5181 = vpop.permute.xlu0 %5180
      %v5184 = vadd.f32 %v5169, %v5179
      %v5185 = vadd.f32 %v5170, %v5181
      %s5186 = sadd.s32 %s5021, 11
      %s5187 = sld [smem:[#allocation11 + %s5186]]
      %v5188 = vstv %s5187
      %v5189 = vmul.f32 %v5188, %v4004
      %v5190 = vmul.f32 %v5188, %v4005
      %5193 = vrot.lane.b32.xlu0 %v5189, 123
      %v5194 = vpop.permute.xlu0 %5193
      %5195 = vrot.lane.b32.xlu0 %v5190, 123
      %v5196 = vpop.permute.xlu0 %5195
      %v5199 = vadd.f32 %v5184, %v5194
      %v5200 = vadd.f32 %v5185, %v5196
      %s5201 = sadd.s32 %s5021, 12
      %s5202 = sld [smem:[#allocation11 + %s5201]]
      %v5203 = vstv %s5202
      %v5204 = vmul.f32 %v5203, %v4015
      %v5205 = vmul.f32 %v5203, %v4016
      %5208 = vrot.lane.b32.xlu0 %v5204, 123
      %v5209 = vpop.permute.xlu0 %5208
      %5210 = vrot.lane.b32.xlu0 %v5205, 123
      %v5211 = vpop.permute.xlu0 %5210
      %v5214 = vadd.f32 %v5199, %v5209
      %v5215 = vadd.f32 %v5200, %v5211
      %s5216 = sadd.s32 %s5021, 13
      %s5217 = sld [smem:[#allocation11 + %s5216]]
      %v5218 = vstv %s5217
      %v5219 = vmul.f32 %v5218, %v4026
      %v5220 = vmul.f32 %v5218, %v4027
      %5223 = vrot.lane.b32.xlu0 %v5219, 123
      %v5224 = vpop.permute.xlu0 %5223
      %5225 = vrot.lane.b32.xlu0 %v5220, 123
      %v5226 = vpop.permute.xlu0 %5225
      %v5229 = vadd.f32 %v5214, %v5224
      %v5230 = vadd.f32 %v5215, %v5226
      %s5231 = sadd.s32 %s5021, 14
      %s5232 = sld [smem:[#allocation11 + %s5231]]
      %v5233 = vstv %s5232
      %v5234 = vmul.f32 %v5233, %v4037
      %v5235 = vmul.f32 %v5233, %v4038
      %5238 = vrot.lane.b32.xlu0 %v5234, 123
      %v5239 = vpop.permute.xlu0 %5238
      %5240 = vrot.lane.b32.xlu0 %v5235, 123
      %v5241 = vpop.permute.xlu0 %5240
      %v5244 = vadd.f32 %v5229, %v5239
      %v5245 = vadd.f32 %v5230, %v5241
      %s5246 = sadd.s32 %s5021, 15
      %s5247 = sld [smem:[#allocation11 + %s5246]]
      %v5248 = vstv %s5247
      %v5249 = vmul.f32 %v5248, %v4048
      %v5250 = vmul.f32 %v5248, %v4049
      %5253 = vrot.lane.b32.xlu0 %v5249, 123
      %v5254 = vpop.permute.xlu0 %5253
      %5255 = vrot.lane.b32.xlu0 %v5250, 123
      %v5256 = vpop.permute.xlu0 %5255
      %v5259 = vadd.f32 %v5244, %v5254
      %v5260 = vadd.f32 %v5245, %v5256
      %s5261 = sadd.s32 %s4055, 6
      %s5262 = smul.u32 %s5261, 16
      %s5263 = sld [smem:[#allocation11 + %s5262]]
      %v5264 = vstv %s5263
      %v5265 = vmul.f32 %v5264, %v3883
      %v5266 = vmul.f32 %v5264, %v3884
      %5269 = vrot.lane.b32.xlu0 %v5265, 122
      %v5270 = vpop.permute.xlu0 %5269
      %5271 = vrot.lane.b32.xlu0 %v5266, 122
      %v5272 = vpop.permute.xlu0 %5271
      %v5275 = vadd.f32 %v5259, %v5270
      %v5276 = vadd.f32 %v5260, %v5272
      %s5277 = sadd.s32 %s5262, 1
      %s5278 = sld [smem:[#allocation11 + %s5277]]
      %v5279 = vstv %s5278
      %v5280 = vmul.f32 %v5279, %v3894
      %v5281 = vmul.f32 %v5279, %v3895
      %5284 = vrot.lane.b32.xlu0 %v5280, 122
      %v5285 = vpop.permute.xlu0 %5284
      %5286 = vrot.lane.b32.xlu0 %v5281, 122
      %v5287 = vpop.permute.xlu0 %5286
      %v5290 = vadd.f32 %v5275, %v5285
      %v5291 = vadd.f32 %v5276, %v5287
      %s5292 = sadd.s32 %s5262, 2
      %s5293 = sld [smem:[#allocation11 + %s5292]]
      %v5294 = vstv %s5293
      %v5295 = vmul.f32 %v5294, %v3905
      %v5296 = vmul.f32 %v5294, %v3906
      %5299 = vrot.lane.b32.xlu0 %v5295, 122
      %v5300 = vpop.permute.xlu0 %5299
      %5301 = vrot.lane.b32.xlu0 %v5296, 122
      %v5302 = vpop.permute.xlu0 %5301
      %v5305 = vadd.f32 %v5290, %v5300
      %v5306 = vadd.f32 %v5291, %v5302
      %s5307 = sadd.s32 %s5262, 3
      %s5308 = sld [smem:[#allocation11 + %s5307]]
      %v5309 = vstv %s5308
      %v5310 = vmul.f32 %v5309, %v3916
      %v5311 = vmul.f32 %v5309, %v3917
      %5314 = vrot.lane.b32.xlu0 %v5310, 122
      %v5315 = vpop.permute.xlu0 %5314
      %5316 = vrot.lane.b32.xlu0 %v5311, 122
      %v5317 = vpop.permute.xlu0 %5316
      %v5320 = vadd.f32 %v5305, %v5315
      %v5321 = vadd.f32 %v5306, %v5317
      %s5322 = sadd.s32 %s5262, 4
      %s5323 = sld [smem:[#allocation11 + %s5322]]
      %v5324 = vstv %s5323
      %v5325 = vmul.f32 %v5324, %v3927
      %v5326 = vmul.f32 %v5324, %v3928
      %5329 = vrot.lane.b32.xlu0 %v5325, 122
      %v5330 = vpop.permute.xlu0 %5329
      %5331 = vrot.lane.b32.xlu0 %v5326, 122
      %v5332 = vpop.permute.xlu0 %5331
      %v5335 = vadd.f32 %v5320, %v5330
      %v5336 = vadd.f32 %v5321, %v5332
      %s5337 = sadd.s32 %s5262, 5
      %s5338 = sld [smem:[#allocation11 + %s5337]]
      %v5339 = vstv %s5338
      %v5340 = vmul.f32 %v5339, %v3938
      %v5341 = vmul.f32 %v5339, %v3939
      %5344 = vrot.lane.b32.xlu0 %v5340, 122
      %v5345 = vpop.permute.xlu0 %5344
      %5346 = vrot.lane.b32.xlu0 %v5341, 122
      %v5347 = vpop.permute.xlu0 %5346
      %v5350 = vadd.f32 %v5335, %v5345
      %v5351 = vadd.f32 %v5336, %v5347
      %s5352 = sadd.s32 %s5262, 6
      %s5353 = sld [smem:[#allocation11 + %s5352]]
      %v5354 = vstv %s5353
      %v5355 = vmul.f32 %v5354, %v3949
      %v5356 = vmul.f32 %v5354, %v3950
      %5359 = vrot.lane.b32.xlu0 %v5355, 122
      %v5360 = vpop.permute.xlu0 %5359
      %5361 = vrot.lane.b32.xlu0 %v5356, 122
      %v5362 = vpop.permute.xlu0 %5361
      %v5365 = vadd.f32 %v5350, %v5360
      %v5366 = vadd.f32 %v5351, %v5362
      %s5367 = sadd.s32 %s5262, 7
      %s5368 = sld [smem:[#allocation11 + %s5367]]
      %v5369 = vstv %s5368
      %v5370 = vmul.f32 %v5369, %v3960
      %v5371 = vmul.f32 %v5369, %v3961
      %5374 = vrot.lane.b32.xlu0 %v5370, 122
      %v5375 = vpop.permute.xlu0 %5374
      %5376 = vrot.lane.b32.xlu0 %v5371, 122
      %v5377 = vpop.permute.xlu0 %5376
      %v5380 = vadd.f32 %v5365, %v5375
      %v5381 = vadd.f32 %v5366, %v5377
      %s5382 = sadd.s32 %s5262, 8
      %s5383 = sld [smem:[#allocation11 + %s5382]]
      %v5384 = vstv %s5383
      %v5385 = vmul.f32 %v5384, %v3971
      %v5386 = vmul.f32 %v5384, %v3972
      %5389 = vrot.lane.b32.xlu0 %v5385, 122
      %v5390 = vpop.permute.xlu0 %5389
      %5391 = vrot.lane.b32.xlu0 %v5386, 122
      %v5392 = vpop.permute.xlu0 %5391
      %v5395 = vadd.f32 %v5380, %v5390
      %v5396 = vadd.f32 %v5381, %v5392
      %s5397 = sadd.s32 %s5262, 9
      %s5398 = sld [smem:[#allocation11 + %s5397]]
      %v5399 = vstv %s5398
      %v5400 = vmul.f32 %v5399, %v3982
      %v5401 = vmul.f32 %v5399, %v3983
      %5404 = vrot.lane.b32.xlu0 %v5400, 122
      %v5405 = vpop.permute.xlu0 %5404
      %5406 = vrot.lane.b32.xlu0 %v5401, 122
      %v5407 = vpop.permute.xlu0 %5406
      %v5410 = vadd.f32 %v5395, %v5405
      %v5411 = vadd.f32 %v5396, %v5407
      %s5412 = sadd.s32 %s5262, 10
      %s5413 = sld [smem:[#allocation11 + %s5412]]
      %v5414 = vstv %s5413
      %v5415 = vmul.f32 %v5414, %v3993
      %v5416 = vmul.f32 %v5414, %v3994
      %5419 = vrot.lane.b32.xlu0 %v5415, 122
      %v5420 = vpop.permute.xlu0 %5419
      %5421 = vrot.lane.b32.xlu0 %v5416, 122
      %v5422 = vpop.permute.xlu0 %5421
      %v5425 = vadd.f32 %v5410, %v5420
      %v5426 = vadd.f32 %v5411, %v5422
      %s5427 = sadd.s32 %s5262, 11
      %s5428 = sld [smem:[#allocation11 + %s5427]]
      %v5429 = vstv %s5428
      %v5430 = vmul.f32 %v5429, %v4004
      %v5431 = vmul.f32 %v5429, %v4005
      %5434 = vrot.lane.b32.xlu0 %v5430, 122
      %v5435 = vpop.permute.xlu0 %5434
      %5436 = vrot.lane.b32.xlu0 %v5431, 122
      %v5437 = vpop.permute.xlu0 %5436
      %v5440 = vadd.f32 %v5425, %v5435
      %v5441 = vadd.f32 %v5426, %v5437
      %s5442 = sadd.s32 %s5262, 12
      %s5443 = sld [smem:[#allocation11 + %s5442]]
      %v5444 = vstv %s5443
      %v5445 = vmul.f32 %v5444, %v4015
      %v5446 = vmul.f32 %v5444, %v4016
      %5449 = vrot.lane.b32.xlu0 %v5445, 122
      %v5450 = vpop.permute.xlu0 %5449
      %5451 = vrot.lane.b32.xlu0 %v5446, 122
      %v5452 = vpop.permute.xlu0 %5451
      %v5455 = vadd.f32 %v5440, %v5450
      %v5456 = vadd.f32 %v5441, %v5452
      %s5457 = sadd.s32 %s5262, 13
      %s5458 = sld [smem:[#allocation11 + %s5457]]
      %v5459 = vstv %s5458
      %v5460 = vmul.f32 %v5459, %v4026
      %v5461 = vmul.f32 %v5459, %v4027
      %5464 = vrot.lane.b32.xlu0 %v5460, 122
      %v5465 = vpop.permute.xlu0 %5464
      %5466 = vrot.lane.b32.xlu0 %v5461, 122
      %v5467 = vpop.permute.xlu0 %5466
      %v5470 = vadd.f32 %v5455, %v5465
      %v5471 = vadd.f32 %v5456, %v5467
      %s5472 = sadd.s32 %s5262, 14
      %s5473 = sld [smem:[#allocation11 + %s5472]]
      %v5474 = vstv %s5473
      %v5475 = vmul.f32 %v5474, %v4037
      %v5476 = vmul.f32 %v5474, %v4038
      %5479 = vrot.lane.b32.xlu0 %v5475, 122
      %v5480 = vpop.permute.xlu0 %5479
      %5481 = vrot.lane.b32.xlu0 %v5476, 122
      %v5482 = vpop.permute.xlu0 %5481
      %v5485 = vadd.f32 %v5470, %v5480
      %v5486 = vadd.f32 %v5471, %v5482
      %s5487 = sadd.s32 %s5262, 15
      %s5488 = sld [smem:[#allocation11 + %s5487]]
      %v5489 = vstv %s5488
      %v5490 = vmul.f32 %v5489, %v4048
      %v5491 = vmul.f32 %v5489, %v4049
      %5494 = vrot.lane.b32.xlu0 %v5490, 122
      %v5495 = vpop.permute.xlu0 %5494
      %5496 = vrot.lane.b32.xlu0 %v5491, 122
      %v5497 = vpop.permute.xlu0 %5496
      %v5500 = vadd.f32 %v5485, %v5495
      %v5501 = vadd.f32 %v5486, %v5497
      %5502 = vst.msk [vmem:[#allocation5] sm:$0xff] %vm322, %v5500
      %5503 = vst.msk [vmem:[#allocation5 + $0x8] sm:$0xff] %vm322, %v5501
    $region58: #{tpu_custom_call.1} parent=1 // loop_footer
      %s3877 = sadd.s32 1, %s3873
    $region59: #{tpu_custom_call.1} parent=1 // loop_footer_branch
      %3872 = sbr.rel target = $region55
    $region60: #{tpu_custom_call.1} parent=1 // loop_exit
      _
    %v5504 = vld [vmem:[#allocation5] sm:$0xff]
    %v5505 = vld [vmem:[#allocation5 + $0x8] sm:$0xff]
    %v5506 = vxor.u32 %v5504, 2147483648
    %v5507 = vxor.u32 %v5505, 2147483648
    %v5508 = vmul.f32 %v5506, 1.442695
    %v5509 = vpow.pop %v5508
    %v5510 = vmul.f32 %v5507, 1.442695
    %v5511 = vpow.pop %v5510
    %v5512 = vadd.f32 %v5509, 1.0
    %v5513 = vadd.f32 %v5511, 1.0
    %v5514 = vrcp.pop %v5512
    %v5515 = vmul.f32 1.0, %v5514
    %v5516 = vrcp.pop %v5513
    %v5517 = vmul.f32 1.0, %v5516
    %5518 = vst.msk [vmem:[#allocation13] sm:$0xff] %vm199, %v5515
    %5519 = vst.msk [vmem:[#allocation13 + $0x8] sm:$0xff] %vm199, %v5517
    %5522 = vrot.lane.b32.xlu0 %v5515, 106
    %v5523 = vpop.permute.xlu0 %5522
    %5524 = vrot.lane.b32.xlu0 %v5517, 106
    %v5525 = vpop.permute.xlu0 %5524
    %s5528 = scalar_lea.vmem [#allocation13], 16
    %5529 = vst.msk [vmem:[%s5528] sm:$0xff] %vm199, %v5523
    %5530 = vst.msk [vmem:[%s5528 + $0x8] sm:$0xff] %vm199, %v5525
    // Predicated region
    $region61: #{tpu_custom_call.1} parent=1 // pred_check
      _
    $region62: #{tpu_custom_call.1} parent=1 // pred_check_branch
      %5532 = sbr.rel (0) target = $region64
    $region63: #{tpu_custom_call.1} parent=1 // pred_region
      %s5534 = ssub.s32 512, 512
      %5535 = vsyncadd [#allocation8], %s5534
      %s5536 = sshll.u32 [#allocation13], 4
      %s5537 = int_to_ptr.vmem [resolvable:$true] %s5536
      %5542 = dma.vmem_to_hbm [thread:$0]  %s5537, 512, %s3, [#allocation8], 128, 128, 8
    $region64: #{tpu_custom_call.1} parent=1 // pred_fallthru
      _
    // Predicated region
    $region65: #{tpu_custom_call.1} parent=1 // pred_check
      _
    $region66: #{tpu_custom_call.1} parent=1 // pred_check_branch
      %5544 = sbr.rel (0) target = $region68
    $region67: #{tpu_custom_call.1} parent=1 // pred_region
      %5545 = dma.done [#allocation8], 512
    $region68: #{tpu_custom_call.1} parent=1 // pred_fallthru
      _
    %5546 = vsyncpa [#allocation7], 1
    %5547 = vsyncpa [#allocation8], 1
    %5548 = vsyncpa [#allocation9], 1
    %5549 = vsyncpa [#allocation12], 1

</llo_original>
